<compile_context>
chip_gen: v6e
topology: v6e:2x2x1
jax: 0.10.0
libtpu: 0.0.40
codegen_flags: <defaults>
</compile_context>

<pallas_src>
import functools
import math

import jax
import jax.numpy as jnp
import numpy as np
from jax.experimental import pallas as pl
from jax.experimental.pallas import tpu as pltpu


_PARAM_KEYS = (
    "ln1w", "ln1b", "ln2w", "ln2b", "ln3w", "ln3b",
    "sa_wq", "sa_bq", "sa_wk", "sa_bk", "sa_wv", "sa_bv", "sa_wo", "sa_bo",
    "ca_wq", "ca_bq", "ca_wk", "ca_bk", "ca_wv", "ca_bv", "ca_wo", "ca_bo",
    "w1", "b1", "w2", "b2",
)

# Weight matrices that feed the MXU -> stored/streamed as bf16.
_MATMUL_WEIGHTS = ("sa_wq", "sa_wk", "sa_wv", "sa_wo",
                   "ca_wq", "ca_wk", "ca_wv", "ca_wo", "w1", "w2")


# ------------------------------ kernel-side math -------------------------------

def _layernorm(v, w, b, eps=1e-5):
    # v: (M, D) f32; w, b: (1, D) f32.  All-f32 elementwise math.
    mu = jnp.mean(v, axis=-1, keepdims=True)
    var = jnp.mean((v - mu) ** 2, axis=-1, keepdims=True)
    return (v - mu) * jax.lax.rsqrt(var + eps) * w + b


def _softmax_rows(s):
    # f32 softmax over the last axis.  EUP approximate reciprocal + one Newton
    # step (denom >= 1, well conditioned) instead of a VALU divide.
    m = jnp.max(s, axis=-1, keepdims=True)
    p = jnp.exp(s - m)
    denom = jnp.sum(p, axis=-1, keepdims=True)
    r = pl.reciprocal(denom, approx=True)
    r = r * (2.0 - denom * r)
    return p * r


def _mha(q_in, kv_in, nhead,
         wq_ref, bq_ref, wk_ref, bk_ref, wv_ref, bv_ref, wo_ref, bo_ref):
    """Multi-head attention for one batch element.

    q_in: (Sq, D) f32, kv_in: (Skv, D) f32.  Weight refs are bf16 and are read
    lazily at the point of use.  The 1/sqrt(head_dim) scale is pre-folded into
    wq/bq (see prepare_params).  All head matmuls are batched into single
    dot_generals over a (nhead, S, hd) layout; the output projection is one
    (Sq, D) @ (D, D) matmul.
    """
    Sq, D = q_in.shape
    Skv = kv_in.shape[0]
    hd = D // nhead

    q_bf = q_in.astype(jnp.bfloat16)
    kv_bf = kv_in.astype(jnp.bfloat16)

    # Full-width projections: bf16 MXU operands, f32 accumulation, f32 bias add.
    q = jnp.dot(q_bf, wq_ref[...], preferred_element_type=jnp.float32) + bq_ref[...]
    k = jnp.dot(kv_bf, wk_ref[...], preferred_element_type=jnp.float32) + bk_ref[...]
    v = jnp.dot(kv_bf, wv_ref[...], preferred_element_type=jnp.float32) + bv_ref[...]

    # Head-major layout (nhead, S, hd) so all heads go through the MXU as one
    # batched matmul stream (no per-head Python loop, no concatenate).
    qh = jnp.transpose(q.reshape(Sq, nhead, hd), (1, 0, 2)).astype(jnp.bfloat16)
    kh = jnp.transpose(k.reshape(Skv, nhead, hd), (1, 0, 2)).astype(jnp.bfloat16)
    vh = jnp.transpose(v.reshape(Skv, nhead, hd), (1, 0, 2)).astype(jnp.bfloat16)

    # Scores: contract the last dims directly (no materialized K transpose).
    s = jnp.einsum("hqd,hkd->hqk", qh, kh, preferred_element_type=jnp.float32)
    p = _softmax_rows(s).astype(jnp.bfloat16)          # softmax stays in f32
    ctx = jnp.einsum("hqk,hkd->hqd", p, vh, preferred_element_type=jnp.float32)

    # Back to (Sq, D) and one lane-dense output projection (K = D).
    o = jnp.transpose(ctx, (1, 0, 2)).reshape(Sq, D).astype(jnp.bfloat16)
    return jnp.dot(o, wo_ref[...], preferred_element_type=jnp.float32) + bo_ref[...]


def decoder_kernel(x_ref, mem_ref, *rest, nhead):
    r = dict(zip(_PARAM_KEYS, rest[:-1]))   # weight refs, loaded lazily
    out_ref = rest[-1]

    x = x_ref[...]      # (S, D)  f32 -- one batch element (leading dim squeezed)
    mem = mem_ref[...]  # (Sm, D) f32

    # --- self-attention block (pre-norm) ---
    x2 = _layernorm(x, r["ln1w"][...], r["ln1b"][...])
    x = x + _mha(x2, x2, nhead,
                 r["sa_wq"], r["sa_bq"], r["sa_wk"], r["sa_bk"],
                 r["sa_wv"], r["sa_bv"], r["sa_wo"], r["sa_bo"])

    # --- cross-attention block ---
    x2 = _layernorm(x, r["ln2w"][...], r["ln2b"][...])
    x = x + _mha(x2, mem, nhead,
                 r["ca_wq"], r["ca_bq"], r["ca_wk"], r["ca_bk"],
                 r["ca_wv"], r["ca_bv"], r["ca_wo"], r["ca_bo"])

    # --- feed-forward block ---
    x2 = _layernorm(x, r["ln3w"][...], r["ln3b"][...])
    h = jnp.maximum(
        jnp.dot(x2.astype(jnp.bfloat16), r["w1"][...],
                preferred_element_type=jnp.float32) + r["b1"][...],
        0.0)
    x = x + jnp.dot(h.astype(jnp.bfloat16), r["w2"][...],
                    preferred_element_type=jnp.float32) + r["b2"][...]

    out_ref[...] = x


# --------------------------------- wrapper --------------------------------------

def _vmem_limit_bytes():
    # Derive the scoped-VMEM cap from the hardware (leave pipeline headroom:
    # ~96 MiB on v5e/v6e (128 MiB physical), ~48 MiB on v7x (64 MiB physical)).
    try:
        cap = int(pltpu.get_tpu_info().vmem_capacity_bytes)
    except Exception:
        cap = 64 * 1024 * 1024
    return min(cap * 3 // 4, 100 * 1024 * 1024)


def decoder_forward(x, memory, params, nhead):
    B, S, D = x.shape
    Sm = memory.shape[1]
    FF = params["w1"].shape[1]
    weight_args = [params[k] for k in _PARAM_KEYS]

    # Grid over batch, marked parallel (megacore sharding on v7x).  Activation
    # and output blocks are per-batch slices with the leading dim squeezed, so
    # the kernel works on 2-D lane-dense (S, D)/(Sm, D) tiles and the pipeline
    # overlaps the next batch element's DMA with the current compute.
    # TODO(synk): for long sequences add a second grid axis over query-row
    # tiles (K/V still needs the full per-batch sequence).
    x_spec = pl.BlockSpec((None, S, D), lambda b: (b, 0, 0))
    m_spec = pl.BlockSpec((None, Sm, D), lambda b: (b, 0, 0))
    o_spec = pl.BlockSpec((None, S, D), lambda b: (b, 0, 0))

    # Weights: whole arrays resident in VMEM for the entire grid (constant
    # across steps -> no per-step DMA, no double-buffering of the parameters).
    w_specs = [pl.BlockSpec(memory_space=pltpu.MemorySpace.VMEM)
               for _ in weight_args]

    # Advisory cost estimate for XLA scheduling around the custom call.
    flops = B * (
        8 * S * D * D + 4 * S * S * D                        # self-attention
        + 4 * S * D * D + 4 * Sm * D * D + 4 * S * Sm * D    # cross-attention
        + 4 * S * D * FF)                                    # feed-forward
    transcendentals = B * nhead * (S * S + S * Sm) + 3 * B * S
    bytes_accessed = (x.size * 4 + memory.size * 4 + B * S * D * 4
                      + sum(int(w.size) * jnp.dtype(w.dtype).itemsize
                            for w in weight_args))

    return pl.pallas_call(
        functools.partial(decoder_kernel, nhead=nhead),
        out_shape=jax.ShapeDtypeStruct((B, S, D), jnp.float32),
        grid_spec=pltpu.PrefetchScalarGridSpec(
            num_scalar_prefetch=0,
            grid=(B,),
            in_specs=[x_spec, m_spec] + w_specs,
            out_specs=o_spec,
        ),
        compiler_params=pltpu.CompilerParams(
            dimension_semantics=("parallel",),
            vmem_limit_bytes=_vmem_limit_bytes(),
        ),
        cost_estimate=pl.CostEstimate(
            flops=flops,
            transcendentals=transcendentals,
            bytes_accessed=bytes_accessed),
    )(x, memory, *weight_args)


# ------------------------------ parameters --------------------------------------

def init_params(key, d_model, dim_feedforward):
    """Random parameters in module layout (linear weights transposed for x @ W).

    Q/K/V projections are stored as separate (D, D) matrices (the split of the
    module's in_proj_weight) so the kernel never slices a fused weight.
    """
    ks = jax.random.split(key, 24)
    s = 1.0 / math.sqrt(d_model)

    def rn(k, shape, scale):
        return (scale * jax.random.normal(k, shape)).astype(jnp.float32)

    return {
        # LayerNorms
        "ln1w": 1.0 + rn(ks[0], (1, d_model), 0.01),
        "ln1b": rn(ks[1], (1, d_model), 0.01),
        "ln2w": 1.0 + rn(ks[2], (1, d_model), 0.01),
        "ln2b": rn(ks[3], (1, d_model), 0.01),
        "ln3w": 1.0 + rn(ks[4], (1, d_model), 0.01),
        "ln3b": rn(ks[5], (1, d_model), 0.01),
        # self-attention
        "sa_wq": rn(ks[6], (d_model, d_model), s),
        "sa_bq": rn(ks[7], (1, d_model), 0.02),
        "sa_wk": rn(ks[8], (d_model, d_model), s),
        "sa_bk": rn(ks[9], (1, d_model), 0.02),
        "sa_wv": rn(ks[10], (d_model, d_model), s),
        "sa_bv": rn(ks[11], (1, d_model), 0.02),
        "sa_wo": rn(ks[12], (d_model, d_model), s),
        "sa_bo": rn(ks[13], (1, d_model), 0.02),
        # cross-attention
        "ca_wq": rn(ks[14], (d_model, d_model), s),
        "ca_bq": rn(ks[15], (1, d_model), 0.02),
        "ca_wk": rn(ks[16], (d_model, d_model), s),
        "ca_bk": rn(ks[17], (1, d_model), 0.02),
        "ca_wv": rn(ks[18], (d_model, d_model), s),
        "ca_bv": rn(ks[19], (1, d_model), 0.02),
        "ca_wo": rn(ks[20], (d_model, d_model), s),
        "ca_bo": rn(ks[21], (1, d_model), 0.02),
        # feed-forward
        "w1": rn(ks[22], (d_model, dim_feedforward), s),
        "b1": jnp.zeros((1, dim_feedforward), jnp.float32),
        "w2": rn(ks[23], (dim_feedforward, d_model), 1.0 / math.sqrt(dim_feedforward)),
        "b2": jnp.zeros((1, d_model), jnp.float32),
    }


def prepare_params(params, nhead):
    """One-time host-side transform:
      * fold the 1/sqrt(head_dim) attention scale into the Q weight AND bias,
      * cast all MXU weight matrices to bf16 (biases / LN params stay f32)."""
    d_model = params["sa_wq"].shape[0]
    scale = 1.0 / math.sqrt(d_model // nhead)
    p = dict(params)
    for name in ("sa_wq", "sa_bq", "ca_wq", "ca_bq"):
        p[name] = p[name] * scale
    for name in _MATMUL_WEIGHTS:
        p[name] = p[name].astype(jnp.bfloat16)
    return p


# ------------------------------ pure-JAX reference -------------------------------

def reference_decoder(x, memory, params, nhead):
    """Independent f32 reference with module semantics (explicit Q scaling,
    exact softmax division), using the raw (unprepared) parameters."""

    def ln(v, w, b, eps=1e-5):
        mu = jnp.mean(v, axis=-1, keepdims=True)
        var = jnp.mean((v - mu) ** 2, axis=-1, keepdims=True)
        return (v - mu) / jnp.sqrt(var + eps) * w + b

    def mha(q_in, kv_in, pfx):
        D = q_in.shape[-1]
        hd = D // nhead
        q = q_in @ params[pfx + "wq"] + params[pfx + "bq"]
        k = kv_in @ params[pfx + "wk"] + params[pfx + "bk"]
        v = kv_in @ params[pfx + "wv"] + params[pfx + "bv"]
        qh = q.reshape(-1, nhead, hd).transpose(1, 0, 2) / math.sqrt(hd)
        kh = k.reshape(-1, nhead, hd).transpose(1, 0, 2)
        vh = v.reshape(-1, nhead, hd).transpose(1, 0, 2)
        s = jnp.einsum("hqd,hkd->hqk", qh, kh)
        p = jax.nn.softmax(s, axis=-1)
        o = jnp.einsum("hqk,hkd->hqd", p, vh).transpose(1, 0, 2).reshape(-1, D)
        return o @ params[pfx + "wo"] + params[pfx + "bo"]

    def one(xb, mb):
        x2 = ln(xb, params["ln1w"], params["ln1b"])
        xb = xb + mha(x2, x2, "sa_")
        x2 = ln(xb, params["ln2w"], params["ln2b"])
        xb = xb + mha(x2, mb, "ca_")
        x2 = ln(xb, params["ln3w"], params["ln3b"])
        h = jnp.maximum(x2 @ params["w1"] + params["b1"], 0.0)
        return xb + h @ params["w2"] + params["b2"]

    return jax.vmap(one)(x, memory)


# ----------------------------------- main ----------------------------------------

if __name__ == "__main__":
    # Small shapes: d_model=128 keeps every block lane-dense, S multiple of 8.
    B, S, Sm, D, NH, FF = 2, 8, 16, 128, 8, 256

    key = jax.random.PRNGKey(0)
    kx, km, kp = jax.random.split(key, 3)
    x = jax.random.normal(kx, (B, S, D), dtype=jnp.float32)
    memory = jax.random.normal(km, (B, Sm, D), dtype=jnp.float32)

    params = init_params(kp, D, FF)
    kernel_params = prepare_params(params, NH)   # one-time weight preparation

    out = jax.block_until_ready(decoder_forward(x, memory, kernel_params, NH))
    ref = jax.block_until_ready(reference_decoder(x, memory, params, NH))

    # Tolerance covers the intentional bf16 MXU operands (f32 accumulation);
    # observed error is well below this.
    np.testing.assert_allclose(np.asarray(out), np.asarray(ref), rtol=5e-2, atol=5e-2)
    print("KERNEL_OK")
</pallas_src>

<mosaic_0001>
module attributes {stable_mosaic.version = 11 : i64} {
  func.func @decoder_kernel(%arg0: i32, %arg1: memref<1x8x128xf32, #tpu.memory_space<vmem>>, %arg2: memref<1x16x128xf32, #tpu.memory_space<vmem>>, %arg3: memref<1x128xf32, #tpu.memory_space<vmem>>, %arg4: memref<1x128xf32, #tpu.memory_space<vmem>>, %arg5: memref<1x128xf32, #tpu.memory_space<vmem>>, %arg6: memref<1x128xf32, #tpu.memory_space<vmem>>, %arg7: memref<1x128xf32, #tpu.memory_space<vmem>>, %arg8: memref<1x128xf32, #tpu.memory_space<vmem>>, %arg9: memref<128x128xbf16, #tpu.memory_space<vmem>>, %arg10: memref<1x128xf32, #tpu.memory_space<vmem>>, %arg11: memref<128x128xbf16, #tpu.memory_space<vmem>>, %arg12: memref<1x128xf32, #tpu.memory_space<vmem>>, %arg13: memref<128x128xbf16, #tpu.memory_space<vmem>>, %arg14: memref<1x128xf32, #tpu.memory_space<vmem>>, %arg15: memref<128x128xbf16, #tpu.memory_space<vmem>>, %arg16: memref<1x128xf32, #tpu.memory_space<vmem>>, %arg17: memref<128x128xbf16, #tpu.memory_space<vmem>>, %arg18: memref<1x128xf32, #tpu.memory_space<vmem>>, %arg19: memref<128x128xbf16, #tpu.memory_space<vmem>>, %arg20: memref<1x128xf32, #tpu.memory_space<vmem>>, %arg21: memref<128x128xbf16, #tpu.memory_space<vmem>>, %arg22: memref<1x128xf32, #tpu.memory_space<vmem>>, %arg23: memref<128x128xbf16, #tpu.memory_space<vmem>>, %arg24: memref<1x128xf32, #tpu.memory_space<vmem>>, %arg25: memref<128x256xbf16, #tpu.memory_space<vmem>>, %arg26: memref<1x256xf32, #tpu.memory_space<vmem>>, %arg27: memref<256x128xbf16, #tpu.memory_space<vmem>>, %arg28: memref<1x128xf32, #tpu.memory_space<vmem>>, %arg29: memref<1x8x128xf32, #tpu.memory_space<vmem>>) attributes {dimension_semantics = [#tpu.dimension_semantics<parallel>], iteration_bounds = array<i64: 2>, scalar_prefetch = 0 : i64, scratch_operands = 0 : i64, tpu.core_type = #tpu.core_type<tc>, window_params = [{transform_indices = @transform_0, window_bounds = array<i64: 1, 8, 128>}, {transform_indices = @transform_1, window_bounds = array<i64: 1, 16, 128>}, {pipeline_mode = #tpu.pipeline_mode<synchronous>, transform_indices = @transform_2, window_bounds = array<i64: 1, 128>}, {pipeline_mode = #tpu.pipeline_mode<synchronous>, transform_indices = @transform_3, window_bounds = array<i64: 1, 128>}, {pipeline_mode = #tpu.pipeline_mode<synchronous>, transform_indices = @transform_4, window_bounds = array<i64: 1, 128>}, {pipeline_mode = #tpu.pipeline_mode<synchronous>, transform_indices = @transform_5, window_bounds = array<i64: 1, 128>}, {pipeline_mode = #tpu.pipeline_mode<synchronous>, transform_indices = @transform_6, window_bounds = array<i64: 1, 128>}, {pipeline_mode = #tpu.pipeline_mode<synchronous>, transform_indices = @transform_7, window_bounds = array<i64: 1, 128>}, {pipeline_mode = #tpu.pipeline_mode<synchronous>, transform_indices = @transform_8, window_bounds = array<i64: 128, 128>}, {pipeline_mode = #tpu.pipeline_mode<synchronous>, transform_indices = @transform_9, window_bounds = array<i64: 1, 128>}, {pipeline_mode = #tpu.pipeline_mode<synchronous>, transform_indices = @transform_10, window_bounds = array<i64: 128, 128>}, {pipeline_mode = #tpu.pipeline_mode<synchronous>, transform_indices = @transform_11, window_bounds = array<i64: 1, 128>}, {pipeline_mode = #tpu.pipeline_mode<synchronous>, transform_indices = @transform_12, window_bounds = array<i64: 128, 128>}, {pipeline_mode = #tpu.pipeline_mode<synchronous>, transform_indices = @transform_13, window_bounds = array<i64: 1, 128>}, {pipeline_mode = #tpu.pipeline_mode<synchronous>, transform_indices = @transform_14, window_bounds = array<i64: 128, 128>}, {pipeline_mode = #tpu.pipeline_mode<synchronous>, transform_indices = @transform_15, window_bounds = array<i64: 1, 128>}, {pipeline_mode = #tpu.pipeline_mode<synchronous>, transform_indices = @transform_16, window_bounds = array<i64: 128, 128>}, {pipeline_mode = #tpu.pipeline_mode<synchronous>, transform_indices = @transform_17, window_bounds = array<i64: 1, 128>}, {pipeline_mode = #tpu.pipeline_mode<synchronous>, transform_indices = @transform_18, window_bounds = array<i64: 128, 128>}, {pipeline_mode = #tpu.pipeline_mode<synchronous>, transform_indices = @transform_19, window_bounds = array<i64: 1, 128>}, {pipeline_mode = #tpu.pipeline_mode<synchronous>, transform_indices = @transform_20, window_bounds = array<i64: 128, 128>}, {pipeline_mode = #tpu.pipeline_mode<synchronous>, transform_indices = @transform_21, window_bounds = array<i64: 1, 128>}, {pipeline_mode = #tpu.pipeline_mode<synchronous>, transform_indices = @transform_22, window_bounds = array<i64: 128, 128>}, {pipeline_mode = #tpu.pipeline_mode<synchronous>, transform_indices = @transform_23, window_bounds = array<i64: 1, 128>}, {pipeline_mode = #tpu.pipeline_mode<synchronous>, transform_indices = @transform_24, window_bounds = array<i64: 128, 256>}, {pipeline_mode = #tpu.pipeline_mode<synchronous>, transform_indices = @transform_25, window_bounds = array<i64: 1, 256>}, {pipeline_mode = #tpu.pipeline_mode<synchronous>, transform_indices = @transform_26, window_bounds = array<i64: 256, 128>}, {pipeline_mode = #tpu.pipeline_mode<synchronous>, transform_indices = @transform_27, window_bounds = array<i64: 1, 128>}, {transform_indices = @transform_28, window_bounds = array<i64: 1, 8, 128>}]} {
    %c0 = arith.constant 0 : index
    %c0_0 = arith.constant 0 : index
    %c0_1 = arith.constant 0 : index
    %0 = vector.load %arg1[%c0, %c0_0, %c0_1] : memref<1x8x128xf32, #tpu.memory_space<vmem>>, vector<1x8x128xf32>
    %1 = vector.shape_cast %0 : vector<1x8x128xf32> to vector<8x128xf32>
    %c0_2 = arith.constant 0 : index
    %c0_3 = arith.constant 0 : index
    %c0_4 = arith.constant 0 : index
    %2 = vector.load %arg2[%c0_2, %c0_3, %c0_4] : memref<1x16x128xf32, #tpu.memory_space<vmem>>, vector<1x16x128xf32>
    %3 = vector.shape_cast %2 : vector<1x16x128xf32> to vector<16x128xf32>
    %c0_5 = arith.constant 0 : index
    %c0_6 = arith.constant 0 : index
    %4 = vector.load %arg3[%c0_5, %c0_6] : memref<1x128xf32, #tpu.memory_space<vmem>>, vector<1x128xf32>
    %c0_7 = arith.constant 0 : index
    %c0_8 = arith.constant 0 : index
    %5 = vector.load %arg4[%c0_7, %c0_8] : memref<1x128xf32, #tpu.memory_space<vmem>>, vector<1x128xf32>
    %cst = arith.constant dense<0.000000e+00> : vector<8xf32>
    %6 = vector.multi_reduction <add>, %1, %cst [1] : vector<8x128xf32> to vector<8xf32>
    %7 = vector.shape_cast %6 : vector<8xf32> to vector<8x1xf32>
    %cst_9 = arith.constant 1.280000e+02 : f32
    %8 = vector.broadcast %cst_9 : f32 to vector<8x1xf32>
    %9 = arith.divf %7, %8 : vector<8x1xf32>
    %10 = vector.broadcast %9 : vector<8x1xf32> to vector<8x128xf32>
    %11 = arith.subf %1, %10 : vector<8x128xf32>
    %12 = arith.mulf %11, %11 : vector<8x128xf32>
    %cst_10 = arith.constant dense<0.000000e+00> : vector<8xf32>
    %13 = vector.multi_reduction <add>, %12, %cst_10 [1] : vector<8x128xf32> to vector<8xf32>
    %14 = vector.shape_cast %13 : vector<8xf32> to vector<8x1xf32>
    %cst_11 = arith.constant 1.280000e+02 : f32
    %15 = vector.broadcast %cst_11 : f32 to vector<8x1xf32>
    %16 = arith.divf %14, %15 : vector<8x1xf32>
    %17 = vector.broadcast %9 : vector<8x1xf32> to vector<8x128xf32>
    %18 = arith.subf %1, %17 : vector<8x128xf32>
    %cst_12 = arith.constant 9.99999974E-6 : f32
    %19 = vector.broadcast %cst_12 : f32 to vector<8x1xf32>
    %20 = arith.addf %16, %19 : vector<8x1xf32>
    %21 = math.rsqrt %20 : vector<8x1xf32>
    %22 = vector.broadcast %21 : vector<8x1xf32> to vector<8x128xf32>
    %23 = arith.mulf %18, %22 : vector<8x128xf32>
    %24 = vector.broadcast %4 : vector<1x128xf32> to vector<8x128xf32>
    %25 = arith.mulf %23, %24 : vector<8x128xf32>
    %26 = vector.broadcast %5 : vector<1x128xf32> to vector<8x128xf32>
    %27 = arith.addf %25, %26 : vector<8x128xf32>
    %28 = arith.truncf %27 : vector<8x128xf32> to vector<8x128xbf16>
    %29 = arith.truncf %27 : vector<8x128xf32> to vector<8x128xbf16>
    %c0_13 = arith.constant 0 : index
    %c0_14 = arith.constant 0 : index
    %30 = vector.load %arg9[%c0_13, %c0_14] : memref<128x128xbf16, #tpu.memory_space<vmem>>, vector<128x128xbf16>
    %cst_15 = arith.constant dense<0.000000e+00> : vector<8x128xf32>
    %31 = tpu.matmul %28, %30, %cst_15 {dimension_numbers = #tpu.dot_dimension_numbers<[1], [0], [0], [1], [0, 0, 1, 1], [], []>} : vector<8x128xbf16>, vector<128x128xbf16>, vector<8x128xf32> -> vector<8x128xf32>
    %c0_16 = arith.constant 0 : index
    %c0_17 = arith.constant 0 : index
    %32 = vector.load %arg10[%c0_16, %c0_17] : memref<1x128xf32, #tpu.memory_space<vmem>>, vector<1x128xf32>
    %33 = vector.broadcast %32 : vector<1x128xf32> to vector<8x128xf32>
    %34 = arith.addf %31, %33 : vector<8x128xf32>
    %c0_18 = arith.constant 0 : index
    %c0_19 = arith.constant 0 : index
    %35 = vector.load %arg11[%c0_18, %c0_19] : memref<128x128xbf16, #tpu.memory_space<vmem>>, vector<128x128xbf16>
    %cst_20 = arith.constant dense<0.000000e+00> : vector<8x128xf32>
    %36 = tpu.matmul %29, %35, %cst_20 {dimension_numbers = #tpu.dot_dimension_numbers<[1], [0], [0], [1], [0, 0, 1, 1], [], []>} : vector<8x128xbf16>, vector<128x128xbf16>, vector<8x128xf32> -> vector<8x128xf32>
    %c0_21 = arith.constant 0 : index
    %c0_22 = arith.constant 0 : index
    %37 = vector.load %arg12[%c0_21, %c0_22] : memref<1x128xf32, #tpu.memory_space<vmem>>, vector<1x128xf32>
    %38 = vector.broadcast %37 : vector<1x128xf32> to vector<8x128xf32>
    %39 = arith.addf %36, %38 : vector<8x128xf32>
    %c0_23 = arith.constant 0 : index
    %c0_24 = arith.constant 0 : index
    %40 = vector.load %arg13[%c0_23, %c0_24] : memref<128x128xbf16, #tpu.memory_space<vmem>>, vector<128x128xbf16>
    %cst_25 = arith.constant dense<0.000000e+00> : vector<8x128xf32>
    %41 = tpu.matmul %29, %40, %cst_25 {dimension_numbers = #tpu.dot_dimension_numbers<[1], [0], [0], [1], [0, 0, 1, 1], [], []>} : vector<8x128xbf16>, vector<128x128xbf16>, vector<8x128xf32> -> vector<8x128xf32>
    %c0_26 = arith.constant 0 : index
    %c0_27 = arith.constant 0 : index
    %42 = vector.load %arg14[%c0_26, %c0_27] : memref<1x128xf32, #tpu.memory_space<vmem>>, vector<1x128xf32>
    %43 = vector.broadcast %42 : vector<1x128xf32> to vector<8x128xf32>
    %44 = arith.addf %41, %43 : vector<8x128xf32>
    %45 = vector.shape_cast %34 : vector<8x128xf32> to vector<8x8x16xf32>
    %46 = tpu.transpose %45, [1, 0, 2] : vector<8x8x16xf32> -> vector<8x8x16xf32>
    %47 = arith.truncf %46 : vector<8x8x16xf32> to vector<8x8x16xbf16>
    %48 = vector.shape_cast %39 : vector<8x128xf32> to vector<8x8x16xf32>
    %49 = tpu.transpose %48, [1, 0, 2] : vector<8x8x16xf32> -> vector<8x8x16xf32>
    %50 = arith.truncf %49 : vector<8x8x16xf32> to vector<8x8x16xbf16>
    %51 = vector.shape_cast %44 : vector<8x128xf32> to vector<8x8x16xf32>
    %52 = tpu.transpose %51, [1, 0, 2] : vector<8x8x16xf32> -> vector<8x8x16xf32>
    %53 = arith.truncf %52 : vector<8x8x16xf32> to vector<8x8x16xbf16>
    "tpu.trace_start"() <{level = 10 : i32, message = "hqd,hkd->hqk"}> : () -> ()
    %cst_28 = arith.constant dense<0.000000e+00> : vector<8x8x8xf32>
    %54 = tpu.matmul %47, %50, %cst_28 {dimension_numbers = #tpu.dot_dimension_numbers<[2], [2], [1], [1], [0, 0, 0, 1, 1, 1], [0], [0]>} : vector<8x8x16xbf16>, vector<8x8x16xbf16>, vector<8x8x8xf32> -> vector<8x8x8xf32>
    "tpu.trace_stop"() : () -> ()
    %cst_29 = arith.constant dense<0xFF800000> : vector<8x8xf32>
    %55 = vector.multi_reduction <maximumf>, %54, %cst_29 [2] : vector<8x8x8xf32> to vector<8x8xf32>
    %56 = vector.shape_cast %55 : vector<8x8xf32> to vector<8x8x1xf32>
    %57 = vector.broadcast %56 : vector<8x8x1xf32> to vector<8x8x8xf32>
    %58 = arith.subf %54, %57 : vector<8x8x8xf32>
    %59 = math.exp %58 : vector<8x8x8xf32>
    %cst_30 = arith.constant dense<0.000000e+00> : vector<8x8xf32>
    %60 = vector.multi_reduction <add>, %59, %cst_30 [2] : vector<8x8x8xf32> to vector<8x8xf32>
    %61 = vector.shape_cast %60 : vector<8x8xf32> to vector<8x8x1xf32>
    %62 = tpu.reciprocal %61 {approx = true} : vector<8x8x1xf32> -> vector<8x8x1xf32>
    %63 = arith.mulf %61, %62 : vector<8x8x1xf32>
    %cst_31 = arith.constant 2.000000e+00 : f32
    %64 = vector.broadcast %cst_31 : f32 to vector<8x8x1xf32>
    %65 = arith.subf %64, %63 : vector<8x8x1xf32>
    %66 = arith.mulf %62, %65 : vector<8x8x1xf32>
    %67 = vector.broadcast %66 : vector<8x8x1xf32> to vector<8x8x8xf32>
    %68 = arith.mulf %59, %67 : vector<8x8x8xf32>
    %69 = arith.truncf %68 : vector<8x8x8xf32> to vector<8x8x8xbf16>
    "tpu.trace_start"() <{level = 10 : i32, message = "hqk,hkd->hqd"}> : () -> ()
    %cst_32 = arith.constant dense<0.000000e+00> : vector<8x8x16xf32>
    %70 = tpu.matmul %69, %53, %cst_32 {dimension_numbers = #tpu.dot_dimension_numbers<[2], [1], [1], [2], [0, 0, 0, 1, 1, 2], [0], [0]>} : vector<8x8x8xbf16>, vector<8x8x16xbf16>, vector<8x8x16xf32> -> vector<8x8x16xf32>
    "tpu.trace_stop"() : () -> ()
    %71 = tpu.transpose %70, [1, 0, 2] : vector<8x8x16xf32> -> vector<8x8x16xf32>
    %72 = vector.shape_cast %71 : vector<8x8x16xf32> to vector<8x128xf32>
    %73 = arith.truncf %72 : vector<8x128xf32> to vector<8x128xbf16>
    %c0_33 = arith.constant 0 : index
    %c0_34 = arith.constant 0 : index
    %74 = vector.load %arg15[%c0_33, %c0_34] : memref<128x128xbf16, #tpu.memory_space<vmem>>, vector<128x128xbf16>
    %cst_35 = arith.constant dense<0.000000e+00> : vector<8x128xf32>
    %75 = tpu.matmul %73, %74, %cst_35 {dimension_numbers = #tpu.dot_dimension_numbers<[1], [0], [0], [1], [0, 0, 1, 1], [], []>} : vector<8x128xbf16>, vector<128x128xbf16>, vector<8x128xf32> -> vector<8x128xf32>
    %c0_36 = arith.constant 0 : index
    %c0_37 = arith.constant 0 : index
    %76 = vector.load %arg16[%c0_36, %c0_37] : memref<1x128xf32, #tpu.memory_space<vmem>>, vector<1x128xf32>
    %77 = vector.broadcast %76 : vector<1x128xf32> to vector<8x128xf32>
    %78 = arith.addf %75, %77 : vector<8x128xf32>
    %79 = arith.addf %1, %78 : vector<8x128xf32>
    %c0_38 = arith.constant 0 : index
    %c0_39 = arith.constant 0 : index
    %80 = vector.load %arg5[%c0_38, %c0_39] : memref<1x128xf32, #tpu.memory_space<vmem>>, vector<1x128xf32>
    %c0_40 = arith.constant 0 : index
    %c0_41 = arith.constant 0 : index
    %81 = vector.load %arg6[%c0_40, %c0_41] : memref<1x128xf32, #tpu.memory_space<vmem>>, vector<1x128xf32>
    %cst_42 = arith.constant dense<0.000000e+00> : vector<8xf32>
    %82 = vector.multi_reduction <add>, %79, %cst_42 [1] : vector<8x128xf32> to vector<8xf32>
    %83 = vector.shape_cast %82 : vector<8xf32> to vector<8x1xf32>
    %cst_43 = arith.constant 1.280000e+02 : f32
    %84 = vector.broadcast %cst_43 : f32 to vector<8x1xf32>
    %85 = arith.divf %83, %84 : vector<8x1xf32>
    %86 = vector.broadcast %85 : vector<8x1xf32> to vector<8x128xf32>
    %87 = arith.subf %79, %86 : vector<8x128xf32>
    %88 = arith.mulf %87, %87 : vector<8x128xf32>
    %cst_44 = arith.constant dense<0.000000e+00> : vector<8xf32>
    %89 = vector.multi_reduction <add>, %88, %cst_44 [1] : vector<8x128xf32> to vector<8xf32>
    %90 = vector.shape_cast %89 : vector<8xf32> to vector<8x1xf32>
    %cst_45 = arith.constant 1.280000e+02 : f32
    %91 = vector.broadcast %cst_45 : f32 to vector<8x1xf32>
    %92 = arith.divf %90, %91 : vector<8x1xf32>
    %93 = vector.broadcast %85 : vector<8x1xf32> to vector<8x128xf32>
    %94 = arith.subf %79, %93 : vector<8x128xf32>
    %cst_46 = arith.constant 9.99999974E-6 : f32
    %95 = vector.broadcast %cst_46 : f32 to vector<8x1xf32>
    %96 = arith.addf %92, %95 : vector<8x1xf32>
    %97 = math.rsqrt %96 : vector<8x1xf32>
    %98 = vector.broadcast %97 : vector<8x1xf32> to vector<8x128xf32>
    %99 = arith.mulf %94, %98 : vector<8x128xf32>
    %100 = vector.broadcast %80 : vector<1x128xf32> to vector<8x128xf32>
    %101 = arith.mulf %99, %100 : vector<8x128xf32>
    %102 = vector.broadcast %81 : vector<1x128xf32> to vector<8x128xf32>
    %103 = arith.addf %101, %102 : vector<8x128xf32>
    %104 = arith.truncf %103 : vector<8x128xf32> to vector<8x128xbf16>
    %105 = arith.truncf %3 : vector<16x128xf32> to vector<16x128xbf16>
    %c0_47 = arith.constant 0 : index
    %c0_48 = arith.constant 0 : index
    %106 = vector.load %arg17[%c0_47, %c0_48] : memref<128x128xbf16, #tpu.memory_space<vmem>>, vector<128x128xbf16>
    %cst_49 = arith.constant dense<0.000000e+00> : vector<8x128xf32>
    %107 = tpu.matmul %104, %106, %cst_49 {dimension_numbers = #tpu.dot_dimension_numbers<[1], [0], [0], [1], [0, 0, 1, 1], [], []>} : vector<8x128xbf16>, vector<128x128xbf16>, vector<8x128xf32> -> vector<8x128xf32>
    %c0_50 = arith.constant 0 : index
    %c0_51 = arith.constant 0 : index
    %108 = vector.load %arg18[%c0_50, %c0_51] : memref<1x128xf32, #tpu.memory_space<vmem>>, vector<1x128xf32>
    %109 = vector.broadcast %108 : vector<1x128xf32> to vector<8x128xf32>
    %110 = arith.addf %107, %109 : vector<8x128xf32>
    %c0_52 = arith.constant 0 : index
    %c0_53 = arith.constant 0 : index
    %111 = vector.load %arg19[%c0_52, %c0_53] : memref<128x128xbf16, #tpu.memory_space<vmem>>, vector<128x128xbf16>
    %cst_54 = arith.constant dense<0.000000e+00> : vector<16x128xf32>
    %112 = tpu.matmul %105, %111, %cst_54 {dimension_numbers = #tpu.dot_dimension_numbers<[1], [0], [0], [1], [0, 0, 1, 1], [], []>} : vector<16x128xbf16>, vector<128x128xbf16>, vector<16x128xf32> -> vector<16x128xf32>
    %c0_55 = arith.constant 0 : index
    %c0_56 = arith.constant 0 : index
    %113 = vector.load %arg20[%c0_55, %c0_56] : memref<1x128xf32, #tpu.memory_space<vmem>>, vector<1x128xf32>
    %114 = vector.broadcast %113 : vector<1x128xf32> to vector<16x128xf32>
    %115 = arith.addf %112, %114 : vector<16x128xf32>
    %c0_57 = arith.constant 0 : index
    %c0_58 = arith.constant 0 : index
    %116 = vector.load %arg21[%c0_57, %c0_58] : memref<128x128xbf16, #tpu.memory_space<vmem>>, vector<128x128xbf16>
    %cst_59 = arith.constant dense<0.000000e+00> : vector<16x128xf32>
    %117 = tpu.matmul %105, %116, %cst_59 {dimension_numbers = #tpu.dot_dimension_numbers<[1], [0], [0], [1], [0, 0, 1, 1], [], []>} : vector<16x128xbf16>, vector<128x128xbf16>, vector<16x128xf32> -> vector<16x128xf32>
    %c0_60 = arith.constant 0 : index
    %c0_61 = arith.constant 0 : index
    %118 = vector.load %arg22[%c0_60, %c0_61] : memref<1x128xf32, #tpu.memory_space<vmem>>, vector<1x128xf32>
    %119 = vector.broadcast %118 : vector<1x128xf32> to vector<16x128xf32>
    %120 = arith.addf %117, %119 : vector<16x128xf32>
    %121 = vector.shape_cast %110 : vector<8x128xf32> to vector<8x8x16xf32>
    %122 = tpu.transpose %121, [1, 0, 2] : vector<8x8x16xf32> -> vector<8x8x16xf32>
    %123 = arith.truncf %122 : vector<8x8x16xf32> to vector<8x8x16xbf16>
    %124 = vector.shape_cast %115 : vector<16x128xf32> to vector<16x8x16xf32>
    %125 = tpu.transpose %124, [1, 0, 2] : vector<16x8x16xf32> -> vector<8x16x16xf32>
    %126 = arith.truncf %125 : vector<8x16x16xf32> to vector<8x16x16xbf16>
    %127 = vector.shape_cast %120 : vector<16x128xf32> to vector<16x8x16xf32>
    %128 = tpu.transpose %127, [1, 0, 2] : vector<16x8x16xf32> -> vector<8x16x16xf32>
    %129 = arith.truncf %128 : vector<8x16x16xf32> to vector<8x16x16xbf16>
    "tpu.trace_start"() <{level = 10 : i32, message = "hqd,hkd->hqk"}> : () -> ()
    %cst_62 = arith.constant dense<0.000000e+00> : vector<8x8x16xf32>
    %130 = tpu.matmul %123, %126, %cst_62 {dimension_numbers = #tpu.dot_dimension_numbers<[2], [2], [1], [1], [0, 0, 0, 1, 1, 1], [0], [0]>} : vector<8x8x16xbf16>, vector<8x16x16xbf16>, vector<8x8x16xf32> -> vector<8x8x16xf32>
    "tpu.trace_stop"() : () -> ()
    %cst_63 = arith.constant dense<0xFF800000> : vector<8x8xf32>
    %131 = vector.multi_reduction <maximumf>, %130, %cst_63 [2] : vector<8x8x16xf32> to vector<8x8xf32>
    %132 = vector.shape_cast %131 : vector<8x8xf32> to vector<8x8x1xf32>
    %133 = vector.broadcast %132 : vector<8x8x1xf32> to vector<8x8x16xf32>
    %134 = arith.subf %130, %133 : vector<8x8x16xf32>
    %135 = math.exp %134 : vector<8x8x16xf32>
    %cst_64 = arith.constant dense<0.000000e+00> : vector<8x8xf32>
    %136 = vector.multi_reduction <add>, %135, %cst_64 [2] : vector<8x8x16xf32> to vector<8x8xf32>
    %137 = vector.shape_cast %136 : vector<8x8xf32> to vector<8x8x1xf32>
    %138 = tpu.reciprocal %137 {approx = true} : vector<8x8x1xf32> -> vector<8x8x1xf32>
    %139 = arith.mulf %137, %138 : vector<8x8x1xf32>
    %cst_65 = arith.constant 2.000000e+00 : f32
    %140 = vector.broadcast %cst_65 : f32 to vector<8x8x1xf32>
    %141 = arith.subf %140, %139 : vector<8x8x1xf32>
    %142 = arith.mulf %138, %141 : vector<8x8x1xf32>
    %143 = vector.broadcast %142 : vector<8x8x1xf32> to vector<8x8x16xf32>
    %144 = arith.mulf %135, %143 : vector<8x8x16xf32>
    %145 = arith.truncf %144 : vector<8x8x16xf32> to vector<8x8x16xbf16>
    "tpu.trace_start"() <{level = 10 : i32, message = "hqk,hkd->hqd"}> : () -> ()
    %cst_66 = arith.constant dense<0.000000e+00> : vector<8x8x16xf32>
    %146 = tpu.matmul %145, %129, %cst_66 {dimension_numbers = #tpu.dot_dimension_numbers<[2], [1], [1], [2], [0, 0, 0, 1, 1, 2], [0], [0]>} : vector<8x8x16xbf16>, vector<8x16x16xbf16>, vector<8x8x16xf32> -> vector<8x8x16xf32>
    "tpu.trace_stop"() : () -> ()
    %147 = tpu.transpose %146, [1, 0, 2] : vector<8x8x16xf32> -> vector<8x8x16xf32>
    %148 = vector.shape_cast %147 : vector<8x8x16xf32> to vector<8x128xf32>
    %149 = arith.truncf %148 : vector<8x128xf32> to vector<8x128xbf16>
    %c0_67 = arith.constant 0 : index
    %c0_68 = arith.constant 0 : index
    %150 = vector.load %arg23[%c0_67, %c0_68] : memref<128x128xbf16, #tpu.memory_space<vmem>>, vector<128x128xbf16>
    %cst_69 = arith.constant dense<0.000000e+00> : vector<8x128xf32>
    %151 = tpu.matmul %149, %150, %cst_69 {dimension_numbers = #tpu.dot_dimension_numbers<[1], [0], [0], [1], [0, 0, 1, 1], [], []>} : vector<8x128xbf16>, vector<128x128xbf16>, vector<8x128xf32> -> vector<8x128xf32>
    %c0_70 = arith.constant 0 : index
    %c0_71 = arith.constant 0 : index
    %152 = vector.load %arg24[%c0_70, %c0_71] : memref<1x128xf32, #tpu.memory_space<vmem>>, vector<1x128xf32>
    %153 = vector.broadcast %152 : vector<1x128xf32> to vector<8x128xf32>
    %154 = arith.addf %151, %153 : vector<8x128xf32>
    %155 = arith.addf %79, %154 : vector<8x128xf32>
    %c0_72 = arith.constant 0 : index
    %c0_73 = arith.constant 0 : index
    %156 = vector.load %arg7[%c0_72, %c0_73] : memref<1x128xf32, #tpu.memory_space<vmem>>, vector<1x128xf32>
    %c0_74 = arith.constant 0 : index
    %c0_75 = arith.constant 0 : index
    %157 = vector.load %arg8[%c0_74, %c0_75] : memref<1x128xf32, #tpu.memory_space<vmem>>, vector<1x128xf32>
    %cst_76 = arith.constant dense<0.000000e+00> : vector<8xf32>
    %158 = vector.multi_reduction <add>, %155, %cst_76 [1] : vector<8x128xf32> to vector<8xf32>
    %159 = vector.shape_cast %158 : vector<8xf32> to vector<8x1xf32>
    %cst_77 = arith.constant 1.280000e+02 : f32
    %160 = vector.broadcast %cst_77 : f32 to vector<8x1xf32>
    %161 = arith.divf %159, %160 : vector<8x1xf32>
    %162 = vector.broadcast %161 : vector<8x1xf32> to vector<8x128xf32>
    %163 = arith.subf %155, %162 : vector<8x128xf32>
    %164 = arith.mulf %163, %163 : vector<8x128xf32>
    %cst_78 = arith.constant dense<0.000000e+00> : vector<8xf32>
    %165 = vector.multi_reduction <add>, %164, %cst_78 [1] : vector<8x128xf32> to vector<8xf32>
    %166 = vector.shape_cast %165 : vector<8xf32> to vector<8x1xf32>
    %cst_79 = arith.constant 1.280000e+02 : f32
    %167 = vector.broadcast %cst_79 : f32 to vector<8x1xf32>
    %168 = arith.divf %166, %167 : vector<8x1xf32>
    %169 = vector.broadcast %161 : vector<8x1xf32> to vector<8x128xf32>
    %170 = arith.subf %155, %169 : vector<8x128xf32>
    %cst_80 = arith.constant 9.99999974E-6 : f32
    %171 = vector.broadcast %cst_80 : f32 to vector<8x1xf32>
    %172 = arith.addf %168, %171 : vector<8x1xf32>
    %173 = math.rsqrt %172 : vector<8x1xf32>
    %174 = vector.broadcast %173 : vector<8x1xf32> to vector<8x128xf32>
    %175 = arith.mulf %170, %174 : vector<8x128xf32>
    %176 = vector.broadcast %156 : vector<1x128xf32> to vector<8x128xf32>
    %177 = arith.mulf %175, %176 : vector<8x128xf32>
    %178 = vector.broadcast %157 : vector<1x128xf32> to vector<8x128xf32>
    %179 = arith.addf %177, %178 : vector<8x128xf32>
    %180 = arith.truncf %179 : vector<8x128xf32> to vector<8x128xbf16>
    %c0_81 = arith.constant 0 : index
    %c0_82 = arith.constant 0 : index
    %181 = vector.load %arg25[%c0_81, %c0_82] : memref<128x256xbf16, #tpu.memory_space<vmem>>, vector<128x256xbf16>
    %cst_83 = arith.constant dense<0.000000e+00> : vector<8x256xf32>
    %182 = tpu.matmul %180, %181, %cst_83 {dimension_numbers = #tpu.dot_dimension_numbers<[1], [0], [0], [1], [0, 0, 1, 1], [], []>} : vector<8x128xbf16>, vector<128x256xbf16>, vector<8x256xf32> -> vector<8x256xf32>
    %c0_84 = arith.constant 0 : index
    %c0_85 = arith.constant 0 : index
    %183 = vector.load %arg26[%c0_84, %c0_85] : memref<1x256xf32, #tpu.memory_space<vmem>>, vector<1x256xf32>
    %184 = vector.broadcast %183 : vector<1x256xf32> to vector<8x256xf32>
    %185 = arith.addf %182, %184 : vector<8x256xf32>
    %cst_86 = arith.constant 0.000000e+00 : f32
    %186 = vector.broadcast %cst_86 : f32 to vector<8x256xf32>
    %187 = arith.maximumf %185, %186 : vector<8x256xf32>
    %188 = arith.truncf %187 : vector<8x256xf32> to vector<8x256xbf16>
    %c0_87 = arith.constant 0 : index
    %c0_88 = arith.constant 0 : index
    %189 = vector.load %arg27[%c0_87, %c0_88] : memref<256x128xbf16, #tpu.memory_space<vmem>>, vector<256x128xbf16>
    %cst_89 = arith.constant dense<0.000000e+00> : vector<8x128xf32>
    %190 = tpu.matmul %188, %189, %cst_89 {dimension_numbers = #tpu.dot_dimension_numbers<[1], [0], [0], [1], [0, 0, 1, 1], [], []>} : vector<8x256xbf16>, vector<256x128xbf16>, vector<8x128xf32> -> vector<8x128xf32>
    %191 = arith.addf %155, %190 : vector<8x128xf32>
    %c0_90 = arith.constant 0 : index
    %c0_91 = arith.constant 0 : index
    %192 = vector.load %arg28[%c0_90, %c0_91] : memref<1x128xf32, #tpu.memory_space<vmem>>, vector<1x128xf32>
    %193 = vector.broadcast %192 : vector<1x128xf32> to vector<8x128xf32>
    %194 = arith.addf %191, %193 : vector<8x128xf32>
    %c0_92 = arith.constant 0 : index
    %c0_93 = arith.constant 0 : index
    %c0_94 = arith.constant 0 : index
    %195 = vector.load %arg29[%c0_92, %c0_93, %c0_94] : memref<1x8x128xf32, #tpu.memory_space<vmem>>, vector<1x8x128xf32>
    %196 = vector.shape_cast %195 : vector<1x8x128xf32> to vector<8x128xf32>
    %197 = vector.shape_cast %194 : vector<8x128xf32> to vector<1x8x128xf32>
    tpu.vector_store %arg29[%c0_92, %c0_93, %c0_94], %197 {strides = array<i32>} : memref<1x8x128xf32, #tpu.memory_space<vmem>>, vector<1x8x128xf32>,
    return
  }
  func.func @transform_0(%arg0: i32) -> (i32, i32, i32) {
    %c0_i32 = arith.constant 0 : i32
    %c0_i32_0 = arith.constant 0 : i32
    %c0_i32_1 = arith.constant 0 : i32
    return %arg0, %c0_i32, %c0_i32_0 : i32, i32, i32
  }
  func.func @transform_1(%arg0: i32) -> (i32, i32, i32) {
    %c0_i32 = arith.constant 0 : i32
    %c0_i32_0 = arith.constant 0 : i32
    %c0_i32_1 = arith.constant 0 : i32
    return %arg0, %c0_i32, %c0_i32_0 : i32, i32, i32
  }
  func.func @transform_2(%arg0: i32) -> (i32, i32) {
    %c0_i32 = arith.constant 0 : i32
    %c0_i32_0 = arith.constant 0 : i32
    %c0_i32_1 = arith.constant 0 : i32
    return %c0_i32, %c0_i32_0 : i32, i32
  }
  func.func @transform_3(%arg0: i32) -> (i32, i32) {
    %c0_i32 = arith.constant 0 : i32
    %c0_i32_0 = arith.constant 0 : i32
    %c0_i32_1 = arith.constant 0 : i32
    return %c0_i32, %c0_i32_0 : i32, i32
  }
  func.func @transform_4(%arg0: i32) -> (i32, i32) {
    %c0_i32 = arith.constant 0 : i32
    %c0_i32_0 = arith.constant 0 : i32
    %c0_i32_1 = arith.constant 0 : i32
    return %c0_i32, %c0_i32_0 : i32, i32
  }
  func.func @transform_5(%arg0: i32) -> (i32, i32) {
    %c0_i32 = arith.constant 0 : i32
    %c0_i32_0 = arith.constant 0 : i32
    %c0_i32_1 = arith.constant 0 : i32
    return %c0_i32, %c0_i32_0 : i32, i32
  }
  func.func @transform_6(%arg0: i32) -> (i32, i32) {
    %c0_i32 = arith.constant 0 : i32
    %c0_i32_0 = arith.constant 0 : i32
    %c0_i32_1 = arith.constant 0 : i32
    return %c0_i32, %c0_i32_0 : i32, i32
  }
  func.func @transform_7(%arg0: i32) -> (i32, i32) {
    %c0_i32 = arith.constant 0 : i32
    %c0_i32_0 = arith.constant 0 : i32
    %c0_i32_1 = arith.constant 0 : i32
    return %c0_i32, %c0_i32_0 : i32, i32
  }
  func.func @transform_8(%arg0: i32) -> (i32, i32) {
    %c0_i32 = arith.constant 0 : i32
    %c0_i32_0 = arith.constant 0 : i32
    %c0_i32_1 = arith.constant 0 : i32
    return %c0_i32, %c0_i32_0 : i32, i32
  }
  func.func @transform_9(%arg0: i32) -> (i32, i32) {
    %c0_i32 = arith.constant 0 : i32
    %c0_i32_0 = arith.constant 0 : i32
    %c0_i32_1 = arith.constant 0 : i32
    return %c0_i32, %c0_i32_0 : i32, i32
  }
  func.func @transform_10(%arg0: i32) -> (i32, i32) {
    %c0_i32 = arith.constant 0 : i32
    %c0_i32_0 = arith.constant 0 : i32
    %c0_i32_1 = arith.constant 0 : i32
    return %c0_i32, %c0_i32_0 : i32, i32
  }
  func.func @transform_11(%arg0: i32) -> (i32, i32) {
    %c0_i32 = arith.constant 0 : i32
    %c0_i32_0 = arith.constant 0 : i32
    %c0_i32_1 = arith.constant 0 : i32
    return %c0_i32, %c0_i32_0 : i32, i32
  }
  func.func @transform_12(%arg0: i32) -> (i32, i32) {
    %c0_i32 = arith.constant 0 : i32
    %c0_i32_0 = arith.constant 0 : i32
    %c0_i32_1 = arith.constant 0 : i32
    return %c0_i32, %c0_i32_0 : i32, i32
  }
  func.func @transform_13(%arg0: i32) -> (i32, i32) {
    %c0_i32 = arith.constant 0 : i32
    %c0_i32_0 = arith.constant 0 : i32
    %c0_i32_1 = arith.constant 0 : i32
    return %c0_i32, %c0_i32_0 : i32, i32
  }
  func.func @transform_14(%arg0: i32) -> (i32, i32) {
    %c0_i32 = arith.constant 0 : i32
    %c0_i32_0 = arith.constant 0 : i32
    %c0_i32_1 = arith.constant 0 : i32
    return %c0_i32, %c0_i32_0 : i32, i32
  }
  func.func @transform_15(%arg0: i32) -> (i32, i32) {
    %c0_i32 = arith.constant 0 : i32
    %c0_i32_0 = arith.constant 0 : i32
    %c0_i32_1 = arith.constant 0 : i32
    return %c0_i32, %c0_i32_0 : i32, i32
  }
  func.func @transform_16(%arg0: i32) -> (i32, i32) {
    %c0_i32 = arith.constant 0 : i32
    %c0_i32_0 = arith.constant 0 : i32
    %c0_i32_1 = arith.constant 0 : i32
    return %c0_i32, %c0_i32_0 : i32, i32
  }
  func.func @transform_17(%arg0: i32) -> (i32, i32) {
    %c0_i32 = arith.constant 0 : i32
    %c0_i32_0 = arith.constant 0 : i32
    %c0_i32_1 = arith.constant 0 : i32
    return %c0_i32, %c0_i32_0 : i32, i32
  }
  func.func @transform_18(%arg0: i32) -> (i32, i32) {
    %c0_i32 = arith.constant 0 : i32
    %c0_i32_0 = arith.constant 0 : i32
    %c0_i32_1 = arith.constant 0 : i32
    return %c0_i32, %c0_i32_0 : i32, i32
  }
  func.func @transform_19(%arg0: i32) -> (i32, i32) {
    %c0_i32 = arith.constant 0 : i32
    %c0_i32_0 = arith.constant 0 : i32
    %c0_i32_1 = arith.constant 0 : i32
    return %c0_i32, %c0_i32_0 : i32, i32
  }
  func.func @transform_20(%arg0: i32) -> (i32, i32) {
    %c0_i32 = arith.constant 0 : i32
    %c0_i32_0 = arith.constant 0 : i32
    %c0_i32_1 = arith.constant 0 : i32
    return %c0_i32, %c0_i32_0 : i32, i32
  }
  func.func @transform_21(%arg0: i32) -> (i32, i32) {
    %c0_i32 = arith.constant 0 : i32
    %c0_i32_0 = arith.constant 0 : i32
    %c0_i32_1 = arith.constant 0 : i32
    return %c0_i32, %c0_i32_0 : i32, i32
  }
  func.func @transform_22(%arg0: i32) -> (i32, i32) {
    %c0_i32 = arith.constant 0 : i32
    %c0_i32_0 = arith.constant 0 : i32
    %c0_i32_1 = arith.constant 0 : i32
    return %c0_i32, %c0_i32_0 : i32, i32
  }
  func.func @transform_23(%arg0: i32) -> (i32, i32) {
    %c0_i32 = arith.constant 0 : i32
    %c0_i32_0 = arith.constant 0 : i32
    %c0_i32_1 = arith.constant 0 : i32
    return %c0_i32, %c0_i32_0 : i32, i32
  }
  func.func @transform_24(%arg0: i32) -> (i32, i32) {
    %c0_i32 = arith.constant 0 : i32
    %c0_i32_0 = arith.constant 0 : i32
    %c0_i32_1 = arith.constant 0 : i32
    return %c0_i32, %c0_i32_0 : i32, i32
  }
  func.func @transform_25(%arg0: i32) -> (i32, i32) {
    %c0_i32 = arith.constant 0 : i32
    %c0_i32_0 = arith.constant 0 : i32
    %c0_i32_1 = arith.constant 0 : i32
    return %c0_i32, %c0_i32_0 : i32, i32
  }
  func.func @transform_26(%arg0: i32) -> (i32, i32) {
    %c0_i32 = arith.constant 0 : i32
    %c0_i32_0 = arith.constant 0 : i32
    %c0_i32_1 = arith.constant 0 : i32
    return %c0_i32, %c0_i32_0 : i32, i32
  }
  func.func @transform_27(%arg0: i32) -> (i32, i32) {
    %c0_i32 = arith.constant 0 : i32
    %c0_i32_0 = arith.constant 0 : i32
    %c0_i32_1 = arith.constant 0 : i32
    return %c0_i32, %c0_i32_0 : i32, i32
  }
  func.func @transform_28(%arg0: i32) -> (i32, i32, i32) {
    %c0_i32 = arith.constant 0 : i32
    %c0_i32_0 = arith.constant 0 : i32
    %c0_i32_1 = arith.constant 0 : i32
    return %arg0, %c0_i32, %c0_i32_0 : i32, i32, i32
  }
}

</mosaic_0001>

<llo_original>
// kernel: tpu_custom_call.1
$region0: #{tpu_custom_call.1}
  #allocation0 [shape = 'u32[]', space=smem, size = 0x4, offset = 0x4, fixed_abs, tag = 'smem constant byte address 0x4 - core index']
  #allocation1 [shape = 'u32[144,128]{1,0:T(1,128)}', space=vmem, size = 0x12000, scoped, tag = 'internal scratch']
  %s0 = inlined_call_operand.hbm [shape: f32[2,8,128], index: 0, kind: input, shape index: {}]
  %s1 = inlined_call_operand.hbm [shape: f32[2,16,128], index: 1, kind: input, shape index: {}]
  %s2 = inlined_call_operand.vmem [shape: f32[1,128], index: 2, kind: input, shape index: {}]
  %s3 = inlined_call_operand.vmem [shape: f32[1,128], index: 3, kind: input, shape index: {}]
  %s4 = inlined_call_operand.vmem [shape: f32[1,128], index: 4, kind: input, shape index: {}]
  %s5 = inlined_call_operand.vmem [shape: f32[1,128], index: 5, kind: input, shape index: {}]
  %s6 = inlined_call_operand.vmem [shape: f32[1,128], index: 6, kind: input, shape index: {}]
  %s7 = inlined_call_operand.vmem [shape: f32[1,128], index: 7, kind: input, shape index: {}]
  %s8 = inlined_call_operand.hbm [shape: bf16[128,128], index: 8, kind: input, shape index: {}]
  %s9 = inlined_call_operand.vmem [shape: f32[1,128], index: 9, kind: input, shape index: {}]
  %s10 = inlined_call_operand.hbm [shape: bf16[128,128], index: 10, kind: input, shape index: {}]
  %s11 = inlined_call_operand.vmem [shape: f32[1,128], index: 11, kind: input, shape index: {}]
  %s12 = inlined_call_operand.hbm [shape: bf16[128,128], index: 12, kind: input, shape index: {}]
  %s13 = inlined_call_operand.vmem [shape: f32[1,128], index: 13, kind: input, shape index: {}]
  %s14 = inlined_call_operand.hbm [shape: bf16[128,128], index: 14, kind: input, shape index: {}]
  %s15 = inlined_call_operand.vmem [shape: f32[1,128], index: 15, kind: input, shape index: {}]
  %s16 = inlined_call_operand.hbm [shape: bf16[128,128], index: 16, kind: input, shape index: {}]
  %s17 = inlined_call_operand.vmem [shape: f32[1,128], index: 17, kind: input, shape index: {}]
  %s18 = inlined_call_operand.hbm [shape: bf16[128,128], index: 18, kind: input, shape index: {}]
  %s19 = inlined_call_operand.vmem [shape: f32[1,128], index: 19, kind: input, shape index: {}]
  %s20 = inlined_call_operand.hbm [shape: bf16[128,128], index: 20, kind: input, shape index: {}]
  %s21 = inlined_call_operand.vmem [shape: f32[1,128], index: 21, kind: input, shape index: {}]
  %s22 = inlined_call_operand.hbm [shape: bf16[128,128], index: 22, kind: input, shape index: {}]
  %s23 = inlined_call_operand.vmem [shape: f32[1,128], index: 23, kind: input, shape index: {}]
  %s24 = inlined_call_operand.hbm [shape: bf16[128,256], index: 24, kind: input, shape index: {}]
  %s25 = inlined_call_operand.vmem [shape: f32[1,256], index: 25, kind: input, shape index: {}]
  %s26 = inlined_call_operand.hbm [shape: bf16[256,128], index: 26, kind: input, shape index: {}]
  %s27 = inlined_call_operand.vmem [shape: f32[1,128], index: 27, kind: input, shape index: {}]
  %s28 = inlined_call_operand.hbm [shape: f32[2,8,128], index: 28, kind: output, shape index: {}]
  %s29 = sld [smem:[#allocation0]]
  $region193: #{tpu_custom_call.1} parent=0
    _
  %s31 = ssub.s32 1, %s29
  %s32 = scalar_select 0, %s31, %s29
  $region1: #{tpu_custom_call.1} parent=0
    #allocation2 [shape = 'u8[8192]{0}', space=vmem, size = 0x2000, scoped, tag = 'input window, operand 0']
    #allocation3 [shape = 's32[2]{0}', space=sflag, size = 0x8, scoped, tag = 'scoped memory for tpu_custom_call.1']
    #allocation4 [shape = 's32[2]{0}', space=sflag, size = 0x8, scoped, tag = 'scoped memory for tpu_custom_call.1']
    #allocation5 [shape = 'u8[16384]{0}', space=vmem, size = 0x4000, scoped, tag = 'input window, operand 1']
    #allocation6 [shape = 's32[2]{0}', space=sflag, size = 0x8, scoped, tag = 'scoped memory for tpu_custom_call.1']
    #allocation7 [shape = 'u8[32768]{0}', space=vmem, size = 0x8000, scoped, tag = 'input window, operand 8, single buffered']
    #allocation8 [shape = 'u8[32768]{0}', space=vmem, size = 0x8000, scoped, tag = 'input window, operand 10, single buffered']
    #allocation9 [shape = 's32[1]{0}', space=sflag, size = 0x4, scoped, tag = 'scoped memory for tpu_custom_call.1']
    #allocation10 [shape = 'u8[32768]{0}', space=vmem, size = 0x8000, scoped, tag = 'input window, operand 12, single buffered']
    #allocation11 [shape = 'u8[32768]{0}', space=vmem, size = 0x8000, scoped, tag = 'input window, operand 14, single buffered']
    #allocation12 [shape = 's32[1]{0}', space=sflag, size = 0x4, scoped, tag = 'scoped memory for tpu_custom_call.1']
    #allocation13 [shape = 'u8[32768]{0}', space=vmem, size = 0x8000, scoped, tag = 'input window, operand 16, single buffered']
    #allocation14 [shape = 'u8[32768]{0}', space=vmem, size = 0x8000, scoped, tag = 'input window, operand 18, single buffered']
    #allocation15 [shape = 's32[1]{0}', space=sflag, size = 0x4, scoped, tag = 'scoped memory for tpu_custom_call.1']
    #allocation16 [shape = 'u8[32768]{0}', space=vmem, size = 0x8000, scoped, tag = 'input window, operand 20, single buffered']
    #allocation17 [shape = 'u8[32768]{0}', space=vmem, size = 0x8000, scoped, tag = 'input window, operand 22, single buffered']
    #allocation18 [shape = 's32[1]{0}', space=sflag, size = 0x4, scoped, tag = 'scoped memory for tpu_custom_call.1']
    #allocation19 [shape = 'u8[65536]{0}', space=vmem, size = 0x10000, scoped, tag = 'input window, operand 24, single buffered']
    #allocation20 [shape = 'u8[65536]{0}', space=vmem, size = 0x10000, scoped, tag = 'input window, operand 26, single buffered']
    #allocation21 [shape = 's32[1]{0}', space=sflag, size = 0x4, scoped, tag = 'scoped memory for tpu_custom_call.1']
    #allocation22 [shape = 'u8[8192]{0}', space=vmem, size = 0x2000, scoped, tag = 'output window, operand 0']
    %33 = vsyncpa [#allocation3], 0
    %s34 = scalar_lea.sflag [#allocation3], 1
    %35 = vsyncpa %s34, 0
    %36 = vsyncpa [#allocation6], 0
    %s37 = scalar_lea.sflag [#allocation6], 1
    %38 = vsyncpa %s37, 0
    %39 = vsyncpa [#allocation9], 0
    %40 = vsyncpa [#allocation12], 0
    %41 = vsyncpa [#allocation15], 0
    %42 = vsyncpa [#allocation18], 0
    %43 = vsyncpa [#allocation21], 0
    %44 = vsyncpa [#allocation4], 0
    %s45 = scalar_lea.sflag [#allocation4], 1
    %46 = vsyncpa %s45, 0
    loop: start=0, step=1, limit=4
    $region2: #{tpu_custom_call.1} parent=1 // loop_pre_header
      _
    $region3: #{tpu_custom_call.1} parent=1 // loop_header
      %s48 = sphi 0, %s52
      %p49 = scmp.ge.s32.totalorder %s48, 4
      %s58 = sphi 0, %s60
      %s61 = sphi 0, %s58
      %s62 = sphi 0, %s61
      %s78 = sphi 0, %s62
      %s84 = sphi 0, %s86
      %s87 = sphi 0, %s84
      %s88 = sphi 0, %s87
      %s104 = sphi 0, %s88
      %s108 = sphi 0, %s108
      %s110 = sphi 0, %s108
      %s111 = sphi 0, %s110
      %s125 = sphi 0, %s111
      %s129 = sphi 0, %s129
      %s131 = sphi 0, %s129
      %s132 = sphi 0, %s131
      %s146 = sphi 0, %s132
      %s150 = sphi 0, %s150
      %s152 = sphi 0, %s150
      %s153 = sphi 0, %s152
      %s167 = sphi 0, %s153
      %s171 = sphi 0, %s171
      %s173 = sphi 0, %s171
      %s174 = sphi 0, %s173
      %s188 = sphi 0, %s174
      %s192 = sphi 0, %s192
      %s194 = sphi 0, %s192
      %s195 = sphi 0, %s194
      %s209 = sphi 0, %s195
      %s213 = sphi 0, %s213
      %s215 = sphi 0, %s213
      %s216 = sphi 0, %s215
      %s230 = sphi 0, %s216
      %s234 = sphi 0, %s234
      %s236 = sphi 0, %s234
      %s237 = sphi 0, %s236
      %s251 = sphi 0, %s237
      %s255 = sphi 0, %s255
      %s257 = sphi 0, %s255
      %s258 = sphi 0, %s257
      %s272 = sphi 0, %s258
      %s276 = sphi 0, %s276
      %s278 = sphi 0, %s276
      %s279 = sphi 0, %s278
      %s293 = sphi 0, %s279
      %s297 = sphi 0, %s297
      %s299 = sphi 0, %s297
      %s300 = sphi 0, %s299
      %s314 = sphi 0, %s300
      %s318 = sphi 0, %s318
      %s320 = sphi 0, %s318
      %s321 = sphi 0, %s320
      %s335 = sphi 0, %s321
      %s339 = sphi 0, %s339
      %s341 = sphi 0, %s339
      %s342 = sphi 0, %s341
      %s356 = sphi 0, %s342
      %s360 = sphi 0, %s360
      %s362 = sphi 0, %s360
      %s363 = sphi 0, %s362
      %s377 = sphi 0, %s363
      %s381 = sphi 0, %s381
      %s383 = sphi 0, %s381
      %s384 = sphi 0, %s383
      %s398 = sphi 0, %s384
      %s402 = sphi 0, %s402
      %s404 = sphi 0, %s402
      %s405 = sphi 0, %s404
      %s419 = sphi 0, %s405
      %s423 = sphi 0, %s423
      %s425 = sphi 0, %s423
      %s426 = sphi 0, %s425
      %s440 = sphi 0, %s426
      %s444 = sphi 0, %s444
      %s446 = sphi 0, %s444
      %s447 = sphi 0, %s446
      %s461 = sphi 0, %s447
      %s465 = sphi 0, %s465
      %s467 = sphi 0, %s465
      %s468 = sphi 0, %s467
      %s482 = sphi 0, %s468
      %s486 = sphi 0, %s486
      %s488 = sphi 0, %s486
      %s489 = sphi 0, %s488
      %s503 = sphi 0, %s489
      %s507 = sphi 0, %s507
      %s509 = sphi 0, %s507
      %s510 = sphi 0, %s509
      %s524 = sphi 0, %s510
      %s528 = sphi 0, %s528
      %s530 = sphi 0, %s528
      %s531 = sphi 0, %s530
      %s545 = sphi 0, %s531
      %s549 = sphi 0, %s549
      %s551 = sphi 0, %s549
      %s552 = sphi 0, %s551
      %s566 = sphi 0, %s552
      %s570 = sphi 0, %s570
      %s572 = sphi 0, %s570
      %s573 = sphi 0, %s572
      %s587 = sphi 0, %s573
      %s591 = sphi 0, %s591
      %s593 = sphi 0, %s591
      %s594 = sphi 0, %s593
      %s608 = sphi 0, %s594
      %s612 = sphi 0, %s612
      %s614 = sphi 0, %s612
      %s615 = sphi 0, %s614
      %s629 = sphi 0, %s615
      %s633 = sphi 0, %s633
      %s635 = sphi 0, %s633
      %s636 = sphi 0, %s635
      %s650 = sphi 0, %s636
      %s656 = sphi 0, %s658
      %s659 = sphi 0, %s656
      %s660 = sphi 0, %s659
      %s676 = sphi 0, %s660
    $region4: #{tpu_custom_call.1} parent=1 // loop_header_branch
      %51 = sbr.rel (%p49) target = $region8
    $region5: #{tpu_custom_call.1} parent=1 // loop_body
      %s53 = ssub.s32 %s48, 1
      %s54 = ssub.s32 %s48, 2
      %s55 = sadd.s32 %s48, 1
      %s56 = ssub.s32 %s48, %s55
      %p57 = scmp.eq.s32.totalorder %s56, 0
      %s59 = sadd.s32 %s58, 1
      %s60 = scalar_select %p57, %s58, %s59
      %p63 = pneg %p57
      %p64 = scmp.eq.s32.totalorder %s48, 1
      %p65 = por %p63, %p64
      %p66 = scmp.ne.s32.totalorder %s58, %s61
      %p67 = scmp.eq.s32.totalorder %s48, 0
      %p68 = por %p66, %p67
      %p69 = scmp.ne.s32.totalorder %s58, %s61
      %p70 = scmp.eq.s32.totalorder %s53, 1
      %p71 = por %p69, %p70
      %p72 = scmp.ne.s32.totalorder %s61, %s62
      %p73 = scmp.eq.s32.totalorder %s53, 0
      %p74 = por %p72, %p73
      %p75 = scmp.ne.s32.totalorder %s61, %s62
      %p76 = scmp.eq.s32.totalorder %s54, 1
      %p77 = por %p75, %p76
      %p79 = scmp.ne.s32.totalorder %s62, %s78
      %p80 = scmp.eq.s32.totalorder %s54, 0
      %p81 = por %p79, %p80
      %s82 = ssub.s32 %s48, %s55
      %p83 = scmp.eq.s32.totalorder %s82, 0
      %s85 = sadd.s32 %s84, 1
      %s86 = scalar_select %p83, %s84, %s85
      %p89 = pneg %p83
      %p90 = scmp.eq.s32.totalorder %s48, 1
      %p91 = por %p89, %p90
      %p92 = scmp.ne.s32.totalorder %s84, %s87
      %p93 = scmp.eq.s32.totalorder %s48, 0
      %p94 = por %p92, %p93
      %p95 = scmp.ne.s32.totalorder %s84, %s87
      %p96 = scmp.eq.s32.totalorder %s53, 1
      %p97 = por %p95, %p96
      %p98 = scmp.ne.s32.totalorder %s87, %s88
      %p99 = scmp.eq.s32.totalorder %s53, 0
      %p100 = por %p98, %p99
      %p101 = scmp.ne.s32.totalorder %s87, %s88
      %p102 = scmp.eq.s32.totalorder %s54, 1
      %p103 = por %p101, %p102
      %p105 = scmp.ne.s32.totalorder %s88, %s104
      %p106 = scmp.eq.s32.totalorder %s54, 0
      %p107 = por %p105, %p106
      %s109 = sadd.s32 %s108, 1
      %p112 = scmp.eq.s32.totalorder %s48, 1
      %p113 = scmp.ne.s32.totalorder %s108, %s110
      %p114 = scmp.eq.s32.totalorder %s48, 0
      %p115 = por %p113, %p114
      %p116 = scmp.ne.s32.totalorder %s108, %s110
      %p117 = scmp.eq.s32.totalorder %s53, 1
      %p118 = por %p116, %p117
      %p119 = scmp.ne.s32.totalorder %s110, %s111
      %p120 = scmp.eq.s32.totalorder %s53, 0
      %p121 = por %p119, %p120
      %p122 = scmp.ne.s32.totalorder %s110, %s111
      %p123 = scmp.eq.s32.totalorder %s54, 1
      %p124 = por %p122, %p123
      %p126 = scmp.ne.s32.totalorder %s111, %s125
      %p127 = scmp.eq.s32.totalorder %s54, 0
      %p128 = por %p126, %p127
      %s130 = sadd.s32 %s129, 1
      %p133 = scmp.eq.s32.totalorder %s48, 1
      %p134 = scmp.ne.s32.totalorder %s129, %s131
      %p135 = scmp.eq.s32.totalorder %s48, 0
      %p136 = por %p134, %p135
      %p137 = scmp.ne.s32.totalorder %s129, %s131
      %p138 = scmp.eq.s32.totalorder %s53, 1
      %p139 = por %p137, %p138
      %p140 = scmp.ne.s32.totalorder %s131, %s132
      %p141 = scmp.eq.s32.totalorder %s53, 0
      %p142 = por %p140, %p141
      %p143 = scmp.ne.s32.totalorder %s131, %s132
      %p144 = scmp.eq.s32.totalorder %s54, 1
      %p145 = por %p143, %p144
      %p147 = scmp.ne.s32.totalorder %s132, %s146
      %p148 = scmp.eq.s32.totalorder %s54, 0
      %p149 = por %p147, %p148
      %s151 = sadd.s32 %s150, 1
      %p154 = scmp.eq.s32.totalorder %s48, 1
      %p155 = scmp.ne.s32.totalorder %s150, %s152
      %p156 = scmp.eq.s32.totalorder %s48, 0
      %p157 = por %p155, %p156
      %p158 = scmp.ne.s32.totalorder %s150, %s152
      %p159 = scmp.eq.s32.totalorder %s53, 1
      %p160 = por %p158, %p159
      %p161 = scmp.ne.s32.totalorder %s152, %s153
      %p162 = scmp.eq.s32.totalorder %s53, 0
      %p163 = por %p161, %p162
      %p164 = scmp.ne.s32.totalorder %s152, %s153
      %p165 = scmp.eq.s32.totalorder %s54, 1
      %p166 = por %p164, %p165
      %p168 = scmp.ne.s32.totalorder %s153, %s167
      %p169 = scmp.eq.s32.totalorder %s54, 0
      %p170 = por %p168, %p169
      %s172 = sadd.s32 %s171, 1
      %p175 = scmp.eq.s32.totalorder %s48, 1
      %p176 = scmp.ne.s32.totalorder %s171, %s173
      %p177 = scmp.eq.s32.totalorder %s48, 0
      %p178 = por %p176, %p177
      %p179 = scmp.ne.s32.totalorder %s171, %s173
      %p180 = scmp.eq.s32.totalorder %s53, 1
      %p181 = por %p179, %p180
      %p182 = scmp.ne.s32.totalorder %s173, %s174
      %p183 = scmp.eq.s32.totalorder %s53, 0
      %p184 = por %p182, %p183
      %p185 = scmp.ne.s32.totalorder %s173, %s174
      %p186 = scmp.eq.s32.totalorder %s54, 1
      %p187 = por %p185, %p186
      %p189 = scmp.ne.s32.totalorder %s174, %s188
      %p190 = scmp.eq.s32.totalorder %s54, 0
      %p191 = por %p189, %p190
      %s193 = sadd.s32 %s192, 1
      %p196 = scmp.eq.s32.totalorder %s48, 1
      %p197 = scmp.ne.s32.totalorder %s192, %s194
      %p198 = scmp.eq.s32.totalorder %s48, 0
      %p199 = por %p197, %p198
      %p200 = scmp.ne.s32.totalorder %s192, %s194
      %p201 = scmp.eq.s32.totalorder %s53, 1
      %p202 = por %p200, %p201
      %p203 = scmp.ne.s32.totalorder %s194, %s195
      %p204 = scmp.eq.s32.totalorder %s53, 0
      %p205 = por %p203, %p204
      %p206 = scmp.ne.s32.totalorder %s194, %s195
      %p207 = scmp.eq.s32.totalorder %s54, 1
      %p208 = por %p206, %p207
      %p210 = scmp.ne.s32.totalorder %s195, %s209
      %p211 = scmp.eq.s32.totalorder %s54, 0
      %p212 = por %p210, %p211
      %s214 = sadd.s32 %s213, 1
      %p217 = scmp.eq.s32.totalorder %s48, 1
      %p218 = scmp.ne.s32.totalorder %s213, %s215
      %p219 = scmp.eq.s32.totalorder %s48, 0
      %p220 = por %p218, %p219
      %p221 = scmp.ne.s32.totalorder %s213, %s215
      %p222 = scmp.eq.s32.totalorder %s53, 1
      %p223 = por %p221, %p222
      %p224 = scmp.ne.s32.totalorder %s215, %s216
      %p225 = scmp.eq.s32.totalorder %s53, 0
      %p226 = por %p224, %p225
      %p227 = scmp.ne.s32.totalorder %s215, %s216
      %p228 = scmp.eq.s32.totalorder %s54, 1
      %p229 = por %p227, %p228
      %p231 = scmp.ne.s32.totalorder %s216, %s230
      %p232 = scmp.eq.s32.totalorder %s54, 0
      %p233 = por %p231, %p232
      %s235 = sadd.s32 %s234, 1
      %p238 = scmp.eq.s32.totalorder %s48, 1
      %p239 = scmp.ne.s32.totalorder %s234, %s236
      %p240 = scmp.eq.s32.totalorder %s48, 0
      %p241 = por %p239, %p240
      %p242 = scmp.ne.s32.totalorder %s234, %s236
      %p243 = scmp.eq.s32.totalorder %s53, 1
      %p244 = por %p242, %p243
      %p245 = scmp.ne.s32.totalorder %s236, %s237
      %p246 = scmp.eq.s32.totalorder %s53, 0
      %p247 = por %p245, %p246
      %p248 = scmp.ne.s32.totalorder %s236, %s237
      %p249 = scmp.eq.s32.totalorder %s54, 1
      %p250 = por %p248, %p249
      %p252 = scmp.ne.s32.totalorder %s237, %s251
      %p253 = scmp.eq.s32.totalorder %s54, 0
      %p254 = por %p252, %p253
      %s256 = sadd.s32 %s255, 1
      %p259 = scmp.eq.s32.totalorder %s48, 1
      %p260 = scmp.ne.s32.totalorder %s255, %s257
      %p261 = scmp.eq.s32.totalorder %s48, 0
      %p262 = por %p260, %p261
      %p263 = scmp.ne.s32.totalorder %s255, %s257
      %p264 = scmp.eq.s32.totalorder %s53, 1
      %p265 = por %p263, %p264
      %p266 = scmp.ne.s32.totalorder %s257, %s258
      %p267 = scmp.eq.s32.totalorder %s53, 0
      %p268 = por %p266, %p267
      %p269 = scmp.ne.s32.totalorder %s257, %s258
      %p270 = scmp.eq.s32.totalorder %s54, 1
      %p271 = por %p269, %p270
      %p273 = scmp.ne.s32.totalorder %s258, %s272
      %p274 = scmp.eq.s32.totalorder %s54, 0
      %p275 = por %p273, %p274
      %s277 = sadd.s32 %s276, 1
      %p280 = scmp.eq.s32.totalorder %s48, 1
      %p281 = scmp.ne.s32.totalorder %s276, %s278
      %p282 = scmp.eq.s32.totalorder %s48, 0
      %p283 = por %p281, %p282
      %p284 = scmp.ne.s32.totalorder %s276, %s278
      %p285 = scmp.eq.s32.totalorder %s53, 1
      %p286 = por %p284, %p285
      %p287 = scmp.ne.s32.totalorder %s278, %s279
      %p288 = scmp.eq.s32.totalorder %s53, 0
      %p289 = por %p287, %p288
      %p290 = scmp.ne.s32.totalorder %s278, %s279
      %p291 = scmp.eq.s32.totalorder %s54, 1
      %p292 = por %p290, %p291
      %p294 = scmp.ne.s32.totalorder %s279, %s293
      %p295 = scmp.eq.s32.totalorder %s54, 0
      %p296 = por %p294, %p295
      %s298 = sadd.s32 %s297, 1
      %p301 = scmp.eq.s32.totalorder %s48, 1
      %p302 = scmp.ne.s32.totalorder %s297, %s299
      %p303 = scmp.eq.s32.totalorder %s48, 0
      %p304 = por %p302, %p303
      %p305 = scmp.ne.s32.totalorder %s297, %s299
      %p306 = scmp.eq.s32.totalorder %s53, 1
      %p307 = por %p305, %p306
      %p308 = scmp.ne.s32.totalorder %s299, %s300
      %p309 = scmp.eq.s32.totalorder %s53, 0
      %p310 = por %p308, %p309
      %p311 = scmp.ne.s32.totalorder %s299, %s300
      %p312 = scmp.eq.s32.totalorder %s54, 1
      %p313 = por %p311, %p312
      %p315 = scmp.ne.s32.totalorder %s300, %s314
      %p316 = scmp.eq.s32.totalorder %s54, 0
      %p317 = por %p315, %p316
      %s319 = sadd.s32 %s318, 1
      %p322 = scmp.eq.s32.totalorder %s48, 1
      %p323 = scmp.ne.s32.totalorder %s318, %s320
      %p324 = scmp.eq.s32.totalorder %s48, 0
      %p325 = por %p323, %p324
      %p326 = scmp.ne.s32.totalorder %s318, %s320
      %p327 = scmp.eq.s32.totalorder %s53, 1
      %p328 = por %p326, %p327
      %p329 = scmp.ne.s32.totalorder %s320, %s321
      %p330 = scmp.eq.s32.totalorder %s53, 0
      %p331 = por %p329, %p330
      %p332 = scmp.ne.s32.totalorder %s320, %s321
      %p333 = scmp.eq.s32.totalorder %s54, 1
      %p334 = por %p332, %p333
      %p336 = scmp.ne.s32.totalorder %s321, %s335
      %p337 = scmp.eq.s32.totalorder %s54, 0
      %p338 = por %p336, %p337
      %s340 = sadd.s32 %s339, 1
      %p343 = scmp.eq.s32.totalorder %s48, 1
      %p344 = scmp.ne.s32.totalorder %s339, %s341
      %p345 = scmp.eq.s32.totalorder %s48, 0
      %p346 = por %p344, %p345
      %p347 = scmp.ne.s32.totalorder %s339, %s341
      %p348 = scmp.eq.s32.totalorder %s53, 1
      %p349 = por %p347, %p348
      %p350 = scmp.ne.s32.totalorder %s341, %s342
      %p351 = scmp.eq.s32.totalorder %s53, 0
      %p352 = por %p350, %p351
      %p353 = scmp.ne.s32.totalorder %s341, %s342
      %p354 = scmp.eq.s32.totalorder %s54, 1
      %p355 = por %p353, %p354
      %p357 = scmp.ne.s32.totalorder %s342, %s356
      %p358 = scmp.eq.s32.totalorder %s54, 0
      %p359 = por %p357, %p358
      %s361 = sadd.s32 %s360, 1
      %p364 = scmp.eq.s32.totalorder %s48, 1
      %p365 = scmp.ne.s32.totalorder %s360, %s362
      %p366 = scmp.eq.s32.totalorder %s48, 0
      %p367 = por %p365, %p366
      %p368 = scmp.ne.s32.totalorder %s360, %s362
      %p369 = scmp.eq.s32.totalorder %s53, 1
      %p370 = por %p368, %p369
      %p371 = scmp.ne.s32.totalorder %s362, %s363
      %p372 = scmp.eq.s32.totalorder %s53, 0
      %p373 = por %p371, %p372
      %p374 = scmp.ne.s32.totalorder %s362, %s363
      %p375 = scmp.eq.s32.totalorder %s54, 1
      %p376 = por %p374, %p375
      %p378 = scmp.ne.s32.totalorder %s363, %s377
      %p379 = scmp.eq.s32.totalorder %s54, 0
      %p380 = por %p378, %p379
      %s382 = sadd.s32 %s381, 1
      %p385 = scmp.eq.s32.totalorder %s48, 1
      %p386 = scmp.ne.s32.totalorder %s381, %s383
      %p387 = scmp.eq.s32.totalorder %s48, 0
      %p388 = por %p386, %p387
      %p389 = scmp.ne.s32.totalorder %s381, %s383
      %p390 = scmp.eq.s32.totalorder %s53, 1
      %p391 = por %p389, %p390
      %p392 = scmp.ne.s32.totalorder %s383, %s384
      %p393 = scmp.eq.s32.totalorder %s53, 0
      %p394 = por %p392, %p393
      %p395 = scmp.ne.s32.totalorder %s383, %s384
      %p396 = scmp.eq.s32.totalorder %s54, 1
      %p397 = por %p395, %p396
      %p399 = scmp.ne.s32.totalorder %s384, %s398
      %p400 = scmp.eq.s32.totalorder %s54, 0
      %p401 = por %p399, %p400
      %s403 = sadd.s32 %s402, 1
      %p406 = scmp.eq.s32.totalorder %s48, 1
      %p407 = scmp.ne.s32.totalorder %s402, %s404
      %p408 = scmp.eq.s32.totalorder %s48, 0
      %p409 = por %p407, %p408
      %p410 = scmp.ne.s32.totalorder %s402, %s404
      %p411 = scmp.eq.s32.totalorder %s53, 1
      %p412 = por %p410, %p411
      %p413 = scmp.ne.s32.totalorder %s404, %s405
      %p414 = scmp.eq.s32.totalorder %s53, 0
      %p415 = por %p413, %p414
      %p416 = scmp.ne.s32.totalorder %s404, %s405
      %p417 = scmp.eq.s32.totalorder %s54, 1
      %p418 = por %p416, %p417
      %p420 = scmp.ne.s32.totalorder %s405, %s419
      %p421 = scmp.eq.s32.totalorder %s54, 0
      %p422 = por %p420, %p421
      %s424 = sadd.s32 %s423, 1
      %p427 = scmp.eq.s32.totalorder %s48, 1
      %p428 = scmp.ne.s32.totalorder %s423, %s425
      %p429 = scmp.eq.s32.totalorder %s48, 0
      %p430 = por %p428, %p429
      %p431 = scmp.ne.s32.totalorder %s423, %s425
      %p432 = scmp.eq.s32.totalorder %s53, 1
      %p433 = por %p431, %p432
      %p434 = scmp.ne.s32.totalorder %s425, %s426
      %p435 = scmp.eq.s32.totalorder %s53, 0
      %p436 = por %p434, %p435
      %p437 = scmp.ne.s32.totalorder %s425, %s426
      %p438 = scmp.eq.s32.totalorder %s54, 1
      %p439 = por %p437, %p438
      %p441 = scmp.ne.s32.totalorder %s426, %s440
      %p442 = scmp.eq.s32.totalorder %s54, 0
      %p443 = por %p441, %p442
      %s445 = sadd.s32 %s444, 1
      %p448 = scmp.eq.s32.totalorder %s48, 1
      %p449 = scmp.ne.s32.totalorder %s444, %s446
      %p450 = scmp.eq.s32.totalorder %s48, 0
      %p451 = por %p449, %p450
      %p452 = scmp.ne.s32.totalorder %s444, %s446
      %p453 = scmp.eq.s32.totalorder %s53, 1
      %p454 = por %p452, %p453
      %p455 = scmp.ne.s32.totalorder %s446, %s447
      %p456 = scmp.eq.s32.totalorder %s53, 0
      %p457 = por %p455, %p456
      %p458 = scmp.ne.s32.totalorder %s446, %s447
      %p459 = scmp.eq.s32.totalorder %s54, 1
      %p460 = por %p458, %p459
      %p462 = scmp.ne.s32.totalorder %s447, %s461
      %p463 = scmp.eq.s32.totalorder %s54, 0
      %p464 = por %p462, %p463
      %s466 = sadd.s32 %s465, 1
      %p469 = scmp.eq.s32.totalorder %s48, 1
      %p470 = scmp.ne.s32.totalorder %s465, %s467
      %p471 = scmp.eq.s32.totalorder %s48, 0
      %p472 = por %p470, %p471
      %p473 = scmp.ne.s32.totalorder %s465, %s467
      %p474 = scmp.eq.s32.totalorder %s53, 1
      %p475 = por %p473, %p474
      %p476 = scmp.ne.s32.totalorder %s467, %s468
      %p477 = scmp.eq.s32.totalorder %s53, 0
      %p478 = por %p476, %p477
      %p479 = scmp.ne.s32.totalorder %s467, %s468
      %p480 = scmp.eq.s32.totalorder %s54, 1
      %p481 = por %p479, %p480
      %p483 = scmp.ne.s32.totalorder %s468, %s482
      %p484 = scmp.eq.s32.totalorder %s54, 0
      %p485 = por %p483, %p484
      %s487 = sadd.s32 %s486, 1
      %p490 = scmp.eq.s32.totalorder %s48, 1
      %p491 = scmp.ne.s32.totalorder %s486, %s488
      %p492 = scmp.eq.s32.totalorder %s48, 0
      %p493 = por %p491, %p492
      %p494 = scmp.ne.s32.totalorder %s486, %s488
      %p495 = scmp.eq.s32.totalorder %s53, 1
      %p496 = por %p494, %p495
      %p497 = scmp.ne.s32.totalorder %s488, %s489
      %p498 = scmp.eq.s32.totalorder %s53, 0
      %p499 = por %p497, %p498
      %p500 = scmp.ne.s32.totalorder %s488, %s489
      %p501 = scmp.eq.s32.totalorder %s54, 1
      %p502 = por %p500, %p501
      %p504 = scmp.ne.s32.totalorder %s489, %s503
      %p505 = scmp.eq.s32.totalorder %s54, 0
      %p506 = por %p504, %p505
      %s508 = sadd.s32 %s507, 1
      %p511 = scmp.eq.s32.totalorder %s48, 1
      %p512 = scmp.ne.s32.totalorder %s507, %s509
      %p513 = scmp.eq.s32.totalorder %s48, 0
      %p514 = por %p512, %p513
      %p515 = scmp.ne.s32.totalorder %s507, %s509
      %p516 = scmp.eq.s32.totalorder %s53, 1
      %p517 = por %p515, %p516
      %p518 = scmp.ne.s32.totalorder %s509, %s510
      %p519 = scmp.eq.s32.totalorder %s53, 0
      %p520 = por %p518, %p519
      %p521 = scmp.ne.s32.totalorder %s509, %s510
      %p522 = scmp.eq.s32.totalorder %s54, 1
      %p523 = por %p521, %p522
      %p525 = scmp.ne.s32.totalorder %s510, %s524
      %p526 = scmp.eq.s32.totalorder %s54, 0
      %p527 = por %p525, %p526
      %s529 = sadd.s32 %s528, 1
      %p532 = scmp.eq.s32.totalorder %s48, 1
      %p533 = scmp.ne.s32.totalorder %s528, %s530
      %p534 = scmp.eq.s32.totalorder %s48, 0
      %p535 = por %p533, %p534
      %p536 = scmp.ne.s32.totalorder %s528, %s530
      %p537 = scmp.eq.s32.totalorder %s53, 1
      %p538 = por %p536, %p537
      %p539 = scmp.ne.s32.totalorder %s530, %s531
      %p540 = scmp.eq.s32.totalorder %s53, 0
      %p541 = por %p539, %p540
      %p542 = scmp.ne.s32.totalorder %s530, %s531
      %p543 = scmp.eq.s32.totalorder %s54, 1
      %p544 = por %p542, %p543
      %p546 = scmp.ne.s32.totalorder %s531, %s545
      %p547 = scmp.eq.s32.totalorder %s54, 0
      %p548 = por %p546, %p547
      %s550 = sadd.s32 %s549, 1
      %p553 = scmp.eq.s32.totalorder %s48, 1
      %p554 = scmp.ne.s32.totalorder %s549, %s551
      %p555 = scmp.eq.s32.totalorder %s48, 0
      %p556 = por %p554, %p555
      %p557 = scmp.ne.s32.totalorder %s549, %s551
      %p558 = scmp.eq.s32.totalorder %s53, 1
      %p559 = por %p557, %p558
      %p560 = scmp.ne.s32.totalorder %s551, %s552
      %p561 = scmp.eq.s32.totalorder %s53, 0
      %p562 = por %p560, %p561
      %p563 = scmp.ne.s32.totalorder %s551, %s552
      %p564 = scmp.eq.s32.totalorder %s54, 1
      %p565 = por %p563, %p564
      %p567 = scmp.ne.s32.totalorder %s552, %s566
      %p568 = scmp.eq.s32.totalorder %s54, 0
      %p569 = por %p567, %p568
      %s571 = sadd.s32 %s570, 1
      %p574 = scmp.eq.s32.totalorder %s48, 1
      %p575 = scmp.ne.s32.totalorder %s570, %s572
      %p576 = scmp.eq.s32.totalorder %s48, 0
      %p577 = por %p575, %p576
      %p578 = scmp.ne.s32.totalorder %s570, %s572
      %p579 = scmp.eq.s32.totalorder %s53, 1
      %p580 = por %p578, %p579
      %p581 = scmp.ne.s32.totalorder %s572, %s573
      %p582 = scmp.eq.s32.totalorder %s53, 0
      %p583 = por %p581, %p582
      %p584 = scmp.ne.s32.totalorder %s572, %s573
      %p585 = scmp.eq.s32.totalorder %s54, 1
      %p586 = por %p584, %p585
      %p588 = scmp.ne.s32.totalorder %s573, %s587
      %p589 = scmp.eq.s32.totalorder %s54, 0
      %p590 = por %p588, %p589
      %s592 = sadd.s32 %s591, 1
      %p595 = scmp.eq.s32.totalorder %s48, 1
      %p596 = scmp.ne.s32.totalorder %s591, %s593
      %p597 = scmp.eq.s32.totalorder %s48, 0
      %p598 = por %p596, %p597
      %p599 = scmp.ne.s32.totalorder %s591, %s593
      %p600 = scmp.eq.s32.totalorder %s53, 1
      %p601 = por %p599, %p600
      %p602 = scmp.ne.s32.totalorder %s593, %s594
      %p603 = scmp.eq.s32.totalorder %s53, 0
      %p604 = por %p602, %p603
      %p605 = scmp.ne.s32.totalorder %s593, %s594
      %p606 = scmp.eq.s32.totalorder %s54, 1
      %p607 = por %p605, %p606
      %p609 = scmp.ne.s32.totalorder %s594, %s608
      %p610 = scmp.eq.s32.totalorder %s54, 0
      %p611 = por %p609, %p610
      %s613 = sadd.s32 %s612, 1
      %p616 = scmp.eq.s32.totalorder %s48, 1
      %p617 = scmp.ne.s32.totalorder %s612, %s614
      %p618 = scmp.eq.s32.totalorder %s48, 0
      %p619 = por %p617, %p618
      %p620 = scmp.ne.s32.totalorder %s612, %s614
      %p621 = scmp.eq.s32.totalorder %s53, 1
      %p622 = por %p620, %p621
      %p623 = scmp.ne.s32.totalorder %s614, %s615
      %p624 = scmp.eq.s32.totalorder %s53, 0
      %p625 = por %p623, %p624
      %p626 = scmp.ne.s32.totalorder %s614, %s615
      %p627 = scmp.eq.s32.totalorder %s54, 1
      %p628 = por %p626, %p627
      %p630 = scmp.ne.s32.totalorder %s615, %s629
      %p631 = scmp.eq.s32.totalorder %s54, 0
      %p632 = por %p630, %p631
      %s634 = sadd.s32 %s633, 1
      %p637 = scmp.eq.s32.totalorder %s48, 1
      %p638 = scmp.ne.s32.totalorder %s633, %s635
      %p639 = scmp.eq.s32.totalorder %s48, 0
      %p640 = por %p638, %p639
      %p641 = scmp.ne.s32.totalorder %s633, %s635
      %p642 = scmp.eq.s32.totalorder %s53, 1
      %p643 = por %p641, %p642
      %p644 = scmp.ne.s32.totalorder %s635, %s636
      %p645 = scmp.eq.s32.totalorder %s53, 0
      %p646 = por %p644, %p645
      %p647 = scmp.ne.s32.totalorder %s635, %s636
      %p648 = scmp.eq.s32.totalorder %s54, 1
      %p649 = por %p647, %p648
      %p651 = scmp.ne.s32.totalorder %s636, %s650
      %p652 = scmp.eq.s32.totalorder %s54, 0
      %p653 = por %p651, %p652
      %s654 = ssub.s32 %s48, %s55
      %p655 = scmp.eq.s32.totalorder %s654, 0
      %s657 = sadd.s32 %s656, 1
      %s658 = scalar_select %p655, %s656, %s657
      %p661 = pneg %p655
      %p662 = scmp.eq.s32.totalorder %s48, 1
      %p663 = por %p661, %p662
      %p664 = scmp.ne.s32.totalorder %s656, %s659
      %p665 = scmp.eq.s32.totalorder %s48, 0
      %p666 = por %p664, %p665
      %p667 = scmp.ne.s32.totalorder %s656, %s659
      %p668 = scmp.eq.s32.totalorder %s53, 1
      %p669 = por %p667, %p668
      %p670 = scmp.ne.s32.totalorder %s659, %s660
      %p671 = scmp.eq.s32.totalorder %s53, 0
      %p672 = por %p670, %p671
      %p673 = scmp.ne.s32.totalorder %s659, %s660
      %p674 = scmp.eq.s32.totalorder %s54, 1
      %p675 = por %p673, %p674
      %p677 = scmp.ne.s32.totalorder %s660, %s676
      %p678 = scmp.eq.s32.totalorder %s54, 0
      %p679 = por %p677, %p678
      %p680 = scmp.le.s32.totalorder 1, %s48
      %p681 = scmp.lt.s32.totalorder %s48, 3
      %p682 = pnand %p680, %p681
      %p683 = pneg %p682
      // Predicated region
      $region9: #{tpu_custom_call.1} parent=5 // pred_check
        _
      $region10: #{tpu_custom_call.1} parent=5 // pred_check_branch
        %685 = sbr.rel (%p682) target = $region12
      $region11: #{tpu_custom_call.1} parent=5 // pred_region
        %s686 = ssub.s32 %s48, 1
        // Predicated region
        $region13: #{tpu_custom_call.1} parent=11 // pred_check
          %p687 = pneg %p121
        $region14: #{tpu_custom_call.1} parent=11 // pred_check_branch
          %689 = sbr.rel (%p687) target = $region16
        $region15: #{tpu_custom_call.1} parent=11 // pred_region
          _
        $region16: #{tpu_custom_call.1} parent=11 // pred_fallthru
          _
        // Predicated region
        $region17: #{tpu_custom_call.1} parent=11 // pred_check
          %p690 = pneg %p142
        $region18: #{tpu_custom_call.1} parent=11 // pred_check_branch
          %692 = sbr.rel (%p690) target = $region20
        $region19: #{tpu_custom_call.1} parent=11 // pred_region
          _
        $region20: #{tpu_custom_call.1} parent=11 // pred_fallthru
          _
        // Predicated region
        $region21: #{tpu_custom_call.1} parent=11 // pred_check
          %p693 = pneg %p163
        $region22: #{tpu_custom_call.1} parent=11 // pred_check_branch
          %695 = sbr.rel (%p693) target = $region24
        $region23: #{tpu_custom_call.1} parent=11 // pred_region
          _
        $region24: #{tpu_custom_call.1} parent=11 // pred_fallthru
          _
        // Predicated region
        $region25: #{tpu_custom_call.1} parent=11 // pred_check
          %p696 = pneg %p184
        $region26: #{tpu_custom_call.1} parent=11 // pred_check_branch
          %698 = sbr.rel (%p696) target = $region28
        $region27: #{tpu_custom_call.1} parent=11 // pred_region
          _
        $region28: #{tpu_custom_call.1} parent=11 // pred_fallthru
          _
        // Predicated region
        $region29: #{tpu_custom_call.1} parent=11 // pred_check
          %p699 = pneg %p205
        $region30: #{tpu_custom_call.1} parent=11 // pred_check_branch
          %701 = sbr.rel (%p699) target = $region32
        $region31: #{tpu_custom_call.1} parent=11 // pred_region
          _
        $region32: #{tpu_custom_call.1} parent=11 // pred_fallthru
          _
        // Predicated region
        $region33: #{tpu_custom_call.1} parent=11 // pred_check
          %p702 = pneg %p226
        $region34: #{tpu_custom_call.1} parent=11 // pred_check_branch
          %704 = sbr.rel (%p702) target = $region36
        $region35: #{tpu_custom_call.1} parent=11 // pred_region
          _
        $region36: #{tpu_custom_call.1} parent=11 // pred_fallthru
          _
        // Predicated region
        $region37: #{tpu_custom_call.1} parent=11 // pred_check
          %p705 = pneg %p247
        $region38: #{tpu_custom_call.1} parent=11 // pred_check_branch
          %707 = sbr.rel (%p705) target = $region40
        $region39: #{tpu_custom_call.1} parent=11 // pred_region
          %s709 = ssub.s32 1024, 1024
          %710 = vsyncadd [#allocation6], %s709
          %s711 = sshll.u32 [#allocation7], 4
          %s712 = int_to_ptr.vmem [resolvable:$true] %s711
          %717 = dma.hbm_to_vmem [thread:$0]  %s8, 1024, %s712, [#allocation6], 64, 64, 4
        $region40: #{tpu_custom_call.1} parent=11 // pred_fallthru
          _
        // Predicated region
        $region41: #{tpu_custom_call.1} parent=11 // pred_check
          %p718 = pneg %p268
        $region42: #{tpu_custom_call.1} parent=11 // pred_check_branch
          %720 = sbr.rel (%p718) target = $region44
        $region43: #{tpu_custom_call.1} parent=11 // pred_region
          _
        $region44: #{tpu_custom_call.1} parent=11 // pred_fallthru
          _
        // Predicated region
        $region45: #{tpu_custom_call.1} parent=11 // pred_check
          %p721 = pneg %p289
        $region46: #{tpu_custom_call.1} parent=11 // pred_check_branch
          %723 = sbr.rel (%p721) target = $region48
        $region47: #{tpu_custom_call.1} parent=11 // pred_region
          %s725 = ssub.s32 1024, 1024
          %726 = vsyncadd [#allocation9], %s725
          %s727 = sshll.u32 [#allocation8], 4
          %s728 = int_to_ptr.vmem [resolvable:$true] %s727
          %733 = dma.hbm_to_vmem [thread:$0]  %s10, 1024, %s728, [#allocation9], 64, 64, 4
        $region48: #{tpu_custom_call.1} parent=11 // pred_fallthru
          _
        // Predicated region
        $region49: #{tpu_custom_call.1} parent=11 // pred_check
          %p734 = pneg %p310
        $region50: #{tpu_custom_call.1} parent=11 // pred_check_branch
          %736 = sbr.rel (%p734) target = $region52
        $region51: #{tpu_custom_call.1} parent=11 // pred_region
          _
        $region52: #{tpu_custom_call.1} parent=11 // pred_fallthru
          _
        // Predicated region
        $region53: #{tpu_custom_call.1} parent=11 // pred_check
          %p737 = pneg %p331
        $region54: #{tpu_custom_call.1} parent=11 // pred_check_branch
          %739 = sbr.rel (%p737) target = $region56
        $region55: #{tpu_custom_call.1} parent=11 // pred_region
          %s741 = ssub.s32 1024, 1024
          %742 = vsyncadd [#allocation9], %s741
          %s743 = sshll.u32 [#allocation10], 4
          %s744 = int_to_ptr.vmem [resolvable:$true] %s743
          %749 = dma.hbm_to_vmem [thread:$0]  %s12, 1024, %s744, [#allocation9], 64, 64, 4
        $region56: #{tpu_custom_call.1} parent=11 // pred_fallthru
          _
        // Predicated region
        $region57: #{tpu_custom_call.1} parent=11 // pred_check
          %p750 = pneg %p352
        $region58: #{tpu_custom_call.1} parent=11 // pred_check_branch
          %752 = sbr.rel (%p750) target = $region60
        $region59: #{tpu_custom_call.1} parent=11 // pred_region
          _
        $region60: #{tpu_custom_call.1} parent=11 // pred_fallthru
          _
        // Predicated region
        $region61: #{tpu_custom_call.1} parent=11 // pred_check
          %p753 = pneg %p373
        $region62: #{tpu_custom_call.1} parent=11 // pred_check_branch
          %755 = sbr.rel (%p753) target = $region64
        $region63: #{tpu_custom_call.1} parent=11 // pred_region
          %s757 = ssub.s32 1024, 1024
          %758 = vsyncadd [#allocation12], %s757
          %s759 = sshll.u32 [#allocation11], 4
          %s760 = int_to_ptr.vmem [resolvable:$true] %s759
          %765 = dma.hbm_to_vmem [thread:$0]  %s14, 1024, %s760, [#allocation12], 64, 64, 4
        $region64: #{tpu_custom_call.1} parent=11 // pred_fallthru
          _
        // Predicated region
        $region65: #{tpu_custom_call.1} parent=11 // pred_check
          %p766 = pneg %p394
        $region66: #{tpu_custom_call.1} parent=11 // pred_check_branch
          %768 = sbr.rel (%p766) target = $region68
        $region67: #{tpu_custom_call.1} parent=11 // pred_region
          _
        $region68: #{tpu_custom_call.1} parent=11 // pred_fallthru
          _
        // Predicated region
        $region69: #{tpu_custom_call.1} parent=11 // pred_check
          %p769 = pneg %p415
        $region70: #{tpu_custom_call.1} parent=11 // pred_check_branch
          %771 = sbr.rel (%p769) target = $region72
        $region71: #{tpu_custom_call.1} parent=11 // pred_region
          %s773 = ssub.s32 1024, 1024
          %774 = vsyncadd [#allocation12], %s773
          %s775 = sshll.u32 [#allocation13], 4
          %s776 = int_to_ptr.vmem [resolvable:$true] %s775
          %781 = dma.hbm_to_vmem [thread:$0]  %s16, 1024, %s776, [#allocation12], 64, 64, 4
        $region72: #{tpu_custom_call.1} parent=11 // pred_fallthru
          _
        // Predicated region
        $region73: #{tpu_custom_call.1} parent=11 // pred_check
          %p782 = pneg %p436
        $region74: #{tpu_custom_call.1} parent=11 // pred_check_branch
          %784 = sbr.rel (%p782) target = $region76
        $region75: #{tpu_custom_call.1} parent=11 // pred_region
          _
        $region76: #{tpu_custom_call.1} parent=11 // pred_fallthru
          _
        // Predicated region
        $region77: #{tpu_custom_call.1} parent=11 // pred_check
          %p785 = pneg %p457
        $region78: #{tpu_custom_call.1} parent=11 // pred_check_branch
          %787 = sbr.rel (%p785) target = $region80
        $region79: #{tpu_custom_call.1} parent=11 // pred_region
          %s789 = ssub.s32 1024, 1024
          %790 = vsyncadd [#allocation15], %s789
          %s791 = sshll.u32 [#allocation14], 4
          %s792 = int_to_ptr.vmem [resolvable:$true] %s791
          %797 = dma.hbm_to_vmem [thread:$0]  %s18, 1024, %s792, [#allocation15], 64, 64, 4
        $region80: #{tpu_custom_call.1} parent=11 // pred_fallthru
          _
        // Predicated region
        $region81: #{tpu_custom_call.1} parent=11 // pred_check
          %p798 = pneg %p478
        $region82: #{tpu_custom_call.1} parent=11 // pred_check_branch
          %800 = sbr.rel (%p798) target = $region84
        $region83: #{tpu_custom_call.1} parent=11 // pred_region
          _
        $region84: #{tpu_custom_call.1} parent=11 // pred_fallthru
          _
        // Predicated region
        $region85: #{tpu_custom_call.1} parent=11 // pred_check
          %p801 = pneg %p499
        $region86: #{tpu_custom_call.1} parent=11 // pred_check_branch
          %803 = sbr.rel (%p801) target = $region88
        $region87: #{tpu_custom_call.1} parent=11 // pred_region
          %s805 = ssub.s32 1024, 1024
          %806 = vsyncadd [#allocation15], %s805
          %s807 = sshll.u32 [#allocation16], 4
          %s808 = int_to_ptr.vmem [resolvable:$true] %s807
          %813 = dma.hbm_to_vmem [thread:$0]  %s20, 1024, %s808, [#allocation15], 64, 64, 4
        $region88: #{tpu_custom_call.1} parent=11 // pred_fallthru
          _
        // Predicated region
        $region89: #{tpu_custom_call.1} parent=11 // pred_check
          %p814 = pneg %p520
        $region90: #{tpu_custom_call.1} parent=11 // pred_check_branch
          %816 = sbr.rel (%p814) target = $region92
        $region91: #{tpu_custom_call.1} parent=11 // pred_region
          _
        $region92: #{tpu_custom_call.1} parent=11 // pred_fallthru
          _
        // Predicated region
        $region93: #{tpu_custom_call.1} parent=11 // pred_check
          %p817 = pneg %p541
        $region94: #{tpu_custom_call.1} parent=11 // pred_check_branch
          %819 = sbr.rel (%p817) target = $region96
        $region95: #{tpu_custom_call.1} parent=11 // pred_region
          %s821 = ssub.s32 1024, 1024
          %822 = vsyncadd [#allocation18], %s821
          %s823 = sshll.u32 [#allocation17], 4
          %s824 = int_to_ptr.vmem [resolvable:$true] %s823
          %829 = dma.hbm_to_vmem [thread:$0]  %s22, 1024, %s824, [#allocation18], 64, 64, 4
        $region96: #{tpu_custom_call.1} parent=11 // pred_fallthru
          _
        // Predicated region
        $region97: #{tpu_custom_call.1} parent=11 // pred_check
          %p830 = pneg %p562
        $region98: #{tpu_custom_call.1} parent=11 // pred_check_branch
          %832 = sbr.rel (%p830) target = $region100
        $region99: #{tpu_custom_call.1} parent=11 // pred_region
          _
        $region100: #{tpu_custom_call.1} parent=11 // pred_fallthru
          _
        // Predicated region
        $region101: #{tpu_custom_call.1} parent=11 // pred_check
          %p833 = pneg %p583
        $region102: #{tpu_custom_call.1} parent=11 // pred_check_branch
          %835 = sbr.rel (%p833) target = $region104
        $region103: #{tpu_custom_call.1} parent=11 // pred_region
          %s837 = ssub.s32 2048, 2048
          %838 = vsyncadd [#allocation18], %s837
          %s839 = sshll.u32 [#allocation19], 4
          %s840 = int_to_ptr.vmem [resolvable:$true] %s839
          %845 = dma.hbm_to_vmem [thread:$0]  %s24, 2048, %s840, [#allocation18], 128, 128, 8
        $region104: #{tpu_custom_call.1} parent=11 // pred_fallthru
          _
        // Predicated region
        $region105: #{tpu_custom_call.1} parent=11 // pred_check
          %p846 = pneg %p604
        $region106: #{tpu_custom_call.1} parent=11 // pred_check_branch
          %848 = sbr.rel (%p846) target = $region108
        $region107: #{tpu_custom_call.1} parent=11 // pred_region
          _
        $region108: #{tpu_custom_call.1} parent=11 // pred_fallthru
          _
        // Predicated region
        $region109: #{tpu_custom_call.1} parent=11 // pred_check
          %p849 = pneg %p625
        $region110: #{tpu_custom_call.1} parent=11 // pred_check_branch
          %851 = sbr.rel (%p849) target = $region112
        $region111: #{tpu_custom_call.1} parent=11 // pred_region
          %s853 = ssub.s32 2048, 2048
          %854 = vsyncadd [#allocation21], %s853
          %s855 = sshll.u32 [#allocation20], 4
          %s856 = int_to_ptr.vmem [resolvable:$true] %s855
          %861 = dma.hbm_to_vmem [thread:$0]  %s26, 2048, %s856, [#allocation21], 64, 64, 4
        $region112: #{tpu_custom_call.1} parent=11 // pred_fallthru
          _
        // Predicated region
        $region113: #{tpu_custom_call.1} parent=11 // pred_check
          %p862 = pneg %p646
        $region114: #{tpu_custom_call.1} parent=11 // pred_check_branch
          %864 = sbr.rel (%p862) target = $region116
        $region115: #{tpu_custom_call.1} parent=11 // pred_region
          _
        $region116: #{tpu_custom_call.1} parent=11 // pred_fallthru
          _
      $region12: #{tpu_custom_call.1} parent=5 // pred_fallthru
        _
      %p865 = scmp.lt.s32.totalorder %s48, 2
      // Predicated region
      $region117: #{tpu_custom_call.1} parent=5 // pred_check
        %p866 = pneg %p865
      $region118: #{tpu_custom_call.1} parent=5 // pred_check_branch
        %868 = sbr.rel (%p866) target = $region120
      $region119: #{tpu_custom_call.1} parent=5 // pred_region
        // Predicated region
        $region121: #{tpu_custom_call.1} parent=119 // pred_check
          %p869 = pneg %p68
        $region122: #{tpu_custom_call.1} parent=119 // pred_check_branch
          %871 = sbr.rel (%p869) target = $region124
        $region123: #{tpu_custom_call.1} parent=119 // pred_region
          %s872 = sand.u32 %s58, 1
          %s873 = scalar_lea.sflag [#allocation3], %s872
          %s874 = sand.u32 %s58, 1
          %s875 = smul.addr %s874, 8
          %s876 = scalar_lea.vmem [#allocation2], %s875
          %s878 = ssub.s32 128, 128
          %879 = vsyncadd %s873, %s878
          %s880 = smul.addr %s48, 128
          %s881 = scalar_lea.hbm %s0, %s880
          %s883 = sshll.u32 %s876, 4
          %s884 = int_to_ptr.vmem [resolvable:$true] %s883
          %886 = dma.hbm_to_vmem [thread:$0]  %s881, 128, %s884, %s873
        $region124: #{tpu_custom_call.1} parent=119 // pred_fallthru
          _
        // Predicated region
        $region125: #{tpu_custom_call.1} parent=119 // pred_check
          %p887 = pneg %p94
        $region126: #{tpu_custom_call.1} parent=119 // pred_check_branch
          %889 = sbr.rel (%p887) target = $region128
        $region127: #{tpu_custom_call.1} parent=119 // pred_region
          %s890 = sand.u32 %s48, 1
          %s891 = scalar_lea.sflag [#allocation6], %s890
          %s892 = sand.u32 %s84, 1
          %s893 = smul.addr %s892, 16
          %s894 = scalar_lea.vmem [#allocation5], %s893
          %s896 = ssub.s32 256, 256
          %897 = vsyncadd %s891, %s896
          %s898 = smul.addr %s48, 2
          %s899 = smul.addr %s898, 128
          %s900 = scalar_lea.hbm %s1, %s899
          %s901 = sshll.u32 %s894, 4
          %s902 = int_to_ptr.vmem [resolvable:$true] %s901
          %907 = dma.hbm_to_vmem [thread:$0]  %s900, 256, %s902, %s891, 128, 128, 8
        $region128: #{tpu_custom_call.1} parent=119 // pred_fallthru
          _
      $region120: #{tpu_custom_call.1} parent=5 // pred_fallthru
        _
      %p908 = scmp.le.s32.totalorder 1, %s48
      %p909 = scmp.lt.s32.totalorder %s48, 3
      %p910 = pnand %p908, %p909
      %p911 = pneg %p910
      // Predicated region
      $region129: #{tpu_custom_call.1} parent=5 // pred_check
        _
      $region130: #{tpu_custom_call.1} parent=5 // pred_check_branch
        %913 = sbr.rel (%p910) target = $region132
      $region131: #{tpu_custom_call.1} parent=5 // pred_region
        %s914 = ssub.s32 %s48, 1
        %s915 = sand.u32 %s61, 1
        %s916 = scalar_lea.sflag [#allocation3], %s915
        %s917 = sand.u32 %s61, 1
        %s918 = smul.addr %s917, 8
        %s919 = scalar_lea.vmem [#allocation2], %s918
        // Predicated region
        $region133: #{tpu_custom_call.1} parent=131 // pred_check
          %p920 = pneg %p74
        $region134: #{tpu_custom_call.1} parent=131 // pred_check_branch
          %922 = sbr.rel (%p920) target = $region136
        $region135: #{tpu_custom_call.1} parent=131 // pred_region
          %923 = dma.done %s916, 128
        $region136: #{tpu_custom_call.1} parent=131 // pred_fallthru
          _
        %s924 = sand.u32 %s53, 1
        %s925 = scalar_lea.sflag [#allocation6], %s924
        %s926 = sand.u32 %s87, 1
        %s927 = smul.addr %s926, 16
        %s928 = scalar_lea.vmem [#allocation5], %s927
        // Predicated region
        $region137: #{tpu_custom_call.1} parent=131 // pred_check
          %p929 = pneg %p100
        $region138: #{tpu_custom_call.1} parent=131 // pred_check_branch
          %931 = sbr.rel (%p929) target = $region140
        $region139: #{tpu_custom_call.1} parent=131 // pred_region
          %932 = dma.done %s925, 256
        $region140: #{tpu_custom_call.1} parent=131 // pred_fallthru
          _
        // Predicated region
        $region141: #{tpu_custom_call.1} parent=131 // pred_check
          %p933 = pneg %p247
        $region142: #{tpu_custom_call.1} parent=131 // pred_check_branch
          %935 = sbr.rel (%p933) target = $region144
        $region143: #{tpu_custom_call.1} parent=131 // pred_region
          %936 = dma.done [#allocation6], 1024
        $region144: #{tpu_custom_call.1} parent=131 // pred_fallthru
          _
        // Predicated region
        $region145: #{tpu_custom_call.1} parent=131 // pred_check
          %p937 = pneg %p289
        $region146: #{tpu_custom_call.1} parent=131 // pred_check_branch
          %939 = sbr.rel (%p937) target = $region148
        $region147: #{tpu_custom_call.1} parent=131 // pred_region
          %940 = dma.done [#allocation9], 1024
        $region148: #{tpu_custom_call.1} parent=131 // pred_fallthru
          _
        // Predicated region
        $region149: #{tpu_custom_call.1} parent=131 // pred_check
          %p941 = pneg %p331
        $region150: #{tpu_custom_call.1} parent=131 // pred_check_branch
          %943 = sbr.rel (%p941) target = $region152
        $region151: #{tpu_custom_call.1} parent=131 // pred_region
          %944 = dma.done [#allocation9], 1024
        $region152: #{tpu_custom_call.1} parent=131 // pred_fallthru
          _
        // Predicated region
        $region153: #{tpu_custom_call.1} parent=131 // pred_check
          %p945 = pneg %p373
        $region154: #{tpu_custom_call.1} parent=131 // pred_check_branch
          %947 = sbr.rel (%p945) target = $region156
        $region155: #{tpu_custom_call.1} parent=131 // pred_region
          %948 = dma.done [#allocation12], 1024
        $region156: #{tpu_custom_call.1} parent=131 // pred_fallthru
          _
        // Predicated region
        $region157: #{tpu_custom_call.1} parent=131 // pred_check
          %p949 = pneg %p415
        $region158: #{tpu_custom_call.1} parent=131 // pred_check_branch
          %951 = sbr.rel (%p949) target = $region160
        $region159: #{tpu_custom_call.1} parent=131 // pred_region
          %952 = dma.done [#allocation12], 1024
        $region160: #{tpu_custom_call.1} parent=131 // pred_fallthru
          _
        // Predicated region
        $region161: #{tpu_custom_call.1} parent=131 // pred_check
          %p953 = pneg %p457
        $region162: #{tpu_custom_call.1} parent=131 // pred_check_branch
          %955 = sbr.rel (%p953) target = $region164
        $region163: #{tpu_custom_call.1} parent=131 // pred_region
          %956 = dma.done [#allocation15], 1024
        $region164: #{tpu_custom_call.1} parent=131 // pred_fallthru
          _
        // Predicated region
        $region165: #{tpu_custom_call.1} parent=131 // pred_check
          %p957 = pneg %p499
        $region166: #{tpu_custom_call.1} parent=131 // pred_check_branch
          %959 = sbr.rel (%p957) target = $region168
        $region167: #{tpu_custom_call.1} parent=131 // pred_region
          %960 = dma.done [#allocation15], 1024
        $region168: #{tpu_custom_call.1} parent=131 // pred_fallthru
          _
        // Predicated region
        $region169: #{tpu_custom_call.1} parent=131 // pred_check
          %p961 = pneg %p541
        $region170: #{tpu_custom_call.1} parent=131 // pred_check_branch
          %963 = sbr.rel (%p961) target = $region172
        $region171: #{tpu_custom_call.1} parent=131 // pred_region
          %964 = dma.done [#allocation18], 1024
        $region172: #{tpu_custom_call.1} parent=131 // pred_fallthru
          _
        // Predicated region
        $region173: #{tpu_custom_call.1} parent=131 // pred_check
          %p965 = pneg %p583
        $region174: #{tpu_custom_call.1} parent=131 // pred_check_branch
          %967 = sbr.rel (%p965) target = $region176
        $region175: #{tpu_custom_call.1} parent=131 // pred_region
          %968 = dma.done [#allocation18], 2048
        $region176: #{tpu_custom_call.1} parent=131 // pred_fallthru
          _
        // Predicated region
        $region177: #{tpu_custom_call.1} parent=131 // pred_check
          %p969 = pneg %p625
        $region178: #{tpu_custom_call.1} parent=131 // pred_check_branch
          %971 = sbr.rel (%p969) target = $region180
        $region179: #{tpu_custom_call.1} parent=131 // pred_region
          %972 = dma.done [#allocation21], 2048
        $region180: #{tpu_custom_call.1} parent=131 // pred_fallthru
          _
        %s973 = sand.u32 %s61, 1
        %s974 = scalar_lea.sflag [#allocation3], %s973
        %s975 = sand.u32 %s61, 1
        %s976 = smul.addr %s975, 8
        %s977 = scalar_lea.vmem [#allocation2], %s976
        %p978 = pneg %p74
        %p979 = pneg %p71
        %s980 = sand.u32 %s53, 1
        %s981 = scalar_lea.sflag [#allocation6], %s980
        %s982 = sand.u32 %s87, 1
        %s983 = smul.addr %s982, 16
        %s984 = scalar_lea.vmem [#allocation5], %s983
        %p985 = pneg %p100
        %p986 = pneg %p97
        %p987 = pneg %p121
        %p988 = pneg %p118
        %p989 = pneg %p142
        %p990 = pneg %p139
        %p991 = pneg %p163
        %p992 = pneg %p160
        %p993 = pneg %p184
        %p994 = pneg %p181
        %p995 = pneg %p205
        %p996 = pneg %p202
        %p997 = pneg %p226
        %p998 = pneg %p223
        %p999 = pneg %p247
        %p1000 = pneg %p244
        %p1001 = pneg %p268
        %p1002 = pneg %p265
        %p1003 = pneg %p289
        %p1004 = pneg %p286
        %p1005 = pneg %p310
        %p1006 = pneg %p307
        %p1007 = pneg %p331
        %p1008 = pneg %p328
        %p1009 = pneg %p352
        %p1010 = pneg %p349
        %p1011 = pneg %p373
        %p1012 = pneg %p370
        %p1013 = pneg %p394
        %p1014 = pneg %p391
        %p1015 = pneg %p415
        %p1016 = pneg %p412
        %p1017 = pneg %p436
        %p1018 = pneg %p433
        %p1019 = pneg %p457
        %p1020 = pneg %p454
        %p1021 = pneg %p478
        %p1022 = pneg %p475
        %p1023 = pneg %p499
        %p1024 = pneg %p496
        %p1025 = pneg %p520
        %p1026 = pneg %p517
        %p1027 = pneg %p541
        %p1028 = pneg %p538
        %p1029 = pneg %p562
        %p1030 = pneg %p559
        %p1031 = pneg %p583
        %p1032 = pneg %p580
        %p1033 = pneg %p604
        %p1034 = pneg %p601
        %p1035 = pneg %p625
        %p1036 = pneg %p622
        %p1037 = pneg %p646
        %p1038 = pneg %p643
        %p1039 = pneg %p672
        %p1040 = pneg %p669
        %s1041 = sand.u32 %s659, 1
        %s1042 = scalar_lea.sflag [#allocation4], %s1041
        %s1043 = sand.u32 %s659, 1
        %s1044 = smul.addr %s1043, 8
        %s1045 = scalar_lea.vmem [#allocation22], %s1044
        %v1047 = vld [vmem:[%s919] sm:$0xff]
        %v1048 = vld [vmem:[%s928] sm:$0xff]
        %v1049 = vld [vmem:[%s928 + $0x8] sm:$0xff]
        %v1050 = vld [vmem:[%s2] sm:$0x1]
        %v1051 = vld [vmem:[%s3] sm:$0x1]
        %1052 = vadd.xlane.f32.xlu0 %v1047
        %v1053 = vpop.xlane.xlu0 %1052
        %v1054 = vrcp.pop 128.0
        %v1055 = vmul.f32 %v1053, %v1054
        %v1056 = vsub.f32 %v1047, %v1055
        %v1057 = vmul.f32 %v1056, %v1056
        %1058 = vadd.xlane.f32.xlu0 %v1057
        %v1059 = vpop.xlane.xlu0 %1058
        %v1060 = vmul.f32 %v1059, %v1054
        %v1061 = vadd.f32 %v1060, 1e-05
        %v1062 = vrsqrt.pop %v1061
        %v1063 = vmul.f32 %v1056, %v1062
        %v1065 = vlaneseq
        %v1066 = vshrl.u32 %v1065, 7
        %v1067 = vsub.s32 0, %v1066
        %v1068 = vrot.slane %v1050, %v1067
        %v1070 = vmul.f32 %v1063, %v1068
        %v1072 = vlaneseq
        %v1073 = vshrl.u32 %v1072, 7
        %v1074 = vsub.s32 0, %v1073
        %v1075 = vrot.slane %v1051, %v1074
        %v1077 = vadd.f32 %v1070, %v1075
        %v1078 = vpack.c.bf16 %v1077, %v1077
        %v1079 = vld [vmem:[#allocation7] sm:$0xf]
        %v1080 = vld [vmem:[#allocation7 + $0x4] sm:$0xf]
        %v1081 = vld [vmem:[#allocation7 + $0x8] sm:$0xf]
        %v1082 = vld [vmem:[#allocation7 + $0xc] sm:$0xf]
        %v1083 = vld [vmem:[#allocation7 + $0x10] sm:$0xf]
        %v1084 = vld [vmem:[#allocation7 + $0x14] sm:$0xf]
        %v1085 = vld [vmem:[#allocation7 + $0x18] sm:$0xf]
        %v1086 = vld [vmem:[#allocation7 + $0x1c] sm:$0xf]
        %v1087 = vld [vmem:[#allocation7 + $0x20] sm:$0xf]
        %v1088 = vld [vmem:[#allocation7 + $0x24] sm:$0xf]
        %v1089 = vld [vmem:[#allocation7 + $0x28] sm:$0xf]
        %v1090 = vld [vmem:[#allocation7 + $0x2c] sm:$0xf]
        %v1091 = vld [vmem:[#allocation7 + $0x30] sm:$0xf]
        %v1092 = vld [vmem:[#allocation7 + $0x34] sm:$0xf]
        %v1093 = vld [vmem:[#allocation7 + $0x38] sm:$0xf]
        %v1094 = vld [vmem:[#allocation7 + $0x3c] sm:$0xf]
        %v1095 = vld [vmem:[%s9] sm:$0x1]
        %v1097 = vlaneseq
        %v1098 = vshrl.u32 %v1097, 7
        %v1099 = vsub.s32 0, %v1098
        %v1100 = vrot.slane %v1095, %v1099
        %v1118 = vunpack.c.l.b16 %v1079
        %v1119 = vunpack.c.l.b16 %v1080
        %v1120 = vunpack.c.l.b16 %v1081
        %v1121 = vunpack.c.l.b16 %v1082
        %v1122 = vunpack.c.l.b16 %v1083
        %v1123 = vunpack.c.l.b16 %v1084
        %v1124 = vunpack.c.l.b16 %v1085
        %v1125 = vunpack.c.l.b16 %v1086
        %v1126 = vunpack.c.l.b16 %v1087
        %v1127 = vunpack.c.l.b16 %v1088
        %v1128 = vunpack.c.l.b16 %v1089
        %v1129 = vunpack.c.l.b16 %v1090
        %v1130 = vunpack.c.l.b16 %v1091
        %v1131 = vunpack.c.l.b16 %v1092
        %v1132 = vunpack.c.l.b16 %v1093
        %v1133 = vunpack.c.l.b16 %v1094
        %v1134 = vpack.c.b16 %v1119, %v1118
        %v1135 = vpack.c.b16 %v1121, %v1120
        %v1136 = vpack.c.b16 %v1123, %v1122
        %v1137 = vpack.c.b16 %v1125, %v1124
        %v1138 = vpack.c.b16 %v1127, %v1126
        %v1139 = vpack.c.b16 %v1129, %v1128
        %v1140 = vpack.c.b16 %v1131, %v1130
        %v1141 = vpack.c.b16 %v1133, %v1132
        %1150 = vmatprep.subr.bf16.mxu0 0
        %1151 = vmatpush1.bf16.msra.mxu0 %v1141
        %1152 = vmatprep.subr.bf16.mxu0 0
        %1153 = vmatpush1.bf16.msra.mxu0 %v1140
        %1154 = vmatprep.subr.bf16.mxu0 0
        %1155 = vmatpush1.bf16.msra.mxu0 %v1139
        %1156 = vmatprep.subr.bf16.mxu0 0
        %1157 = vmatpush1.bf16.msra.mxu0 %v1138
        %1158 = vmatprep.subr.bf16.mxu0 0
        %1159 = vmatpush1.bf16.msra.mxu0 %v1137
        %1160 = vmatprep.subr.bf16.mxu0 0
        %1161 = vmatpush1.bf16.msra.mxu0 %v1136
        %1162 = vmatprep.subr.bf16.mxu0 0
        %1163 = vmatpush1.bf16.msra.mxu0 %v1135
        %1164 = vmatprep.subr.bf16.mxu0 0
        %1165 = vmatpush1.bf16.msra.mxu0 %v1134
        %1166 = vmatprep.subr.bf16.mxu0 0
        %1167 = vmatpush2.bf16.msra.mxu0 0
        %1168 = vmatprep.subr.bf16.mxu0 0
        %1169 = vmatpush2.bf16.msra.mxu0 0
        %1170 = vmatprep.subr.bf16.mxu0 0
        %1171 = vmatpush2.bf16.msra.mxu0 0
        %1172 = vmatprep.subr.bf16.mxu0 0
        %1173 = vmatpush2.bf16.msra.mxu0 0
        %1174 = vmatprep.subr.bf16.mxu0 0
        %1175 = vmatpush2.bf16.msra.mxu0 0
        %1176 = vmatprep.subr.bf16.mxu0 0
        %1177 = vmatpush2.bf16.msra.mxu0 0
        %1178 = vmatprep.subr.bf16.mxu0 0
        %1179 = vmatpush2.bf16.msra.mxu0 0
        %1180 = vmatprep.subr.bf16.mxu0 0
        %1181 = vmatpush2.bf16.msra.mxu0 0
        %1182 = vmatprep.mubr.bf16.mxu0 0
        %1183 = vmatmul.mubr.bf16.gmra.mxu0 %v1078
        %v1184 = vpop.f32.mrf.mxu0
        %v1185 = vadd.f32 %v1100, %v1184
        %v1186 = vpop.f32.mrf.mxu0
        %v1187 = vpop.f32.mrf.mxu0
        %v1188 = vpop.f32.mrf.mxu0
        %1189 = vdwg.mxu0
        %v1190 = vld [vmem:[#allocation8] sm:$0xf]
        %v1191 = vld [vmem:[#allocation8 + $0x4] sm:$0xf]
        %v1192 = vld [vmem:[#allocation8 + $0x8] sm:$0xf]
        %v1193 = vld [vmem:[#allocation8 + $0xc] sm:$0xf]
        %v1194 = vld [vmem:[#allocation8 + $0x10] sm:$0xf]
        %v1195 = vld [vmem:[#allocation8 + $0x14] sm:$0xf]
        %v1196 = vld [vmem:[#allocation8 + $0x18] sm:$0xf]
        %v1197 = vld [vmem:[#allocation8 + $0x1c] sm:$0xf]
        %v1198 = vld [vmem:[#allocation8 + $0x20] sm:$0xf]
        %v1199 = vld [vmem:[#allocation8 + $0x24] sm:$0xf]
        %v1200 = vld [vmem:[#allocation8 + $0x28] sm:$0xf]
        %v1201 = vld [vmem:[#allocation8 + $0x2c] sm:$0xf]
        %v1202 = vld [vmem:[#allocation8 + $0x30] sm:$0xf]
        %v1203 = vld [vmem:[#allocation8 + $0x34] sm:$0xf]
        %v1204 = vld [vmem:[#allocation8 + $0x38] sm:$0xf]
        %v1205 = vld [vmem:[#allocation8 + $0x3c] sm:$0xf]
        %v1206 = vld [vmem:[%s11] sm:$0x1]
        %v1208 = vlaneseq
        %v1209 = vshrl.u32 %v1208, 7
        %v1210 = vsub.s32 0, %v1209
        %v1211 = vrot.slane %v1206, %v1210
        %v1229 = vunpack.c.l.b16 %v1190
        %v1230 = vunpack.c.l.b16 %v1191
        %v1231 = vunpack.c.l.b16 %v1192
        %v1232 = vunpack.c.l.b16 %v1193
        %v1233 = vunpack.c.l.b16 %v1194
        %v1234 = vunpack.c.l.b16 %v1195
        %v1235 = vunpack.c.l.b16 %v1196
        %v1236 = vunpack.c.l.b16 %v1197
        %v1237 = vunpack.c.l.b16 %v1198
        %v1238 = vunpack.c.l.b16 %v1199
        %v1239 = vunpack.c.l.b16 %v1200
        %v1240 = vunpack.c.l.b16 %v1201
        %v1241 = vunpack.c.l.b16 %v1202
        %v1242 = vunpack.c.l.b16 %v1203
        %v1243 = vunpack.c.l.b16 %v1204
        %v1244 = vunpack.c.l.b16 %v1205
        %v1245 = vpack.c.b16 %v1230, %v1229
        %v1246 = vpack.c.b16 %v1232, %v1231
        %v1247 = vpack.c.b16 %v1234, %v1233
        %v1248 = vpack.c.b16 %v1236, %v1235
        %v1249 = vpack.c.b16 %v1238, %v1237
        %v1250 = vpack.c.b16 %v1240, %v1239
        %v1251 = vpack.c.b16 %v1242, %v1241
        %v1252 = vpack.c.b16 %v1244, %v1243
        %1261 = vmatprep.subr.bf16.mxu0 0
        %1262 = vmatpush1.bf16.msra.mxu0 %v1252
        %1263 = vmatprep.subr.bf16.mxu0 0
        %1264 = vmatpush1.bf16.msra.mxu0 %v1251
        %1265 = vmatprep.subr.bf16.mxu0 0
        %1266 = vmatpush1.bf16.msra.mxu0 %v1250
        %1267 = vmatprep.subr.bf16.mxu0 0
        %1268 = vmatpush1.bf16.msra.mxu0 %v1249
        %1269 = vmatprep.subr.bf16.mxu0 0
        %1270 = vmatpush1.bf16.msra.mxu0 %v1248
        %1271 = vmatprep.subr.bf16.mxu0 0
        %1272 = vmatpush1.bf16.msra.mxu0 %v1247
        %1273 = vmatprep.subr.bf16.mxu0 0
        %1274 = vmatpush1.bf16.msra.mxu0 %v1246
        %1275 = vmatprep.subr.bf16.mxu0 0
        %1276 = vmatpush1.bf16.msra.mxu0 %v1245
        %1277 = vmatprep.subr.bf16.mxu0 0
        %1278 = vmatpush2.bf16.msra.mxu0 0
        %1279 = vmatprep.subr.bf16.mxu0 0
        %1280 = vmatpush2.bf16.msra.mxu0 0
        %1281 = vmatprep.subr.bf16.mxu0 0
        %1282 = vmatpush2.bf16.msra.mxu0 0
        %1283 = vmatprep.subr.bf16.mxu0 0
        %1284 = vmatpush2.bf16.msra.mxu0 0
        %1285 = vmatprep.subr.bf16.mxu0 0
        %1286 = vmatpush2.bf16.msra.mxu0 0
        %1287 = vmatprep.subr.bf16.mxu0 0
        %1288 = vmatpush2.bf16.msra.mxu0 0
        %1289 = vmatprep.subr.bf16.mxu0 0
        %1290 = vmatpush2.bf16.msra.mxu0 0
        %1291 = vmatprep.subr.bf16.mxu0 0
        %1292 = vmatpush2.bf16.msra.mxu0 0
        %1293 = vmatprep.mubr.bf16.mxu0 0
        %1294 = vmatmul.mubr.bf16.gmra.mxu0 %v1078
        %v1295 = vpop.f32.mrf.mxu0
        %v1296 = vadd.f32 %v1211, %v1295
        %v1297 = vpop.f32.mrf.mxu0
        %v1298 = vpop.f32.mrf.mxu0
        %v1299 = vpop.f32.mrf.mxu0
        %1300 = vdwg.mxu0
        %v1301 = vld [vmem:[#allocation10] sm:$0xf]
        %v1302 = vld [vmem:[#allocation10 + $0x4] sm:$0xf]
        %v1303 = vld [vmem:[#allocation10 + $0x8] sm:$0xf]
        %v1304 = vld [vmem:[#allocation10 + $0xc] sm:$0xf]
        %v1305 = vld [vmem:[#allocation10 + $0x10] sm:$0xf]
        %v1306 = vld [vmem:[#allocation10 + $0x14] sm:$0xf]
        %v1307 = vld [vmem:[#allocation10 + $0x18] sm:$0xf]
        %v1308 = vld [vmem:[#allocation10 + $0x1c] sm:$0xf]
        %v1309 = vld [vmem:[#allocation10 + $0x20] sm:$0xf]
        %v1310 = vld [vmem:[#allocation10 + $0x24] sm:$0xf]
        %v1311 = vld [vmem:[#allocation10 + $0x28] sm:$0xf]
        %v1312 = vld [vmem:[#allocation10 + $0x2c] sm:$0xf]
        %v1313 = vld [vmem:[#allocation10 + $0x30] sm:$0xf]
        %v1314 = vld [vmem:[#allocation10 + $0x34] sm:$0xf]
        %v1315 = vld [vmem:[#allocation10 + $0x38] sm:$0xf]
        %v1316 = vld [vmem:[#allocation10 + $0x3c] sm:$0xf]
        %v1317 = vld [vmem:[%s13] sm:$0x1]
        %v1319 = vlaneseq
        %v1320 = vshrl.u32 %v1319, 7
        %v1321 = vsub.s32 0, %v1320
        %v1322 = vrot.slane %v1317, %v1321
        %v1340 = vunpack.c.l.b16 %v1301
        %v1341 = vunpack.c.l.b16 %v1302
        %v1342 = vunpack.c.l.b16 %v1303
        %v1343 = vunpack.c.l.b16 %v1304
        %v1344 = vunpack.c.l.b16 %v1305
        %v1345 = vunpack.c.l.b16 %v1306
        %v1346 = vunpack.c.l.b16 %v1307
        %v1347 = vunpack.c.l.b16 %v1308
        %v1348 = vunpack.c.l.b16 %v1309
        %v1349 = vunpack.c.l.b16 %v1310
        %v1350 = vunpack.c.l.b16 %v1311
        %v1351 = vunpack.c.l.b16 %v1312
        %v1352 = vunpack.c.l.b16 %v1313
        %v1353 = vunpack.c.l.b16 %v1314
        %v1354 = vunpack.c.l.b16 %v1315
        %v1355 = vunpack.c.l.b16 %v1316
        %v1356 = vpack.c.b16 %v1341, %v1340
        %v1357 = vpack.c.b16 %v1343, %v1342
        %v1358 = vpack.c.b16 %v1345, %v1344
        %v1359 = vpack.c.b16 %v1347, %v1346
        %v1360 = vpack.c.b16 %v1349, %v1348
        %v1361 = vpack.c.b16 %v1351, %v1350
        %v1362 = vpack.c.b16 %v1353, %v1352
        %v1363 = vpack.c.b16 %v1355, %v1354
        %1372 = vmatprep.subr.bf16.mxu0 0
        %1373 = vmatpush1.bf16.msra.mxu0 %v1363
        %1374 = vmatprep.subr.bf16.mxu0 0
        %1375 = vmatpush1.bf16.msra.mxu0 %v1362
        %1376 = vmatprep.subr.bf16.mxu0 0
        %1377 = vmatpush1.bf16.msra.mxu0 %v1361
        %1378 = vmatprep.subr.bf16.mxu0 0
        %1379 = vmatpush1.bf16.msra.mxu0 %v1360
        %1380 = vmatprep.subr.bf16.mxu0 0
        %1381 = vmatpush1.bf16.msra.mxu0 %v1359
        %1382 = vmatprep.subr.bf16.mxu0 0
        %1383 = vmatpush1.bf16.msra.mxu0 %v1358
        %1384 = vmatprep.subr.bf16.mxu0 0
        %1385 = vmatpush1.bf16.msra.mxu0 %v1357
        %1386 = vmatprep.subr.bf16.mxu0 0
        %1387 = vmatpush1.bf16.msra.mxu0 %v1356
        %1388 = vmatprep.subr.bf16.mxu0 0
        %1389 = vmatpush2.bf16.msra.mxu0 0
        %1390 = vmatprep.subr.bf16.mxu0 0
        %1391 = vmatpush2.bf16.msra.mxu0 0
        %1392 = vmatprep.subr.bf16.mxu0 0
        %1393 = vmatpush2.bf16.msra.mxu0 0
        %1394 = vmatprep.subr.bf16.mxu0 0
        %1395 = vmatpush2.bf16.msra.mxu0 0
        %1396 = vmatprep.subr.bf16.mxu0 0
        %1397 = vmatpush2.bf16.msra.mxu0 0
        %1398 = vmatprep.subr.bf16.mxu0 0
        %1399 = vmatpush2.bf16.msra.mxu0 0
        %1400 = vmatprep.subr.bf16.mxu0 0
        %1401 = vmatpush2.bf16.msra.mxu0 0
        %1402 = vmatprep.subr.bf16.mxu0 0
        %1403 = vmatpush2.bf16.msra.mxu0 0
        %1404 = vmatprep.mubr.bf16.mxu0 0
        %1405 = vmatmul.mubr.bf16.gmra.mxu0 %v1078
        %v1406 = vpop.f32.mrf.mxu0
        %v1407 = vadd.f32 %v1322, %v1406
        %v1408 = vpop.f32.mrf.mxu0
        %v1409 = vpop.f32.mrf.mxu0
        %v1410 = vpop.f32.mrf.mxu0
        %1411 = vdwg.mxu0
        %1413 = vrot.lane.b32.xlu0 %v1185, 112
        %v1414 = vpop.permute.xlu0 %1413
        %1416 = vrot.lane.b32.xlu0 %v1185, 96
        %v1417 = vpop.permute.xlu0 %1416
        %1419 = vrot.lane.b32.xlu0 %v1185, 80
        %v1420 = vpop.permute.xlu0 %1419
        %1422 = vrot.lane.b32.xlu0 %v1185, 64
        %v1423 = vpop.permute.xlu0 %1422
        %1425 = vrot.lane.b32.xlu0 %v1185, 48
        %v1426 = vpop.permute.xlu0 %1425
        %1428 = vrot.lane.b32.xlu0 %v1185, 32
        %v1429 = vpop.permute.xlu0 %1428
        %1431 = vrot.lane.b32.xlu0 %v1185, 16
        %v1432 = vpop.permute.xlu0 %1431
        %v1434 = vcombine.low %v1185, %v1417
        %v1435 = vcombine.high %v1185, %v1417
        %v1437 = vunpack.c.l.s4 1983009808
        %v1438 = vunpack.c.0.s8 %v1437
        %v1439 = vlaneseq
        %v1440 = vshrl.u32 %v1439, 7
        %v1441 = vsub.s32 %v1438, %v1440
        %v1442 = vrot.slane %v1434, %v1441
        %v1444 = vunpack.c.l.s4 1983009808
        %v1445 = vunpack.c.0.s8 %v1444
        %v1446 = vlaneseq
        %v1447 = vshrl.u32 %v1446, 7
        %v1448 = vsub.s32 %v1445, %v1447
        %v1449 = vrot.slane %v1435, %v1448
        %v1450 = vcombine.low %v1414, %v1420
        %v1451 = vcombine.high %v1414, %v1420
        %v1453 = vunpack.c.l.s4 1983009808
        %v1454 = vunpack.c.0.s8 %v1453
        %v1455 = vlaneseq
        %v1456 = vshrl.u32 %v1455, 7
        %v1457 = vsub.s32 %v1454, %v1456
        %v1458 = vrot.slane %v1450, %v1457
        %v1460 = vunpack.c.l.s4 1983009808
        %v1461 = vunpack.c.0.s8 %v1460
        %v1462 = vlaneseq
        %v1463 = vshrl.u32 %v1462, 7
        %v1464 = vsub.s32 %v1461, %v1463
        %v1465 = vrot.slane %v1451, %v1464
        %v1466 = vcombine.low %v1423, %v1429
        %v1467 = vcombine.high %v1423, %v1429
        %v1469 = vunpack.c.l.s4 1983009808
        %v1470 = vunpack.c.0.s8 %v1469
        %v1471 = vlaneseq
        %v1472 = vshrl.u32 %v1471, 7
        %v1473 = vsub.s32 %v1470, %v1472
        %v1474 = vrot.slane %v1466, %v1473
        %v1476 = vunpack.c.l.s4 1983009808
        %v1477 = vunpack.c.0.s8 %v1476
        %v1478 = vlaneseq
        %v1479 = vshrl.u32 %v1478, 7
        %v1480 = vsub.s32 %v1477, %v1479
        %v1481 = vrot.slane %v1467, %v1480
        %v1482 = vcombine.low %v1426, %v1432
        %v1483 = vcombine.high %v1426, %v1432
        %v1485 = vunpack.c.l.s4 1983009808
        %v1486 = vunpack.c.0.s8 %v1485
        %v1487 = vlaneseq
        %v1488 = vshrl.u32 %v1487, 7
        %v1489 = vsub.s32 %v1486, %v1488
        %v1490 = vrot.slane %v1482, %v1489
        %v1492 = vunpack.c.l.s4 1983009808
        %v1493 = vunpack.c.0.s8 %v1492
        %v1494 = vlaneseq
        %v1495 = vshrl.u32 %v1494, 7
        %v1496 = vsub.s32 %v1493, %v1495
        %v1497 = vrot.slane %v1483, %v1496
        %v1498 = vcombine.low %v1442, %v1458
        %v1499 = vcombine.high %v1442, %v1458
        %v1501 = vunpack.c.l.s4 1934713408
        %v1502 = vunpack.c.0.s8 %v1501
        %v1503 = vlaneseq
        %v1504 = vshrl.u32 %v1503, 7
        %v1505 = vsub.s32 %v1502, %v1504
        %v1506 = vrot.slane %v1498, %v1505
        %v1508 = vunpack.c.l.s4 1934713408
        %v1509 = vunpack.c.0.s8 %v1508
        %v1510 = vlaneseq
        %v1511 = vshrl.u32 %v1510, 7
        %v1512 = vsub.s32 %v1509, %v1511
        %v1513 = vrot.slane %v1499, %v1512
        %v1514 = vcombine.low %v1449, %v1465
        %v1515 = vcombine.high %v1449, %v1465
        %v1517 = vunpack.c.l.s4 1934713408
        %v1518 = vunpack.c.0.s8 %v1517
        %v1519 = vlaneseq
        %v1520 = vshrl.u32 %v1519, 7
        %v1521 = vsub.s32 %v1518, %v1520
        %v1522 = vrot.slane %v1514, %v1521
        %v1524 = vunpack.c.l.s4 1934713408
        %v1525 = vunpack.c.0.s8 %v1524
        %v1526 = vlaneseq
        %v1527 = vshrl.u32 %v1526, 7
        %v1528 = vsub.s32 %v1525, %v1527
        %v1529 = vrot.slane %v1515, %v1528
        %v1530 = vcombine.low %v1474, %v1490
        %v1531 = vcombine.high %v1474, %v1490
        %v1533 = vunpack.c.l.s4 1934713408
        %v1534 = vunpack.c.0.s8 %v1533
        %v1535 = vlaneseq
        %v1536 = vshrl.u32 %v1535, 7
        %v1537 = vsub.s32 %v1534, %v1536
        %v1538 = vrot.slane %v1530, %v1537
        %v1540 = vunpack.c.l.s4 1934713408
        %v1541 = vunpack.c.0.s8 %v1540
        %v1542 = vlaneseq
        %v1543 = vshrl.u32 %v1542, 7
        %v1544 = vsub.s32 %v1541, %v1543
        %v1545 = vrot.slane %v1531, %v1544
        %v1546 = vcombine.low %v1481, %v1497
        %v1547 = vcombine.high %v1481, %v1497
        %v1549 = vunpack.c.l.s4 1934713408
        %v1550 = vunpack.c.0.s8 %v1549
        %v1551 = vlaneseq
        %v1552 = vshrl.u32 %v1551, 7
        %v1553 = vsub.s32 %v1550, %v1552
        %v1554 = vrot.slane %v1546, %v1553
        %v1556 = vunpack.c.l.s4 1934713408
        %v1557 = vunpack.c.0.s8 %v1556
        %v1558 = vlaneseq
        %v1559 = vshrl.u32 %v1558, 7
        %v1560 = vsub.s32 %v1557, %v1559
        %v1561 = vrot.slane %v1547, %v1560
        %v1562 = vcombine.low %v1506, %v1538
        %v1563 = vcombine.high %v1506, %v1538
        %v1564 = vcombine.low %v1513, %v1545
        %v1565 = vcombine.high %v1513, %v1545
        %v1566 = vcombine.low %v1522, %v1554
        %v1567 = vcombine.high %v1522, %v1554
        %v1568 = vcombine.low %v1529, %v1561
        %v1569 = vcombine.high %v1529, %v1561
        %v1570 = vcombine.low %v1562, %v1564
        %v1571 = vcombine.high %v1562, %v1564
        %v1573 = vunpack.c.l.s4 1983009808
        %v1574 = vunpack.c.0.s8 %v1573
        %v1575 = vlaneseq
        %v1576 = vshrl.u32 %v1575, 7
        %v1577 = vsub.s32 %v1574, %v1576
        %v1578 = vrot.slane %v1570, %v1577
        %v1580 = vunpack.c.l.s4 1983009808
        %v1581 = vunpack.c.0.s8 %v1580
        %v1582 = vlaneseq
        %v1583 = vshrl.u32 %v1582, 7
        %v1584 = vsub.s32 %v1581, %v1583
        %v1585 = vrot.slane %v1571, %v1584
        %v1586 = vcombine.low %v1563, %v1565
        %v1587 = vcombine.high %v1563, %v1565
        %v1589 = vunpack.c.l.s4 1983009808
        %v1590 = vunpack.c.0.s8 %v1589
        %v1591 = vlaneseq
        %v1592 = vshrl.u32 %v1591, 7
        %v1593 = vsub.s32 %v1590, %v1592
        %v1594 = vrot.slane %v1586, %v1593
        %v1596 = vunpack.c.l.s4 1983009808
        %v1597 = vunpack.c.0.s8 %v1596
        %v1598 = vlaneseq
        %v1599 = vshrl.u32 %v1598, 7
        %v1600 = vsub.s32 %v1597, %v1599
        %v1601 = vrot.slane %v1587, %v1600
        %v1602 = vcombine.low %v1566, %v1568
        %v1603 = vcombine.high %v1566, %v1568
        %v1605 = vunpack.c.l.s4 1983009808
        %v1606 = vunpack.c.0.s8 %v1605
        %v1607 = vlaneseq
        %v1608 = vshrl.u32 %v1607, 7
        %v1609 = vsub.s32 %v1606, %v1608
        %v1610 = vrot.slane %v1602, %v1609
        %v1612 = vunpack.c.l.s4 1983009808
        %v1613 = vunpack.c.0.s8 %v1612
        %v1614 = vlaneseq
        %v1615 = vshrl.u32 %v1614, 7
        %v1616 = vsub.s32 %v1613, %v1615
        %v1617 = vrot.slane %v1603, %v1616
        %v1618 = vcombine.low %v1567, %v1569
        %v1619 = vcombine.high %v1567, %v1569
        %v1621 = vunpack.c.l.s4 1983009808
        %v1622 = vunpack.c.0.s8 %v1621
        %v1623 = vlaneseq
        %v1624 = vshrl.u32 %v1623, 7
        %v1625 = vsub.s32 %v1622, %v1624
        %v1626 = vrot.slane %v1618, %v1625
        %v1628 = vunpack.c.l.s4 1983009808
        %v1629 = vunpack.c.0.s8 %v1628
        %v1630 = vlaneseq
        %v1631 = vshrl.u32 %v1630, 7
        %v1632 = vsub.s32 %v1629, %v1631
        %v1633 = vrot.slane %v1619, %v1632
        %v1634 = vcombine.low %v1578, %v1594
        %v1635 = vcombine.high %v1578, %v1594
        %v1637 = vunpack.c.l.s4 1934713408
        %v1638 = vunpack.c.0.s8 %v1637
        %v1639 = vlaneseq
        %v1640 = vshrl.u32 %v1639, 7
        %v1641 = vsub.s32 %v1638, %v1640
        %v1642 = vrot.slane %v1634, %v1641
        %v1644 = vunpack.c.l.s4 1934713408
        %v1645 = vunpack.c.0.s8 %v1644
        %v1646 = vlaneseq
        %v1647 = vshrl.u32 %v1646, 7
        %v1648 = vsub.s32 %v1645, %v1647
        %v1649 = vrot.slane %v1635, %v1648
        %v1650 = vcombine.low %v1585, %v1601
        %v1651 = vcombine.high %v1585, %v1601
        %v1653 = vunpack.c.l.s4 1934713408
        %v1654 = vunpack.c.0.s8 %v1653
        %v1655 = vlaneseq
        %v1656 = vshrl.u32 %v1655, 7
        %v1657 = vsub.s32 %v1654, %v1656
        %v1658 = vrot.slane %v1650, %v1657
        %v1660 = vunpack.c.l.s4 1934713408
        %v1661 = vunpack.c.0.s8 %v1660
        %v1662 = vlaneseq
        %v1663 = vshrl.u32 %v1662, 7
        %v1664 = vsub.s32 %v1661, %v1663
        %v1665 = vrot.slane %v1651, %v1664
        %v1666 = vcombine.low %v1610, %v1626
        %v1667 = vcombine.high %v1610, %v1626
        %v1669 = vunpack.c.l.s4 1934713408
        %v1670 = vunpack.c.0.s8 %v1669
        %v1671 = vlaneseq
        %v1672 = vshrl.u32 %v1671, 7
        %v1673 = vsub.s32 %v1670, %v1672
        %v1674 = vrot.slane %v1666, %v1673
        %v1676 = vunpack.c.l.s4 1934713408
        %v1677 = vunpack.c.0.s8 %v1676
        %v1678 = vlaneseq
        %v1679 = vshrl.u32 %v1678, 7
        %v1680 = vsub.s32 %v1677, %v1679
        %v1681 = vrot.slane %v1667, %v1680
        %v1682 = vcombine.low %v1617, %v1633
        %v1683 = vcombine.high %v1617, %v1633
        %v1685 = vunpack.c.l.s4 1934713408
        %v1686 = vunpack.c.0.s8 %v1685
        %v1687 = vlaneseq
        %v1688 = vshrl.u32 %v1687, 7
        %v1689 = vsub.s32 %v1686, %v1688
        %v1690 = vrot.slane %v1682, %v1689
        %v1692 = vunpack.c.l.s4 1934713408
        %v1693 = vunpack.c.0.s8 %v1692
        %v1694 = vlaneseq
        %v1695 = vshrl.u32 %v1694, 7
        %v1696 = vsub.s32 %v1693, %v1695
        %v1697 = vrot.slane %v1683, %v1696
        %v1698 = vcombine.low %v1642, %v1674
        %v1699 = vcombine.high %v1642, %v1674
        %v1700 = vcombine.low %v1649, %v1681
        %v1701 = vcombine.high %v1649, %v1681
        %v1702 = vcombine.low %v1658, %v1690
        %v1703 = vcombine.high %v1658, %v1690
        %v1704 = vcombine.low %v1665, %v1697
        %v1705 = vcombine.high %v1665, %v1697
        %v1706 = vpack.c.bf16 %v1698, %v1698
        %v1707 = vpack.c.bf16 %v1699, %v1699
        %v1708 = vpack.c.bf16 %v1700, %v1700
        %v1709 = vpack.c.bf16 %v1701, %v1701
        %v1710 = vpack.c.bf16 %v1702, %v1702
        %v1711 = vpack.c.bf16 %v1703, %v1703
        %v1712 = vpack.c.bf16 %v1704, %v1704
        %v1713 = vpack.c.bf16 %v1705, %v1705
        %1715 = vrot.lane.b32.xlu0 %v1296, 112
        %v1716 = vpop.permute.xlu0 %1715
        %1718 = vrot.lane.b32.xlu0 %v1296, 96
        %v1719 = vpop.permute.xlu0 %1718
        %1721 = vrot.lane.b32.xlu0 %v1296, 80
        %v1722 = vpop.permute.xlu0 %1721
        %1724 = vrot.lane.b32.xlu0 %v1296, 64
        %v1725 = vpop.permute.xlu0 %1724
        %1727 = vrot.lane.b32.xlu0 %v1296, 48
        %v1728 = vpop.permute.xlu0 %1727
        %1730 = vrot.lane.b32.xlu0 %v1296, 32
        %v1731 = vpop.permute.xlu0 %1730
        %1733 = vrot.lane.b32.xlu0 %v1296, 16
        %v1734 = vpop.permute.xlu0 %1733
        %v1736 = vcombine.low %v1296, %v1719
        %v1737 = vcombine.high %v1296, %v1719
        %v1739 = vunpack.c.l.s4 1983009808
        %v1740 = vunpack.c.0.s8 %v1739
        %v1741 = vlaneseq
        %v1742 = vshrl.u32 %v1741, 7
        %v1743 = vsub.s32 %v1740, %v1742
        %v1744 = vrot.slane %v1736, %v1743
        %v1746 = vunpack.c.l.s4 1983009808
        %v1747 = vunpack.c.0.s8 %v1746
        %v1748 = vlaneseq
        %v1749 = vshrl.u32 %v1748, 7
        %v1750 = vsub.s32 %v1747, %v1749
        %v1751 = vrot.slane %v1737, %v1750
        %v1752 = vcombine.low %v1716, %v1722
        %v1753 = vcombine.high %v1716, %v1722
        %v1755 = vunpack.c.l.s4 1983009808
        %v1756 = vunpack.c.0.s8 %v1755
        %v1757 = vlaneseq
        %v1758 = vshrl.u32 %v1757, 7
        %v1759 = vsub.s32 %v1756, %v1758
        %v1760 = vrot.slane %v1752, %v1759
        %v1762 = vunpack.c.l.s4 1983009808
        %v1763 = vunpack.c.0.s8 %v1762
        %v1764 = vlaneseq
        %v1765 = vshrl.u32 %v1764, 7
        %v1766 = vsub.s32 %v1763, %v1765
        %v1767 = vrot.slane %v1753, %v1766
        %v1768 = vcombine.low %v1725, %v1731
        %v1769 = vcombine.high %v1725, %v1731
        %v1771 = vunpack.c.l.s4 1983009808
        %v1772 = vunpack.c.0.s8 %v1771
        %v1773 = vlaneseq
        %v1774 = vshrl.u32 %v1773, 7
        %v1775 = vsub.s32 %v1772, %v1774
        %v1776 = vrot.slane %v1768, %v1775
        %v1778 = vunpack.c.l.s4 1983009808
        %v1779 = vunpack.c.0.s8 %v1778
        %v1780 = vlaneseq
        %v1781 = vshrl.u32 %v1780, 7
        %v1782 = vsub.s32 %v1779, %v1781
        %v1783 = vrot.slane %v1769, %v1782
        %v1784 = vcombine.low %v1728, %v1734
        %v1785 = vcombine.high %v1728, %v1734
        %v1787 = vunpack.c.l.s4 1983009808
        %v1788 = vunpack.c.0.s8 %v1787
        %v1789 = vlaneseq
        %v1790 = vshrl.u32 %v1789, 7
        %v1791 = vsub.s32 %v1788, %v1790
        %v1792 = vrot.slane %v1784, %v1791
        %v1794 = vunpack.c.l.s4 1983009808
        %v1795 = vunpack.c.0.s8 %v1794
        %v1796 = vlaneseq
        %v1797 = vshrl.u32 %v1796, 7
        %v1798 = vsub.s32 %v1795, %v1797
        %v1799 = vrot.slane %v1785, %v1798
        %v1800 = vcombine.low %v1744, %v1760
        %v1801 = vcombine.high %v1744, %v1760
        %v1803 = vunpack.c.l.s4 1934713408
        %v1804 = vunpack.c.0.s8 %v1803
        %v1805 = vlaneseq
        %v1806 = vshrl.u32 %v1805, 7
        %v1807 = vsub.s32 %v1804, %v1806
        %v1808 = vrot.slane %v1800, %v1807
        %v1810 = vunpack.c.l.s4 1934713408
        %v1811 = vunpack.c.0.s8 %v1810
        %v1812 = vlaneseq
        %v1813 = vshrl.u32 %v1812, 7
        %v1814 = vsub.s32 %v1811, %v1813
        %v1815 = vrot.slane %v1801, %v1814
        %v1816 = vcombine.low %v1751, %v1767
        %v1817 = vcombine.high %v1751, %v1767
        %v1819 = vunpack.c.l.s4 1934713408
        %v1820 = vunpack.c.0.s8 %v1819
        %v1821 = vlaneseq
        %v1822 = vshrl.u32 %v1821, 7
        %v1823 = vsub.s32 %v1820, %v1822
        %v1824 = vrot.slane %v1816, %v1823
        %v1826 = vunpack.c.l.s4 1934713408
        %v1827 = vunpack.c.0.s8 %v1826
        %v1828 = vlaneseq
        %v1829 = vshrl.u32 %v1828, 7
        %v1830 = vsub.s32 %v1827, %v1829
        %v1831 = vrot.slane %v1817, %v1830
        %v1832 = vcombine.low %v1776, %v1792
        %v1833 = vcombine.high %v1776, %v1792
        %v1835 = vunpack.c.l.s4 1934713408
        %v1836 = vunpack.c.0.s8 %v1835
        %v1837 = vlaneseq
        %v1838 = vshrl.u32 %v1837, 7
        %v1839 = vsub.s32 %v1836, %v1838
        %v1840 = vrot.slane %v1832, %v1839
        %v1842 = vunpack.c.l.s4 1934713408
        %v1843 = vunpack.c.0.s8 %v1842
        %v1844 = vlaneseq
        %v1845 = vshrl.u32 %v1844, 7
        %v1846 = vsub.s32 %v1843, %v1845
        %v1847 = vrot.slane %v1833, %v1846
        %v1848 = vcombine.low %v1783, %v1799
        %v1849 = vcombine.high %v1783, %v1799
        %v1851 = vunpack.c.l.s4 1934713408
        %v1852 = vunpack.c.0.s8 %v1851
        %v1853 = vlaneseq
        %v1854 = vshrl.u32 %v1853, 7
        %v1855 = vsub.s32 %v1852, %v1854
        %v1856 = vrot.slane %v1848, %v1855
        %v1858 = vunpack.c.l.s4 1934713408
        %v1859 = vunpack.c.0.s8 %v1858
        %v1860 = vlaneseq
        %v1861 = vshrl.u32 %v1860, 7
        %v1862 = vsub.s32 %v1859, %v1861
        %v1863 = vrot.slane %v1849, %v1862
        %v1864 = vcombine.low %v1808, %v1840
        %v1865 = vcombine.high %v1808, %v1840
        %v1866 = vcombine.low %v1815, %v1847
        %v1867 = vcombine.high %v1815, %v1847
        %v1868 = vcombine.low %v1824, %v1856
        %v1869 = vcombine.high %v1824, %v1856
        %v1870 = vcombine.low %v1831, %v1863
        %v1871 = vcombine.high %v1831, %v1863
        %v1872 = vcombine.low %v1864, %v1866
        %v1873 = vcombine.high %v1864, %v1866
        %v1875 = vunpack.c.l.s4 1983009808
        %v1876 = vunpack.c.0.s8 %v1875
        %v1877 = vlaneseq
        %v1878 = vshrl.u32 %v1877, 7
        %v1879 = vsub.s32 %v1876, %v1878
        %v1880 = vrot.slane %v1872, %v1879
        %v1882 = vunpack.c.l.s4 1983009808
        %v1883 = vunpack.c.0.s8 %v1882
        %v1884 = vlaneseq
        %v1885 = vshrl.u32 %v1884, 7
        %v1886 = vsub.s32 %v1883, %v1885
        %v1887 = vrot.slane %v1873, %v1886
        %v1888 = vcombine.low %v1865, %v1867
        %v1889 = vcombine.high %v1865, %v1867
        %v1891 = vunpack.c.l.s4 1983009808
        %v1892 = vunpack.c.0.s8 %v1891
        %v1893 = vlaneseq
        %v1894 = vshrl.u32 %v1893, 7
        %v1895 = vsub.s32 %v1892, %v1894
        %v1896 = vrot.slane %v1888, %v1895
        %v1898 = vunpack.c.l.s4 1983009808
        %v1899 = vunpack.c.0.s8 %v1898
        %v1900 = vlaneseq
        %v1901 = vshrl.u32 %v1900, 7
        %v1902 = vsub.s32 %v1899, %v1901
        %v1903 = vrot.slane %v1889, %v1902
        %v1904 = vcombine.low %v1868, %v1870
        %v1905 = vcombine.high %v1868, %v1870
        %v1907 = vunpack.c.l.s4 1983009808
        %v1908 = vunpack.c.0.s8 %v1907
        %v1909 = vlaneseq
        %v1910 = vshrl.u32 %v1909, 7
        %v1911 = vsub.s32 %v1908, %v1910
        %v1912 = vrot.slane %v1904, %v1911
        %v1914 = vunpack.c.l.s4 1983009808
        %v1915 = vunpack.c.0.s8 %v1914
        %v1916 = vlaneseq
        %v1917 = vshrl.u32 %v1916, 7
        %v1918 = vsub.s32 %v1915, %v1917
        %v1919 = vrot.slane %v1905, %v1918
        %v1920 = vcombine.low %v1869, %v1871
        %v1921 = vcombine.high %v1869, %v1871
        %v1923 = vunpack.c.l.s4 1983009808
        %v1924 = vunpack.c.0.s8 %v1923
        %v1925 = vlaneseq
        %v1926 = vshrl.u32 %v1925, 7
        %v1927 = vsub.s32 %v1924, %v1926
        %v1928 = vrot.slane %v1920, %v1927
        %v1930 = vunpack.c.l.s4 1983009808
        %v1931 = vunpack.c.0.s8 %v1930
        %v1932 = vlaneseq
        %v1933 = vshrl.u32 %v1932, 7
        %v1934 = vsub.s32 %v1931, %v1933
        %v1935 = vrot.slane %v1921, %v1934
        %v1936 = vcombine.low %v1880, %v1896
        %v1937 = vcombine.high %v1880, %v1896
        %v1939 = vunpack.c.l.s4 1934713408
        %v1940 = vunpack.c.0.s8 %v1939
        %v1941 = vlaneseq
        %v1942 = vshrl.u32 %v1941, 7
        %v1943 = vsub.s32 %v1940, %v1942
        %v1944 = vrot.slane %v1936, %v1943
        %v1946 = vunpack.c.l.s4 1934713408
        %v1947 = vunpack.c.0.s8 %v1946
        %v1948 = vlaneseq
        %v1949 = vshrl.u32 %v1948, 7
        %v1950 = vsub.s32 %v1947, %v1949
        %v1951 = vrot.slane %v1937, %v1950
        %v1952 = vcombine.low %v1887, %v1903
        %v1953 = vcombine.high %v1887, %v1903
        %v1955 = vunpack.c.l.s4 1934713408
        %v1956 = vunpack.c.0.s8 %v1955
        %v1957 = vlaneseq
        %v1958 = vshrl.u32 %v1957, 7
        %v1959 = vsub.s32 %v1956, %v1958
        %v1960 = vrot.slane %v1952, %v1959
        %v1962 = vunpack.c.l.s4 1934713408
        %v1963 = vunpack.c.0.s8 %v1962
        %v1964 = vlaneseq
        %v1965 = vshrl.u32 %v1964, 7
        %v1966 = vsub.s32 %v1963, %v1965
        %v1967 = vrot.slane %v1953, %v1966
        %v1968 = vcombine.low %v1912, %v1928
        %v1969 = vcombine.high %v1912, %v1928
        %v1971 = vunpack.c.l.s4 1934713408
        %v1972 = vunpack.c.0.s8 %v1971
        %v1973 = vlaneseq
        %v1974 = vshrl.u32 %v1973, 7
        %v1975 = vsub.s32 %v1972, %v1974
        %v1976 = vrot.slane %v1968, %v1975
        %v1978 = vunpack.c.l.s4 1934713408
        %v1979 = vunpack.c.0.s8 %v1978
        %v1980 = vlaneseq
        %v1981 = vshrl.u32 %v1980, 7
        %v1982 = vsub.s32 %v1979, %v1981
        %v1983 = vrot.slane %v1969, %v1982
        %v1984 = vcombine.low %v1919, %v1935
        %v1985 = vcombine.high %v1919, %v1935
        %v1987 = vunpack.c.l.s4 1934713408
        %v1988 = vunpack.c.0.s8 %v1987
        %v1989 = vlaneseq
        %v1990 = vshrl.u32 %v1989, 7
        %v1991 = vsub.s32 %v1988, %v1990
        %v1992 = vrot.slane %v1984, %v1991
        %v1994 = vunpack.c.l.s4 1934713408
        %v1995 = vunpack.c.0.s8 %v1994
        %v1996 = vlaneseq
        %v1997 = vshrl.u32 %v1996, 7
        %v1998 = vsub.s32 %v1995, %v1997
        %v1999 = vrot.slane %v1985, %v1998
        %v2000 = vcombine.low %v1944, %v1976
        %v2001 = vcombine.high %v1944, %v1976
        %v2002 = vcombine.low %v1951, %v1983
        %v2003 = vcombine.high %v1951, %v1983
        %v2004 = vcombine.low %v1960, %v1992
        %v2005 = vcombine.high %v1960, %v1992
        %v2006 = vcombine.low %v1967, %v1999
        %v2007 = vcombine.high %v1967, %v1999
        %v2008 = vpack.c.bf16 %v2000, %v2000
        %v2009 = vpack.c.bf16 %v2001, %v2001
        %v2010 = vpack.c.bf16 %v2002, %v2002
        %v2011 = vpack.c.bf16 %v2003, %v2003
        %v2012 = vpack.c.bf16 %v2004, %v2004
        %v2013 = vpack.c.bf16 %v2005, %v2005
        %v2014 = vpack.c.bf16 %v2006, %v2006
        %v2015 = vpack.c.bf16 %v2007, %v2007
        %2017 = vrot.lane.b32.xlu0 %v1407, 112
        %v2018 = vpop.permute.xlu0 %2017
        %2020 = vrot.lane.b32.xlu0 %v1407, 96
        %v2021 = vpop.permute.xlu0 %2020
        %2023 = vrot.lane.b32.xlu0 %v1407, 80
        %v2024 = vpop.permute.xlu0 %2023
        %2026 = vrot.lane.b32.xlu0 %v1407, 64
        %v2027 = vpop.permute.xlu0 %2026
        %2029 = vrot.lane.b32.xlu0 %v1407, 48
        %v2030 = vpop.permute.xlu0 %2029
        %2032 = vrot.lane.b32.xlu0 %v1407, 32
        %v2033 = vpop.permute.xlu0 %2032
        %2035 = vrot.lane.b32.xlu0 %v1407, 16
        %v2036 = vpop.permute.xlu0 %2035
        %v2038 = vcombine.low %v1407, %v2021
        %v2039 = vcombine.high %v1407, %v2021
        %v2041 = vunpack.c.l.s4 1983009808
        %v2042 = vunpack.c.0.s8 %v2041
        %v2043 = vlaneseq
        %v2044 = vshrl.u32 %v2043, 7
        %v2045 = vsub.s32 %v2042, %v2044
        %v2046 = vrot.slane %v2038, %v2045
        %v2048 = vunpack.c.l.s4 1983009808
        %v2049 = vunpack.c.0.s8 %v2048
        %v2050 = vlaneseq
        %v2051 = vshrl.u32 %v2050, 7
        %v2052 = vsub.s32 %v2049, %v2051
        %v2053 = vrot.slane %v2039, %v2052
        %v2054 = vcombine.low %v2018, %v2024
        %v2055 = vcombine.high %v2018, %v2024
        %v2057 = vunpack.c.l.s4 1983009808
        %v2058 = vunpack.c.0.s8 %v2057
        %v2059 = vlaneseq
        %v2060 = vshrl.u32 %v2059, 7
        %v2061 = vsub.s32 %v2058, %v2060
        %v2062 = vrot.slane %v2054, %v2061
        %v2064 = vunpack.c.l.s4 1983009808
        %v2065 = vunpack.c.0.s8 %v2064
        %v2066 = vlaneseq
        %v2067 = vshrl.u32 %v2066, 7
        %v2068 = vsub.s32 %v2065, %v2067
        %v2069 = vrot.slane %v2055, %v2068
        %v2070 = vcombine.low %v2027, %v2033
        %v2071 = vcombine.high %v2027, %v2033
        %v2073 = vunpack.c.l.s4 1983009808
        %v2074 = vunpack.c.0.s8 %v2073
        %v2075 = vlaneseq
        %v2076 = vshrl.u32 %v2075, 7
        %v2077 = vsub.s32 %v2074, %v2076
        %v2078 = vrot.slane %v2070, %v2077
        %v2080 = vunpack.c.l.s4 1983009808
        %v2081 = vunpack.c.0.s8 %v2080
        %v2082 = vlaneseq
        %v2083 = vshrl.u32 %v2082, 7
        %v2084 = vsub.s32 %v2081, %v2083
        %v2085 = vrot.slane %v2071, %v2084
        %v2086 = vcombine.low %v2030, %v2036
        %v2087 = vcombine.high %v2030, %v2036
        %v2089 = vunpack.c.l.s4 1983009808
        %v2090 = vunpack.c.0.s8 %v2089
        %v2091 = vlaneseq
        %v2092 = vshrl.u32 %v2091, 7
        %v2093 = vsub.s32 %v2090, %v2092
        %v2094 = vrot.slane %v2086, %v2093
        %v2096 = vunpack.c.l.s4 1983009808
        %v2097 = vunpack.c.0.s8 %v2096
        %v2098 = vlaneseq
        %v2099 = vshrl.u32 %v2098, 7
        %v2100 = vsub.s32 %v2097, %v2099
        %v2101 = vrot.slane %v2087, %v2100
        %v2102 = vcombine.low %v2046, %v2062
        %v2103 = vcombine.high %v2046, %v2062
        %v2105 = vunpack.c.l.s4 1934713408
        %v2106 = vunpack.c.0.s8 %v2105
        %v2107 = vlaneseq
        %v2108 = vshrl.u32 %v2107, 7
        %v2109 = vsub.s32 %v2106, %v2108
        %v2110 = vrot.slane %v2102, %v2109
        %v2112 = vunpack.c.l.s4 1934713408
        %v2113 = vunpack.c.0.s8 %v2112
        %v2114 = vlaneseq
        %v2115 = vshrl.u32 %v2114, 7
        %v2116 = vsub.s32 %v2113, %v2115
        %v2117 = vrot.slane %v2103, %v2116
        %v2118 = vcombine.low %v2053, %v2069
        %v2119 = vcombine.high %v2053, %v2069
        %v2121 = vunpack.c.l.s4 1934713408
        %v2122 = vunpack.c.0.s8 %v2121
        %v2123 = vlaneseq
        %v2124 = vshrl.u32 %v2123, 7
        %v2125 = vsub.s32 %v2122, %v2124
        %v2126 = vrot.slane %v2118, %v2125
        %v2128 = vunpack.c.l.s4 1934713408
        %v2129 = vunpack.c.0.s8 %v2128
        %v2130 = vlaneseq
        %v2131 = vshrl.u32 %v2130, 7
        %v2132 = vsub.s32 %v2129, %v2131
        %v2133 = vrot.slane %v2119, %v2132
        %v2134 = vcombine.low %v2078, %v2094
        %v2135 = vcombine.high %v2078, %v2094
        %v2137 = vunpack.c.l.s4 1934713408
        %v2138 = vunpack.c.0.s8 %v2137
        %v2139 = vlaneseq
        %v2140 = vshrl.u32 %v2139, 7
        %v2141 = vsub.s32 %v2138, %v2140
        %v2142 = vrot.slane %v2134, %v2141
        %v2144 = vunpack.c.l.s4 1934713408
        %v2145 = vunpack.c.0.s8 %v2144
        %v2146 = vlaneseq
        %v2147 = vshrl.u32 %v2146, 7
        %v2148 = vsub.s32 %v2145, %v2147
        %v2149 = vrot.slane %v2135, %v2148
        %v2150 = vcombine.low %v2085, %v2101
        %v2151 = vcombine.high %v2085, %v2101
        %v2153 = vunpack.c.l.s4 1934713408
        %v2154 = vunpack.c.0.s8 %v2153
        %v2155 = vlaneseq
        %v2156 = vshrl.u32 %v2155, 7
        %v2157 = vsub.s32 %v2154, %v2156
        %v2158 = vrot.slane %v2150, %v2157
        %v2160 = vunpack.c.l.s4 1934713408
        %v2161 = vunpack.c.0.s8 %v2160
        %v2162 = vlaneseq
        %v2163 = vshrl.u32 %v2162, 7
        %v2164 = vsub.s32 %v2161, %v2163
        %v2165 = vrot.slane %v2151, %v2164
        %v2166 = vcombine.low %v2110, %v2142
        %v2167 = vcombine.high %v2110, %v2142
        %v2168 = vcombine.low %v2117, %v2149
        %v2169 = vcombine.high %v2117, %v2149
        %v2170 = vcombine.low %v2126, %v2158
        %v2171 = vcombine.high %v2126, %v2158
        %v2172 = vcombine.low %v2133, %v2165
        %v2173 = vcombine.high %v2133, %v2165
        %v2174 = vcombine.low %v2166, %v2168
        %v2175 = vcombine.high %v2166, %v2168
        %v2177 = vunpack.c.l.s4 1983009808
        %v2178 = vunpack.c.0.s8 %v2177
        %v2179 = vlaneseq
        %v2180 = vshrl.u32 %v2179, 7
        %v2181 = vsub.s32 %v2178, %v2180
        %v2182 = vrot.slane %v2174, %v2181
        %v2184 = vunpack.c.l.s4 1983009808
        %v2185 = vunpack.c.0.s8 %v2184
        %v2186 = vlaneseq
        %v2187 = vshrl.u32 %v2186, 7
        %v2188 = vsub.s32 %v2185, %v2187
        %v2189 = vrot.slane %v2175, %v2188
        %v2190 = vcombine.low %v2167, %v2169
        %v2191 = vcombine.high %v2167, %v2169
        %v2193 = vunpack.c.l.s4 1983009808
        %v2194 = vunpack.c.0.s8 %v2193
        %v2195 = vlaneseq
        %v2196 = vshrl.u32 %v2195, 7
        %v2197 = vsub.s32 %v2194, %v2196
        %v2198 = vrot.slane %v2190, %v2197
        %v2200 = vunpack.c.l.s4 1983009808
        %v2201 = vunpack.c.0.s8 %v2200
        %v2202 = vlaneseq
        %v2203 = vshrl.u32 %v2202, 7
        %v2204 = vsub.s32 %v2201, %v2203
        %v2205 = vrot.slane %v2191, %v2204
        %v2206 = vcombine.low %v2170, %v2172
        %v2207 = vcombine.high %v2170, %v2172
        %v2209 = vunpack.c.l.s4 1983009808
        %v2210 = vunpack.c.0.s8 %v2209
        %v2211 = vlaneseq
        %v2212 = vshrl.u32 %v2211, 7
        %v2213 = vsub.s32 %v2210, %v2212
        %v2214 = vrot.slane %v2206, %v2213
        %v2216 = vunpack.c.l.s4 1983009808
        %v2217 = vunpack.c.0.s8 %v2216
        %v2218 = vlaneseq
        %v2219 = vshrl.u32 %v2218, 7
        %v2220 = vsub.s32 %v2217, %v2219
        %v2221 = vrot.slane %v2207, %v2220
        %v2222 = vcombine.low %v2171, %v2173
        %v2223 = vcombine.high %v2171, %v2173
        %v2225 = vunpack.c.l.s4 1983009808
        %v2226 = vunpack.c.0.s8 %v2225
        %v2227 = vlaneseq
        %v2228 = vshrl.u32 %v2227, 7
        %v2229 = vsub.s32 %v2226, %v2228
        %v2230 = vrot.slane %v2222, %v2229
        %v2232 = vunpack.c.l.s4 1983009808
        %v2233 = vunpack.c.0.s8 %v2232
        %v2234 = vlaneseq
        %v2235 = vshrl.u32 %v2234, 7
        %v2236 = vsub.s32 %v2233, %v2235
        %v2237 = vrot.slane %v2223, %v2236
        %v2238 = vcombine.low %v2182, %v2198
        %v2239 = vcombine.high %v2182, %v2198
        %v2241 = vunpack.c.l.s4 1934713408
        %v2242 = vunpack.c.0.s8 %v2241
        %v2243 = vlaneseq
        %v2244 = vshrl.u32 %v2243, 7
        %v2245 = vsub.s32 %v2242, %v2244
        %v2246 = vrot.slane %v2238, %v2245
        %v2248 = vunpack.c.l.s4 1934713408
        %v2249 = vunpack.c.0.s8 %v2248
        %v2250 = vlaneseq
        %v2251 = vshrl.u32 %v2250, 7
        %v2252 = vsub.s32 %v2249, %v2251
        %v2253 = vrot.slane %v2239, %v2252
        %v2254 = vcombine.low %v2189, %v2205
        %v2255 = vcombine.high %v2189, %v2205
        %v2257 = vunpack.c.l.s4 1934713408
        %v2258 = vunpack.c.0.s8 %v2257
        %v2259 = vlaneseq
        %v2260 = vshrl.u32 %v2259, 7
        %v2261 = vsub.s32 %v2258, %v2260
        %v2262 = vrot.slane %v2254, %v2261
        %v2264 = vunpack.c.l.s4 1934713408
        %v2265 = vunpack.c.0.s8 %v2264
        %v2266 = vlaneseq
        %v2267 = vshrl.u32 %v2266, 7
        %v2268 = vsub.s32 %v2265, %v2267
        %v2269 = vrot.slane %v2255, %v2268
        %v2270 = vcombine.low %v2214, %v2230
        %v2271 = vcombine.high %v2214, %v2230
        %v2273 = vunpack.c.l.s4 1934713408
        %v2274 = vunpack.c.0.s8 %v2273
        %v2275 = vlaneseq
        %v2276 = vshrl.u32 %v2275, 7
        %v2277 = vsub.s32 %v2274, %v2276
        %v2278 = vrot.slane %v2270, %v2277
        %v2280 = vunpack.c.l.s4 1934713408
        %v2281 = vunpack.c.0.s8 %v2280
        %v2282 = vlaneseq
        %v2283 = vshrl.u32 %v2282, 7
        %v2284 = vsub.s32 %v2281, %v2283
        %v2285 = vrot.slane %v2271, %v2284
        %v2286 = vcombine.low %v2221, %v2237
        %v2287 = vcombine.high %v2221, %v2237
        %v2289 = vunpack.c.l.s4 1934713408
        %v2290 = vunpack.c.0.s8 %v2289
        %v2291 = vlaneseq
        %v2292 = vshrl.u32 %v2291, 7
        %v2293 = vsub.s32 %v2290, %v2292
        %v2294 = vrot.slane %v2286, %v2293
        %v2296 = vunpack.c.l.s4 1934713408
        %v2297 = vunpack.c.0.s8 %v2296
        %v2298 = vlaneseq
        %v2299 = vshrl.u32 %v2298, 7
        %v2300 = vsub.s32 %v2297, %v2299
        %v2301 = vrot.slane %v2287, %v2300
        %v2302 = vcombine.low %v2246, %v2278
        %v2303 = vcombine.high %v2246, %v2278
        %v2304 = vcombine.low %v2253, %v2285
        %v2305 = vcombine.high %v2253, %v2285
        %v2306 = vcombine.low %v2262, %v2294
        %v2307 = vcombine.high %v2262, %v2294
        %v2308 = vcombine.low %v2269, %v2301
        %v2309 = vcombine.high %v2269, %v2301
        %v2310 = vpack.c.bf16 %v2302, %v2302
        %v2311 = vpack.c.bf16 %v2303, %v2303
        %v2312 = vpack.c.bf16 %v2304, %v2304
        %v2313 = vpack.c.bf16 %v2305, %v2305
        %v2314 = vpack.c.bf16 %v2306, %v2306
        %v2315 = vpack.c.bf16 %v2307, %v2307
        %v2316 = vpack.c.bf16 %v2308, %v2308
        %v2317 = vpack.c.bf16 %v2309, %v2309
        %vm2318 = vcmask 130048
        %v2320 = vsel %vm2318, %v1706, 0
        %v2323 = vsel %vm2318, %v2008, 0
        %2325 = vmatprep.subr.bf16.mxu0 0
        %2326 = vmatpush1.bf16.xpose.msra.mxu0 0
        %2327 = vmatprep.subr.bf16.mxu0 0
        %2328 = vmatpush1.bf16.xpose.msra.mxu0 0
        %2329 = vmatprep.subr.bf16.mxu0 0
        %2330 = vmatpush1.bf16.xpose.msra.mxu0 0
        %2331 = vmatprep.subr.bf16.mxu0 0
        %2332 = vmatpush1.bf16.xpose.msra.mxu0 0
        %2333 = vmatprep.subr.bf16.mxu0 0
        %2334 = vmatpush1.bf16.xpose.msra.mxu0 0
        %2335 = vmatprep.subr.bf16.mxu0 0
        %2336 = vmatpush1.bf16.xpose.msra.mxu0 0
        %2337 = vmatprep.subr.bf16.mxu0 0
        %2338 = vmatpush1.bf16.xpose.msra.mxu0 0
        %2339 = vmatprep.subr.bf16.mxu0 0
        %2340 = vmatpush1.bf16.xpose.msra.mxu0 %v2323
        %2341 = vmatprep.subr.bf16.mxu0 0
        %2342 = vmatpush2.bf16.xpose.msra.mxu0 0
        %2343 = vmatprep.subr.bf16.mxu0 0
        %2344 = vmatpush2.bf16.xpose.msra.mxu0 0
        %2345 = vmatprep.subr.bf16.mxu0 0
        %2346 = vmatpush2.bf16.xpose.msra.mxu0 0
        %2347 = vmatprep.subr.bf16.mxu0 0
        %2348 = vmatpush2.bf16.xpose.msra.mxu0 0
        %2349 = vmatprep.subr.bf16.mxu0 0
        %2350 = vmatpush2.bf16.xpose.msra.mxu0 0
        %2351 = vmatprep.subr.bf16.mxu0 0
        %2352 = vmatpush2.bf16.xpose.msra.mxu0 0
        %2353 = vmatprep.subr.bf16.mxu0 0
        %2354 = vmatpush2.bf16.xpose.msra.mxu0 0
        %2355 = vmatprep.subr.bf16.mxu0 0
        %2356 = vmatpush2.bf16.xpose.msra.mxu0 0
        %2357 = vmatprep.mubr.bf16.mxu0 0
        %2358 = vmatmul.mubr.bf16.gmra.mxu0 %v2320
        %v2359 = vpop.f32.mrf.mxu0
        %v2360 = vadd.f32 0.0, %v2359
        %v2361 = vpop.f32.mrf.mxu0
        %v2362 = vpop.f32.mrf.mxu0
        %v2363 = vpop.f32.mrf.mxu0
        %2364 = vdwg.mxu0
        %v2366 = vsel %vm2318, %v1707, 0
        %v2369 = vsel %vm2318, %v2009, 0
        %2371 = vmatprep.subr.bf16.mxu0 0
        %2372 = vmatpush1.bf16.xpose.msra.mxu0 0
        %2373 = vmatprep.subr.bf16.mxu0 0
        %2374 = vmatpush1.bf16.xpose.msra.mxu0 0
        %2375 = vmatprep.subr.bf16.mxu0 0
        %2376 = vmatpush1.bf16.xpose.msra.mxu0 0
        %2377 = vmatprep.subr.bf16.mxu0 0
        %2378 = vmatpush1.bf16.xpose.msra.mxu0 0
        %2379 = vmatprep.subr.bf16.mxu0 0
        %2380 = vmatpush1.bf16.xpose.msra.mxu0 0
        %2381 = vmatprep.subr.bf16.mxu0 0
        %2382 = vmatpush1.bf16.xpose.msra.mxu0 0
        %2383 = vmatprep.subr.bf16.mxu0 0
        %2384 = vmatpush1.bf16.xpose.msra.mxu0 0
        %2385 = vmatprep.subr.bf16.mxu0 0
        %2386 = vmatpush1.bf16.xpose.msra.mxu0 %v2369
        %2387 = vmatprep.subr.bf16.mxu0 0
        %2388 = vmatpush2.bf16.xpose.msra.mxu0 0
        %2389 = vmatprep.subr.bf16.mxu0 0
        %2390 = vmatpush2.bf16.xpose.msra.mxu0 0
        %2391 = vmatprep.subr.bf16.mxu0 0
        %2392 = vmatpush2.bf16.xpose.msra.mxu0 0
        %2393 = vmatprep.subr.bf16.mxu0 0
        %2394 = vmatpush2.bf16.xpose.msra.mxu0 0
        %2395 = vmatprep.subr.bf16.mxu0 0
        %2396 = vmatpush2.bf16.xpose.msra.mxu0 0
        %2397 = vmatprep.subr.bf16.mxu0 0
        %2398 = vmatpush2.bf16.xpose.msra.mxu0 0
        %2399 = vmatprep.subr.bf16.mxu0 0
        %2400 = vmatpush2.bf16.xpose.msra.mxu0 0
        %2401 = vmatprep.subr.bf16.mxu0 0
        %2402 = vmatpush2.bf16.xpose.msra.mxu0 0
        %2403 = vmatprep.mubr.bf16.mxu0 0
        %2404 = vmatmul.mubr.bf16.gmra.mxu0 %v2366
        %v2405 = vpop.f32.mrf.mxu0
        %v2406 = vadd.f32 0.0, %v2405
        %v2407 = vpop.f32.mrf.mxu0
        %v2408 = vpop.f32.mrf.mxu0
        %v2409 = vpop.f32.mrf.mxu0
        %2410 = vdwg.mxu0
        %v2412 = vsel %vm2318, %v1708, 0
        %v2415 = vsel %vm2318, %v2010, 0
        %2417 = vmatprep.subr.bf16.mxu0 0
        %2418 = vmatpush1.bf16.xpose.msra.mxu0 0
        %2419 = vmatprep.subr.bf16.mxu0 0
        %2420 = vmatpush1.bf16.xpose.msra.mxu0 0
        %2421 = vmatprep.subr.bf16.mxu0 0
        %2422 = vmatpush1.bf16.xpose.msra.mxu0 0
        %2423 = vmatprep.subr.bf16.mxu0 0
        %2424 = vmatpush1.bf16.xpose.msra.mxu0 0
        %2425 = vmatprep.subr.bf16.mxu0 0
        %2426 = vmatpush1.bf16.xpose.msra.mxu0 0
        %2427 = vmatprep.subr.bf16.mxu0 0
        %2428 = vmatpush1.bf16.xpose.msra.mxu0 0
        %2429 = vmatprep.subr.bf16.mxu0 0
        %2430 = vmatpush1.bf16.xpose.msra.mxu0 0
        %2431 = vmatprep.subr.bf16.mxu0 0
        %2432 = vmatpush1.bf16.xpose.msra.mxu0 %v2415
        %2433 = vmatprep.subr.bf16.mxu0 0
        %2434 = vmatpush2.bf16.xpose.msra.mxu0 0
        %2435 = vmatprep.subr.bf16.mxu0 0
        %2436 = vmatpush2.bf16.xpose.msra.mxu0 0
        %2437 = vmatprep.subr.bf16.mxu0 0
        %2438 = vmatpush2.bf16.xpose.msra.mxu0 0
        %2439 = vmatprep.subr.bf16.mxu0 0
        %2440 = vmatpush2.bf16.xpose.msra.mxu0 0
        %2441 = vmatprep.subr.bf16.mxu0 0
        %2442 = vmatpush2.bf16.xpose.msra.mxu0 0
        %2443 = vmatprep.subr.bf16.mxu0 0
        %2444 = vmatpush2.bf16.xpose.msra.mxu0 0
        %2445 = vmatprep.subr.bf16.mxu0 0
        %2446 = vmatpush2.bf16.xpose.msra.mxu0 0
        %2447 = vmatprep.subr.bf16.mxu0 0
        %2448 = vmatpush2.bf16.xpose.msra.mxu0 0
        %2449 = vmatprep.mubr.bf16.mxu0 0
        %2450 = vmatmul.mubr.bf16.gmra.mxu0 %v2412
        %v2451 = vpop.f32.mrf.mxu0
        %v2452 = vadd.f32 0.0, %v2451
        %v2453 = vpop.f32.mrf.mxu0
        %v2454 = vpop.f32.mrf.mxu0
        %v2455 = vpop.f32.mrf.mxu0
        %2456 = vdwg.mxu0
        %v2458 = vsel %vm2318, %v1709, 0
        %v2461 = vsel %vm2318, %v2011, 0
        %2463 = vmatprep.subr.bf16.mxu0 0
        %2464 = vmatpush1.bf16.xpose.msra.mxu0 0
        %2465 = vmatprep.subr.bf16.mxu0 0
        %2466 = vmatpush1.bf16.xpose.msra.mxu0 0
        %2467 = vmatprep.subr.bf16.mxu0 0
        %2468 = vmatpush1.bf16.xpose.msra.mxu0 0
        %2469 = vmatprep.subr.bf16.mxu0 0
        %2470 = vmatpush1.bf16.xpose.msra.mxu0 0
        %2471 = vmatprep.subr.bf16.mxu0 0
        %2472 = vmatpush1.bf16.xpose.msra.mxu0 0
        %2473 = vmatprep.subr.bf16.mxu0 0
        %2474 = vmatpush1.bf16.xpose.msra.mxu0 0
        %2475 = vmatprep.subr.bf16.mxu0 0
        %2476 = vmatpush1.bf16.xpose.msra.mxu0 0
        %2477 = vmatprep.subr.bf16.mxu0 0
        %2478 = vmatpush1.bf16.xpose.msra.mxu0 %v2461
        %2479 = vmatprep.subr.bf16.mxu0 0
        %2480 = vmatpush2.bf16.xpose.msra.mxu0 0
        %2481 = vmatprep.subr.bf16.mxu0 0
        %2482 = vmatpush2.bf16.xpose.msra.mxu0 0
        %2483 = vmatprep.subr.bf16.mxu0 0
        %2484 = vmatpush2.bf16.xpose.msra.mxu0 0
        %2485 = vmatprep.subr.bf16.mxu0 0
        %2486 = vmatpush2.bf16.xpose.msra.mxu0 0
        %2487 = vmatprep.subr.bf16.mxu0 0
        %2488 = vmatpush2.bf16.xpose.msra.mxu0 0
        %2489 = vmatprep.subr.bf16.mxu0 0
        %2490 = vmatpush2.bf16.xpose.msra.mxu0 0
        %2491 = vmatprep.subr.bf16.mxu0 0
        %2492 = vmatpush2.bf16.xpose.msra.mxu0 0
        %2493 = vmatprep.subr.bf16.mxu0 0
        %2494 = vmatpush2.bf16.xpose.msra.mxu0 0
        %2495 = vmatprep.mubr.bf16.mxu0 0
        %2496 = vmatmul.mubr.bf16.gmra.mxu0 %v2458
        %v2497 = vpop.f32.mrf.mxu0
        %v2498 = vadd.f32 0.0, %v2497
        %v2499 = vpop.f32.mrf.mxu0
        %v2500 = vpop.f32.mrf.mxu0
        %v2501 = vpop.f32.mrf.mxu0
        %2502 = vdwg.mxu0
        %v2504 = vsel %vm2318, %v1710, 0
        %v2507 = vsel %vm2318, %v2012, 0
        %2509 = vmatprep.subr.bf16.mxu0 0
        %2510 = vmatpush1.bf16.xpose.msra.mxu0 0
        %2511 = vmatprep.subr.bf16.mxu0 0
        %2512 = vmatpush1.bf16.xpose.msra.mxu0 0
        %2513 = vmatprep.subr.bf16.mxu0 0
        %2514 = vmatpush1.bf16.xpose.msra.mxu0 0
        %2515 = vmatprep.subr.bf16.mxu0 0
        %2516 = vmatpush1.bf16.xpose.msra.mxu0 0
        %2517 = vmatprep.subr.bf16.mxu0 0
        %2518 = vmatpush1.bf16.xpose.msra.mxu0 0
        %2519 = vmatprep.subr.bf16.mxu0 0
        %2520 = vmatpush1.bf16.xpose.msra.mxu0 0
        %2521 = vmatprep.subr.bf16.mxu0 0
        %2522 = vmatpush1.bf16.xpose.msra.mxu0 0
        %2523 = vmatprep.subr.bf16.mxu0 0
        %2524 = vmatpush1.bf16.xpose.msra.mxu0 %v2507
        %2525 = vmatprep.subr.bf16.mxu0 0
        %2526 = vmatpush2.bf16.xpose.msra.mxu0 0
        %2527 = vmatprep.subr.bf16.mxu0 0
        %2528 = vmatpush2.bf16.xpose.msra.mxu0 0
        %2529 = vmatprep.subr.bf16.mxu0 0
        %2530 = vmatpush2.bf16.xpose.msra.mxu0 0
        %2531 = vmatprep.subr.bf16.mxu0 0
        %2532 = vmatpush2.bf16.xpose.msra.mxu0 0
        %2533 = vmatprep.subr.bf16.mxu0 0
        %2534 = vmatpush2.bf16.xpose.msra.mxu0 0
        %2535 = vmatprep.subr.bf16.mxu0 0
        %2536 = vmatpush2.bf16.xpose.msra.mxu0 0
        %2537 = vmatprep.subr.bf16.mxu0 0
        %2538 = vmatpush2.bf16.xpose.msra.mxu0 0
        %2539 = vmatprep.subr.bf16.mxu0 0
        %2540 = vmatpush2.bf16.xpose.msra.mxu0 0
        %2541 = vmatprep.mubr.bf16.mxu0 0
        %2542 = vmatmul.mubr.bf16.gmra.mxu0 %v2504
        %v2543 = vpop.f32.mrf.mxu0
        %v2544 = vadd.f32 0.0, %v2543
        %v2545 = vpop.f32.mrf.mxu0
        %v2546 = vpop.f32.mrf.mxu0
        %v2547 = vpop.f32.mrf.mxu0
        %2548 = vdwg.mxu0
        %v2550 = vsel %vm2318, %v1711, 0
        %v2553 = vsel %vm2318, %v2013, 0
        %2555 = vmatprep.subr.bf16.mxu0 0
        %2556 = vmatpush1.bf16.xpose.msra.mxu0 0
        %2557 = vmatprep.subr.bf16.mxu0 0
        %2558 = vmatpush1.bf16.xpose.msra.mxu0 0
        %2559 = vmatprep.subr.bf16.mxu0 0
        %2560 = vmatpush1.bf16.xpose.msra.mxu0 0
        %2561 = vmatprep.subr.bf16.mxu0 0
        %2562 = vmatpush1.bf16.xpose.msra.mxu0 0
        %2563 = vmatprep.subr.bf16.mxu0 0
        %2564 = vmatpush1.bf16.xpose.msra.mxu0 0
        %2565 = vmatprep.subr.bf16.mxu0 0
        %2566 = vmatpush1.bf16.xpose.msra.mxu0 0
        %2567 = vmatprep.subr.bf16.mxu0 0
        %2568 = vmatpush1.bf16.xpose.msra.mxu0 0
        %2569 = vmatprep.subr.bf16.mxu0 0
        %2570 = vmatpush1.bf16.xpose.msra.mxu0 %v2553
        %2571 = vmatprep.subr.bf16.mxu0 0
        %2572 = vmatpush2.bf16.xpose.msra.mxu0 0
        %2573 = vmatprep.subr.bf16.mxu0 0
        %2574 = vmatpush2.bf16.xpose.msra.mxu0 0
        %2575 = vmatprep.subr.bf16.mxu0 0
        %2576 = vmatpush2.bf16.xpose.msra.mxu0 0
        %2577 = vmatprep.subr.bf16.mxu0 0
        %2578 = vmatpush2.bf16.xpose.msra.mxu0 0
        %2579 = vmatprep.subr.bf16.mxu0 0
        %2580 = vmatpush2.bf16.xpose.msra.mxu0 0
        %2581 = vmatprep.subr.bf16.mxu0 0
        %2582 = vmatpush2.bf16.xpose.msra.mxu0 0
        %2583 = vmatprep.subr.bf16.mxu0 0
        %2584 = vmatpush2.bf16.xpose.msra.mxu0 0
        %2585 = vmatprep.subr.bf16.mxu0 0
        %2586 = vmatpush2.bf16.xpose.msra.mxu0 0
        %2587 = vmatprep.mubr.bf16.mxu0 0
        %2588 = vmatmul.mubr.bf16.gmra.mxu0 %v2550
        %v2589 = vpop.f32.mrf.mxu0
        %v2590 = vadd.f32 0.0, %v2589
        %v2591 = vpop.f32.mrf.mxu0
        %v2592 = vpop.f32.mrf.mxu0
        %v2593 = vpop.f32.mrf.mxu0
        %2594 = vdwg.mxu0
        %v2596 = vsel %vm2318, %v1712, 0
        %v2599 = vsel %vm2318, %v2014, 0
        %2601 = vmatprep.subr.bf16.mxu0 0
        %2602 = vmatpush1.bf16.xpose.msra.mxu0 0
        %2603 = vmatprep.subr.bf16.mxu0 0
        %2604 = vmatpush1.bf16.xpose.msra.mxu0 0
        %2605 = vmatprep.subr.bf16.mxu0 0
        %2606 = vmatpush1.bf16.xpose.msra.mxu0 0
        %2607 = vmatprep.subr.bf16.mxu0 0
        %2608 = vmatpush1.bf16.xpose.msra.mxu0 0
        %2609 = vmatprep.subr.bf16.mxu0 0
        %2610 = vmatpush1.bf16.xpose.msra.mxu0 0
        %2611 = vmatprep.subr.bf16.mxu0 0
        %2612 = vmatpush1.bf16.xpose.msra.mxu0 0
        %2613 = vmatprep.subr.bf16.mxu0 0
        %2614 = vmatpush1.bf16.xpose.msra.mxu0 0
        %2615 = vmatprep.subr.bf16.mxu0 0
        %2616 = vmatpush1.bf16.xpose.msra.mxu0 %v2599
        %2617 = vmatprep.subr.bf16.mxu0 0
        %2618 = vmatpush2.bf16.xpose.msra.mxu0 0
        %2619 = vmatprep.subr.bf16.mxu0 0
        %2620 = vmatpush2.bf16.xpose.msra.mxu0 0
        %2621 = vmatprep.subr.bf16.mxu0 0
        %2622 = vmatpush2.bf16.xpose.msra.mxu0 0
        %2623 = vmatprep.subr.bf16.mxu0 0
        %2624 = vmatpush2.bf16.xpose.msra.mxu0 0
        %2625 = vmatprep.subr.bf16.mxu0 0
        %2626 = vmatpush2.bf16.xpose.msra.mxu0 0
        %2627 = vmatprep.subr.bf16.mxu0 0
        %2628 = vmatpush2.bf16.xpose.msra.mxu0 0
        %2629 = vmatprep.subr.bf16.mxu0 0
        %2630 = vmatpush2.bf16.xpose.msra.mxu0 0
        %2631 = vmatprep.subr.bf16.mxu0 0
        %2632 = vmatpush2.bf16.xpose.msra.mxu0 0
        %2633 = vmatprep.mubr.bf16.mxu0 0
        %2634 = vmatmul.mubr.bf16.gmra.mxu0 %v2596
        %v2635 = vpop.f32.mrf.mxu0
        %v2636 = vadd.f32 0.0, %v2635
        %v2637 = vpop.f32.mrf.mxu0
        %v2638 = vpop.f32.mrf.mxu0
        %v2639 = vpop.f32.mrf.mxu0
        %2640 = vdwg.mxu0
        %v2642 = vsel %vm2318, %v1713, 0
        %v2645 = vsel %vm2318, %v2015, 0
        %2647 = vmatprep.subr.bf16.mxu0 0
        %2648 = vmatpush1.bf16.xpose.msra.mxu0 0
        %2649 = vmatprep.subr.bf16.mxu0 0
        %2650 = vmatpush1.bf16.xpose.msra.mxu0 0
        %2651 = vmatprep.subr.bf16.mxu0 0
        %2652 = vmatpush1.bf16.xpose.msra.mxu0 0
        %2653 = vmatprep.subr.bf16.mxu0 0
        %2654 = vmatpush1.bf16.xpose.msra.mxu0 0
        %2655 = vmatprep.subr.bf16.mxu0 0
        %2656 = vmatpush1.bf16.xpose.msra.mxu0 0
        %2657 = vmatprep.subr.bf16.mxu0 0
        %2658 = vmatpush1.bf16.xpose.msra.mxu0 0
        %2659 = vmatprep.subr.bf16.mxu0 0
        %2660 = vmatpush1.bf16.xpose.msra.mxu0 0
        %2661 = vmatprep.subr.bf16.mxu0 0
        %2662 = vmatpush1.bf16.xpose.msra.mxu0 %v2645
        %2663 = vmatprep.subr.bf16.mxu0 0
        %2664 = vmatpush2.bf16.xpose.msra.mxu0 0
        %2665 = vmatprep.subr.bf16.mxu0 0
        %2666 = vmatpush2.bf16.xpose.msra.mxu0 0
        %2667 = vmatprep.subr.bf16.mxu0 0
        %2668 = vmatpush2.bf16.xpose.msra.mxu0 0
        %2669 = vmatprep.subr.bf16.mxu0 0
        %2670 = vmatpush2.bf16.xpose.msra.mxu0 0
        %2671 = vmatprep.subr.bf16.mxu0 0
        %2672 = vmatpush2.bf16.xpose.msra.mxu0 0
        %2673 = vmatprep.subr.bf16.mxu0 0
        %2674 = vmatpush2.bf16.xpose.msra.mxu0 0
        %2675 = vmatprep.subr.bf16.mxu0 0
        %2676 = vmatpush2.bf16.xpose.msra.mxu0 0
        %2677 = vmatprep.subr.bf16.mxu0 0
        %2678 = vmatpush2.bf16.xpose.msra.mxu0 0
        %2679 = vmatprep.mubr.bf16.mxu0 0
        %2680 = vmatmul.mubr.bf16.gmra.mxu0 %v2642
        %v2681 = vpop.f32.mrf.mxu0
        %v2682 = vadd.f32 0.0, %v2681
        %v2683 = vpop.f32.mrf.mxu0
        %v2684 = vpop.f32.mrf.mxu0
        %v2685 = vpop.f32.mrf.mxu0
        %2686 = vdwg.mxu0
        %vm2687 = vcmask 64512
        %v2688 = vsel %vm2687, %v2360, -inf
        %2689 = vmax.xlane.f32.xlu0 %v2688
        %v2690 = vpop.xlane.xlu0 %2689
        %v2691 = vsel %vm2687, %v2406, -inf
        %2692 = vmax.xlane.f32.xlu0 %v2691
        %v2693 = vpop.xlane.xlu0 %2692
        %v2694 = vsel %vm2687, %v2452, -inf
        %2695 = vmax.xlane.f32.xlu0 %v2694
        %v2696 = vpop.xlane.xlu0 %2695
        %v2697 = vsel %vm2687, %v2498, -inf
        %2698 = vmax.xlane.f32.xlu0 %v2697
        %v2699 = vpop.xlane.xlu0 %2698
        %v2700 = vsel %vm2687, %v2544, -inf
        %2701 = vmax.xlane.f32.xlu0 %v2700
        %v2702 = vpop.xlane.xlu0 %2701
        %v2703 = vsel %vm2687, %v2590, -inf
        %2704 = vmax.xlane.f32.xlu0 %v2703
        %v2705 = vpop.xlane.xlu0 %2704
        %v2706 = vsel %vm2687, %v2636, -inf
        %2707 = vmax.xlane.f32.xlu0 %v2706
        %v2708 = vpop.xlane.xlu0 %2707
        %v2709 = vsel %vm2687, %v2682, -inf
        %2710 = vmax.xlane.f32.xlu0 %v2709
        %v2711 = vpop.xlane.xlu0 %2710
        %v2712 = vsub.f32 %v2360, %v2690
        %v2713 = vsub.f32 %v2406, %v2693
        %v2714 = vsub.f32 %v2452, %v2696
        %v2715 = vsub.f32 %v2498, %v2699
        %v2716 = vsub.f32 %v2544, %v2702
        %v2717 = vsub.f32 %v2590, %v2705
        %v2718 = vsub.f32 %v2636, %v2708
        %v2719 = vsub.f32 %v2682, %v2711
        %v2720 = vmul.f32 %v2712, 1.442695
        %v2721 = vpow.pop %v2720
        %v2722 = vmul.f32 %v2713, 1.442695
        %v2723 = vpow.pop %v2722
        %v2724 = vmul.f32 %v2714, 1.442695
        %v2725 = vpow.pop %v2724
        %v2726 = vmul.f32 %v2715, 1.442695
        %v2727 = vpow.pop %v2726
        %v2728 = vmul.f32 %v2716, 1.442695
        %v2729 = vpow.pop %v2728
        %v2730 = vmul.f32 %v2717, 1.442695
        %v2731 = vpow.pop %v2730
        %v2732 = vmul.f32 %v2718, 1.442695
        %v2733 = vpow.pop %v2732
        %v2734 = vmul.f32 %v2719, 1.442695
        %v2735 = vpow.pop %v2734
        %v2736 = vsel %vm2687, %v2721, 0.0
        %2737 = vadd.xlane.f32.xlu0 %v2736
        %v2738 = vpop.xlane.xlu0 %2737
        %v2739 = vsel %vm2687, %v2723, 0.0
        %2740 = vadd.xlane.f32.xlu0 %v2739
        %v2741 = vpop.xlane.xlu0 %2740
        %v2742 = vsel %vm2687, %v2725, 0.0
        %2743 = vadd.xlane.f32.xlu0 %v2742
        %v2744 = vpop.xlane.xlu0 %2743
        %v2745 = vsel %vm2687, %v2727, 0.0
        %2746 = vadd.xlane.f32.xlu0 %v2745
        %v2747 = vpop.xlane.xlu0 %2746
        %v2748 = vsel %vm2687, %v2729, 0.0
        %2749 = vadd.xlane.f32.xlu0 %v2748
        %v2750 = vpop.xlane.xlu0 %2749
        %v2751 = vsel %vm2687, %v2731, 0.0
        %2752 = vadd.xlane.f32.xlu0 %v2751
        %v2753 = vpop.xlane.xlu0 %2752
        %v2754 = vsel %vm2687, %v2733, 0.0
        %2755 = vadd.xlane.f32.xlu0 %v2754
        %v2756 = vpop.xlane.xlu0 %2755
        %v2757 = vsel %vm2687, %v2735, 0.0
        %2758 = vadd.xlane.f32.xlu0 %v2757
        %v2759 = vpop.xlane.xlu0 %2758
        %v2760 = vrcp.pop %v2738
        %v2761 = vrcp.pop %v2741
        %v2762 = vrcp.pop %v2744
        %v2763 = vrcp.pop %v2747
        %v2764 = vrcp.pop %v2750
        %v2765 = vrcp.pop %v2753
        %v2766 = vrcp.pop %v2756
        %v2767 = vrcp.pop %v2759
        %v2768 = vmul.f32 %v2738, %v2760
        %v2769 = vmul.f32 %v2741, %v2761
        %v2770 = vmul.f32 %v2744, %v2762
        %v2771 = vmul.f32 %v2747, %v2763
        %v2772 = vmul.f32 %v2750, %v2764
        %v2773 = vmul.f32 %v2753, %v2765
        %v2774 = vmul.f32 %v2756, %v2766
        %v2775 = vmul.f32 %v2759, %v2767
        %v2776 = vsub.f32 2.0, %v2768
        %v2777 = vsub.f32 2.0, %v2769
        %v2778 = vsub.f32 2.0, %v2770
        %v2779 = vsub.f32 2.0, %v2771
        %v2780 = vsub.f32 2.0, %v2772
        %v2781 = vsub.f32 2.0, %v2773
        %v2782 = vsub.f32 2.0, %v2774
        %v2783 = vsub.f32 2.0, %v2775
        %v2784 = vmul.f32 %v2760, %v2776
        %v2785 = vmul.f32 %v2761, %v2777
        %v2786 = vmul.f32 %v2762, %v2778
        %v2787 = vmul.f32 %v2763, %v2779
        %v2788 = vmul.f32 %v2764, %v2780
        %v2789 = vmul.f32 %v2765, %v2781
        %v2790 = vmul.f32 %v2766, %v2782
        %v2791 = vmul.f32 %v2767, %v2783
        %v2792 = vmul.f32 %v2721, %v2784
        %v2793 = vmul.f32 %v2723, %v2785
        %v2794 = vmul.f32 %v2725, %v2786
        %v2795 = vmul.f32 %v2727, %v2787
        %v2796 = vmul.f32 %v2729, %v2788
        %v2797 = vmul.f32 %v2731, %v2789
        %v2798 = vmul.f32 %v2733, %v2790
        %v2799 = vmul.f32 %v2735, %v2791
        %v2800 = vpack.c.bf16 %v2792, %v2792
        %v2801 = vpack.c.bf16 %v2793, %v2793
        %v2802 = vpack.c.bf16 %v2794, %v2794
        %v2803 = vpack.c.bf16 %v2795, %v2795
        %v2804 = vpack.c.bf16 %v2796, %v2796
        %v2805 = vpack.c.bf16 %v2797, %v2797
        %v2806 = vpack.c.bf16 %v2798, %v2798
        %v2807 = vpack.c.bf16 %v2799, %v2799
        %v2809 = vsel %vm2687, %v2800, 0
        %vm2811 = vcmask 1043456
        %v2813 = vsel %vm2811, %v2310, 0
        %2815 = vmatprep.subr.bf16.mxu0 0
        %2816 = vmatpush1.bf16.msra.mxu0 0
        %2817 = vmatprep.subr.bf16.mxu0 0
        %2818 = vmatpush1.bf16.msra.mxu0 0
        %2819 = vmatprep.subr.bf16.mxu0 0
        %2820 = vmatpush1.bf16.msra.mxu0 0
        %2821 = vmatprep.subr.bf16.mxu0 0
        %2822 = vmatpush1.bf16.msra.mxu0 0
        %2823 = vmatprep.subr.bf16.mxu0 0
        %2824 = vmatpush1.bf16.msra.mxu0 0
        %2825 = vmatprep.subr.bf16.mxu0 0
        %2826 = vmatpush1.bf16.msra.mxu0 0
        %2827 = vmatprep.subr.bf16.mxu0 0
        %2828 = vmatpush1.bf16.msra.mxu0 0
        %2829 = vmatprep.subr.bf16.mxu0 0
        %2830 = vmatpush1.bf16.msra.mxu0 %v2813
        %2831 = vmatprep.subr.bf16.mxu0 0
        %2832 = vmatpush2.bf16.msra.mxu0 0
        %2833 = vmatprep.subr.bf16.mxu0 0
        %2834 = vmatpush2.bf16.msra.mxu0 0
        %2835 = vmatprep.subr.bf16.mxu0 0
        %2836 = vmatpush2.bf16.msra.mxu0 0
        %2837 = vmatprep.subr.bf16.mxu0 0
        %2838 = vmatpush2.bf16.msra.mxu0 0
        %2839 = vmatprep.subr.bf16.mxu0 0
        %2840 = vmatpush2.bf16.msra.mxu0 0
        %2841 = vmatprep.subr.bf16.mxu0 0
        %2842 = vmatpush2.bf16.msra.mxu0 0
        %2843 = vmatprep.subr.bf16.mxu0 0
        %2844 = vmatpush2.bf16.msra.mxu0 0
        %2845 = vmatprep.subr.bf16.mxu0 0
        %2846 = vmatpush2.bf16.msra.mxu0 0
        %2847 = vmatprep.mubr.bf16.mxu0 0
        %2848 = vmatmul.mubr.bf16.gmra.mxu0 %v2809
        %v2849 = vpop.f32.mrf.mxu0
        %v2850 = vadd.f32 0.0, %v2849
        %v2851 = vpop.f32.mrf.mxu0
        %v2852 = vpop.f32.mrf.mxu0
        %v2853 = vpop.f32.mrf.mxu0
        %2854 = vdwg.mxu0
        %v2856 = vsel %vm2687, %v2801, 0
        %v2859 = vsel %vm2811, %v2311, 0
        %2861 = vmatprep.subr.bf16.mxu0 0
        %2862 = vmatpush1.bf16.msra.mxu0 0
        %2863 = vmatprep.subr.bf16.mxu0 0
        %2864 = vmatpush1.bf16.msra.mxu0 0
        %2865 = vmatprep.subr.bf16.mxu0 0
        %2866 = vmatpush1.bf16.msra.mxu0 0
        %2867 = vmatprep.subr.bf16.mxu0 0
        %2868 = vmatpush1.bf16.msra.mxu0 0
        %2869 = vmatprep.subr.bf16.mxu0 0
        %2870 = vmatpush1.bf16.msra.mxu0 0
        %2871 = vmatprep.subr.bf16.mxu0 0
        %2872 = vmatpush1.bf16.msra.mxu0 0
        %2873 = vmatprep.subr.bf16.mxu0 0
        %2874 = vmatpush1.bf16.msra.mxu0 0
        %2875 = vmatprep.subr.bf16.mxu0 0
        %2876 = vmatpush1.bf16.msra.mxu0 %v2859
        %2877 = vmatprep.subr.bf16.mxu0 0
        %2878 = vmatpush2.bf16.msra.mxu0 0
        %2879 = vmatprep.subr.bf16.mxu0 0
        %2880 = vmatpush2.bf16.msra.mxu0 0
        %2881 = vmatprep.subr.bf16.mxu0 0
        %2882 = vmatpush2.bf16.msra.mxu0 0
        %2883 = vmatprep.subr.bf16.mxu0 0
        %2884 = vmatpush2.bf16.msra.mxu0 0
        %2885 = vmatprep.subr.bf16.mxu0 0
        %2886 = vmatpush2.bf16.msra.mxu0 0
        %2887 = vmatprep.subr.bf16.mxu0 0
        %2888 = vmatpush2.bf16.msra.mxu0 0
        %2889 = vmatprep.subr.bf16.mxu0 0
        %2890 = vmatpush2.bf16.msra.mxu0 0
        %2891 = vmatprep.subr.bf16.mxu0 0
        %2892 = vmatpush2.bf16.msra.mxu0 0
        %2893 = vmatprep.mubr.bf16.mxu0 0
        %2894 = vmatmul.mubr.bf16.gmra.mxu0 %v2856
        %v2895 = vpop.f32.mrf.mxu0
        %v2896 = vadd.f32 0.0, %v2895
        %v2897 = vpop.f32.mrf.mxu0
        %v2898 = vpop.f32.mrf.mxu0
        %v2899 = vpop.f32.mrf.mxu0
        %2900 = vdwg.mxu0
        %v2902 = vsel %vm2687, %v2802, 0
        %v2905 = vsel %vm2811, %v2312, 0
        %2907 = vmatprep.subr.bf16.mxu0 0
        %2908 = vmatpush1.bf16.msra.mxu0 0
        %2909 = vmatprep.subr.bf16.mxu0 0
        %2910 = vmatpush1.bf16.msra.mxu0 0
        %2911 = vmatprep.subr.bf16.mxu0 0
        %2912 = vmatpush1.bf16.msra.mxu0 0
        %2913 = vmatprep.subr.bf16.mxu0 0
        %2914 = vmatpush1.bf16.msra.mxu0 0
        %2915 = vmatprep.subr.bf16.mxu0 0
        %2916 = vmatpush1.bf16.msra.mxu0 0
        %2917 = vmatprep.subr.bf16.mxu0 0
        %2918 = vmatpush1.bf16.msra.mxu0 0
        %2919 = vmatprep.subr.bf16.mxu0 0
        %2920 = vmatpush1.bf16.msra.mxu0 0
        %2921 = vmatprep.subr.bf16.mxu0 0
        %2922 = vmatpush1.bf16.msra.mxu0 %v2905
        %2923 = vmatprep.subr.bf16.mxu0 0
        %2924 = vmatpush2.bf16.msra.mxu0 0
        %2925 = vmatprep.subr.bf16.mxu0 0
        %2926 = vmatpush2.bf16.msra.mxu0 0
        %2927 = vmatprep.subr.bf16.mxu0 0
        %2928 = vmatpush2.bf16.msra.mxu0 0
        %2929 = vmatprep.subr.bf16.mxu0 0
        %2930 = vmatpush2.bf16.msra.mxu0 0
        %2931 = vmatprep.subr.bf16.mxu0 0
        %2932 = vmatpush2.bf16.msra.mxu0 0
        %2933 = vmatprep.subr.bf16.mxu0 0
        %2934 = vmatpush2.bf16.msra.mxu0 0
        %2935 = vmatprep.subr.bf16.mxu0 0
        %2936 = vmatpush2.bf16.msra.mxu0 0
        %2937 = vmatprep.subr.bf16.mxu0 0
        %2938 = vmatpush2.bf16.msra.mxu0 0
        %2939 = vmatprep.mubr.bf16.mxu0 0
        %2940 = vmatmul.mubr.bf16.gmra.mxu0 %v2902
        %v2941 = vpop.f32.mrf.mxu0
        %v2942 = vadd.f32 0.0, %v2941
        %v2943 = vpop.f32.mrf.mxu0
        %v2944 = vpop.f32.mrf.mxu0
        %v2945 = vpop.f32.mrf.mxu0
        %2946 = vdwg.mxu0
        %v2948 = vsel %vm2687, %v2803, 0
        %v2951 = vsel %vm2811, %v2313, 0
        %2953 = vmatprep.subr.bf16.mxu0 0
        %2954 = vmatpush1.bf16.msra.mxu0 0
        %2955 = vmatprep.subr.bf16.mxu0 0
        %2956 = vmatpush1.bf16.msra.mxu0 0
        %2957 = vmatprep.subr.bf16.mxu0 0
        %2958 = vmatpush1.bf16.msra.mxu0 0
        %2959 = vmatprep.subr.bf16.mxu0 0
        %2960 = vmatpush1.bf16.msra.mxu0 0
        %2961 = vmatprep.subr.bf16.mxu0 0
        %2962 = vmatpush1.bf16.msra.mxu0 0
        %2963 = vmatprep.subr.bf16.mxu0 0
        %2964 = vmatpush1.bf16.msra.mxu0 0
        %2965 = vmatprep.subr.bf16.mxu0 0
        %2966 = vmatpush1.bf16.msra.mxu0 0
        %2967 = vmatprep.subr.bf16.mxu0 0
        %2968 = vmatpush1.bf16.msra.mxu0 %v2951
        %2969 = vmatprep.subr.bf16.mxu0 0
        %2970 = vmatpush2.bf16.msra.mxu0 0
        %2971 = vmatprep.subr.bf16.mxu0 0
        %2972 = vmatpush2.bf16.msra.mxu0 0
        %2973 = vmatprep.subr.bf16.mxu0 0
        %2974 = vmatpush2.bf16.msra.mxu0 0
        %2975 = vmatprep.subr.bf16.mxu0 0
        %2976 = vmatpush2.bf16.msra.mxu0 0
        %2977 = vmatprep.subr.bf16.mxu0 0
        %2978 = vmatpush2.bf16.msra.mxu0 0
        %2979 = vmatprep.subr.bf16.mxu0 0
        %2980 = vmatpush2.bf16.msra.mxu0 0
        %2981 = vmatprep.subr.bf16.mxu0 0
        %2982 = vmatpush2.bf16.msra.mxu0 0
        %2983 = vmatprep.subr.bf16.mxu0 0
        %2984 = vmatpush2.bf16.msra.mxu0 0
        %2985 = vmatprep.mubr.bf16.mxu0 0
        %2986 = vmatmul.mubr.bf16.gmra.mxu0 %v2948
        %v2987 = vpop.f32.mrf.mxu0
        %v2988 = vadd.f32 0.0, %v2987
        %v2989 = vpop.f32.mrf.mxu0
        %v2990 = vpop.f32.mrf.mxu0
        %v2991 = vpop.f32.mrf.mxu0
        %2992 = vdwg.mxu0
        %v2994 = vsel %vm2687, %v2804, 0
        %v2997 = vsel %vm2811, %v2314, 0
        %2999 = vmatprep.subr.bf16.mxu0 0
        %3000 = vmatpush1.bf16.msra.mxu0 0
        %3001 = vmatprep.subr.bf16.mxu0 0
        %3002 = vmatpush1.bf16.msra.mxu0 0
        %3003 = vmatprep.subr.bf16.mxu0 0
        %3004 = vmatpush1.bf16.msra.mxu0 0
        %3005 = vmatprep.subr.bf16.mxu0 0
        %3006 = vmatpush1.bf16.msra.mxu0 0
        %3007 = vmatprep.subr.bf16.mxu0 0
        %3008 = vmatpush1.bf16.msra.mxu0 0
        %3009 = vmatprep.subr.bf16.mxu0 0
        %3010 = vmatpush1.bf16.msra.mxu0 0
        %3011 = vmatprep.subr.bf16.mxu0 0
        %3012 = vmatpush1.bf16.msra.mxu0 0
        %3013 = vmatprep.subr.bf16.mxu0 0
        %3014 = vmatpush1.bf16.msra.mxu0 %v2997
        %3015 = vmatprep.subr.bf16.mxu0 0
        %3016 = vmatpush2.bf16.msra.mxu0 0
        %3017 = vmatprep.subr.bf16.mxu0 0
        %3018 = vmatpush2.bf16.msra.mxu0 0
        %3019 = vmatprep.subr.bf16.mxu0 0
        %3020 = vmatpush2.bf16.msra.mxu0 0
        %3021 = vmatprep.subr.bf16.mxu0 0
        %3022 = vmatpush2.bf16.msra.mxu0 0
        %3023 = vmatprep.subr.bf16.mxu0 0
        %3024 = vmatpush2.bf16.msra.mxu0 0
        %3025 = vmatprep.subr.bf16.mxu0 0
        %3026 = vmatpush2.bf16.msra.mxu0 0
        %3027 = vmatprep.subr.bf16.mxu0 0
        %3028 = vmatpush2.bf16.msra.mxu0 0
        %3029 = vmatprep.subr.bf16.mxu0 0
        %3030 = vmatpush2.bf16.msra.mxu0 0
        %3031 = vmatprep.mubr.bf16.mxu0 0
        %3032 = vmatmul.mubr.bf16.gmra.mxu0 %v2994
        %v3033 = vpop.f32.mrf.mxu0
        %v3034 = vadd.f32 0.0, %v3033
        %v3035 = vpop.f32.mrf.mxu0
        %v3036 = vpop.f32.mrf.mxu0
        %v3037 = vpop.f32.mrf.mxu0
        %3038 = vdwg.mxu0
        %v3040 = vsel %vm2687, %v2805, 0
        %v3043 = vsel %vm2811, %v2315, 0
        %3045 = vmatprep.subr.bf16.mxu0 0
        %3046 = vmatpush1.bf16.msra.mxu0 0
        %3047 = vmatprep.subr.bf16.mxu0 0
        %3048 = vmatpush1.bf16.msra.mxu0 0
        %3049 = vmatprep.subr.bf16.mxu0 0
        %3050 = vmatpush1.bf16.msra.mxu0 0
        %3051 = vmatprep.subr.bf16.mxu0 0
        %3052 = vmatpush1.bf16.msra.mxu0 0
        %3053 = vmatprep.subr.bf16.mxu0 0
        %3054 = vmatpush1.bf16.msra.mxu0 0
        %3055 = vmatprep.subr.bf16.mxu0 0
        %3056 = vmatpush1.bf16.msra.mxu0 0
        %3057 = vmatprep.subr.bf16.mxu0 0
        %3058 = vmatpush1.bf16.msra.mxu0 0
        %3059 = vmatprep.subr.bf16.mxu0 0
        %3060 = vmatpush1.bf16.msra.mxu0 %v3043
        %3061 = vmatprep.subr.bf16.mxu0 0
        %3062 = vmatpush2.bf16.msra.mxu0 0
        %3063 = vmatprep.subr.bf16.mxu0 0
        %3064 = vmatpush2.bf16.msra.mxu0 0
        %3065 = vmatprep.subr.bf16.mxu0 0
        %3066 = vmatpush2.bf16.msra.mxu0 0
        %3067 = vmatprep.subr.bf16.mxu0 0
        %3068 = vmatpush2.bf16.msra.mxu0 0
        %3069 = vmatprep.subr.bf16.mxu0 0
        %3070 = vmatpush2.bf16.msra.mxu0 0
        %3071 = vmatprep.subr.bf16.mxu0 0
        %3072 = vmatpush2.bf16.msra.mxu0 0
        %3073 = vmatprep.subr.bf16.mxu0 0
        %3074 = vmatpush2.bf16.msra.mxu0 0
        %3075 = vmatprep.subr.bf16.mxu0 0
        %3076 = vmatpush2.bf16.msra.mxu0 0
        %3077 = vmatprep.mubr.bf16.mxu0 0
        %3078 = vmatmul.mubr.bf16.gmra.mxu0 %v3040
        %v3079 = vpop.f32.mrf.mxu0
        %v3080 = vadd.f32 0.0, %v3079
        %v3081 = vpop.f32.mrf.mxu0
        %v3082 = vpop.f32.mrf.mxu0
        %v3083 = vpop.f32.mrf.mxu0
        %3084 = vdwg.mxu0
        %v3086 = vsel %vm2687, %v2806, 0
        %v3089 = vsel %vm2811, %v2316, 0
        %3091 = vmatprep.subr.bf16.mxu0 0
        %3092 = vmatpush1.bf16.msra.mxu0 0
        %3093 = vmatprep.subr.bf16.mxu0 0
        %3094 = vmatpush1.bf16.msra.mxu0 0
        %3095 = vmatprep.subr.bf16.mxu0 0
        %3096 = vmatpush1.bf16.msra.mxu0 0
        %3097 = vmatprep.subr.bf16.mxu0 0
        %3098 = vmatpush1.bf16.msra.mxu0 0
        %3099 = vmatprep.subr.bf16.mxu0 0
        %3100 = vmatpush1.bf16.msra.mxu0 0
        %3101 = vmatprep.subr.bf16.mxu0 0
        %3102 = vmatpush1.bf16.msra.mxu0 0
        %3103 = vmatprep.subr.bf16.mxu0 0
        %3104 = vmatpush1.bf16.msra.mxu0 0
        %3105 = vmatprep.subr.bf16.mxu0 0
        %3106 = vmatpush1.bf16.msra.mxu0 %v3089
        %3107 = vmatprep.subr.bf16.mxu0 0
        %3108 = vmatpush2.bf16.msra.mxu0 0
        %3109 = vmatprep.subr.bf16.mxu0 0
        %3110 = vmatpush2.bf16.msra.mxu0 0
        %3111 = vmatprep.subr.bf16.mxu0 0
        %3112 = vmatpush2.bf16.msra.mxu0 0
        %3113 = vmatprep.subr.bf16.mxu0 0
        %3114 = vmatpush2.bf16.msra.mxu0 0
        %3115 = vmatprep.subr.bf16.mxu0 0
        %3116 = vmatpush2.bf16.msra.mxu0 0
        %3117 = vmatprep.subr.bf16.mxu0 0
        %3118 = vmatpush2.bf16.msra.mxu0 0
        %3119 = vmatprep.subr.bf16.mxu0 0
        %3120 = vmatpush2.bf16.msra.mxu0 0
        %3121 = vmatprep.subr.bf16.mxu0 0
        %3122 = vmatpush2.bf16.msra.mxu0 0
        %3123 = vmatprep.mubr.bf16.mxu0 0
        %3124 = vmatmul.mubr.bf16.gmra.mxu0 %v3086
        %v3125 = vpop.f32.mrf.mxu0
        %v3126 = vadd.f32 0.0, %v3125
        %v3127 = vpop.f32.mrf.mxu0
        %v3128 = vpop.f32.mrf.mxu0
        %v3129 = vpop.f32.mrf.mxu0
        %3130 = vdwg.mxu0
        %v3132 = vsel %vm2687, %v2807, 0
        %v3135 = vsel %vm2811, %v2317, 0
        %3137 = vmatprep.subr.bf16.mxu0 0
        %3138 = vmatpush1.bf16.msra.mxu0 0
        %3139 = vmatprep.subr.bf16.mxu0 0
        %3140 = vmatpush1.bf16.msra.mxu0 0
        %3141 = vmatprep.subr.bf16.mxu0 0
        %3142 = vmatpush1.bf16.msra.mxu0 0
        %3143 = vmatprep.subr.bf16.mxu0 0
        %3144 = vmatpush1.bf16.msra.mxu0 0
        %3145 = vmatprep.subr.bf16.mxu0 0
        %3146 = vmatpush1.bf16.msra.mxu0 0
        %3147 = vmatprep.subr.bf16.mxu0 0
        %3148 = vmatpush1.bf16.msra.mxu0 0
        %3149 = vmatprep.subr.bf16.mxu0 0
        %3150 = vmatpush1.bf16.msra.mxu0 0
        %3151 = vmatprep.subr.bf16.mxu0 0
        %3152 = vmatpush1.bf16.msra.mxu0 %v3135
        %3153 = vmatprep.subr.bf16.mxu0 0
        %3154 = vmatpush2.bf16.msra.mxu0 0
        %3155 = vmatprep.subr.bf16.mxu0 0
        %3156 = vmatpush2.bf16.msra.mxu0 0
        %3157 = vmatprep.subr.bf16.mxu0 0
        %3158 = vmatpush2.bf16.msra.mxu0 0
        %3159 = vmatprep.subr.bf16.mxu0 0
        %3160 = vmatpush2.bf16.msra.mxu0 0
        %3161 = vmatprep.subr.bf16.mxu0 0
        %3162 = vmatpush2.bf16.msra.mxu0 0
        %3163 = vmatprep.subr.bf16.mxu0 0
        %3164 = vmatpush2.bf16.msra.mxu0 0
        %3165 = vmatprep.subr.bf16.mxu0 0
        %3166 = vmatpush2.bf16.msra.mxu0 0
        %3167 = vmatprep.subr.bf16.mxu0 0
        %3168 = vmatpush2.bf16.msra.mxu0 0
        %3169 = vmatprep.mubr.bf16.mxu0 0
        %3170 = vmatmul.mubr.bf16.gmra.mxu0 %v3132
        %v3171 = vpop.f32.mrf.mxu0
        %v3172 = vadd.f32 0.0, %v3171
        %v3173 = vpop.f32.mrf.mxu0
        %v3174 = vpop.f32.mrf.mxu0
        %v3175 = vpop.f32.mrf.mxu0
        %3176 = vdwg.mxu0
        %v3177 = vcombine.low %v2850, %v2942
        %v3178 = vcombine.high %v2850, %v2942
        %v3180 = vunpack.c.l.s4 1983009808
        %v3181 = vunpack.c.0.s8 %v3180
        %v3182 = vlaneseq
        %v3183 = vshrl.u32 %v3182, 7
        %v3184 = vsub.s32 %v3181, %v3183
        %v3185 = vrot.slane %v3177, %v3184
        %v3187 = vunpack.c.l.s4 1983009808
        %v3188 = vunpack.c.0.s8 %v3187
        %v3189 = vlaneseq
        %v3190 = vshrl.u32 %v3189, 7
        %v3191 = vsub.s32 %v3188, %v3190
        %v3192 = vrot.slane %v3178, %v3191
        %v3193 = vcombine.low %v2896, %v2988
        %v3194 = vcombine.high %v2896, %v2988
        %v3196 = vunpack.c.l.s4 1983009808
        %v3197 = vunpack.c.0.s8 %v3196
        %v3198 = vlaneseq
        %v3199 = vshrl.u32 %v3198, 7
        %v3200 = vsub.s32 %v3197, %v3199
        %v3201 = vrot.slane %v3193, %v3200
        %v3203 = vunpack.c.l.s4 1983009808
        %v3204 = vunpack.c.0.s8 %v3203
        %v3205 = vlaneseq
        %v3206 = vshrl.u32 %v3205, 7
        %v3207 = vsub.s32 %v3204, %v3206
        %v3208 = vrot.slane %v3194, %v3207
        %v3209 = vcombine.low %v3034, %v3126
        %v3210 = vcombine.high %v3034, %v3126
        %v3212 = vunpack.c.l.s4 1983009808
        %v3213 = vunpack.c.0.s8 %v3212
        %v3214 = vlaneseq
        %v3215 = vshrl.u32 %v3214, 7
        %v3216 = vsub.s32 %v3213, %v3215
        %v3217 = vrot.slane %v3209, %v3216
        %v3219 = vunpack.c.l.s4 1983009808
        %v3220 = vunpack.c.0.s8 %v3219
        %v3221 = vlaneseq
        %v3222 = vshrl.u32 %v3221, 7
        %v3223 = vsub.s32 %v3220, %v3222
        %v3224 = vrot.slane %v3210, %v3223
        %v3225 = vcombine.low %v3080, %v3172
        %v3226 = vcombine.high %v3080, %v3172
        %v3228 = vunpack.c.l.s4 1983009808
        %v3229 = vunpack.c.0.s8 %v3228
        %v3230 = vlaneseq
        %v3231 = vshrl.u32 %v3230, 7
        %v3232 = vsub.s32 %v3229, %v3231
        %v3233 = vrot.slane %v3225, %v3232
        %v3235 = vunpack.c.l.s4 1983009808
        %v3236 = vunpack.c.0.s8 %v3235
        %v3237 = vlaneseq
        %v3238 = vshrl.u32 %v3237, 7
        %v3239 = vsub.s32 %v3236, %v3238
        %v3240 = vrot.slane %v3226, %v3239
        %v3241 = vcombine.low %v3185, %v3201
        %v3242 = vcombine.high %v3185, %v3201
        %v3244 = vunpack.c.l.s4 1934713408
        %v3245 = vunpack.c.0.s8 %v3244
        %v3246 = vlaneseq
        %v3247 = vshrl.u32 %v3246, 7
        %v3248 = vsub.s32 %v3245, %v3247
        %v3249 = vrot.slane %v3241, %v3248
        %v3251 = vunpack.c.l.s4 1934713408
        %v3252 = vunpack.c.0.s8 %v3251
        %v3253 = vlaneseq
        %v3254 = vshrl.u32 %v3253, 7
        %v3255 = vsub.s32 %v3252, %v3254
        %v3256 = vrot.slane %v3242, %v3255
        %v3257 = vcombine.low %v3192, %v3208
        %v3258 = vcombine.high %v3192, %v3208
        %v3260 = vunpack.c.l.s4 1934713408
        %v3261 = vunpack.c.0.s8 %v3260
        %v3262 = vlaneseq
        %v3263 = vshrl.u32 %v3262, 7
        %v3264 = vsub.s32 %v3261, %v3263
        %v3265 = vrot.slane %v3257, %v3264
        %v3267 = vunpack.c.l.s4 1934713408
        %v3268 = vunpack.c.0.s8 %v3267
        %v3269 = vlaneseq
        %v3270 = vshrl.u32 %v3269, 7
        %v3271 = vsub.s32 %v3268, %v3270
        %v3272 = vrot.slane %v3258, %v3271
        %v3273 = vcombine.low %v3217, %v3233
        %v3274 = vcombine.high %v3217, %v3233
        %v3276 = vunpack.c.l.s4 1934713408
        %v3277 = vunpack.c.0.s8 %v3276
        %v3278 = vlaneseq
        %v3279 = vshrl.u32 %v3278, 7
        %v3280 = vsub.s32 %v3277, %v3279
        %v3281 = vrot.slane %v3273, %v3280
        %v3283 = vunpack.c.l.s4 1934713408
        %v3284 = vunpack.c.0.s8 %v3283
        %v3285 = vlaneseq
        %v3286 = vshrl.u32 %v3285, 7
        %v3287 = vsub.s32 %v3284, %v3286
        %v3288 = vrot.slane %v3274, %v3287
        %v3289 = vcombine.low %v3224, %v3240
        %v3290 = vcombine.high %v3224, %v3240
        %v3292 = vunpack.c.l.s4 1934713408
        %v3293 = vunpack.c.0.s8 %v3292
        %v3294 = vlaneseq
        %v3295 = vshrl.u32 %v3294, 7
        %v3296 = vsub.s32 %v3293, %v3295
        %v3297 = vrot.slane %v3289, %v3296
        %v3299 = vunpack.c.l.s4 1934713408
        %v3300 = vunpack.c.0.s8 %v3299
        %v3301 = vlaneseq
        %v3302 = vshrl.u32 %v3301, 7
        %v3303 = vsub.s32 %v3300, %v3302
        %v3304 = vrot.slane %v3290, %v3303
        %v3305 = vcombine.low %v3249, %v3281
        %v3306 = vcombine.high %v3249, %v3281
        %v3307 = vcombine.low %v3256, %v3288
        %v3308 = vcombine.high %v3256, %v3288
        %v3309 = vcombine.low %v3265, %v3297
        %v3310 = vcombine.high %v3265, %v3297
        %v3311 = vcombine.low %v3272, %v3304
        %v3312 = vcombine.high %v3272, %v3304
        %v3313 = vcombine.low %v3305, %v3307
        %v3314 = vcombine.high %v3305, %v3307
        %v3316 = vunpack.c.l.s4 1983009808
        %v3317 = vunpack.c.0.s8 %v3316
        %v3318 = vlaneseq
        %v3319 = vshrl.u32 %v3318, 7
        %v3320 = vsub.s32 %v3317, %v3319
        %v3321 = vrot.slane %v3313, %v3320
        %v3323 = vunpack.c.l.s4 1983009808
        %v3324 = vunpack.c.0.s8 %v3323
        %v3325 = vlaneseq
        %v3326 = vshrl.u32 %v3325, 7
        %v3327 = vsub.s32 %v3324, %v3326
        %v3328 = vrot.slane %v3314, %v3327
        %v3329 = vcombine.low %v3306, %v3308
        %v3330 = vcombine.high %v3306, %v3308
        %v3332 = vunpack.c.l.s4 1983009808
        %v3333 = vunpack.c.0.s8 %v3332
        %v3334 = vlaneseq
        %v3335 = vshrl.u32 %v3334, 7
        %v3336 = vsub.s32 %v3333, %v3335
        %v3337 = vrot.slane %v3329, %v3336
        %v3339 = vunpack.c.l.s4 1983009808
        %v3340 = vunpack.c.0.s8 %v3339
        %v3341 = vlaneseq
        %v3342 = vshrl.u32 %v3341, 7
        %v3343 = vsub.s32 %v3340, %v3342
        %v3344 = vrot.slane %v3330, %v3343
        %v3345 = vcombine.low %v3309, %v3311
        %v3346 = vcombine.high %v3309, %v3311
        %v3348 = vunpack.c.l.s4 1983009808
        %v3349 = vunpack.c.0.s8 %v3348
        %v3350 = vlaneseq
        %v3351 = vshrl.u32 %v3350, 7
        %v3352 = vsub.s32 %v3349, %v3351
        %v3353 = vrot.slane %v3345, %v3352
        %v3355 = vunpack.c.l.s4 1983009808
        %v3356 = vunpack.c.0.s8 %v3355
        %v3357 = vlaneseq
        %v3358 = vshrl.u32 %v3357, 7
        %v3359 = vsub.s32 %v3356, %v3358
        %v3360 = vrot.slane %v3346, %v3359
        %v3361 = vcombine.low %v3310, %v3312
        %v3362 = vcombine.high %v3310, %v3312
        %v3364 = vunpack.c.l.s4 1983009808
        %v3365 = vunpack.c.0.s8 %v3364
        %v3366 = vlaneseq
        %v3367 = vshrl.u32 %v3366, 7
        %v3368 = vsub.s32 %v3365, %v3367
        %v3369 = vrot.slane %v3361, %v3368
        %v3371 = vunpack.c.l.s4 1983009808
        %v3372 = vunpack.c.0.s8 %v3371
        %v3373 = vlaneseq
        %v3374 = vshrl.u32 %v3373, 7
        %v3375 = vsub.s32 %v3372, %v3374
        %v3376 = vrot.slane %v3362, %v3375
        %v3377 = vcombine.low %v3321, %v3337
        %v3378 = vcombine.high %v3321, %v3337
        %v3380 = vunpack.c.l.s4 1934713408
        %v3381 = vunpack.c.0.s8 %v3380
        %v3382 = vlaneseq
        %v3383 = vshrl.u32 %v3382, 7
        %v3384 = vsub.s32 %v3381, %v3383
        %v3385 = vrot.slane %v3377, %v3384
        %v3387 = vunpack.c.l.s4 1934713408
        %v3388 = vunpack.c.0.s8 %v3387
        %v3389 = vlaneseq
        %v3390 = vshrl.u32 %v3389, 7
        %v3391 = vsub.s32 %v3388, %v3390
        %v3392 = vrot.slane %v3378, %v3391
        %v3393 = vcombine.low %v3328, %v3344
        %v3394 = vcombine.high %v3328, %v3344
        %v3396 = vunpack.c.l.s4 1934713408
        %v3397 = vunpack.c.0.s8 %v3396
        %v3398 = vlaneseq
        %v3399 = vshrl.u32 %v3398, 7
        %v3400 = vsub.s32 %v3397, %v3399
        %v3401 = vrot.slane %v3393, %v3400
        %v3403 = vunpack.c.l.s4 1934713408
        %v3404 = vunpack.c.0.s8 %v3403
        %v3405 = vlaneseq
        %v3406 = vshrl.u32 %v3405, 7
        %v3407 = vsub.s32 %v3404, %v3406
        %v3408 = vrot.slane %v3394, %v3407
        %v3409 = vcombine.low %v3353, %v3369
        %v3410 = vcombine.high %v3353, %v3369
        %v3412 = vunpack.c.l.s4 1934713408
        %v3413 = vunpack.c.0.s8 %v3412
        %v3414 = vlaneseq
        %v3415 = vshrl.u32 %v3414, 7
        %v3416 = vsub.s32 %v3413, %v3415
        %v3417 = vrot.slane %v3409, %v3416
        %v3419 = vunpack.c.l.s4 1934713408
        %v3420 = vunpack.c.0.s8 %v3419
        %v3421 = vlaneseq
        %v3422 = vshrl.u32 %v3421, 7
        %v3423 = vsub.s32 %v3420, %v3422
        %v3424 = vrot.slane %v3410, %v3423
        %v3425 = vcombine.low %v3360, %v3376
        %v3426 = vcombine.high %v3360, %v3376
        %v3428 = vunpack.c.l.s4 1934713408
        %v3429 = vunpack.c.0.s8 %v3428
        %v3430 = vlaneseq
        %v3431 = vshrl.u32 %v3430, 7
        %v3432 = vsub.s32 %v3429, %v3431
        %v3433 = vrot.slane %v3425, %v3432
        %v3435 = vunpack.c.l.s4 1934713408
        %v3436 = vunpack.c.0.s8 %v3435
        %v3437 = vlaneseq
        %v3438 = vshrl.u32 %v3437, 7
        %v3439 = vsub.s32 %v3436, %v3438
        %v3440 = vrot.slane %v3426, %v3439
        %v3441 = vcombine.low %v3385, %v3417
        %v3442 = vcombine.high %v3385, %v3417
        %v3443 = vcombine.low %v3392, %v3424
        %v3444 = vcombine.high %v3392, %v3424
        %v3445 = vcombine.low %v3401, %v3433
        %v3446 = vcombine.high %v3401, %v3433
        %v3447 = vcombine.low %v3408, %v3440
        %v3448 = vcombine.high %v3408, %v3440
        %3450 = vrot.lane.b32.xlu0 %v3442, 16
        %v3451 = vpop.permute.xlu0 %3450
        %3454 = vrot.lane.b32.xlu0 %v3443, 32
        %v3455 = vpop.permute.xlu0 %3454
        %3458 = vrot.lane.b32.xlu0 %v3444, 48
        %v3459 = vpop.permute.xlu0 %3458
        %3462 = vrot.lane.b32.xlu0 %v3445, 64
        %v3463 = vpop.permute.xlu0 %3462
        %3466 = vrot.lane.b32.xlu0 %v3446, 80
        %v3467 = vpop.permute.xlu0 %3466
        %3470 = vrot.lane.b32.xlu0 %v3447, 96
        %v3471 = vpop.permute.xlu0 %3470
        %3474 = vrot.lane.b32.xlu0 %v3448, 112
        %v3475 = vpop.permute.xlu0 %3474
        %v3477 = vsel %vm2318, %v3441, %v3451
        %vm3478 = vcmask 261120
        %v3479 = vsel %vm3478, %v3477, %v3455
        %vm3480 = vcmask 392192
        %v3481 = vsel %vm3480, %v3479, %v3459
        %vm3482 = vcmask 523264
        %v3483 = vsel %vm3482, %v3481, %v3463
        %vm3484 = vcmask 654336
        %v3485 = vsel %vm3484, %v3483, %v3467
        %vm3486 = vcmask 785408
        %v3487 = vsel %vm3486, %v3485, %v3471
        %vm3488 = vcmask 916480
        %v3489 = vsel %vm3488, %v3487, %v3475
        %v3490 = vpack.c.bf16 %v3489, %v3489
        %v3491 = vld [vmem:[#allocation11] sm:$0xf]
        %v3492 = vld [vmem:[#allocation11 + $0x4] sm:$0xf]
        %v3493 = vld [vmem:[#allocation11 + $0x8] sm:$0xf]
        %v3494 = vld [vmem:[#allocation11 + $0xc] sm:$0xf]
        %v3495 = vld [vmem:[#allocation11 + $0x10] sm:$0xf]
        %v3496 = vld [vmem:[#allocation11 + $0x14] sm:$0xf]
        %v3497 = vld [vmem:[#allocation11 + $0x18] sm:$0xf]
        %v3498 = vld [vmem:[#allocation11 + $0x1c] sm:$0xf]
        %v3499 = vld [vmem:[#allocation11 + $0x20] sm:$0xf]
        %v3500 = vld [vmem:[#allocation11 + $0x24] sm:$0xf]
        %v3501 = vld [vmem:[#allocation11 + $0x28] sm:$0xf]
        %v3502 = vld [vmem:[#allocation11 + $0x2c] sm:$0xf]
        %v3503 = vld [vmem:[#allocation11 + $0x30] sm:$0xf]
        %v3504 = vld [vmem:[#allocation11 + $0x34] sm:$0xf]
        %v3505 = vld [vmem:[#allocation11 + $0x38] sm:$0xf]
        %v3506 = vld [vmem:[#allocation11 + $0x3c] sm:$0xf]
        %v3507 = vld [vmem:[%s15] sm:$0x1]
        %v3509 = vlaneseq
        %v3510 = vshrl.u32 %v3509, 7
        %v3511 = vsub.s32 0, %v3510
        %v3512 = vrot.slane %v3507, %v3511
        %v3530 = vunpack.c.l.b16 %v3491
        %v3531 = vunpack.c.l.b16 %v3492
        %v3532 = vunpack.c.l.b16 %v3493
        %v3533 = vunpack.c.l.b16 %v3494
        %v3534 = vunpack.c.l.b16 %v3495
        %v3535 = vunpack.c.l.b16 %v3496
        %v3536 = vunpack.c.l.b16 %v3497
        %v3537 = vunpack.c.l.b16 %v3498
        %v3538 = vunpack.c.l.b16 %v3499
        %v3539 = vunpack.c.l.b16 %v3500
        %v3540 = vunpack.c.l.b16 %v3501
        %v3541 = vunpack.c.l.b16 %v3502
        %v3542 = vunpack.c.l.b16 %v3503
        %v3543 = vunpack.c.l.b16 %v3504
        %v3544 = vunpack.c.l.b16 %v3505
        %v3545 = vunpack.c.l.b16 %v3506
        %v3546 = vpack.c.b16 %v3531, %v3530
        %v3547 = vpack.c.b16 %v3533, %v3532
        %v3548 = vpack.c.b16 %v3535, %v3534
        %v3549 = vpack.c.b16 %v3537, %v3536
        %v3550 = vpack.c.b16 %v3539, %v3538
        %v3551 = vpack.c.b16 %v3541, %v3540
        %v3552 = vpack.c.b16 %v3543, %v3542
        %v3553 = vpack.c.b16 %v3545, %v3544
        %3562 = vmatprep.subr.bf16.mxu0 0
        %3563 = vmatpush1.bf16.msra.mxu0 %v3553
        %3564 = vmatprep.subr.bf16.mxu0 0
        %3565 = vmatpush1.bf16.msra.mxu0 %v3552
        %3566 = vmatprep.subr.bf16.mxu0 0
        %3567 = vmatpush1.bf16.msra.mxu0 %v3551
        %3568 = vmatprep.subr.bf16.mxu0 0
        %3569 = vmatpush1.bf16.msra.mxu0 %v3550
        %3570 = vmatprep.subr.bf16.mxu0 0
        %3571 = vmatpush1.bf16.msra.mxu0 %v3549
        %3572 = vmatprep.subr.bf16.mxu0 0
        %3573 = vmatpush1.bf16.msra.mxu0 %v3548
        %3574 = vmatprep.subr.bf16.mxu0 0
        %3575 = vmatpush1.bf16.msra.mxu0 %v3547
        %3576 = vmatprep.subr.bf16.mxu0 0
        %3577 = vmatpush1.bf16.msra.mxu0 %v3546
        %3578 = vmatprep.subr.bf16.mxu0 0
        %3579 = vmatpush2.bf16.msra.mxu0 0
        %3580 = vmatprep.subr.bf16.mxu0 0
        %3581 = vmatpush2.bf16.msra.mxu0 0
        %3582 = vmatprep.subr.bf16.mxu0 0
        %3583 = vmatpush2.bf16.msra.mxu0 0
        %3584 = vmatprep.subr.bf16.mxu0 0
        %3585 = vmatpush2.bf16.msra.mxu0 0
        %3586 = vmatprep.subr.bf16.mxu0 0
        %3587 = vmatpush2.bf16.msra.mxu0 0
        %3588 = vmatprep.subr.bf16.mxu0 0
        %3589 = vmatpush2.bf16.msra.mxu0 0
        %3590 = vmatprep.subr.bf16.mxu0 0
        %3591 = vmatpush2.bf16.msra.mxu0 0
        %3592 = vmatprep.subr.bf16.mxu0 0
        %3593 = vmatpush2.bf16.msra.mxu0 0
        %3594 = vmatprep.mubr.bf16.mxu0 0
        %3595 = vmatmul.mubr.bf16.gmra.mxu0 %v3490
        %v3596 = vpop.f32.mrf.mxu0
        %v3597 = vadd.f32 %v3512, %v3596
        %v3598 = vpop.f32.mrf.mxu0
        %v3599 = vpop.f32.mrf.mxu0
        %v3600 = vpop.f32.mrf.mxu0
        %3601 = vdwg.mxu0
        %v3602 = vadd.f32 %v1047, %v3597
        %v3603 = vld [vmem:[%s4] sm:$0x1]
        %v3604 = vld [vmem:[%s5] sm:$0x1]
        %3605 = vadd.xlane.f32.xlu0 %v3602
        %v3606 = vpop.xlane.xlu0 %3605
        %v3607 = vmul.f32 %v3606, %v1054
        %v3608 = vsub.f32 %v3602, %v3607
        %v3609 = vmul.f32 %v3608, %v3608
        %3610 = vadd.xlane.f32.xlu0 %v3609
        %v3611 = vpop.xlane.xlu0 %3610
        %v3612 = vmul.f32 %v3611, %v1054
        %v3613 = vadd.f32 %v3612, 1e-05
        %v3614 = vrsqrt.pop %v3613
        %v3615 = vmul.f32 %v3608, %v3614
        %v3617 = vlaneseq
        %v3618 = vshrl.u32 %v3617, 7
        %v3619 = vsub.s32 0, %v3618
        %v3620 = vrot.slane %v3603, %v3619
        %v3622 = vmul.f32 %v3615, %v3620
        %v3624 = vlaneseq
        %v3625 = vshrl.u32 %v3624, 7
        %v3626 = vsub.s32 0, %v3625
        %v3627 = vrot.slane %v3604, %v3626
        %v3629 = vadd.f32 %v3622, %v3627
        %v3630 = vpack.c.bf16 %v3629, %v3629
        %v3631 = vpack.c.bf16 %v1049, %v1048
        %v3632 = vld [vmem:[#allocation13] sm:$0xf]
        %v3633 = vld [vmem:[#allocation13 + $0x4] sm:$0xf]
        %v3634 = vld [vmem:[#allocation13 + $0x8] sm:$0xf]
        %v3635 = vld [vmem:[#allocation13 + $0xc] sm:$0xf]
        %v3636 = vld [vmem:[#allocation13 + $0x10] sm:$0xf]
        %v3637 = vld [vmem:[#allocation13 + $0x14] sm:$0xf]
        %v3638 = vld [vmem:[#allocation13 + $0x18] sm:$0xf]
        %v3639 = vld [vmem:[#allocation13 + $0x1c] sm:$0xf]
        %v3640 = vld [vmem:[#allocation13 + $0x20] sm:$0xf]
        %v3641 = vld [vmem:[#allocation13 + $0x24] sm:$0xf]
        %v3642 = vld [vmem:[#allocation13 + $0x28] sm:$0xf]
        %v3643 = vld [vmem:[#allocation13 + $0x2c] sm:$0xf]
        %v3644 = vld [vmem:[#allocation13 + $0x30] sm:$0xf]
        %v3645 = vld [vmem:[#allocation13 + $0x34] sm:$0xf]
        %v3646 = vld [vmem:[#allocation13 + $0x38] sm:$0xf]
        %v3647 = vld [vmem:[#allocation13 + $0x3c] sm:$0xf]
        %v3648 = vld [vmem:[%s17] sm:$0x1]
        %v3650 = vlaneseq
        %v3651 = vshrl.u32 %v3650, 7
        %v3652 = vsub.s32 0, %v3651
        %v3653 = vrot.slane %v3648, %v3652
        %v3671 = vunpack.c.l.b16 %v3632
        %v3672 = vunpack.c.l.b16 %v3633
        %v3673 = vunpack.c.l.b16 %v3634
        %v3674 = vunpack.c.l.b16 %v3635
        %v3675 = vunpack.c.l.b16 %v3636
        %v3676 = vunpack.c.l.b16 %v3637
        %v3677 = vunpack.c.l.b16 %v3638
        %v3678 = vunpack.c.l.b16 %v3639
        %v3679 = vunpack.c.l.b16 %v3640
        %v3680 = vunpack.c.l.b16 %v3641
        %v3681 = vunpack.c.l.b16 %v3642
        %v3682 = vunpack.c.l.b16 %v3643
        %v3683 = vunpack.c.l.b16 %v3644
        %v3684 = vunpack.c.l.b16 %v3645
        %v3685 = vunpack.c.l.b16 %v3646
        %v3686 = vunpack.c.l.b16 %v3647
        %v3687 = vpack.c.b16 %v3672, %v3671
        %v3688 = vpack.c.b16 %v3674, %v3673
        %v3689 = vpack.c.b16 %v3676, %v3675
        %v3690 = vpack.c.b16 %v3678, %v3677
        %v3691 = vpack.c.b16 %v3680, %v3679
        %v3692 = vpack.c.b16 %v3682, %v3681
        %v3693 = vpack.c.b16 %v3684, %v3683
        %v3694 = vpack.c.b16 %v3686, %v3685
        %3703 = vmatprep.subr.bf16.mxu0 0
        %3704 = vmatpush1.bf16.msra.mxu0 %v3694
        %3705 = vmatprep.subr.bf16.mxu0 0
        %3706 = vmatpush1.bf16.msra.mxu0 %v3693
        %3707 = vmatprep.subr.bf16.mxu0 0
        %3708 = vmatpush1.bf16.msra.mxu0 %v3692
        %3709 = vmatprep.subr.bf16.mxu0 0
        %3710 = vmatpush1.bf16.msra.mxu0 %v3691
        %3711 = vmatprep.subr.bf16.mxu0 0
        %3712 = vmatpush1.bf16.msra.mxu0 %v3690
        %3713 = vmatprep.subr.bf16.mxu0 0
        %3714 = vmatpush1.bf16.msra.mxu0 %v3689
        %3715 = vmatprep.subr.bf16.mxu0 0
        %3716 = vmatpush1.bf16.msra.mxu0 %v3688
        %3717 = vmatprep.subr.bf16.mxu0 0
        %3718 = vmatpush1.bf16.msra.mxu0 %v3687
        %3719 = vmatprep.subr.bf16.mxu0 0
        %3720 = vmatpush2.bf16.msra.mxu0 0
        %3721 = vmatprep.subr.bf16.mxu0 0
        %3722 = vmatpush2.bf16.msra.mxu0 0
        %3723 = vmatprep.subr.bf16.mxu0 0
        %3724 = vmatpush2.bf16.msra.mxu0 0
        %3725 = vmatprep.subr.bf16.mxu0 0
        %3726 = vmatpush2.bf16.msra.mxu0 0
        %3727 = vmatprep.subr.bf16.mxu0 0
        %3728 = vmatpush2.bf16.msra.mxu0 0
        %3729 = vmatprep.subr.bf16.mxu0 0
        %3730 = vmatpush2.bf16.msra.mxu0 0
        %3731 = vmatprep.subr.bf16.mxu0 0
        %3732 = vmatpush2.bf16.msra.mxu0 0
        %3733 = vmatprep.subr.bf16.mxu0 0
        %3734 = vmatpush2.bf16.msra.mxu0 0
        %3735 = vmatprep.mubr.bf16.mxu0 0
        %3736 = vmatmul.mubr.bf16.gmra.mxu0 %v3630
        %v3737 = vpop.f32.mrf.mxu0
        %v3738 = vadd.f32 %v3653, %v3737
        %v3739 = vpop.f32.mrf.mxu0
        %v3740 = vpop.f32.mrf.mxu0
        %v3741 = vpop.f32.mrf.mxu0
        %3742 = vdwg.mxu0
        %v3743 = vld [vmem:[#allocation14] sm:$0xf]
        %v3744 = vld [vmem:[#allocation14 + $0x4] sm:$0xf]
        %v3745 = vld [vmem:[#allocation14 + $0x8] sm:$0xf]
        %v3746 = vld [vmem:[#allocation14 + $0xc] sm:$0xf]
        %v3747 = vld [vmem:[#allocation14 + $0x10] sm:$0xf]
        %v3748 = vld [vmem:[#allocation14 + $0x14] sm:$0xf]
        %v3749 = vld [vmem:[#allocation14 + $0x18] sm:$0xf]
        %v3750 = vld [vmem:[#allocation14 + $0x1c] sm:$0xf]
        %v3751 = vld [vmem:[#allocation14 + $0x20] sm:$0xf]
        %v3752 = vld [vmem:[#allocation14 + $0x24] sm:$0xf]
        %v3753 = vld [vmem:[#allocation14 + $0x28] sm:$0xf]
        %v3754 = vld [vmem:[#allocation14 + $0x2c] sm:$0xf]
        %v3755 = vld [vmem:[#allocation14 + $0x30] sm:$0xf]
        %v3756 = vld [vmem:[#allocation14 + $0x34] sm:$0xf]
        %v3757 = vld [vmem:[#allocation14 + $0x38] sm:$0xf]
        %v3758 = vld [vmem:[#allocation14 + $0x3c] sm:$0xf]
        %v3759 = vld [vmem:[%s19] sm:$0x1]
        %v3761 = vlaneseq
        %v3762 = vshrl.u32 %v3761, 7
        %v3763 = vsub.s32 0, %v3762
        %v3764 = vrot.slane %v3759, %v3763
        %v3782 = vunpack.c.l.b16 %v3743
        %v3783 = vunpack.c.l.b16 %v3744
        %v3784 = vunpack.c.l.b16 %v3745
        %v3785 = vunpack.c.l.b16 %v3746
        %v3786 = vunpack.c.l.b16 %v3747
        %v3787 = vunpack.c.l.b16 %v3748
        %v3788 = vunpack.c.l.b16 %v3749
        %v3789 = vunpack.c.l.b16 %v3750
        %v3790 = vunpack.c.l.b16 %v3751
        %v3791 = vunpack.c.l.b16 %v3752
        %v3792 = vunpack.c.l.b16 %v3753
        %v3793 = vunpack.c.l.b16 %v3754
        %v3794 = vunpack.c.l.b16 %v3755
        %v3795 = vunpack.c.l.b16 %v3756
        %v3796 = vunpack.c.l.b16 %v3757
        %v3797 = vunpack.c.l.b16 %v3758
        %v3798 = vpack.c.b16 %v3783, %v3782
        %v3799 = vpack.c.b16 %v3785, %v3784
        %v3800 = vpack.c.b16 %v3787, %v3786
        %v3801 = vpack.c.b16 %v3789, %v3788
        %v3802 = vpack.c.b16 %v3791, %v3790
        %v3803 = vpack.c.b16 %v3793, %v3792
        %v3804 = vpack.c.b16 %v3795, %v3794
        %v3805 = vpack.c.b16 %v3797, %v3796
        %3814 = vmatprep.subr.bf16.mxu0 0
        %3815 = vmatpush1.bf16.msra.mxu0 %v3805
        %3816 = vmatprep.subr.bf16.mxu0 0
        %3817 = vmatpush1.bf16.msra.mxu0 %v3804
        %3818 = vmatprep.subr.bf16.mxu0 0
        %3819 = vmatpush1.bf16.msra.mxu0 %v3803
        %3820 = vmatprep.subr.bf16.mxu0 0
        %3821 = vmatpush1.bf16.msra.mxu0 %v3802
        %3822 = vmatprep.subr.bf16.mxu0 0
        %3823 = vmatpush1.bf16.msra.mxu0 %v3801
        %3824 = vmatprep.subr.bf16.mxu0 0
        %3825 = vmatpush1.bf16.msra.mxu0 %v3800
        %3826 = vmatprep.subr.bf16.mxu0 0
        %3827 = vmatpush1.bf16.msra.mxu0 %v3799
        %3828 = vmatprep.subr.bf16.mxu0 0
        %3829 = vmatpush1.bf16.msra.mxu0 %v3798
        %3830 = vmatprep.subr.bf16.mxu0 0
        %3831 = vmatpush2.bf16.msra.mxu0 0
        %3832 = vmatprep.subr.bf16.mxu0 0
        %3833 = vmatpush2.bf16.msra.mxu0 0
        %3834 = vmatprep.subr.bf16.mxu0 0
        %3835 = vmatpush2.bf16.msra.mxu0 0
        %3836 = vmatprep.subr.bf16.mxu0 0
        %3837 = vmatpush2.bf16.msra.mxu0 0
        %3838 = vmatprep.subr.bf16.mxu0 0
        %3839 = vmatpush2.bf16.msra.mxu0 0
        %3840 = vmatprep.subr.bf16.mxu0 0
        %3841 = vmatpush2.bf16.msra.mxu0 0
        %3842 = vmatprep.subr.bf16.mxu0 0
        %3843 = vmatpush2.bf16.msra.mxu0 0
        %3844 = vmatprep.subr.bf16.mxu0 0
        %3845 = vmatpush2.bf16.msra.mxu0 0
        %3846 = vmatprep.mubr.bf16.mxu0 0
        %3847 = vmatmul.mubr.bf16.gmra.mxu0 %v3631
        %v3848 = vpop.f32.mrf.mxu0
        %v3849 = vadd.f32 %v3764, %v3848
        %v3850 = vpop.f32.mrf.mxu0
        %v3851 = vpop.f32.mrf.mxu0
        %v3852 = vadd.f32 %v3764, %v3851
        %v3853 = vpop.f32.mrf.mxu0
        %3854 = vdwg.mxu0
        %v3855 = vld [vmem:[#allocation16] sm:$0xf]
        %v3856 = vld [vmem:[#allocation16 + $0x4] sm:$0xf]
        %v3857 = vld [vmem:[#allocation16 + $0x8] sm:$0xf]
        %v3858 = vld [vmem:[#allocation16 + $0xc] sm:$0xf]
        %v3859 = vld [vmem:[#allocation16 + $0x10] sm:$0xf]
        %v3860 = vld [vmem:[#allocation16 + $0x14] sm:$0xf]
        %v3861 = vld [vmem:[#allocation16 + $0x18] sm:$0xf]
        %v3862 = vld [vmem:[#allocation16 + $0x1c] sm:$0xf]
        %v3863 = vld [vmem:[#allocation16 + $0x20] sm:$0xf]
        %v3864 = vld [vmem:[#allocation16 + $0x24] sm:$0xf]
        %v3865 = vld [vmem:[#allocation16 + $0x28] sm:$0xf]
        %v3866 = vld [vmem:[#allocation16 + $0x2c] sm:$0xf]
        %v3867 = vld [vmem:[#allocation16 + $0x30] sm:$0xf]
        %v3868 = vld [vmem:[#allocation16 + $0x34] sm:$0xf]
        %v3869 = vld [vmem:[#allocation16 + $0x38] sm:$0xf]
        %v3870 = vld [vmem:[#allocation16 + $0x3c] sm:$0xf]
        %v3871 = vld [vmem:[%s21] sm:$0x1]
        %v3873 = vlaneseq
        %v3874 = vshrl.u32 %v3873, 7
        %v3875 = vsub.s32 0, %v3874
        %v3876 = vrot.slane %v3871, %v3875
        %v3894 = vunpack.c.l.b16 %v3855
        %v3895 = vunpack.c.l.b16 %v3856
        %v3896 = vunpack.c.l.b16 %v3857
        %v3897 = vunpack.c.l.b16 %v3858
        %v3898 = vunpack.c.l.b16 %v3859
        %v3899 = vunpack.c.l.b16 %v3860
        %v3900 = vunpack.c.l.b16 %v3861
        %v3901 = vunpack.c.l.b16 %v3862
        %v3902 = vunpack.c.l.b16 %v3863
        %v3903 = vunpack.c.l.b16 %v3864
        %v3904 = vunpack.c.l.b16 %v3865
        %v3905 = vunpack.c.l.b16 %v3866
        %v3906 = vunpack.c.l.b16 %v3867
        %v3907 = vunpack.c.l.b16 %v3868
        %v3908 = vunpack.c.l.b16 %v3869
        %v3909 = vunpack.c.l.b16 %v3870
        %v3910 = vpack.c.b16 %v3895, %v3894
        %v3911 = vpack.c.b16 %v3897, %v3896
        %v3912 = vpack.c.b16 %v3899, %v3898
        %v3913 = vpack.c.b16 %v3901, %v3900
        %v3914 = vpack.c.b16 %v3903, %v3902
        %v3915 = vpack.c.b16 %v3905, %v3904
        %v3916 = vpack.c.b16 %v3907, %v3906
        %v3917 = vpack.c.b16 %v3909, %v3908
        %3926 = vmatprep.subr.bf16.mxu0 0
        %3927 = vmatpush1.bf16.msra.mxu0 %v3917
        %3928 = vmatprep.subr.bf16.mxu0 0
        %3929 = vmatpush1.bf16.msra.mxu0 %v3916
        %3930 = vmatprep.subr.bf16.mxu0 0
        %3931 = vmatpush1.bf16.msra.mxu0 %v3915
        %3932 = vmatprep.subr.bf16.mxu0 0
        %3933 = vmatpush1.bf16.msra.mxu0 %v3914
        %3934 = vmatprep.subr.bf16.mxu0 0
        %3935 = vmatpush1.bf16.msra.mxu0 %v3913
        %3936 = vmatprep.subr.bf16.mxu0 0
        %3937 = vmatpush1.bf16.msra.mxu0 %v3912
        %3938 = vmatprep.subr.bf16.mxu0 0
        %3939 = vmatpush1.bf16.msra.mxu0 %v3911
        %3940 = vmatprep.subr.bf16.mxu0 0
        %3941 = vmatpush1.bf16.msra.mxu0 %v3910
        %3942 = vmatprep.subr.bf16.mxu0 0
        %3943 = vmatpush2.bf16.msra.mxu0 0
        %3944 = vmatprep.subr.bf16.mxu0 0
        %3945 = vmatpush2.bf16.msra.mxu0 0
        %3946 = vmatprep.subr.bf16.mxu0 0
        %3947 = vmatpush2.bf16.msra.mxu0 0
        %3948 = vmatprep.subr.bf16.mxu0 0
        %3949 = vmatpush2.bf16.msra.mxu0 0
        %3950 = vmatprep.subr.bf16.mxu0 0
        %3951 = vmatpush2.bf16.msra.mxu0 0
        %3952 = vmatprep.subr.bf16.mxu0 0
        %3953 = vmatpush2.bf16.msra.mxu0 0
        %3954 = vmatprep.subr.bf16.mxu0 0
        %3955 = vmatpush2.bf16.msra.mxu0 0
        %3956 = vmatprep.subr.bf16.mxu0 0
        %3957 = vmatpush2.bf16.msra.mxu0 0
        %3958 = vmatprep.mubr.bf16.mxu0 0
        %3959 = vmatmul.mubr.bf16.gmra.mxu0 %v3631
        %v3960 = vpop.f32.mrf.mxu0
        %v3961 = vadd.f32 %v3876, %v3960
        %v3962 = vpop.f32.mrf.mxu0
        %v3963 = vpop.f32.mrf.mxu0
        %v3964 = vadd.f32 %v3876, %v3963
        %v3965 = vpop.f32.mrf.mxu0
        %3966 = vdwg.mxu0
        %3968 = vrot.lane.b32.xlu0 %v3738, 112
        %v3969 = vpop.permute.xlu0 %3968
        %3971 = vrot.lane.b32.xlu0 %v3738, 96
        %v3972 = vpop.permute.xlu0 %3971
        %3974 = vrot.lane.b32.xlu0 %v3738, 80
        %v3975 = vpop.permute.xlu0 %3974
        %3977 = vrot.lane.b32.xlu0 %v3738, 64
        %v3978 = vpop.permute.xlu0 %3977
        %3980 = vrot.lane.b32.xlu0 %v3738, 48
        %v3981 = vpop.permute.xlu0 %3980
        %3983 = vrot.lane.b32.xlu0 %v3738, 32
        %v3984 = vpop.permute.xlu0 %3983
        %3986 = vrot.lane.b32.xlu0 %v3738, 16
        %v3987 = vpop.permute.xlu0 %3986
        %v3989 = vcombine.low %v3738, %v3972
        %v3990 = vcombine.high %v3738, %v3972
        %v3992 = vunpack.c.l.s4 1983009808
        %v3993 = vunpack.c.0.s8 %v3992
        %v3994 = vlaneseq
        %v3995 = vshrl.u32 %v3994, 7
        %v3996 = vsub.s32 %v3993, %v3995
        %v3997 = vrot.slane %v3989, %v3996
        %v3999 = vunpack.c.l.s4 1983009808
        %v4000 = vunpack.c.0.s8 %v3999
        %v4001 = vlaneseq
        %v4002 = vshrl.u32 %v4001, 7
        %v4003 = vsub.s32 %v4000, %v4002
        %v4004 = vrot.slane %v3990, %v4003
        %v4005 = vcombine.low %v3969, %v3975
        %v4006 = vcombine.high %v3969, %v3975
        %v4008 = vunpack.c.l.s4 1983009808
        %v4009 = vunpack.c.0.s8 %v4008
        %v4010 = vlaneseq
        %v4011 = vshrl.u32 %v4010, 7
        %v4012 = vsub.s32 %v4009, %v4011
        %v4013 = vrot.slane %v4005, %v4012
        %v4015 = vunpack.c.l.s4 1983009808
        %v4016 = vunpack.c.0.s8 %v4015
        %v4017 = vlaneseq
        %v4018 = vshrl.u32 %v4017, 7
        %v4019 = vsub.s32 %v4016, %v4018
        %v4020 = vrot.slane %v4006, %v4019
        %v4021 = vcombine.low %v3978, %v3984
        %v4022 = vcombine.high %v3978, %v3984
        %v4024 = vunpack.c.l.s4 1983009808
        %v4025 = vunpack.c.0.s8 %v4024
        %v4026 = vlaneseq
        %v4027 = vshrl.u32 %v4026, 7
        %v4028 = vsub.s32 %v4025, %v4027
        %v4029 = vrot.slane %v4021, %v4028
        %v4031 = vunpack.c.l.s4 1983009808
        %v4032 = vunpack.c.0.s8 %v4031
        %v4033 = vlaneseq
        %v4034 = vshrl.u32 %v4033, 7
        %v4035 = vsub.s32 %v4032, %v4034
        %v4036 = vrot.slane %v4022, %v4035
        %v4037 = vcombine.low %v3981, %v3987
        %v4038 = vcombine.high %v3981, %v3987
        %v4040 = vunpack.c.l.s4 1983009808
        %v4041 = vunpack.c.0.s8 %v4040
        %v4042 = vlaneseq
        %v4043 = vshrl.u32 %v4042, 7
        %v4044 = vsub.s32 %v4041, %v4043
        %v4045 = vrot.slane %v4037, %v4044
        %v4047 = vunpack.c.l.s4 1983009808
        %v4048 = vunpack.c.0.s8 %v4047
        %v4049 = vlaneseq
        %v4050 = vshrl.u32 %v4049, 7
        %v4051 = vsub.s32 %v4048, %v4050
        %v4052 = vrot.slane %v4038, %v4051
        %v4053 = vcombine.low %v3997, %v4013
        %v4054 = vcombine.high %v3997, %v4013
        %v4056 = vunpack.c.l.s4 1934713408
        %v4057 = vunpack.c.0.s8 %v4056
        %v4058 = vlaneseq
        %v4059 = vshrl.u32 %v4058, 7
        %v4060 = vsub.s32 %v4057, %v4059
        %v4061 = vrot.slane %v4053, %v4060
        %v4063 = vunpack.c.l.s4 1934713408
        %v4064 = vunpack.c.0.s8 %v4063
        %v4065 = vlaneseq
        %v4066 = vshrl.u32 %v4065, 7
        %v4067 = vsub.s32 %v4064, %v4066
        %v4068 = vrot.slane %v4054, %v4067
        %v4069 = vcombine.low %v4004, %v4020
        %v4070 = vcombine.high %v4004, %v4020
        %v4072 = vunpack.c.l.s4 1934713408
        %v4073 = vunpack.c.0.s8 %v4072
        %v4074 = vlaneseq
        %v4075 = vshrl.u32 %v4074, 7
        %v4076 = vsub.s32 %v4073, %v4075
        %v4077 = vrot.slane %v4069, %v4076
        %v4079 = vunpack.c.l.s4 1934713408
        %v4080 = vunpack.c.0.s8 %v4079
        %v4081 = vlaneseq
        %v4082 = vshrl.u32 %v4081, 7
        %v4083 = vsub.s32 %v4080, %v4082
        %v4084 = vrot.slane %v4070, %v4083
        %v4085 = vcombine.low %v4029, %v4045
        %v4086 = vcombine.high %v4029, %v4045
        %v4088 = vunpack.c.l.s4 1934713408
        %v4089 = vunpack.c.0.s8 %v4088
        %v4090 = vlaneseq
        %v4091 = vshrl.u32 %v4090, 7
        %v4092 = vsub.s32 %v4089, %v4091
        %v4093 = vrot.slane %v4085, %v4092
        %v4095 = vunpack.c.l.s4 1934713408
        %v4096 = vunpack.c.0.s8 %v4095
        %v4097 = vlaneseq
        %v4098 = vshrl.u32 %v4097, 7
        %v4099 = vsub.s32 %v4096, %v4098
        %v4100 = vrot.slane %v4086, %v4099
        %v4101 = vcombine.low %v4036, %v4052
        %v4102 = vcombine.high %v4036, %v4052
        %v4104 = vunpack.c.l.s4 1934713408
        %v4105 = vunpack.c.0.s8 %v4104
        %v4106 = vlaneseq
        %v4107 = vshrl.u32 %v4106, 7
        %v4108 = vsub.s32 %v4105, %v4107
        %v4109 = vrot.slane %v4101, %v4108
        %v4111 = vunpack.c.l.s4 1934713408
        %v4112 = vunpack.c.0.s8 %v4111
        %v4113 = vlaneseq
        %v4114 = vshrl.u32 %v4113, 7
        %v4115 = vsub.s32 %v4112, %v4114
        %v4116 = vrot.slane %v4102, %v4115
        %v4117 = vcombine.low %v4061, %v4093
        %v4118 = vcombine.high %v4061, %v4093
        %v4119 = vcombine.low %v4068, %v4100
        %v4120 = vcombine.high %v4068, %v4100
        %v4121 = vcombine.low %v4077, %v4109
        %v4122 = vcombine.high %v4077, %v4109
        %v4123 = vcombine.low %v4084, %v4116
        %v4124 = vcombine.high %v4084, %v4116
        %v4125 = vcombine.low %v4117, %v4119
        %v4126 = vcombine.high %v4117, %v4119
        %v4128 = vunpack.c.l.s4 1983009808
        %v4129 = vunpack.c.0.s8 %v4128
        %v4130 = vlaneseq
        %v4131 = vshrl.u32 %v4130, 7
        %v4132 = vsub.s32 %v4129, %v4131
        %v4133 = vrot.slane %v4125, %v4132
        %v4135 = vunpack.c.l.s4 1983009808
        %v4136 = vunpack.c.0.s8 %v4135
        %v4137 = vlaneseq
        %v4138 = vshrl.u32 %v4137, 7
        %v4139 = vsub.s32 %v4136, %v4138
        %v4140 = vrot.slane %v4126, %v4139
        %v4141 = vcombine.low %v4118, %v4120
        %v4142 = vcombine.high %v4118, %v4120
        %v4144 = vunpack.c.l.s4 1983009808
        %v4145 = vunpack.c.0.s8 %v4144
        %v4146 = vlaneseq
        %v4147 = vshrl.u32 %v4146, 7
        %v4148 = vsub.s32 %v4145, %v4147
        %v4149 = vrot.slane %v4141, %v4148
        %v4151 = vunpack.c.l.s4 1983009808
        %v4152 = vunpack.c.0.s8 %v4151
        %v4153 = vlaneseq
        %v4154 = vshrl.u32 %v4153, 7
        %v4155 = vsub.s32 %v4152, %v4154
        %v4156 = vrot.slane %v4142, %v4155
        %v4157 = vcombine.low %v4121, %v4123
        %v4158 = vcombine.high %v4121, %v4123
        %v4160 = vunpack.c.l.s4 1983009808
        %v4161 = vunpack.c.0.s8 %v4160
        %v4162 = vlaneseq
        %v4163 = vshrl.u32 %v4162, 7
        %v4164 = vsub.s32 %v4161, %v4163
        %v4165 = vrot.slane %v4157, %v4164
        %v4167 = vunpack.c.l.s4 1983009808
        %v4168 = vunpack.c.0.s8 %v4167
        %v4169 = vlaneseq
        %v4170 = vshrl.u32 %v4169, 7
        %v4171 = vsub.s32 %v4168, %v4170
        %v4172 = vrot.slane %v4158, %v4171
        %v4173 = vcombine.low %v4122, %v4124
        %v4174 = vcombine.high %v4122, %v4124
        %v4176 = vunpack.c.l.s4 1983009808
        %v4177 = vunpack.c.0.s8 %v4176
        %v4178 = vlaneseq
        %v4179 = vshrl.u32 %v4178, 7
        %v4180 = vsub.s32 %v4177, %v4179
        %v4181 = vrot.slane %v4173, %v4180
        %v4183 = vunpack.c.l.s4 1983009808
        %v4184 = vunpack.c.0.s8 %v4183
        %v4185 = vlaneseq
        %v4186 = vshrl.u32 %v4185, 7
        %v4187 = vsub.s32 %v4184, %v4186
        %v4188 = vrot.slane %v4174, %v4187
        %v4189 = vcombine.low %v4133, %v4149
        %v4190 = vcombine.high %v4133, %v4149
        %v4192 = vunpack.c.l.s4 1934713408
        %v4193 = vunpack.c.0.s8 %v4192
        %v4194 = vlaneseq
        %v4195 = vshrl.u32 %v4194, 7
        %v4196 = vsub.s32 %v4193, %v4195
        %v4197 = vrot.slane %v4189, %v4196
        %v4199 = vunpack.c.l.s4 1934713408
        %v4200 = vunpack.c.0.s8 %v4199
        %v4201 = vlaneseq
        %v4202 = vshrl.u32 %v4201, 7
        %v4203 = vsub.s32 %v4200, %v4202
        %v4204 = vrot.slane %v4190, %v4203
        %v4205 = vcombine.low %v4140, %v4156
        %v4206 = vcombine.high %v4140, %v4156
        %v4208 = vunpack.c.l.s4 1934713408
        %v4209 = vunpack.c.0.s8 %v4208
        %v4210 = vlaneseq
        %v4211 = vshrl.u32 %v4210, 7
        %v4212 = vsub.s32 %v4209, %v4211
        %v4213 = vrot.slane %v4205, %v4212
        %v4215 = vunpack.c.l.s4 1934713408
        %v4216 = vunpack.c.0.s8 %v4215
        %v4217 = vlaneseq
        %v4218 = vshrl.u32 %v4217, 7
        %v4219 = vsub.s32 %v4216, %v4218
        %v4220 = vrot.slane %v4206, %v4219
        %v4221 = vcombine.low %v4165, %v4181
        %v4222 = vcombine.high %v4165, %v4181
        %v4224 = vunpack.c.l.s4 1934713408
        %v4225 = vunpack.c.0.s8 %v4224
        %v4226 = vlaneseq
        %v4227 = vshrl.u32 %v4226, 7
        %v4228 = vsub.s32 %v4225, %v4227
        %v4229 = vrot.slane %v4221, %v4228
        %v4231 = vunpack.c.l.s4 1934713408
        %v4232 = vunpack.c.0.s8 %v4231
        %v4233 = vlaneseq
        %v4234 = vshrl.u32 %v4233, 7
        %v4235 = vsub.s32 %v4232, %v4234
        %v4236 = vrot.slane %v4222, %v4235
        %v4237 = vcombine.low %v4172, %v4188
        %v4238 = vcombine.high %v4172, %v4188
        %v4240 = vunpack.c.l.s4 1934713408
        %v4241 = vunpack.c.0.s8 %v4240
        %v4242 = vlaneseq
        %v4243 = vshrl.u32 %v4242, 7
        %v4244 = vsub.s32 %v4241, %v4243
        %v4245 = vrot.slane %v4237, %v4244
        %v4247 = vunpack.c.l.s4 1934713408
        %v4248 = vunpack.c.0.s8 %v4247
        %v4249 = vlaneseq
        %v4250 = vshrl.u32 %v4249, 7
        %v4251 = vsub.s32 %v4248, %v4250
        %v4252 = vrot.slane %v4238, %v4251
        %v4253 = vcombine.low %v4197, %v4229
        %v4254 = vcombine.high %v4197, %v4229
        %v4255 = vcombine.low %v4204, %v4236
        %v4256 = vcombine.high %v4204, %v4236
        %v4257 = vcombine.low %v4213, %v4245
        %v4258 = vcombine.high %v4213, %v4245
        %v4259 = vcombine.low %v4220, %v4252
        %v4260 = vcombine.high %v4220, %v4252
        %v4261 = vpack.c.bf16 %v4253, %v4253
        %v4262 = vpack.c.bf16 %v4254, %v4254
        %v4263 = vpack.c.bf16 %v4255, %v4255
        %v4264 = vpack.c.bf16 %v4256, %v4256
        %v4265 = vpack.c.bf16 %v4257, %v4257
        %v4266 = vpack.c.bf16 %v4258, %v4258
        %v4267 = vpack.c.bf16 %v4259, %v4259
        %v4268 = vpack.c.bf16 %v4260, %v4260
        %4271 = vrot.lane.b32.xlu0 %v3849, 112
        %v4272 = vpop.permute.xlu0 %4271
        %4273 = vrot.lane.b32.xlu0 %v3852, 112
        %v4274 = vpop.permute.xlu0 %4273
        %4277 = vrot.lane.b32.xlu0 %v3849, 96
        %v4278 = vpop.permute.xlu0 %4277
        %4279 = vrot.lane.b32.xlu0 %v3852, 96
        %v4280 = vpop.permute.xlu0 %4279
        %4283 = vrot.lane.b32.xlu0 %v3849, 80
        %v4284 = vpop.permute.xlu0 %4283
        %4285 = vrot.lane.b32.xlu0 %v3852, 80
        %v4286 = vpop.permute.xlu0 %4285
        %4289 = vrot.lane.b32.xlu0 %v3849, 64
        %v4290 = vpop.permute.xlu0 %4289
        %4291 = vrot.lane.b32.xlu0 %v3852, 64
        %v4292 = vpop.permute.xlu0 %4291
        %4295 = vrot.lane.b32.xlu0 %v3849, 48
        %v4296 = vpop.permute.xlu0 %4295
        %4297 = vrot.lane.b32.xlu0 %v3852, 48
        %v4298 = vpop.permute.xlu0 %4297
        %4301 = vrot.lane.b32.xlu0 %v3849, 32
        %v4302 = vpop.permute.xlu0 %4301
        %4303 = vrot.lane.b32.xlu0 %v3852, 32
        %v4304 = vpop.permute.xlu0 %4303
        %4307 = vrot.lane.b32.xlu0 %v3849, 16
        %v4308 = vpop.permute.xlu0 %4307
        %4309 = vrot.lane.b32.xlu0 %v3852, 16
        %v4310 = vpop.permute.xlu0 %4309
        %v4313 = vcombine.low %v3849, %v4278
        %v4314 = vcombine.high %v3849, %v4278
        %v4316 = vunpack.c.l.s4 1983009808
        %v4317 = vunpack.c.0.s8 %v4316
        %v4318 = vlaneseq
        %v4319 = vshrl.u32 %v4318, 7
        %v4320 = vsub.s32 %v4317, %v4319
        %v4321 = vrot.slane %v4313, %v4320
        %v4323 = vunpack.c.l.s4 1983009808
        %v4324 = vunpack.c.0.s8 %v4323
        %v4325 = vlaneseq
        %v4326 = vshrl.u32 %v4325, 7
        %v4327 = vsub.s32 %v4324, %v4326
        %v4328 = vrot.slane %v4314, %v4327
        %v4329 = vcombine.low %v4272, %v4284
        %v4330 = vcombine.high %v4272, %v4284
        %v4332 = vunpack.c.l.s4 1983009808
        %v4333 = vunpack.c.0.s8 %v4332
        %v4334 = vlaneseq
        %v4335 = vshrl.u32 %v4334, 7
        %v4336 = vsub.s32 %v4333, %v4335
        %v4337 = vrot.slane %v4329, %v4336
        %v4339 = vunpack.c.l.s4 1983009808
        %v4340 = vunpack.c.0.s8 %v4339
        %v4341 = vlaneseq
        %v4342 = vshrl.u32 %v4341, 7
        %v4343 = vsub.s32 %v4340, %v4342
        %v4344 = vrot.slane %v4330, %v4343
        %v4345 = vcombine.low %v4290, %v4302
        %v4346 = vcombine.high %v4290, %v4302
        %v4348 = vunpack.c.l.s4 1983009808
        %v4349 = vunpack.c.0.s8 %v4348
        %v4350 = vlaneseq
        %v4351 = vshrl.u32 %v4350, 7
        %v4352 = vsub.s32 %v4349, %v4351
        %v4353 = vrot.slane %v4345, %v4352
        %v4355 = vunpack.c.l.s4 1983009808
        %v4356 = vunpack.c.0.s8 %v4355
        %v4357 = vlaneseq
        %v4358 = vshrl.u32 %v4357, 7
        %v4359 = vsub.s32 %v4356, %v4358
        %v4360 = vrot.slane %v4346, %v4359
        %v4361 = vcombine.low %v4296, %v4308
        %v4362 = vcombine.high %v4296, %v4308
        %v4364 = vunpack.c.l.s4 1983009808
        %v4365 = vunpack.c.0.s8 %v4364
        %v4366 = vlaneseq
        %v4367 = vshrl.u32 %v4366, 7
        %v4368 = vsub.s32 %v4365, %v4367
        %v4369 = vrot.slane %v4361, %v4368
        %v4371 = vunpack.c.l.s4 1983009808
        %v4372 = vunpack.c.0.s8 %v4371
        %v4373 = vlaneseq
        %v4374 = vshrl.u32 %v4373, 7
        %v4375 = vsub.s32 %v4372, %v4374
        %v4376 = vrot.slane %v4362, %v4375
        %v4377 = vcombine.low %v4321, %v4337
        %v4378 = vcombine.high %v4321, %v4337
        %v4380 = vunpack.c.l.s4 1934713408
        %v4381 = vunpack.c.0.s8 %v4380
        %v4382 = vlaneseq
        %v4383 = vshrl.u32 %v4382, 7
        %v4384 = vsub.s32 %v4381, %v4383
        %v4385 = vrot.slane %v4377, %v4384
        %v4387 = vunpack.c.l.s4 1934713408
        %v4388 = vunpack.c.0.s8 %v4387
        %v4389 = vlaneseq
        %v4390 = vshrl.u32 %v4389, 7
        %v4391 = vsub.s32 %v4388, %v4390
        %v4392 = vrot.slane %v4378, %v4391
        %v4393 = vcombine.low %v4328, %v4344
        %v4394 = vcombine.high %v4328, %v4344
        %v4396 = vunpack.c.l.s4 1934713408
        %v4397 = vunpack.c.0.s8 %v4396
        %v4398 = vlaneseq
        %v4399 = vshrl.u32 %v4398, 7
        %v4400 = vsub.s32 %v4397, %v4399
        %v4401 = vrot.slane %v4393, %v4400
        %v4403 = vunpack.c.l.s4 1934713408
        %v4404 = vunpack.c.0.s8 %v4403
        %v4405 = vlaneseq
        %v4406 = vshrl.u32 %v4405, 7
        %v4407 = vsub.s32 %v4404, %v4406
        %v4408 = vrot.slane %v4394, %v4407
        %v4409 = vcombine.low %v4353, %v4369
        %v4410 = vcombine.high %v4353, %v4369
        %v4412 = vunpack.c.l.s4 1934713408
        %v4413 = vunpack.c.0.s8 %v4412
        %v4414 = vlaneseq
        %v4415 = vshrl.u32 %v4414, 7
        %v4416 = vsub.s32 %v4413, %v4415
        %v4417 = vrot.slane %v4409, %v4416
        %v4419 = vunpack.c.l.s4 1934713408
        %v4420 = vunpack.c.0.s8 %v4419
        %v4421 = vlaneseq
        %v4422 = vshrl.u32 %v4421, 7
        %v4423 = vsub.s32 %v4420, %v4422
        %v4424 = vrot.slane %v4410, %v4423
        %v4425 = vcombine.low %v4360, %v4376
        %v4426 = vcombine.high %v4360, %v4376
        %v4428 = vunpack.c.l.s4 1934713408
        %v4429 = vunpack.c.0.s8 %v4428
        %v4430 = vlaneseq
        %v4431 = vshrl.u32 %v4430, 7
        %v4432 = vsub.s32 %v4429, %v4431
        %v4433 = vrot.slane %v4425, %v4432
        %v4435 = vunpack.c.l.s4 1934713408
        %v4436 = vunpack.c.0.s8 %v4435
        %v4437 = vlaneseq
        %v4438 = vshrl.u32 %v4437, 7
        %v4439 = vsub.s32 %v4436, %v4438
        %v4440 = vrot.slane %v4426, %v4439
        %v4441 = vcombine.low %v4385, %v4417
        %v4442 = vcombine.high %v4385, %v4417
        %v4443 = vcombine.low %v4392, %v4424
        %v4444 = vcombine.high %v4392, %v4424
        %v4445 = vcombine.low %v4401, %v4433
        %v4446 = vcombine.high %v4401, %v4433
        %v4447 = vcombine.low %v4408, %v4440
        %v4448 = vcombine.high %v4408, %v4440
        %v4449 = vcombine.low %v3852, %v4280
        %v4450 = vcombine.high %v3852, %v4280
        %v4452 = vunpack.c.l.s4 1983009808
        %v4453 = vunpack.c.0.s8 %v4452
        %v4454 = vlaneseq
        %v4455 = vshrl.u32 %v4454, 7
        %v4456 = vsub.s32 %v4453, %v4455
        %v4457 = vrot.slane %v4449, %v4456
        %v4459 = vunpack.c.l.s4 1983009808
        %v4460 = vunpack.c.0.s8 %v4459
        %v4461 = vlaneseq
        %v4462 = vshrl.u32 %v4461, 7
        %v4463 = vsub.s32 %v4460, %v4462
        %v4464 = vrot.slane %v4450, %v4463
        %v4465 = vcombine.low %v4274, %v4286
        %v4466 = vcombine.high %v4274, %v4286
        %v4468 = vunpack.c.l.s4 1983009808
        %v4469 = vunpack.c.0.s8 %v4468
        %v4470 = vlaneseq
        %v4471 = vshrl.u32 %v4470, 7
        %v4472 = vsub.s32 %v4469, %v4471
        %v4473 = vrot.slane %v4465, %v4472
        %v4475 = vunpack.c.l.s4 1983009808
        %v4476 = vunpack.c.0.s8 %v4475
        %v4477 = vlaneseq
        %v4478 = vshrl.u32 %v4477, 7
        %v4479 = vsub.s32 %v4476, %v4478
        %v4480 = vrot.slane %v4466, %v4479
        %v4481 = vcombine.low %v4292, %v4304
        %v4482 = vcombine.high %v4292, %v4304
        %v4484 = vunpack.c.l.s4 1983009808
        %v4485 = vunpack.c.0.s8 %v4484
        %v4486 = vlaneseq
        %v4487 = vshrl.u32 %v4486, 7
        %v4488 = vsub.s32 %v4485, %v4487
        %v4489 = vrot.slane %v4481, %v4488
        %v4491 = vunpack.c.l.s4 1983009808
        %v4492 = vunpack.c.0.s8 %v4491
        %v4493 = vlaneseq
        %v4494 = vshrl.u32 %v4493, 7
        %v4495 = vsub.s32 %v4492, %v4494
        %v4496 = vrot.slane %v4482, %v4495
        %v4497 = vcombine.low %v4298, %v4310
        %v4498 = vcombine.high %v4298, %v4310
        %v4500 = vunpack.c.l.s4 1983009808
        %v4501 = vunpack.c.0.s8 %v4500
        %v4502 = vlaneseq
        %v4503 = vshrl.u32 %v4502, 7
        %v4504 = vsub.s32 %v4501, %v4503
        %v4505 = vrot.slane %v4497, %v4504
        %v4507 = vunpack.c.l.s4 1983009808
        %v4508 = vunpack.c.0.s8 %v4507
        %v4509 = vlaneseq
        %v4510 = vshrl.u32 %v4509, 7
        %v4511 = vsub.s32 %v4508, %v4510
        %v4512 = vrot.slane %v4498, %v4511
        %v4513 = vcombine.low %v4457, %v4473
        %v4514 = vcombine.high %v4457, %v4473
        %v4516 = vunpack.c.l.s4 1934713408
        %v4517 = vunpack.c.0.s8 %v4516
        %v4518 = vlaneseq
        %v4519 = vshrl.u32 %v4518, 7
        %v4520 = vsub.s32 %v4517, %v4519
        %v4521 = vrot.slane %v4513, %v4520
        %v4523 = vunpack.c.l.s4 1934713408
        %v4524 = vunpack.c.0.s8 %v4523
        %v4525 = vlaneseq
        %v4526 = vshrl.u32 %v4525, 7
        %v4527 = vsub.s32 %v4524, %v4526
        %v4528 = vrot.slane %v4514, %v4527
        %v4529 = vcombine.low %v4464, %v4480
        %v4530 = vcombine.high %v4464, %v4480
        %v4532 = vunpack.c.l.s4 1934713408
        %v4533 = vunpack.c.0.s8 %v4532
        %v4534 = vlaneseq
        %v4535 = vshrl.u32 %v4534, 7
        %v4536 = vsub.s32 %v4533, %v4535
        %v4537 = vrot.slane %v4529, %v4536
        %v4539 = vunpack.c.l.s4 1934713408
        %v4540 = vunpack.c.0.s8 %v4539
        %v4541 = vlaneseq
        %v4542 = vshrl.u32 %v4541, 7
        %v4543 = vsub.s32 %v4540, %v4542
        %v4544 = vrot.slane %v4530, %v4543
        %v4545 = vcombine.low %v4489, %v4505
        %v4546 = vcombine.high %v4489, %v4505
        %v4548 = vunpack.c.l.s4 1934713408
        %v4549 = vunpack.c.0.s8 %v4548
        %v4550 = vlaneseq
        %v4551 = vshrl.u32 %v4550, 7
        %v4552 = vsub.s32 %v4549, %v4551
        %v4553 = vrot.slane %v4545, %v4552
        %v4555 = vunpack.c.l.s4 1934713408
        %v4556 = vunpack.c.0.s8 %v4555
        %v4557 = vlaneseq
        %v4558 = vshrl.u32 %v4557, 7
        %v4559 = vsub.s32 %v4556, %v4558
        %v4560 = vrot.slane %v4546, %v4559
        %v4561 = vcombine.low %v4496, %v4512
        %v4562 = vcombine.high %v4496, %v4512
        %v4564 = vunpack.c.l.s4 1934713408
        %v4565 = vunpack.c.0.s8 %v4564
        %v4566 = vlaneseq
        %v4567 = vshrl.u32 %v4566, 7
        %v4568 = vsub.s32 %v4565, %v4567
        %v4569 = vrot.slane %v4561, %v4568
        %v4571 = vunpack.c.l.s4 1934713408
        %v4572 = vunpack.c.0.s8 %v4571
        %v4573 = vlaneseq
        %v4574 = vshrl.u32 %v4573, 7
        %v4575 = vsub.s32 %v4572, %v4574
        %v4576 = vrot.slane %v4562, %v4575
        %v4577 = vcombine.low %v4521, %v4553
        %v4578 = vcombine.high %v4521, %v4553
        %v4579 = vcombine.low %v4528, %v4560
        %v4580 = vcombine.high %v4528, %v4560
        %v4581 = vcombine.low %v4537, %v4569
        %v4582 = vcombine.high %v4537, %v4569
        %v4583 = vcombine.low %v4544, %v4576
        %v4584 = vcombine.high %v4544, %v4576
        %v4585 = vcombine.low %v4441, %v4443
        %v4586 = vcombine.high %v4441, %v4443
        %v4588 = vunpack.c.l.s4 1983009808
        %v4589 = vunpack.c.0.s8 %v4588
        %v4590 = vlaneseq
        %v4591 = vshrl.u32 %v4590, 7
        %v4592 = vsub.s32 %v4589, %v4591
        %v4593 = vrot.slane %v4585, %v4592
        %v4595 = vunpack.c.l.s4 1983009808
        %v4596 = vunpack.c.0.s8 %v4595
        %v4597 = vlaneseq
        %v4598 = vshrl.u32 %v4597, 7
        %v4599 = vsub.s32 %v4596, %v4598
        %v4600 = vrot.slane %v4586, %v4599
        %v4601 = vcombine.low %v4442, %v4444
        %v4602 = vcombine.high %v4442, %v4444
        %v4604 = vunpack.c.l.s4 1983009808
        %v4605 = vunpack.c.0.s8 %v4604
        %v4606 = vlaneseq
        %v4607 = vshrl.u32 %v4606, 7
        %v4608 = vsub.s32 %v4605, %v4607
        %v4609 = vrot.slane %v4601, %v4608
        %v4611 = vunpack.c.l.s4 1983009808
        %v4612 = vunpack.c.0.s8 %v4611
        %v4613 = vlaneseq
        %v4614 = vshrl.u32 %v4613, 7
        %v4615 = vsub.s32 %v4612, %v4614
        %v4616 = vrot.slane %v4602, %v4615
        %v4617 = vcombine.low %v4445, %v4447
        %v4618 = vcombine.high %v4445, %v4447
        %v4620 = vunpack.c.l.s4 1983009808
        %v4621 = vunpack.c.0.s8 %v4620
        %v4622 = vlaneseq
        %v4623 = vshrl.u32 %v4622, 7
        %v4624 = vsub.s32 %v4621, %v4623
        %v4625 = vrot.slane %v4617, %v4624
        %v4627 = vunpack.c.l.s4 1983009808
        %v4628 = vunpack.c.0.s8 %v4627
        %v4629 = vlaneseq
        %v4630 = vshrl.u32 %v4629, 7
        %v4631 = vsub.s32 %v4628, %v4630
        %v4632 = vrot.slane %v4618, %v4631
        %v4633 = vcombine.low %v4446, %v4448
        %v4634 = vcombine.high %v4446, %v4448
        %v4636 = vunpack.c.l.s4 1983009808
        %v4637 = vunpack.c.0.s8 %v4636
        %v4638 = vlaneseq
        %v4639 = vshrl.u32 %v4638, 7
        %v4640 = vsub.s32 %v4637, %v4639
        %v4641 = vrot.slane %v4633, %v4640
        %v4643 = vunpack.c.l.s4 1983009808
        %v4644 = vunpack.c.0.s8 %v4643
        %v4645 = vlaneseq
        %v4646 = vshrl.u32 %v4645, 7
        %v4647 = vsub.s32 %v4644, %v4646
        %v4648 = vrot.slane %v4634, %v4647
        %v4649 = vcombine.low %v4593, %v4609
        %v4650 = vcombine.high %v4593, %v4609
        %v4652 = vunpack.c.l.s4 1934713408
        %v4653 = vunpack.c.0.s8 %v4652
        %v4654 = vlaneseq
        %v4655 = vshrl.u32 %v4654, 7
        %v4656 = vsub.s32 %v4653, %v4655
        %v4657 = vrot.slane %v4649, %v4656
        %v4659 = vunpack.c.l.s4 1934713408
        %v4660 = vunpack.c.0.s8 %v4659
        %v4661 = vlaneseq
        %v4662 = vshrl.u32 %v4661, 7
        %v4663 = vsub.s32 %v4660, %v4662
        %v4664 = vrot.slane %v4650, %v4663
        %v4665 = vcombine.low %v4600, %v4616
        %v4666 = vcombine.high %v4600, %v4616
        %v4668 = vunpack.c.l.s4 1934713408
        %v4669 = vunpack.c.0.s8 %v4668
        %v4670 = vlaneseq
        %v4671 = vshrl.u32 %v4670, 7
        %v4672 = vsub.s32 %v4669, %v4671
        %v4673 = vrot.slane %v4665, %v4672
        %v4675 = vunpack.c.l.s4 1934713408
        %v4676 = vunpack.c.0.s8 %v4675
        %v4677 = vlaneseq
        %v4678 = vshrl.u32 %v4677, 7
        %v4679 = vsub.s32 %v4676, %v4678
        %v4680 = vrot.slane %v4666, %v4679
        %v4681 = vcombine.low %v4625, %v4641
        %v4682 = vcombine.high %v4625, %v4641
        %v4684 = vunpack.c.l.s4 1934713408
        %v4685 = vunpack.c.0.s8 %v4684
        %v4686 = vlaneseq
        %v4687 = vshrl.u32 %v4686, 7
        %v4688 = vsub.s32 %v4685, %v4687
        %v4689 = vrot.slane %v4681, %v4688
        %v4691 = vunpack.c.l.s4 1934713408
        %v4692 = vunpack.c.0.s8 %v4691
        %v4693 = vlaneseq
        %v4694 = vshrl.u32 %v4693, 7
        %v4695 = vsub.s32 %v4692, %v4694
        %v4696 = vrot.slane %v4682, %v4695
        %v4697 = vcombine.low %v4632, %v4648
        %v4698 = vcombine.high %v4632, %v4648
        %v4700 = vunpack.c.l.s4 1934713408
        %v4701 = vunpack.c.0.s8 %v4700
        %v4702 = vlaneseq
        %v4703 = vshrl.u32 %v4702, 7
        %v4704 = vsub.s32 %v4701, %v4703
        %v4705 = vrot.slane %v4697, %v4704
        %v4707 = vunpack.c.l.s4 1934713408
        %v4708 = vunpack.c.0.s8 %v4707
        %v4709 = vlaneseq
        %v4710 = vshrl.u32 %v4709, 7
        %v4711 = vsub.s32 %v4708, %v4710
        %v4712 = vrot.slane %v4698, %v4711
        %v4713 = vcombine.low %v4657, %v4689
        %v4714 = vcombine.high %v4657, %v4689
        %v4715 = vcombine.low %v4664, %v4696
        %v4716 = vcombine.high %v4664, %v4696
        %v4717 = vcombine.low %v4673, %v4705
        %v4718 = vcombine.high %v4673, %v4705
        %v4719 = vcombine.low %v4680, %v4712
        %v4720 = vcombine.high %v4680, %v4712
        %v4721 = vcombine.low %v4577, %v4579
        %v4722 = vcombine.high %v4577, %v4579
        %v4724 = vunpack.c.l.s4 1983009808
        %v4725 = vunpack.c.0.s8 %v4724
        %v4726 = vlaneseq
        %v4727 = vshrl.u32 %v4726, 7
        %v4728 = vsub.s32 %v4725, %v4727
        %v4729 = vrot.slane %v4721, %v4728
        %v4731 = vunpack.c.l.s4 1983009808
        %v4732 = vunpack.c.0.s8 %v4731
        %v4733 = vlaneseq
        %v4734 = vshrl.u32 %v4733, 7
        %v4735 = vsub.s32 %v4732, %v4734
        %v4736 = vrot.slane %v4722, %v4735
        %v4737 = vcombine.low %v4578, %v4580
        %v4738 = vcombine.high %v4578, %v4580
        %v4740 = vunpack.c.l.s4 1983009808
        %v4741 = vunpack.c.0.s8 %v4740
        %v4742 = vlaneseq
        %v4743 = vshrl.u32 %v4742, 7
        %v4744 = vsub.s32 %v4741, %v4743
        %v4745 = vrot.slane %v4737, %v4744
        %v4747 = vunpack.c.l.s4 1983009808
        %v4748 = vunpack.c.0.s8 %v4747
        %v4749 = vlaneseq
        %v4750 = vshrl.u32 %v4749, 7
        %v4751 = vsub.s32 %v4748, %v4750
        %v4752 = vrot.slane %v4738, %v4751
        %v4753 = vcombine.low %v4581, %v4583
        %v4754 = vcombine.high %v4581, %v4583
        %v4756 = vunpack.c.l.s4 1983009808
        %v4757 = vunpack.c.0.s8 %v4756
        %v4758 = vlaneseq
        %v4759 = vshrl.u32 %v4758, 7
        %v4760 = vsub.s32 %v4757, %v4759
        %v4761 = vrot.slane %v4753, %v4760
        %v4763 = vunpack.c.l.s4 1983009808
        %v4764 = vunpack.c.0.s8 %v4763
        %v4765 = vlaneseq
        %v4766 = vshrl.u32 %v4765, 7
        %v4767 = vsub.s32 %v4764, %v4766
        %v4768 = vrot.slane %v4754, %v4767
        %v4769 = vcombine.low %v4582, %v4584
        %v4770 = vcombine.high %v4582, %v4584
        %v4772 = vunpack.c.l.s4 1983009808
        %v4773 = vunpack.c.0.s8 %v4772
        %v4774 = vlaneseq
        %v4775 = vshrl.u32 %v4774, 7
        %v4776 = vsub.s32 %v4773, %v4775
        %v4777 = vrot.slane %v4769, %v4776
        %v4779 = vunpack.c.l.s4 1983009808
        %v4780 = vunpack.c.0.s8 %v4779
        %v4781 = vlaneseq
        %v4782 = vshrl.u32 %v4781, 7
        %v4783 = vsub.s32 %v4780, %v4782
        %v4784 = vrot.slane %v4770, %v4783
        %v4785 = vcombine.low %v4729, %v4745
        %v4786 = vcombine.high %v4729, %v4745
        %v4788 = vunpack.c.l.s4 1934713408
        %v4789 = vunpack.c.0.s8 %v4788
        %v4790 = vlaneseq
        %v4791 = vshrl.u32 %v4790, 7
        %v4792 = vsub.s32 %v4789, %v4791
        %v4793 = vrot.slane %v4785, %v4792
        %v4795 = vunpack.c.l.s4 1934713408
        %v4796 = vunpack.c.0.s8 %v4795
        %v4797 = vlaneseq
        %v4798 = vshrl.u32 %v4797, 7
        %v4799 = vsub.s32 %v4796, %v4798
        %v4800 = vrot.slane %v4786, %v4799
        %v4801 = vcombine.low %v4736, %v4752
        %v4802 = vcombine.high %v4736, %v4752
        %v4804 = vunpack.c.l.s4 1934713408
        %v4805 = vunpack.c.0.s8 %v4804
        %v4806 = vlaneseq
        %v4807 = vshrl.u32 %v4806, 7
        %v4808 = vsub.s32 %v4805, %v4807
        %v4809 = vrot.slane %v4801, %v4808
        %v4811 = vunpack.c.l.s4 1934713408
        %v4812 = vunpack.c.0.s8 %v4811
        %v4813 = vlaneseq
        %v4814 = vshrl.u32 %v4813, 7
        %v4815 = vsub.s32 %v4812, %v4814
        %v4816 = vrot.slane %v4802, %v4815
        %v4817 = vcombine.low %v4761, %v4777
        %v4818 = vcombine.high %v4761, %v4777
        %v4820 = vunpack.c.l.s4 1934713408
        %v4821 = vunpack.c.0.s8 %v4820
        %v4822 = vlaneseq
        %v4823 = vshrl.u32 %v4822, 7
        %v4824 = vsub.s32 %v4821, %v4823
        %v4825 = vrot.slane %v4817, %v4824
        %v4827 = vunpack.c.l.s4 1934713408
        %v4828 = vunpack.c.0.s8 %v4827
        %v4829 = vlaneseq
        %v4830 = vshrl.u32 %v4829, 7
        %v4831 = vsub.s32 %v4828, %v4830
        %v4832 = vrot.slane %v4818, %v4831
        %v4833 = vcombine.low %v4768, %v4784
        %v4834 = vcombine.high %v4768, %v4784
        %v4836 = vunpack.c.l.s4 1934713408
        %v4837 = vunpack.c.0.s8 %v4836
        %v4838 = vlaneseq
        %v4839 = vshrl.u32 %v4838, 7
        %v4840 = vsub.s32 %v4837, %v4839
        %v4841 = vrot.slane %v4833, %v4840
        %v4843 = vunpack.c.l.s4 1934713408
        %v4844 = vunpack.c.0.s8 %v4843
        %v4845 = vlaneseq
        %v4846 = vshrl.u32 %v4845, 7
        %v4847 = vsub.s32 %v4844, %v4846
        %v4848 = vrot.slane %v4834, %v4847
        %v4849 = vcombine.low %v4793, %v4825
        %v4850 = vcombine.high %v4793, %v4825
        %v4851 = vcombine.low %v4800, %v4832
        %v4852 = vcombine.high %v4800, %v4832
        %v4853 = vcombine.low %v4809, %v4841
        %v4854 = vcombine.high %v4809, %v4841
        %v4855 = vcombine.low %v4816, %v4848
        %v4856 = vcombine.high %v4816, %v4848
        %v4857 = vpack.c.bf16 %v4849, %v4713
        %v4858 = vpack.c.bf16 %v4850, %v4714
        %v4859 = vpack.c.bf16 %v4851, %v4715
        %v4860 = vpack.c.bf16 %v4852, %v4716
        %v4861 = vpack.c.bf16 %v4853, %v4717
        %v4862 = vpack.c.bf16 %v4854, %v4718
        %v4863 = vpack.c.bf16 %v4855, %v4719
        %v4864 = vpack.c.bf16 %v4856, %v4720
        %4867 = vrot.lane.b32.xlu0 %v3961, 112
        %v4868 = vpop.permute.xlu0 %4867
        %4869 = vrot.lane.b32.xlu0 %v3964, 112
        %v4870 = vpop.permute.xlu0 %4869
        %4873 = vrot.lane.b32.xlu0 %v3961, 96
        %v4874 = vpop.permute.xlu0 %4873
        %4875 = vrot.lane.b32.xlu0 %v3964, 96
        %v4876 = vpop.permute.xlu0 %4875
        %4879 = vrot.lane.b32.xlu0 %v3961, 80
        %v4880 = vpop.permute.xlu0 %4879
        %4881 = vrot.lane.b32.xlu0 %v3964, 80
        %v4882 = vpop.permute.xlu0 %4881
        %4885 = vrot.lane.b32.xlu0 %v3961, 64
        %v4886 = vpop.permute.xlu0 %4885
        %4887 = vrot.lane.b32.xlu0 %v3964, 64
        %v4888 = vpop.permute.xlu0 %4887
        %4891 = vrot.lane.b32.xlu0 %v3961, 48
        %v4892 = vpop.permute.xlu0 %4891
        %4893 = vrot.lane.b32.xlu0 %v3964, 48
        %v4894 = vpop.permute.xlu0 %4893
        %4897 = vrot.lane.b32.xlu0 %v3961, 32
        %v4898 = vpop.permute.xlu0 %4897
        %4899 = vrot.lane.b32.xlu0 %v3964, 32
        %v4900 = vpop.permute.xlu0 %4899
        %4903 = vrot.lane.b32.xlu0 %v3961, 16
        %v4904 = vpop.permute.xlu0 %4903
        %4905 = vrot.lane.b32.xlu0 %v3964, 16
        %v4906 = vpop.permute.xlu0 %4905
        %v4909 = vcombine.low %v3961, %v4874
        %v4910 = vcombine.high %v3961, %v4874
        %v4912 = vunpack.c.l.s4 1983009808
        %v4913 = vunpack.c.0.s8 %v4912
        %v4914 = vlaneseq
        %v4915 = vshrl.u32 %v4914, 7
        %v4916 = vsub.s32 %v4913, %v4915
        %v4917 = vrot.slane %v4909, %v4916
        %v4919 = vunpack.c.l.s4 1983009808
        %v4920 = vunpack.c.0.s8 %v4919
        %v4921 = vlaneseq
        %v4922 = vshrl.u32 %v4921, 7
        %v4923 = vsub.s32 %v4920, %v4922
        %v4924 = vrot.slane %v4910, %v4923
        %v4925 = vcombine.low %v4868, %v4880
        %v4926 = vcombine.high %v4868, %v4880
        %v4928 = vunpack.c.l.s4 1983009808
        %v4929 = vunpack.c.0.s8 %v4928
        %v4930 = vlaneseq
        %v4931 = vshrl.u32 %v4930, 7
        %v4932 = vsub.s32 %v4929, %v4931
        %v4933 = vrot.slane %v4925, %v4932
        %v4935 = vunpack.c.l.s4 1983009808
        %v4936 = vunpack.c.0.s8 %v4935
        %v4937 = vlaneseq
        %v4938 = vshrl.u32 %v4937, 7
        %v4939 = vsub.s32 %v4936, %v4938
        %v4940 = vrot.slane %v4926, %v4939
        %v4941 = vcombine.low %v4886, %v4898
        %v4942 = vcombine.high %v4886, %v4898
        %v4944 = vunpack.c.l.s4 1983009808
        %v4945 = vunpack.c.0.s8 %v4944
        %v4946 = vlaneseq
        %v4947 = vshrl.u32 %v4946, 7
        %v4948 = vsub.s32 %v4945, %v4947
        %v4949 = vrot.slane %v4941, %v4948
        %v4951 = vunpack.c.l.s4 1983009808
        %v4952 = vunpack.c.0.s8 %v4951
        %v4953 = vlaneseq
        %v4954 = vshrl.u32 %v4953, 7
        %v4955 = vsub.s32 %v4952, %v4954
        %v4956 = vrot.slane %v4942, %v4955
        %v4957 = vcombine.low %v4892, %v4904
        %v4958 = vcombine.high %v4892, %v4904
        %v4960 = vunpack.c.l.s4 1983009808
        %v4961 = vunpack.c.0.s8 %v4960
        %v4962 = vlaneseq
        %v4963 = vshrl.u32 %v4962, 7
        %v4964 = vsub.s32 %v4961, %v4963
        %v4965 = vrot.slane %v4957, %v4964
        %v4967 = vunpack.c.l.s4 1983009808
        %v4968 = vunpack.c.0.s8 %v4967
        %v4969 = vlaneseq
        %v4970 = vshrl.u32 %v4969, 7
        %v4971 = vsub.s32 %v4968, %v4970
        %v4972 = vrot.slane %v4958, %v4971
        %v4973 = vcombine.low %v4917, %v4933
        %v4974 = vcombine.high %v4917, %v4933
        %v4976 = vunpack.c.l.s4 1934713408
        %v4977 = vunpack.c.0.s8 %v4976
        %v4978 = vlaneseq
        %v4979 = vshrl.u32 %v4978, 7
        %v4980 = vsub.s32 %v4977, %v4979
        %v4981 = vrot.slane %v4973, %v4980
        %v4983 = vunpack.c.l.s4 1934713408
        %v4984 = vunpack.c.0.s8 %v4983
        %v4985 = vlaneseq
        %v4986 = vshrl.u32 %v4985, 7
        %v4987 = vsub.s32 %v4984, %v4986
        %v4988 = vrot.slane %v4974, %v4987
        %v4989 = vcombine.low %v4924, %v4940
        %v4990 = vcombine.high %v4924, %v4940
        %v4992 = vunpack.c.l.s4 1934713408
        %v4993 = vunpack.c.0.s8 %v4992
        %v4994 = vlaneseq
        %v4995 = vshrl.u32 %v4994, 7
        %v4996 = vsub.s32 %v4993, %v4995
        %v4997 = vrot.slane %v4989, %v4996
        %v4999 = vunpack.c.l.s4 1934713408
        %v5000 = vunpack.c.0.s8 %v4999
        %v5001 = vlaneseq
        %v5002 = vshrl.u32 %v5001, 7
        %v5003 = vsub.s32 %v5000, %v5002
        %v5004 = vrot.slane %v4990, %v5003
        %v5005 = vcombine.low %v4949, %v4965
        %v5006 = vcombine.high %v4949, %v4965
        %v5008 = vunpack.c.l.s4 1934713408
        %v5009 = vunpack.c.0.s8 %v5008
        %v5010 = vlaneseq
        %v5011 = vshrl.u32 %v5010, 7
        %v5012 = vsub.s32 %v5009, %v5011
        %v5013 = vrot.slane %v5005, %v5012
        %v5015 = vunpack.c.l.s4 1934713408
        %v5016 = vunpack.c.0.s8 %v5015
        %v5017 = vlaneseq
        %v5018 = vshrl.u32 %v5017, 7
        %v5019 = vsub.s32 %v5016, %v5018
        %v5020 = vrot.slane %v5006, %v5019
        %v5021 = vcombine.low %v4956, %v4972
        %v5022 = vcombine.high %v4956, %v4972
        %v5024 = vunpack.c.l.s4 1934713408
        %v5025 = vunpack.c.0.s8 %v5024
        %v5026 = vlaneseq
        %v5027 = vshrl.u32 %v5026, 7
        %v5028 = vsub.s32 %v5025, %v5027
        %v5029 = vrot.slane %v5021, %v5028
        %v5031 = vunpack.c.l.s4 1934713408
        %v5032 = vunpack.c.0.s8 %v5031
        %v5033 = vlaneseq
        %v5034 = vshrl.u32 %v5033, 7
        %v5035 = vsub.s32 %v5032, %v5034
        %v5036 = vrot.slane %v5022, %v5035
        %v5037 = vcombine.low %v4981, %v5013
        %v5038 = vcombine.high %v4981, %v5013
        %v5039 = vcombine.low %v4988, %v5020
        %v5040 = vcombine.high %v4988, %v5020
        %v5041 = vcombine.low %v4997, %v5029
        %v5042 = vcombine.high %v4997, %v5029
        %v5043 = vcombine.low %v5004, %v5036
        %v5044 = vcombine.high %v5004, %v5036
        %v5045 = vcombine.low %v3964, %v4876
        %v5046 = vcombine.high %v3964, %v4876
        %v5048 = vunpack.c.l.s4 1983009808
        %v5049 = vunpack.c.0.s8 %v5048
        %v5050 = vlaneseq
        %v5051 = vshrl.u32 %v5050, 7
        %v5052 = vsub.s32 %v5049, %v5051
        %v5053 = vrot.slane %v5045, %v5052
        %v5055 = vunpack.c.l.s4 1983009808
        %v5056 = vunpack.c.0.s8 %v5055
        %v5057 = vlaneseq
        %v5058 = vshrl.u32 %v5057, 7
        %v5059 = vsub.s32 %v5056, %v5058
        %v5060 = vrot.slane %v5046, %v5059
        %v5061 = vcombine.low %v4870, %v4882
        %v5062 = vcombine.high %v4870, %v4882
        %v5064 = vunpack.c.l.s4 1983009808
        %v5065 = vunpack.c.0.s8 %v5064
        %v5066 = vlaneseq
        %v5067 = vshrl.u32 %v5066, 7
        %v5068 = vsub.s32 %v5065, %v5067
        %v5069 = vrot.slane %v5061, %v5068
        %v5071 = vunpack.c.l.s4 1983009808
        %v5072 = vunpack.c.0.s8 %v5071
        %v5073 = vlaneseq
        %v5074 = vshrl.u32 %v5073, 7
        %v5075 = vsub.s32 %v5072, %v5074
        %v5076 = vrot.slane %v5062, %v5075
        %v5077 = vcombine.low %v4888, %v4900
        %v5078 = vcombine.high %v4888, %v4900
        %v5080 = vunpack.c.l.s4 1983009808
        %v5081 = vunpack.c.0.s8 %v5080
        %v5082 = vlaneseq
        %v5083 = vshrl.u32 %v5082, 7
        %v5084 = vsub.s32 %v5081, %v5083
        %v5085 = vrot.slane %v5077, %v5084
        %v5087 = vunpack.c.l.s4 1983009808
        %v5088 = vunpack.c.0.s8 %v5087
        %v5089 = vlaneseq
        %v5090 = vshrl.u32 %v5089, 7
        %v5091 = vsub.s32 %v5088, %v5090
        %v5092 = vrot.slane %v5078, %v5091
        %v5093 = vcombine.low %v4894, %v4906
        %v5094 = vcombine.high %v4894, %v4906
        %v5096 = vunpack.c.l.s4 1983009808
        %v5097 = vunpack.c.0.s8 %v5096
        %v5098 = vlaneseq
        %v5099 = vshrl.u32 %v5098, 7
        %v5100 = vsub.s32 %v5097, %v5099
        %v5101 = vrot.slane %v5093, %v5100
        %v5103 = vunpack.c.l.s4 1983009808
        %v5104 = vunpack.c.0.s8 %v5103
        %v5105 = vlaneseq
        %v5106 = vshrl.u32 %v5105, 7
        %v5107 = vsub.s32 %v5104, %v5106
        %v5108 = vrot.slane %v5094, %v5107
        %v5109 = vcombine.low %v5053, %v5069
        %v5110 = vcombine.high %v5053, %v5069
        %v5112 = vunpack.c.l.s4 1934713408
        %v5113 = vunpack.c.0.s8 %v5112
        %v5114 = vlaneseq
        %v5115 = vshrl.u32 %v5114, 7
        %v5116 = vsub.s32 %v5113, %v5115
        %v5117 = vrot.slane %v5109, %v5116
        %v5119 = vunpack.c.l.s4 1934713408
        %v5120 = vunpack.c.0.s8 %v5119
        %v5121 = vlaneseq
        %v5122 = vshrl.u32 %v5121, 7
        %v5123 = vsub.s32 %v5120, %v5122
        %v5124 = vrot.slane %v5110, %v5123
        %v5125 = vcombine.low %v5060, %v5076
        %v5126 = vcombine.high %v5060, %v5076
        %v5128 = vunpack.c.l.s4 1934713408
        %v5129 = vunpack.c.0.s8 %v5128
        %v5130 = vlaneseq
        %v5131 = vshrl.u32 %v5130, 7
        %v5132 = vsub.s32 %v5129, %v5131
        %v5133 = vrot.slane %v5125, %v5132
        %v5135 = vunpack.c.l.s4 1934713408
        %v5136 = vunpack.c.0.s8 %v5135
        %v5137 = vlaneseq
        %v5138 = vshrl.u32 %v5137, 7
        %v5139 = vsub.s32 %v5136, %v5138
        %v5140 = vrot.slane %v5126, %v5139
        %v5141 = vcombine.low %v5085, %v5101
        %v5142 = vcombine.high %v5085, %v5101
        %v5144 = vunpack.c.l.s4 1934713408
        %v5145 = vunpack.c.0.s8 %v5144
        %v5146 = vlaneseq
        %v5147 = vshrl.u32 %v5146, 7
        %v5148 = vsub.s32 %v5145, %v5147
        %v5149 = vrot.slane %v5141, %v5148
        %v5151 = vunpack.c.l.s4 1934713408
        %v5152 = vunpack.c.0.s8 %v5151
        %v5153 = vlaneseq
        %v5154 = vshrl.u32 %v5153, 7
        %v5155 = vsub.s32 %v5152, %v5154
        %v5156 = vrot.slane %v5142, %v5155
        %v5157 = vcombine.low %v5092, %v5108
        %v5158 = vcombine.high %v5092, %v5108
        %v5160 = vunpack.c.l.s4 1934713408
        %v5161 = vunpack.c.0.s8 %v5160
        %v5162 = vlaneseq
        %v5163 = vshrl.u32 %v5162, 7
        %v5164 = vsub.s32 %v5161, %v5163
        %v5165 = vrot.slane %v5157, %v5164
        %v5167 = vunpack.c.l.s4 1934713408
        %v5168 = vunpack.c.0.s8 %v5167
        %v5169 = vlaneseq
        %v5170 = vshrl.u32 %v5169, 7
        %v5171 = vsub.s32 %v5168, %v5170
        %v5172 = vrot.slane %v5158, %v5171
        %v5173 = vcombine.low %v5117, %v5149
        %v5174 = vcombine.high %v5117, %v5149
        %v5175 = vcombine.low %v5124, %v5156
        %v5176 = vcombine.high %v5124, %v5156
        %v5177 = vcombine.low %v5133, %v5165
        %v5178 = vcombine.high %v5133, %v5165
        %v5179 = vcombine.low %v5140, %v5172
        %v5180 = vcombine.high %v5140, %v5172
        %v5181 = vcombine.low %v5037, %v5039
        %v5182 = vcombine.high %v5037, %v5039
        %v5184 = vunpack.c.l.s4 1983009808
        %v5185 = vunpack.c.0.s8 %v5184
        %v5186 = vlaneseq
        %v5187 = vshrl.u32 %v5186, 7
        %v5188 = vsub.s32 %v5185, %v5187
        %v5189 = vrot.slane %v5181, %v5188
        %v5191 = vunpack.c.l.s4 1983009808
        %v5192 = vunpack.c.0.s8 %v5191
        %v5193 = vlaneseq
        %v5194 = vshrl.u32 %v5193, 7
        %v5195 = vsub.s32 %v5192, %v5194
        %v5196 = vrot.slane %v5182, %v5195
        %v5197 = vcombine.low %v5038, %v5040
        %v5198 = vcombine.high %v5038, %v5040
        %v5200 = vunpack.c.l.s4 1983009808
        %v5201 = vunpack.c.0.s8 %v5200
        %v5202 = vlaneseq
        %v5203 = vshrl.u32 %v5202, 7
        %v5204 = vsub.s32 %v5201, %v5203
        %v5205 = vrot.slane %v5197, %v5204
        %v5207 = vunpack.c.l.s4 1983009808
        %v5208 = vunpack.c.0.s8 %v5207
        %v5209 = vlaneseq
        %v5210 = vshrl.u32 %v5209, 7
        %v5211 = vsub.s32 %v5208, %v5210
        %v5212 = vrot.slane %v5198, %v5211
        %v5213 = vcombine.low %v5041, %v5043
        %v5214 = vcombine.high %v5041, %v5043
        %v5216 = vunpack.c.l.s4 1983009808
        %v5217 = vunpack.c.0.s8 %v5216
        %v5218 = vlaneseq
        %v5219 = vshrl.u32 %v5218, 7
        %v5220 = vsub.s32 %v5217, %v5219
        %v5221 = vrot.slane %v5213, %v5220
        %v5223 = vunpack.c.l.s4 1983009808
        %v5224 = vunpack.c.0.s8 %v5223
        %v5225 = vlaneseq
        %v5226 = vshrl.u32 %v5225, 7
        %v5227 = vsub.s32 %v5224, %v5226
        %v5228 = vrot.slane %v5214, %v5227
        %v5229 = vcombine.low %v5042, %v5044
        %v5230 = vcombine.high %v5042, %v5044
        %v5232 = vunpack.c.l.s4 1983009808
        %v5233 = vunpack.c.0.s8 %v5232
        %v5234 = vlaneseq
        %v5235 = vshrl.u32 %v5234, 7
        %v5236 = vsub.s32 %v5233, %v5235
        %v5237 = vrot.slane %v5229, %v5236
        %v5239 = vunpack.c.l.s4 1983009808
        %v5240 = vunpack.c.0.s8 %v5239
        %v5241 = vlaneseq
        %v5242 = vshrl.u32 %v5241, 7
        %v5243 = vsub.s32 %v5240, %v5242
        %v5244 = vrot.slane %v5230, %v5243
        %v5245 = vcombine.low %v5189, %v5205
        %v5246 = vcombine.high %v5189, %v5205
        %v5248 = vunpack.c.l.s4 1934713408
        %v5249 = vunpack.c.0.s8 %v5248
        %v5250 = vlaneseq
        %v5251 = vshrl.u32 %v5250, 7
        %v5252 = vsub.s32 %v5249, %v5251
        %v5253 = vrot.slane %v5245, %v5252
        %v5255 = vunpack.c.l.s4 1934713408
        %v5256 = vunpack.c.0.s8 %v5255
        %v5257 = vlaneseq
        %v5258 = vshrl.u32 %v5257, 7
        %v5259 = vsub.s32 %v5256, %v5258
        %v5260 = vrot.slane %v5246, %v5259
        %v5261 = vcombine.low %v5196, %v5212
        %v5262 = vcombine.high %v5196, %v5212
        %v5264 = vunpack.c.l.s4 1934713408
        %v5265 = vunpack.c.0.s8 %v5264
        %v5266 = vlaneseq
        %v5267 = vshrl.u32 %v5266, 7
        %v5268 = vsub.s32 %v5265, %v5267
        %v5269 = vrot.slane %v5261, %v5268
        %v5271 = vunpack.c.l.s4 1934713408
        %v5272 = vunpack.c.0.s8 %v5271
        %v5273 = vlaneseq
        %v5274 = vshrl.u32 %v5273, 7
        %v5275 = vsub.s32 %v5272, %v5274
        %v5276 = vrot.slane %v5262, %v5275
        %v5277 = vcombine.low %v5221, %v5237
        %v5278 = vcombine.high %v5221, %v5237
        %v5280 = vunpack.c.l.s4 1934713408
        %v5281 = vunpack.c.0.s8 %v5280
        %v5282 = vlaneseq
        %v5283 = vshrl.u32 %v5282, 7
        %v5284 = vsub.s32 %v5281, %v5283
        %v5285 = vrot.slane %v5277, %v5284
        %v5287 = vunpack.c.l.s4 1934713408
        %v5288 = vunpack.c.0.s8 %v5287
        %v5289 = vlaneseq
        %v5290 = vshrl.u32 %v5289, 7
        %v5291 = vsub.s32 %v5288, %v5290
        %v5292 = vrot.slane %v5278, %v5291
        %v5293 = vcombine.low %v5228, %v5244
        %v5294 = vcombine.high %v5228, %v5244
        %v5296 = vunpack.c.l.s4 1934713408
        %v5297 = vunpack.c.0.s8 %v5296
        %v5298 = vlaneseq
        %v5299 = vshrl.u32 %v5298, 7
        %v5300 = vsub.s32 %v5297, %v5299
        %v5301 = vrot.slane %v5293, %v5300
        %v5303 = vunpack.c.l.s4 1934713408
        %v5304 = vunpack.c.0.s8 %v5303
        %v5305 = vlaneseq
        %v5306 = vshrl.u32 %v5305, 7
        %v5307 = vsub.s32 %v5304, %v5306
        %v5308 = vrot.slane %v5294, %v5307
        %v5309 = vcombine.low %v5253, %v5285
        %v5310 = vcombine.high %v5253, %v5285
        %v5311 = vcombine.low %v5260, %v5292
        %v5312 = vcombine.high %v5260, %v5292
        %v5313 = vcombine.low %v5269, %v5301
        %v5314 = vcombine.high %v5269, %v5301
        %v5315 = vcombine.low %v5276, %v5308
        %v5316 = vcombine.high %v5276, %v5308
        %v5317 = vcombine.low %v5173, %v5175
        %v5318 = vcombine.high %v5173, %v5175
        %v5320 = vunpack.c.l.s4 1983009808
        %v5321 = vunpack.c.0.s8 %v5320
        %v5322 = vlaneseq
        %v5323 = vshrl.u32 %v5322, 7
        %v5324 = vsub.s32 %v5321, %v5323
        %v5325 = vrot.slane %v5317, %v5324
        %v5327 = vunpack.c.l.s4 1983009808
        %v5328 = vunpack.c.0.s8 %v5327
        %v5329 = vlaneseq
        %v5330 = vshrl.u32 %v5329, 7
        %v5331 = vsub.s32 %v5328, %v5330
        %v5332 = vrot.slane %v5318, %v5331
        %v5333 = vcombine.low %v5174, %v5176
        %v5334 = vcombine.high %v5174, %v5176
        %v5336 = vunpack.c.l.s4 1983009808
        %v5337 = vunpack.c.0.s8 %v5336
        %v5338 = vlaneseq
        %v5339 = vshrl.u32 %v5338, 7
        %v5340 = vsub.s32 %v5337, %v5339
        %v5341 = vrot.slane %v5333, %v5340
        %v5343 = vunpack.c.l.s4 1983009808
        %v5344 = vunpack.c.0.s8 %v5343
        %v5345 = vlaneseq
        %v5346 = vshrl.u32 %v5345, 7
        %v5347 = vsub.s32 %v5344, %v5346
        %v5348 = vrot.slane %v5334, %v5347
        %v5349 = vcombine.low %v5177, %v5179
        %v5350 = vcombine.high %v5177, %v5179
        %v5352 = vunpack.c.l.s4 1983009808
        %v5353 = vunpack.c.0.s8 %v5352
        %v5354 = vlaneseq
        %v5355 = vshrl.u32 %v5354, 7
        %v5356 = vsub.s32 %v5353, %v5355
        %v5357 = vrot.slane %v5349, %v5356
        %v5359 = vunpack.c.l.s4 1983009808
        %v5360 = vunpack.c.0.s8 %v5359
        %v5361 = vlaneseq
        %v5362 = vshrl.u32 %v5361, 7
        %v5363 = vsub.s32 %v5360, %v5362
        %v5364 = vrot.slane %v5350, %v5363
        %v5365 = vcombine.low %v5178, %v5180
        %v5366 = vcombine.high %v5178, %v5180
        %v5368 = vunpack.c.l.s4 1983009808
        %v5369 = vunpack.c.0.s8 %v5368
        %v5370 = vlaneseq
        %v5371 = vshrl.u32 %v5370, 7
        %v5372 = vsub.s32 %v5369, %v5371
        %v5373 = vrot.slane %v5365, %v5372
        %v5375 = vunpack.c.l.s4 1983009808
        %v5376 = vunpack.c.0.s8 %v5375
        %v5377 = vlaneseq
        %v5378 = vshrl.u32 %v5377, 7
        %v5379 = vsub.s32 %v5376, %v5378
        %v5380 = vrot.slane %v5366, %v5379
        %v5381 = vcombine.low %v5325, %v5341
        %v5382 = vcombine.high %v5325, %v5341
        %v5384 = vunpack.c.l.s4 1934713408
        %v5385 = vunpack.c.0.s8 %v5384
        %v5386 = vlaneseq
        %v5387 = vshrl.u32 %v5386, 7
        %v5388 = vsub.s32 %v5385, %v5387
        %v5389 = vrot.slane %v5381, %v5388
        %v5391 = vunpack.c.l.s4 1934713408
        %v5392 = vunpack.c.0.s8 %v5391
        %v5393 = vlaneseq
        %v5394 = vshrl.u32 %v5393, 7
        %v5395 = vsub.s32 %v5392, %v5394
        %v5396 = vrot.slane %v5382, %v5395
        %v5397 = vcombine.low %v5332, %v5348
        %v5398 = vcombine.high %v5332, %v5348
        %v5400 = vunpack.c.l.s4 1934713408
        %v5401 = vunpack.c.0.s8 %v5400
        %v5402 = vlaneseq
        %v5403 = vshrl.u32 %v5402, 7
        %v5404 = vsub.s32 %v5401, %v5403
        %v5405 = vrot.slane %v5397, %v5404
        %v5407 = vunpack.c.l.s4 1934713408
        %v5408 = vunpack.c.0.s8 %v5407
        %v5409 = vlaneseq
        %v5410 = vshrl.u32 %v5409, 7
        %v5411 = vsub.s32 %v5408, %v5410
        %v5412 = vrot.slane %v5398, %v5411
        %v5413 = vcombine.low %v5357, %v5373
        %v5414 = vcombine.high %v5357, %v5373
        %v5416 = vunpack.c.l.s4 1934713408
        %v5417 = vunpack.c.0.s8 %v5416
        %v5418 = vlaneseq
        %v5419 = vshrl.u32 %v5418, 7
        %v5420 = vsub.s32 %v5417, %v5419
        %v5421 = vrot.slane %v5413, %v5420
        %v5423 = vunpack.c.l.s4 1934713408
        %v5424 = vunpack.c.0.s8 %v5423
        %v5425 = vlaneseq
        %v5426 = vshrl.u32 %v5425, 7
        %v5427 = vsub.s32 %v5424, %v5426
        %v5428 = vrot.slane %v5414, %v5427
        %v5429 = vcombine.low %v5364, %v5380
        %v5430 = vcombine.high %v5364, %v5380
        %v5432 = vunpack.c.l.s4 1934713408
        %v5433 = vunpack.c.0.s8 %v5432
        %v5434 = vlaneseq
        %v5435 = vshrl.u32 %v5434, 7
        %v5436 = vsub.s32 %v5433, %v5435
        %v5437 = vrot.slane %v5429, %v5436
        %v5439 = vunpack.c.l.s4 1934713408
        %v5440 = vunpack.c.0.s8 %v5439
        %v5441 = vlaneseq
        %v5442 = vshrl.u32 %v5441, 7
        %v5443 = vsub.s32 %v5440, %v5442
        %v5444 = vrot.slane %v5430, %v5443
        %v5445 = vcombine.low %v5389, %v5421
        %v5446 = vcombine.high %v5389, %v5421
        %v5447 = vcombine.low %v5396, %v5428
        %v5448 = vcombine.high %v5396, %v5428
        %v5449 = vcombine.low %v5405, %v5437
        %v5450 = vcombine.high %v5405, %v5437
        %v5451 = vcombine.low %v5412, %v5444
        %v5452 = vcombine.high %v5412, %v5444
        %v5453 = vpack.c.bf16 %v5445, %v5309
        %v5454 = vpack.c.bf16 %v5446, %v5310
        %v5455 = vpack.c.bf16 %v5447, %v5311
        %v5456 = vpack.c.bf16 %v5448, %v5312
        %v5457 = vpack.c.bf16 %v5449, %v5313
        %v5458 = vpack.c.bf16 %v5450, %v5314
        %v5459 = vpack.c.bf16 %v5451, %v5315
        %v5460 = vpack.c.bf16 %v5452, %v5316
        %v5462 = vsel %vm2318, %v4261, 0
        %v5465 = vsel %vm2318, %v4857, 0
        %5467 = vmatprep.subr.bf16.mxu0 0
        %5468 = vmatpush1.bf16.xpose.msra.mxu0 0
        %5469 = vmatprep.subr.bf16.mxu0 0
        %5470 = vmatpush1.bf16.xpose.msra.mxu0 0
        %5471 = vmatprep.subr.bf16.mxu0 0
        %5472 = vmatpush1.bf16.xpose.msra.mxu0 0
        %5473 = vmatprep.subr.bf16.mxu0 0
        %5474 = vmatpush1.bf16.xpose.msra.mxu0 0
        %5475 = vmatprep.subr.bf16.mxu0 0
        %5476 = vmatpush1.bf16.xpose.msra.mxu0 0
        %5477 = vmatprep.subr.bf16.mxu0 0
        %5478 = vmatpush1.bf16.xpose.msra.mxu0 0
        %5479 = vmatprep.subr.bf16.mxu0 0
        %5480 = vmatpush1.bf16.xpose.msra.mxu0 0
        %5481 = vmatprep.subr.bf16.mxu0 0
        %5482 = vmatpush1.bf16.xpose.msra.mxu0 %v5465
        %5483 = vmatprep.subr.bf16.mxu0 0
        %5484 = vmatpush2.bf16.xpose.msra.mxu0 0
        %5485 = vmatprep.subr.bf16.mxu0 0
        %5486 = vmatpush2.bf16.xpose.msra.mxu0 0
        %5487 = vmatprep.subr.bf16.mxu0 0
        %5488 = vmatpush2.bf16.xpose.msra.mxu0 0
        %5489 = vmatprep.subr.bf16.mxu0 0
        %5490 = vmatpush2.bf16.xpose.msra.mxu0 0
        %5491 = vmatprep.subr.bf16.mxu0 0
        %5492 = vmatpush2.bf16.xpose.msra.mxu0 0
        %5493 = vmatprep.subr.bf16.mxu0 0
        %5494 = vmatpush2.bf16.xpose.msra.mxu0 0
        %5495 = vmatprep.subr.bf16.mxu0 0
        %5496 = vmatpush2.bf16.xpose.msra.mxu0 0
        %5497 = vmatprep.subr.bf16.mxu0 0
        %5498 = vmatpush2.bf16.xpose.msra.mxu0 0
        %5499 = vmatprep.mubr.bf16.mxu0 0
        %5500 = vmatmul.mubr.bf16.gmra.mxu0 %v5462
        %v5501 = vpop.f32.mrf.mxu0
        %v5502 = vadd.f32 0.0, %v5501
        %v5503 = vpop.f32.mrf.mxu0
        %v5504 = vpop.f32.mrf.mxu0
        %v5505 = vpop.f32.mrf.mxu0
        %5506 = vdwg.mxu0
        %v5508 = vsel %vm2318, %v4262, 0
        %v5511 = vsel %vm2318, %v4858, 0
        %5513 = vmatprep.subr.bf16.mxu0 0
        %5514 = vmatpush1.bf16.xpose.msra.mxu0 0
        %5515 = vmatprep.subr.bf16.mxu0 0
        %5516 = vmatpush1.bf16.xpose.msra.mxu0 0
        %5517 = vmatprep.subr.bf16.mxu0 0
        %5518 = vmatpush1.bf16.xpose.msra.mxu0 0
        %5519 = vmatprep.subr.bf16.mxu0 0
        %5520 = vmatpush1.bf16.xpose.msra.mxu0 0
        %5521 = vmatprep.subr.bf16.mxu0 0
        %5522 = vmatpush1.bf16.xpose.msra.mxu0 0
        %5523 = vmatprep.subr.bf16.mxu0 0
        %5524 = vmatpush1.bf16.xpose.msra.mxu0 0
        %5525 = vmatprep.subr.bf16.mxu0 0
        %5526 = vmatpush1.bf16.xpose.msra.mxu0 0
        %5527 = vmatprep.subr.bf16.mxu0 0
        %5528 = vmatpush1.bf16.xpose.msra.mxu0 %v5511
        %5529 = vmatprep.subr.bf16.mxu0 0
        %5530 = vmatpush2.bf16.xpose.msra.mxu0 0
        %5531 = vmatprep.subr.bf16.mxu0 0
        %5532 = vmatpush2.bf16.xpose.msra.mxu0 0
        %5533 = vmatprep.subr.bf16.mxu0 0
        %5534 = vmatpush2.bf16.xpose.msra.mxu0 0
        %5535 = vmatprep.subr.bf16.mxu0 0
        %5536 = vmatpush2.bf16.xpose.msra.mxu0 0
        %5537 = vmatprep.subr.bf16.mxu0 0
        %5538 = vmatpush2.bf16.xpose.msra.mxu0 0
        %5539 = vmatprep.subr.bf16.mxu0 0
        %5540 = vmatpush2.bf16.xpose.msra.mxu0 0
        %5541 = vmatprep.subr.bf16.mxu0 0
        %5542 = vmatpush2.bf16.xpose.msra.mxu0 0
        %5543 = vmatprep.subr.bf16.mxu0 0
        %5544 = vmatpush2.bf16.xpose.msra.mxu0 0
        %5545 = vmatprep.mubr.bf16.mxu0 0
        %5546 = vmatmul.mubr.bf16.gmra.mxu0 %v5508
        %v5547 = vpop.f32.mrf.mxu0
        %v5548 = vadd.f32 0.0, %v5547
        %v5549 = vpop.f32.mrf.mxu0
        %v5550 = vpop.f32.mrf.mxu0
        %v5551 = vpop.f32.mrf.mxu0
        %5552 = vdwg.mxu0
        %v5554 = vsel %vm2318, %v4263, 0
        %v5557 = vsel %vm2318, %v4859, 0
        %5559 = vmatprep.subr.bf16.mxu0 0
        %5560 = vmatpush1.bf16.xpose.msra.mxu0 0
        %5561 = vmatprep.subr.bf16.mxu0 0
        %5562 = vmatpush1.bf16.xpose.msra.mxu0 0
        %5563 = vmatprep.subr.bf16.mxu0 0
        %5564 = vmatpush1.bf16.xpose.msra.mxu0 0
        %5565 = vmatprep.subr.bf16.mxu0 0
        %5566 = vmatpush1.bf16.xpose.msra.mxu0 0
        %5567 = vmatprep.subr.bf16.mxu0 0
        %5568 = vmatpush1.bf16.xpose.msra.mxu0 0
        %5569 = vmatprep.subr.bf16.mxu0 0
        %5570 = vmatpush1.bf16.xpose.msra.mxu0 0
        %5571 = vmatprep.subr.bf16.mxu0 0
        %5572 = vmatpush1.bf16.xpose.msra.mxu0 0
        %5573 = vmatprep.subr.bf16.mxu0 0
        %5574 = vmatpush1.bf16.xpose.msra.mxu0 %v5557
        %5575 = vmatprep.subr.bf16.mxu0 0
        %5576 = vmatpush2.bf16.xpose.msra.mxu0 0
        %5577 = vmatprep.subr.bf16.mxu0 0
        %5578 = vmatpush2.bf16.xpose.msra.mxu0 0
        %5579 = vmatprep.subr.bf16.mxu0 0
        %5580 = vmatpush2.bf16.xpose.msra.mxu0 0
        %5581 = vmatprep.subr.bf16.mxu0 0
        %5582 = vmatpush2.bf16.xpose.msra.mxu0 0
        %5583 = vmatprep.subr.bf16.mxu0 0
        %5584 = vmatpush2.bf16.xpose.msra.mxu0 0
        %5585 = vmatprep.subr.bf16.mxu0 0
        %5586 = vmatpush2.bf16.xpose.msra.mxu0 0
        %5587 = vmatprep.subr.bf16.mxu0 0
        %5588 = vmatpush2.bf16.xpose.msra.mxu0 0
        %5589 = vmatprep.subr.bf16.mxu0 0
        %5590 = vmatpush2.bf16.xpose.msra.mxu0 0
        %5591 = vmatprep.mubr.bf16.mxu0 0
        %5592 = vmatmul.mubr.bf16.gmra.mxu0 %v5554
        %v5593 = vpop.f32.mrf.mxu0
        %v5594 = vadd.f32 0.0, %v5593
        %v5595 = vpop.f32.mrf.mxu0
        %v5596 = vpop.f32.mrf.mxu0
        %v5597 = vpop.f32.mrf.mxu0
        %5598 = vdwg.mxu0
        %v5600 = vsel %vm2318, %v4264, 0
        %v5603 = vsel %vm2318, %v4860, 0
        %5605 = vmatprep.subr.bf16.mxu0 0
        %5606 = vmatpush1.bf16.xpose.msra.mxu0 0
        %5607 = vmatprep.subr.bf16.mxu0 0
        %5608 = vmatpush1.bf16.xpose.msra.mxu0 0
        %5609 = vmatprep.subr.bf16.mxu0 0
        %5610 = vmatpush1.bf16.xpose.msra.mxu0 0
        %5611 = vmatprep.subr.bf16.mxu0 0
        %5612 = vmatpush1.bf16.xpose.msra.mxu0 0
        %5613 = vmatprep.subr.bf16.mxu0 0
        %5614 = vmatpush1.bf16.xpose.msra.mxu0 0
        %5615 = vmatprep.subr.bf16.mxu0 0
        %5616 = vmatpush1.bf16.xpose.msra.mxu0 0
        %5617 = vmatprep.subr.bf16.mxu0 0
        %5618 = vmatpush1.bf16.xpose.msra.mxu0 0
        %5619 = vmatprep.subr.bf16.mxu0 0
        %5620 = vmatpush1.bf16.xpose.msra.mxu0 %v5603
        %5621 = vmatprep.subr.bf16.mxu0 0
        %5622 = vmatpush2.bf16.xpose.msra.mxu0 0
        %5623 = vmatprep.subr.bf16.mxu0 0
        %5624 = vmatpush2.bf16.xpose.msra.mxu0 0
        %5625 = vmatprep.subr.bf16.mxu0 0
        %5626 = vmatpush2.bf16.xpose.msra.mxu0 0
        %5627 = vmatprep.subr.bf16.mxu0 0
        %5628 = vmatpush2.bf16.xpose.msra.mxu0 0
        %5629 = vmatprep.subr.bf16.mxu0 0
        %5630 = vmatpush2.bf16.xpose.msra.mxu0 0
        %5631 = vmatprep.subr.bf16.mxu0 0
        %5632 = vmatpush2.bf16.xpose.msra.mxu0 0
        %5633 = vmatprep.subr.bf16.mxu0 0
        %5634 = vmatpush2.bf16.xpose.msra.mxu0 0
        %5635 = vmatprep.subr.bf16.mxu0 0
        %5636 = vmatpush2.bf16.xpose.msra.mxu0 0
        %5637 = vmatprep.mubr.bf16.mxu0 0
        %5638 = vmatmul.mubr.bf16.gmra.mxu0 %v5600
        %v5639 = vpop.f32.mrf.mxu0
        %v5640 = vadd.f32 0.0, %v5639
        %v5641 = vpop.f32.mrf.mxu0
        %v5642 = vpop.f32.mrf.mxu0
        %v5643 = vpop.f32.mrf.mxu0
        %5644 = vdwg.mxu0
        %v5646 = vsel %vm2318, %v4265, 0
        %v5649 = vsel %vm2318, %v4861, 0
        %5651 = vmatprep.subr.bf16.mxu0 0
        %5652 = vmatpush1.bf16.xpose.msra.mxu0 0
        %5653 = vmatprep.subr.bf16.mxu0 0
        %5654 = vmatpush1.bf16.xpose.msra.mxu0 0
        %5655 = vmatprep.subr.bf16.mxu0 0
        %5656 = vmatpush1.bf16.xpose.msra.mxu0 0
        %5657 = vmatprep.subr.bf16.mxu0 0
        %5658 = vmatpush1.bf16.xpose.msra.mxu0 0
        %5659 = vmatprep.subr.bf16.mxu0 0
        %5660 = vmatpush1.bf16.xpose.msra.mxu0 0
        %5661 = vmatprep.subr.bf16.mxu0 0
        %5662 = vmatpush1.bf16.xpose.msra.mxu0 0
        %5663 = vmatprep.subr.bf16.mxu0 0
        %5664 = vmatpush1.bf16.xpose.msra.mxu0 0
        %5665 = vmatprep.subr.bf16.mxu0 0
        %5666 = vmatpush1.bf16.xpose.msra.mxu0 %v5649
        %5667 = vmatprep.subr.bf16.mxu0 0
        %5668 = vmatpush2.bf16.xpose.msra.mxu0 0
        %5669 = vmatprep.subr.bf16.mxu0 0
        %5670 = vmatpush2.bf16.xpose.msra.mxu0 0
        %5671 = vmatprep.subr.bf16.mxu0 0
        %5672 = vmatpush2.bf16.xpose.msra.mxu0 0
        %5673 = vmatprep.subr.bf16.mxu0 0
        %5674 = vmatpush2.bf16.xpose.msra.mxu0 0
        %5675 = vmatprep.subr.bf16.mxu0 0
        %5676 = vmatpush2.bf16.xpose.msra.mxu0 0
        %5677 = vmatprep.subr.bf16.mxu0 0
        %5678 = vmatpush2.bf16.xpose.msra.mxu0 0
        %5679 = vmatprep.subr.bf16.mxu0 0
        %5680 = vmatpush2.bf16.xpose.msra.mxu0 0
        %5681 = vmatprep.subr.bf16.mxu0 0
        %5682 = vmatpush2.bf16.xpose.msra.mxu0 0
        %5683 = vmatprep.mubr.bf16.mxu0 0
        %5684 = vmatmul.mubr.bf16.gmra.mxu0 %v5646
        %v5685 = vpop.f32.mrf.mxu0
        %v5686 = vadd.f32 0.0, %v5685
        %v5687 = vpop.f32.mrf.mxu0
        %v5688 = vpop.f32.mrf.mxu0
        %v5689 = vpop.f32.mrf.mxu0
        %5690 = vdwg.mxu0
        %v5692 = vsel %vm2318, %v4266, 0
        %v5695 = vsel %vm2318, %v4862, 0
        %5697 = vmatprep.subr.bf16.mxu0 0
        %5698 = vmatpush1.bf16.xpose.msra.mxu0 0
        %5699 = vmatprep.subr.bf16.mxu0 0
        %5700 = vmatpush1.bf16.xpose.msra.mxu0 0
        %5701 = vmatprep.subr.bf16.mxu0 0
        %5702 = vmatpush1.bf16.xpose.msra.mxu0 0
        %5703 = vmatprep.subr.bf16.mxu0 0
        %5704 = vmatpush1.bf16.xpose.msra.mxu0 0
        %5705 = vmatprep.subr.bf16.mxu0 0
        %5706 = vmatpush1.bf16.xpose.msra.mxu0 0
        %5707 = vmatprep.subr.bf16.mxu0 0
        %5708 = vmatpush1.bf16.xpose.msra.mxu0 0
        %5709 = vmatprep.subr.bf16.mxu0 0
        %5710 = vmatpush1.bf16.xpose.msra.mxu0 0
        %5711 = vmatprep.subr.bf16.mxu0 0
        %5712 = vmatpush1.bf16.xpose.msra.mxu0 %v5695
        %5713 = vmatprep.subr.bf16.mxu0 0
        %5714 = vmatpush2.bf16.xpose.msra.mxu0 0
        %5715 = vmatprep.subr.bf16.mxu0 0
        %5716 = vmatpush2.bf16.xpose.msra.mxu0 0
        %5717 = vmatprep.subr.bf16.mxu0 0
        %5718 = vmatpush2.bf16.xpose.msra.mxu0 0
        %5719 = vmatprep.subr.bf16.mxu0 0
        %5720 = vmatpush2.bf16.xpose.msra.mxu0 0
        %5721 = vmatprep.subr.bf16.mxu0 0
        %5722 = vmatpush2.bf16.xpose.msra.mxu0 0
        %5723 = vmatprep.subr.bf16.mxu0 0
        %5724 = vmatpush2.bf16.xpose.msra.mxu0 0
        %5725 = vmatprep.subr.bf16.mxu0 0
        %5726 = vmatpush2.bf16.xpose.msra.mxu0 0
        %5727 = vmatprep.subr.bf16.mxu0 0
        %5728 = vmatpush2.bf16.xpose.msra.mxu0 0
        %5729 = vmatprep.mubr.bf16.mxu0 0
        %5730 = vmatmul.mubr.bf16.gmra.mxu0 %v5692
        %v5731 = vpop.f32.mrf.mxu0
        %v5732 = vadd.f32 0.0, %v5731
        %v5733 = vpop.f32.mrf.mxu0
        %v5734 = vpop.f32.mrf.mxu0
        %v5735 = vpop.f32.mrf.mxu0
        %5736 = vdwg.mxu0
        %v5738 = vsel %vm2318, %v4267, 0
        %v5741 = vsel %vm2318, %v4863, 0
        %5743 = vmatprep.subr.bf16.mxu0 0
        %5744 = vmatpush1.bf16.xpose.msra.mxu0 0
        %5745 = vmatprep.subr.bf16.mxu0 0
        %5746 = vmatpush1.bf16.xpose.msra.mxu0 0
        %5747 = vmatprep.subr.bf16.mxu0 0
        %5748 = vmatpush1.bf16.xpose.msra.mxu0 0
        %5749 = vmatprep.subr.bf16.mxu0 0
        %5750 = vmatpush1.bf16.xpose.msra.mxu0 0
        %5751 = vmatprep.subr.bf16.mxu0 0
        %5752 = vmatpush1.bf16.xpose.msra.mxu0 0
        %5753 = vmatprep.subr.bf16.mxu0 0
        %5754 = vmatpush1.bf16.xpose.msra.mxu0 0
        %5755 = vmatprep.subr.bf16.mxu0 0
        %5756 = vmatpush1.bf16.xpose.msra.mxu0 0
        %5757 = vmatprep.subr.bf16.mxu0 0
        %5758 = vmatpush1.bf16.xpose.msra.mxu0 %v5741
        %5759 = vmatprep.subr.bf16.mxu0 0
        %5760 = vmatpush2.bf16.xpose.msra.mxu0 0
        %5761 = vmatprep.subr.bf16.mxu0 0
        %5762 = vmatpush2.bf16.xpose.msra.mxu0 0
        %5763 = vmatprep.subr.bf16.mxu0 0
        %5764 = vmatpush2.bf16.xpose.msra.mxu0 0
        %5765 = vmatprep.subr.bf16.mxu0 0
        %5766 = vmatpush2.bf16.xpose.msra.mxu0 0
        %5767 = vmatprep.subr.bf16.mxu0 0
        %5768 = vmatpush2.bf16.xpose.msra.mxu0 0
        %5769 = vmatprep.subr.bf16.mxu0 0
        %5770 = vmatpush2.bf16.xpose.msra.mxu0 0
        %5771 = vmatprep.subr.bf16.mxu0 0
        %5772 = vmatpush2.bf16.xpose.msra.mxu0 0
        %5773 = vmatprep.subr.bf16.mxu0 0
        %5774 = vmatpush2.bf16.xpose.msra.mxu0 0
        %5775 = vmatprep.mubr.bf16.mxu0 0
        %5776 = vmatmul.mubr.bf16.gmra.mxu0 %v5738
        %v5777 = vpop.f32.mrf.mxu0
        %v5778 = vadd.f32 0.0, %v5777
        %v5779 = vpop.f32.mrf.mxu0
        %v5780 = vpop.f32.mrf.mxu0
        %v5781 = vpop.f32.mrf.mxu0
        %5782 = vdwg.mxu0
        %v5784 = vsel %vm2318, %v4268, 0
        %v5787 = vsel %vm2318, %v4864, 0
        %5789 = vmatprep.subr.bf16.mxu0 0
        %5790 = vmatpush1.bf16.xpose.msra.mxu0 0
        %5791 = vmatprep.subr.bf16.mxu0 0
        %5792 = vmatpush1.bf16.xpose.msra.mxu0 0
        %5793 = vmatprep.subr.bf16.mxu0 0
        %5794 = vmatpush1.bf16.xpose.msra.mxu0 0
        %5795 = vmatprep.subr.bf16.mxu0 0
        %5796 = vmatpush1.bf16.xpose.msra.mxu0 0
        %5797 = vmatprep.subr.bf16.mxu0 0
        %5798 = vmatpush1.bf16.xpose.msra.mxu0 0
        %5799 = vmatprep.subr.bf16.mxu0 0
        %5800 = vmatpush1.bf16.xpose.msra.mxu0 0
        %5801 = vmatprep.subr.bf16.mxu0 0
        %5802 = vmatpush1.bf16.xpose.msra.mxu0 0
        %5803 = vmatprep.subr.bf16.mxu0 0
        %5804 = vmatpush1.bf16.xpose.msra.mxu0 %v5787
        %5805 = vmatprep.subr.bf16.mxu0 0
        %5806 = vmatpush2.bf16.xpose.msra.mxu0 0
        %5807 = vmatprep.subr.bf16.mxu0 0
        %5808 = vmatpush2.bf16.xpose.msra.mxu0 0
        %5809 = vmatprep.subr.bf16.mxu0 0
        %5810 = vmatpush2.bf16.xpose.msra.mxu0 0
        %5811 = vmatprep.subr.bf16.mxu0 0
        %5812 = vmatpush2.bf16.xpose.msra.mxu0 0
        %5813 = vmatprep.subr.bf16.mxu0 0
        %5814 = vmatpush2.bf16.xpose.msra.mxu0 0
        %5815 = vmatprep.subr.bf16.mxu0 0
        %5816 = vmatpush2.bf16.xpose.msra.mxu0 0
        %5817 = vmatprep.subr.bf16.mxu0 0
        %5818 = vmatpush2.bf16.xpose.msra.mxu0 0
        %5819 = vmatprep.subr.bf16.mxu0 0
        %5820 = vmatpush2.bf16.xpose.msra.mxu0 0
        %5821 = vmatprep.mubr.bf16.mxu0 0
        %5822 = vmatmul.mubr.bf16.gmra.mxu0 %v5784
        %v5823 = vpop.f32.mrf.mxu0
        %v5824 = vadd.f32 0.0, %v5823
        %v5825 = vpop.f32.mrf.mxu0
        %v5826 = vpop.f32.mrf.mxu0
        %v5827 = vpop.f32.mrf.mxu0
        %5828 = vdwg.mxu0
        %v5829 = vsel %vm2318, %v5502, -inf
        %5830 = vmax.xlane.f32.xlu0 %v5829
        %v5831 = vpop.xlane.xlu0 %5830
        %v5832 = vsel %vm2318, %v5548, -inf
        %5833 = vmax.xlane.f32.xlu0 %v5832
        %v5834 = vpop.xlane.xlu0 %5833
        %v5835 = vsel %vm2318, %v5594, -inf
        %5836 = vmax.xlane.f32.xlu0 %v5835
        %v5837 = vpop.xlane.xlu0 %5836
        %v5838 = vsel %vm2318, %v5640, -inf
        %5839 = vmax.xlane.f32.xlu0 %v5838
        %v5840 = vpop.xlane.xlu0 %5839
        %v5841 = vsel %vm2318, %v5686, -inf
        %5842 = vmax.xlane.f32.xlu0 %v5841
        %v5843 = vpop.xlane.xlu0 %5842
        %v5844 = vsel %vm2318, %v5732, -inf
        %5845 = vmax.xlane.f32.xlu0 %v5844
        %v5846 = vpop.xlane.xlu0 %5845
        %v5847 = vsel %vm2318, %v5778, -inf
        %5848 = vmax.xlane.f32.xlu0 %v5847
        %v5849 = vpop.xlane.xlu0 %5848
        %v5850 = vsel %vm2318, %v5824, -inf
        %5851 = vmax.xlane.f32.xlu0 %v5850
        %v5852 = vpop.xlane.xlu0 %5851
        %v5853 = vsub.f32 %v5502, %v5831
        %v5854 = vsub.f32 %v5548, %v5834
        %v5855 = vsub.f32 %v5594, %v5837
        %v5856 = vsub.f32 %v5640, %v5840
        %v5857 = vsub.f32 %v5686, %v5843
        %v5858 = vsub.f32 %v5732, %v5846
        %v5859 = vsub.f32 %v5778, %v5849
        %v5860 = vsub.f32 %v5824, %v5852
        %v5861 = vmul.f32 %v5853, 1.442695
        %v5862 = vpow.pop %v5861
        %v5863 = vmul.f32 %v5854, 1.442695
        %v5864 = vpow.pop %v5863
        %v5865 = vmul.f32 %v5855, 1.442695
        %v5866 = vpow.pop %v5865
        %v5867 = vmul.f32 %v5856, 1.442695
        %v5868 = vpow.pop %v5867
        %v5869 = vmul.f32 %v5857, 1.442695
        %v5870 = vpow.pop %v5869
        %v5871 = vmul.f32 %v5858, 1.442695
        %v5872 = vpow.pop %v5871
        %v5873 = vmul.f32 %v5859, 1.442695
        %v5874 = vpow.pop %v5873
        %v5875 = vmul.f32 %v5860, 1.442695
        %v5876 = vpow.pop %v5875
        %v5877 = vsel %vm2318, %v5862, 0.0
        %5878 = vadd.xlane.f32.xlu0 %v5877
        %v5879 = vpop.xlane.xlu0 %5878
        %v5880 = vsel %vm2318, %v5864, 0.0
        %5881 = vadd.xlane.f32.xlu0 %v5880
        %v5882 = vpop.xlane.xlu0 %5881
        %v5883 = vsel %vm2318, %v5866, 0.0
        %5884 = vadd.xlane.f32.xlu0 %v5883
        %v5885 = vpop.xlane.xlu0 %5884
        %v5886 = vsel %vm2318, %v5868, 0.0
        %5887 = vadd.xlane.f32.xlu0 %v5886
        %v5888 = vpop.xlane.xlu0 %5887
        %v5889 = vsel %vm2318, %v5870, 0.0
        %5890 = vadd.xlane.f32.xlu0 %v5889
        %v5891 = vpop.xlane.xlu0 %5890
        %v5892 = vsel %vm2318, %v5872, 0.0
        %5893 = vadd.xlane.f32.xlu0 %v5892
        %v5894 = vpop.xlane.xlu0 %5893
        %v5895 = vsel %vm2318, %v5874, 0.0
        %5896 = vadd.xlane.f32.xlu0 %v5895
        %v5897 = vpop.xlane.xlu0 %5896
        %v5898 = vsel %vm2318, %v5876, 0.0
        %5899 = vadd.xlane.f32.xlu0 %v5898
        %v5900 = vpop.xlane.xlu0 %5899
        %v5901 = vrcp.pop %v5879
        %v5902 = vrcp.pop %v5882
        %v5903 = vrcp.pop %v5885
        %v5904 = vrcp.pop %v5888
        %v5905 = vrcp.pop %v5891
        %v5906 = vrcp.pop %v5894
        %v5907 = vrcp.pop %v5897
        %v5908 = vrcp.pop %v5900
        %v5909 = vmul.f32 %v5879, %v5901
        %v5910 = vmul.f32 %v5882, %v5902
        %v5911 = vmul.f32 %v5885, %v5903
        %v5912 = vmul.f32 %v5888, %v5904
        %v5913 = vmul.f32 %v5891, %v5905
        %v5914 = vmul.f32 %v5894, %v5906
        %v5915 = vmul.f32 %v5897, %v5907
        %v5916 = vmul.f32 %v5900, %v5908
        %v5917 = vsub.f32 2.0, %v5909
        %v5918 = vsub.f32 2.0, %v5910
        %v5919 = vsub.f32 2.0, %v5911
        %v5920 = vsub.f32 2.0, %v5912
        %v5921 = vsub.f32 2.0, %v5913
        %v5922 = vsub.f32 2.0, %v5914
        %v5923 = vsub.f32 2.0, %v5915
        %v5924 = vsub.f32 2.0, %v5916
        %v5925 = vmul.f32 %v5901, %v5917
        %v5926 = vmul.f32 %v5902, %v5918
        %v5927 = vmul.f32 %v5903, %v5919
        %v5928 = vmul.f32 %v5904, %v5920
        %v5929 = vmul.f32 %v5905, %v5921
        %v5930 = vmul.f32 %v5906, %v5922
        %v5931 = vmul.f32 %v5907, %v5923
        %v5932 = vmul.f32 %v5908, %v5924
        %v5933 = vmul.f32 %v5862, %v5925
        %v5934 = vmul.f32 %v5864, %v5926
        %v5935 = vmul.f32 %v5866, %v5927
        %v5936 = vmul.f32 %v5868, %v5928
        %v5937 = vmul.f32 %v5870, %v5929
        %v5938 = vmul.f32 %v5872, %v5930
        %v5939 = vmul.f32 %v5874, %v5931
        %v5940 = vmul.f32 %v5876, %v5932
        %v5941 = vpack.c.bf16 %v5933, %v5933
        %v5942 = vpack.c.bf16 %v5934, %v5934
        %v5943 = vpack.c.bf16 %v5935, %v5935
        %v5944 = vpack.c.bf16 %v5936, %v5936
        %v5945 = vpack.c.bf16 %v5937, %v5937
        %v5946 = vpack.c.bf16 %v5938, %v5938
        %v5947 = vpack.c.bf16 %v5939, %v5939
        %v5948 = vpack.c.bf16 %v5940, %v5940
        %v5950 = vsel %vm2318, %v5941, 0
        %5952 = vmatprep.subr.bf16.mxu0 0
        %5953 = vmatpush1.bf16.msra.mxu0 0
        %5954 = vmatprep.subr.bf16.mxu0 0
        %5955 = vmatpush1.bf16.msra.mxu0 0
        %5956 = vmatprep.subr.bf16.mxu0 0
        %5957 = vmatpush1.bf16.msra.mxu0 0
        %5958 = vmatprep.subr.bf16.mxu0 0
        %5959 = vmatpush1.bf16.msra.mxu0 0
        %5960 = vmatprep.subr.bf16.mxu0 0
        %5961 = vmatpush1.bf16.msra.mxu0 0
        %5962 = vmatprep.subr.bf16.mxu0 0
        %5963 = vmatpush1.bf16.msra.mxu0 0
        %5964 = vmatprep.subr.bf16.mxu0 0
        %5965 = vmatpush1.bf16.msra.mxu0 0
        %5966 = vmatprep.subr.bf16.mxu0 0
        %5967 = vmatpush1.bf16.msra.mxu0 %v5453
        %5968 = vmatprep.subr.bf16.mxu0 0
        %5969 = vmatpush2.bf16.msra.mxu0 0
        %5970 = vmatprep.subr.bf16.mxu0 0
        %5971 = vmatpush2.bf16.msra.mxu0 0
        %5972 = vmatprep.subr.bf16.mxu0 0
        %5973 = vmatpush2.bf16.msra.mxu0 0
        %5974 = vmatprep.subr.bf16.mxu0 0
        %5975 = vmatpush2.bf16.msra.mxu0 0
        %5976 = vmatprep.subr.bf16.mxu0 0
        %5977 = vmatpush2.bf16.msra.mxu0 0
        %5978 = vmatprep.subr.bf16.mxu0 0
        %5979 = vmatpush2.bf16.msra.mxu0 0
        %5980 = vmatprep.subr.bf16.mxu0 0
        %5981 = vmatpush2.bf16.msra.mxu0 0
        %5982 = vmatprep.subr.bf16.mxu0 0
        %5983 = vmatpush2.bf16.msra.mxu0 0
        %5984 = vmatprep.mubr.bf16.mxu0 0
        %5985 = vmatmul.mubr.bf16.gmra.mxu0 %v5950
        %v5986 = vpop.f32.mrf.mxu0
        %v5987 = vadd.f32 0.0, %v5986
        %v5988 = vpop.f32.mrf.mxu0
        %v5989 = vpop.f32.mrf.mxu0
        %v5990 = vpop.f32.mrf.mxu0
        %5991 = vdwg.mxu0
        %v5993 = vsel %vm2318, %v5942, 0
        %5995 = vmatprep.subr.bf16.mxu0 0
        %5996 = vmatpush1.bf16.msra.mxu0 0
        %5997 = vmatprep.subr.bf16.mxu0 0
        %5998 = vmatpush1.bf16.msra.mxu0 0
        %5999 = vmatprep.subr.bf16.mxu0 0
        %6000 = vmatpush1.bf16.msra.mxu0 0
        %6001 = vmatprep.subr.bf16.mxu0 0
        %6002 = vmatpush1.bf16.msra.mxu0 0
        %6003 = vmatprep.subr.bf16.mxu0 0
        %6004 = vmatpush1.bf16.msra.mxu0 0
        %6005 = vmatprep.subr.bf16.mxu0 0
        %6006 = vmatpush1.bf16.msra.mxu0 0
        %6007 = vmatprep.subr.bf16.mxu0 0
        %6008 = vmatpush1.bf16.msra.mxu0 0
        %6009 = vmatprep.subr.bf16.mxu0 0
        %6010 = vmatpush1.bf16.msra.mxu0 %v5454
        %6011 = vmatprep.subr.bf16.mxu0 0
        %6012 = vmatpush2.bf16.msra.mxu0 0
        %6013 = vmatprep.subr.bf16.mxu0 0
        %6014 = vmatpush2.bf16.msra.mxu0 0
        %6015 = vmatprep.subr.bf16.mxu0 0
        %6016 = vmatpush2.bf16.msra.mxu0 0
        %6017 = vmatprep.subr.bf16.mxu0 0
        %6018 = vmatpush2.bf16.msra.mxu0 0
        %6019 = vmatprep.subr.bf16.mxu0 0
        %6020 = vmatpush2.bf16.msra.mxu0 0
        %6021 = vmatprep.subr.bf16.mxu0 0
        %6022 = vmatpush2.bf16.msra.mxu0 0
        %6023 = vmatprep.subr.bf16.mxu0 0
        %6024 = vmatpush2.bf16.msra.mxu0 0
        %6025 = vmatprep.subr.bf16.mxu0 0
        %6026 = vmatpush2.bf16.msra.mxu0 0
        %6027 = vmatprep.mubr.bf16.mxu0 0
        %6028 = vmatmul.mubr.bf16.gmra.mxu0 %v5993
        %v6029 = vpop.f32.mrf.mxu0
        %v6030 = vadd.f32 0.0, %v6029
        %v6031 = vpop.f32.mrf.mxu0
        %v6032 = vpop.f32.mrf.mxu0
        %v6033 = vpop.f32.mrf.mxu0
        %6034 = vdwg.mxu0
        %v6036 = vsel %vm2318, %v5943, 0
        %6038 = vmatprep.subr.bf16.mxu0 0
        %6039 = vmatpush1.bf16.msra.mxu0 0
        %6040 = vmatprep.subr.bf16.mxu0 0
        %6041 = vmatpush1.bf16.msra.mxu0 0
        %6042 = vmatprep.subr.bf16.mxu0 0
        %6043 = vmatpush1.bf16.msra.mxu0 0
        %6044 = vmatprep.subr.bf16.mxu0 0
        %6045 = vmatpush1.bf16.msra.mxu0 0
        %6046 = vmatprep.subr.bf16.mxu0 0
        %6047 = vmatpush1.bf16.msra.mxu0 0
        %6048 = vmatprep.subr.bf16.mxu0 0
        %6049 = vmatpush1.bf16.msra.mxu0 0
        %6050 = vmatprep.subr.bf16.mxu0 0
        %6051 = vmatpush1.bf16.msra.mxu0 0
        %6052 = vmatprep.subr.bf16.mxu0 0
        %6053 = vmatpush1.bf16.msra.mxu0 %v5455
        %6054 = vmatprep.subr.bf16.mxu0 0
        %6055 = vmatpush2.bf16.msra.mxu0 0
        %6056 = vmatprep.subr.bf16.mxu0 0
        %6057 = vmatpush2.bf16.msra.mxu0 0
        %6058 = vmatprep.subr.bf16.mxu0 0
        %6059 = vmatpush2.bf16.msra.mxu0 0
        %6060 = vmatprep.subr.bf16.mxu0 0
        %6061 = vmatpush2.bf16.msra.mxu0 0
        %6062 = vmatprep.subr.bf16.mxu0 0
        %6063 = vmatpush2.bf16.msra.mxu0 0
        %6064 = vmatprep.subr.bf16.mxu0 0
        %6065 = vmatpush2.bf16.msra.mxu0 0
        %6066 = vmatprep.subr.bf16.mxu0 0
        %6067 = vmatpush2.bf16.msra.mxu0 0
        %6068 = vmatprep.subr.bf16.mxu0 0
        %6069 = vmatpush2.bf16.msra.mxu0 0
        %6070 = vmatprep.mubr.bf16.mxu0 0
        %6071 = vmatmul.mubr.bf16.gmra.mxu0 %v6036
        %v6072 = vpop.f32.mrf.mxu0
        %v6073 = vadd.f32 0.0, %v6072
        %v6074 = vpop.f32.mrf.mxu0
        %v6075 = vpop.f32.mrf.mxu0
        %v6076 = vpop.f32.mrf.mxu0
        %6077 = vdwg.mxu0
        %v6079 = vsel %vm2318, %v5944, 0
        %6081 = vmatprep.subr.bf16.mxu0 0
        %6082 = vmatpush1.bf16.msra.mxu0 0
        %6083 = vmatprep.subr.bf16.mxu0 0
        %6084 = vmatpush1.bf16.msra.mxu0 0
        %6085 = vmatprep.subr.bf16.mxu0 0
        %6086 = vmatpush1.bf16.msra.mxu0 0
        %6087 = vmatprep.subr.bf16.mxu0 0
        %6088 = vmatpush1.bf16.msra.mxu0 0
        %6089 = vmatprep.subr.bf16.mxu0 0
        %6090 = vmatpush1.bf16.msra.mxu0 0
        %6091 = vmatprep.subr.bf16.mxu0 0
        %6092 = vmatpush1.bf16.msra.mxu0 0
        %6093 = vmatprep.subr.bf16.mxu0 0
        %6094 = vmatpush1.bf16.msra.mxu0 0
        %6095 = vmatprep.subr.bf16.mxu0 0
        %6096 = vmatpush1.bf16.msra.mxu0 %v5456
        %6097 = vmatprep.subr.bf16.mxu0 0
        %6098 = vmatpush2.bf16.msra.mxu0 0
        %6099 = vmatprep.subr.bf16.mxu0 0
        %6100 = vmatpush2.bf16.msra.mxu0 0
        %6101 = vmatprep.subr.bf16.mxu0 0
        %6102 = vmatpush2.bf16.msra.mxu0 0
        %6103 = vmatprep.subr.bf16.mxu0 0
        %6104 = vmatpush2.bf16.msra.mxu0 0
        %6105 = vmatprep.subr.bf16.mxu0 0
        %6106 = vmatpush2.bf16.msra.mxu0 0
        %6107 = vmatprep.subr.bf16.mxu0 0
        %6108 = vmatpush2.bf16.msra.mxu0 0
        %6109 = vmatprep.subr.bf16.mxu0 0
        %6110 = vmatpush2.bf16.msra.mxu0 0
        %6111 = vmatprep.subr.bf16.mxu0 0
        %6112 = vmatpush2.bf16.msra.mxu0 0
        %6113 = vmatprep.mubr.bf16.mxu0 0
        %6114 = vmatmul.mubr.bf16.gmra.mxu0 %v6079
        %v6115 = vpop.f32.mrf.mxu0
        %v6116 = vadd.f32 0.0, %v6115
        %v6117 = vpop.f32.mrf.mxu0
        %v6118 = vpop.f32.mrf.mxu0
        %v6119 = vpop.f32.mrf.mxu0
        %6120 = vdwg.mxu0
        %v6122 = vsel %vm2318, %v5945, 0
        %6124 = vmatprep.subr.bf16.mxu0 0
        %6125 = vmatpush1.bf16.msra.mxu0 0
        %6126 = vmatprep.subr.bf16.mxu0 0
        %6127 = vmatpush1.bf16.msra.mxu0 0
        %6128 = vmatprep.subr.bf16.mxu0 0
        %6129 = vmatpush1.bf16.msra.mxu0 0
        %6130 = vmatprep.subr.bf16.mxu0 0
        %6131 = vmatpush1.bf16.msra.mxu0 0
        %6132 = vmatprep.subr.bf16.mxu0 0
        %6133 = vmatpush1.bf16.msra.mxu0 0
        %6134 = vmatprep.subr.bf16.mxu0 0
        %6135 = vmatpush1.bf16.msra.mxu0 0
        %6136 = vmatprep.subr.bf16.mxu0 0
        %6137 = vmatpush1.bf16.msra.mxu0 0
        %6138 = vmatprep.subr.bf16.mxu0 0
        %6139 = vmatpush1.bf16.msra.mxu0 %v5457
        %6140 = vmatprep.subr.bf16.mxu0 0
        %6141 = vmatpush2.bf16.msra.mxu0 0
        %6142 = vmatprep.subr.bf16.mxu0 0
        %6143 = vmatpush2.bf16.msra.mxu0 0
        %6144 = vmatprep.subr.bf16.mxu0 0
        %6145 = vmatpush2.bf16.msra.mxu0 0
        %6146 = vmatprep.subr.bf16.mxu0 0
        %6147 = vmatpush2.bf16.msra.mxu0 0
        %6148 = vmatprep.subr.bf16.mxu0 0
        %6149 = vmatpush2.bf16.msra.mxu0 0
        %6150 = vmatprep.subr.bf16.mxu0 0
        %6151 = vmatpush2.bf16.msra.mxu0 0
        %6152 = vmatprep.subr.bf16.mxu0 0
        %6153 = vmatpush2.bf16.msra.mxu0 0
        %6154 = vmatprep.subr.bf16.mxu0 0
        %6155 = vmatpush2.bf16.msra.mxu0 0
        %6156 = vmatprep.mubr.bf16.mxu0 0
        %6157 = vmatmul.mubr.bf16.gmra.mxu0 %v6122
        %v6158 = vpop.f32.mrf.mxu0
        %v6159 = vadd.f32 0.0, %v6158
        %v6160 = vpop.f32.mrf.mxu0
        %v6161 = vpop.f32.mrf.mxu0
        %v6162 = vpop.f32.mrf.mxu0
        %6163 = vdwg.mxu0
        %v6165 = vsel %vm2318, %v5946, 0
        %6167 = vmatprep.subr.bf16.mxu0 0
        %6168 = vmatpush1.bf16.msra.mxu0 0
        %6169 = vmatprep.subr.bf16.mxu0 0
        %6170 = vmatpush1.bf16.msra.mxu0 0
        %6171 = vmatprep.subr.bf16.mxu0 0
        %6172 = vmatpush1.bf16.msra.mxu0 0
        %6173 = vmatprep.subr.bf16.mxu0 0
        %6174 = vmatpush1.bf16.msra.mxu0 0
        %6175 = vmatprep.subr.bf16.mxu0 0
        %6176 = vmatpush1.bf16.msra.mxu0 0
        %6177 = vmatprep.subr.bf16.mxu0 0
        %6178 = vmatpush1.bf16.msra.mxu0 0
        %6179 = vmatprep.subr.bf16.mxu0 0
        %6180 = vmatpush1.bf16.msra.mxu0 0
        %6181 = vmatprep.subr.bf16.mxu0 0
        %6182 = vmatpush1.bf16.msra.mxu0 %v5458
        %6183 = vmatprep.subr.bf16.mxu0 0
        %6184 = vmatpush2.bf16.msra.mxu0 0
        %6185 = vmatprep.subr.bf16.mxu0 0
        %6186 = vmatpush2.bf16.msra.mxu0 0
        %6187 = vmatprep.subr.bf16.mxu0 0
        %6188 = vmatpush2.bf16.msra.mxu0 0
        %6189 = vmatprep.subr.bf16.mxu0 0
        %6190 = vmatpush2.bf16.msra.mxu0 0
        %6191 = vmatprep.subr.bf16.mxu0 0
        %6192 = vmatpush2.bf16.msra.mxu0 0
        %6193 = vmatprep.subr.bf16.mxu0 0
        %6194 = vmatpush2.bf16.msra.mxu0 0
        %6195 = vmatprep.subr.bf16.mxu0 0
        %6196 = vmatpush2.bf16.msra.mxu0 0
        %6197 = vmatprep.subr.bf16.mxu0 0
        %6198 = vmatpush2.bf16.msra.mxu0 0
        %6199 = vmatprep.mubr.bf16.mxu0 0
        %6200 = vmatmul.mubr.bf16.gmra.mxu0 %v6165
        %v6201 = vpop.f32.mrf.mxu0
        %v6202 = vadd.f32 0.0, %v6201
        %v6203 = vpop.f32.mrf.mxu0
        %v6204 = vpop.f32.mrf.mxu0
        %v6205 = vpop.f32.mrf.mxu0
        %6206 = vdwg.mxu0
        %v6208 = vsel %vm2318, %v5947, 0
        %6210 = vmatprep.subr.bf16.mxu0 0
        %6211 = vmatpush1.bf16.msra.mxu0 0
        %6212 = vmatprep.subr.bf16.mxu0 0
        %6213 = vmatpush1.bf16.msra.mxu0 0
        %6214 = vmatprep.subr.bf16.mxu0 0
        %6215 = vmatpush1.bf16.msra.mxu0 0
        %6216 = vmatprep.subr.bf16.mxu0 0
        %6217 = vmatpush1.bf16.msra.mxu0 0
        %6218 = vmatprep.subr.bf16.mxu0 0
        %6219 = vmatpush1.bf16.msra.mxu0 0
        %6220 = vmatprep.subr.bf16.mxu0 0
        %6221 = vmatpush1.bf16.msra.mxu0 0
        %6222 = vmatprep.subr.bf16.mxu0 0
        %6223 = vmatpush1.bf16.msra.mxu0 0
        %6224 = vmatprep.subr.bf16.mxu0 0
        %6225 = vmatpush1.bf16.msra.mxu0 %v5459
        %6226 = vmatprep.subr.bf16.mxu0 0
        %6227 = vmatpush2.bf16.msra.mxu0 0
        %6228 = vmatprep.subr.bf16.mxu0 0
        %6229 = vmatpush2.bf16.msra.mxu0 0
        %6230 = vmatprep.subr.bf16.mxu0 0
        %6231 = vmatpush2.bf16.msra.mxu0 0
        %6232 = vmatprep.subr.bf16.mxu0 0
        %6233 = vmatpush2.bf16.msra.mxu0 0
        %6234 = vmatprep.subr.bf16.mxu0 0
        %6235 = vmatpush2.bf16.msra.mxu0 0
        %6236 = vmatprep.subr.bf16.mxu0 0
        %6237 = vmatpush2.bf16.msra.mxu0 0
        %6238 = vmatprep.subr.bf16.mxu0 0
        %6239 = vmatpush2.bf16.msra.mxu0 0
        %6240 = vmatprep.subr.bf16.mxu0 0
        %6241 = vmatpush2.bf16.msra.mxu0 0
        %6242 = vmatprep.mubr.bf16.mxu0 0
        %6243 = vmatmul.mubr.bf16.gmra.mxu0 %v6208
        %v6244 = vpop.f32.mrf.mxu0
        %v6245 = vadd.f32 0.0, %v6244
        %v6246 = vpop.f32.mrf.mxu0
        %v6247 = vpop.f32.mrf.mxu0
        %v6248 = vpop.f32.mrf.mxu0
        %6249 = vdwg.mxu0
        %v6251 = vsel %vm2318, %v5948, 0
        %6253 = vmatprep.subr.bf16.mxu0 0
        %6254 = vmatpush1.bf16.msra.mxu0 0
        %6255 = vmatprep.subr.bf16.mxu0 0
        %6256 = vmatpush1.bf16.msra.mxu0 0
        %6257 = vmatprep.subr.bf16.mxu0 0
        %6258 = vmatpush1.bf16.msra.mxu0 0
        %6259 = vmatprep.subr.bf16.mxu0 0
        %6260 = vmatpush1.bf16.msra.mxu0 0
        %6261 = vmatprep.subr.bf16.mxu0 0
        %6262 = vmatpush1.bf16.msra.mxu0 0
        %6263 = vmatprep.subr.bf16.mxu0 0
        %6264 = vmatpush1.bf16.msra.mxu0 0
        %6265 = vmatprep.subr.bf16.mxu0 0
        %6266 = vmatpush1.bf16.msra.mxu0 0
        %6267 = vmatprep.subr.bf16.mxu0 0
        %6268 = vmatpush1.bf16.msra.mxu0 %v5460
        %6269 = vmatprep.subr.bf16.mxu0 0
        %6270 = vmatpush2.bf16.msra.mxu0 0
        %6271 = vmatprep.subr.bf16.mxu0 0
        %6272 = vmatpush2.bf16.msra.mxu0 0
        %6273 = vmatprep.subr.bf16.mxu0 0
        %6274 = vmatpush2.bf16.msra.mxu0 0
        %6275 = vmatprep.subr.bf16.mxu0 0
        %6276 = vmatpush2.bf16.msra.mxu0 0
        %6277 = vmatprep.subr.bf16.mxu0 0
        %6278 = vmatpush2.bf16.msra.mxu0 0
        %6279 = vmatprep.subr.bf16.mxu0 0
        %6280 = vmatpush2.bf16.msra.mxu0 0
        %6281 = vmatprep.subr.bf16.mxu0 0
        %6282 = vmatpush2.bf16.msra.mxu0 0
        %6283 = vmatprep.subr.bf16.mxu0 0
        %6284 = vmatpush2.bf16.msra.mxu0 0
        %6285 = vmatprep.mubr.bf16.mxu0 0
        %6286 = vmatmul.mubr.bf16.gmra.mxu0 %v6251
        %v6287 = vpop.f32.mrf.mxu0
        %v6288 = vadd.f32 0.0, %v6287
        %v6289 = vpop.f32.mrf.mxu0
        %v6290 = vpop.f32.mrf.mxu0
        %v6291 = vpop.f32.mrf.mxu0
        %6292 = vdwg.mxu0
        %v6293 = vcombine.low %v5987, %v6073
        %v6294 = vcombine.high %v5987, %v6073
        %v6296 = vunpack.c.l.s4 1983009808
        %v6297 = vunpack.c.0.s8 %v6296
        %v6298 = vlaneseq
        %v6299 = vshrl.u32 %v6298, 7
        %v6300 = vsub.s32 %v6297, %v6299
        %v6301 = vrot.slane %v6293, %v6300
        %v6303 = vunpack.c.l.s4 1983009808
        %v6304 = vunpack.c.0.s8 %v6303
        %v6305 = vlaneseq
        %v6306 = vshrl.u32 %v6305, 7
        %v6307 = vsub.s32 %v6304, %v6306
        %v6308 = vrot.slane %v6294, %v6307
        %v6309 = vcombine.low %v6030, %v6116
        %v6310 = vcombine.high %v6030, %v6116
        %v6312 = vunpack.c.l.s4 1983009808
        %v6313 = vunpack.c.0.s8 %v6312
        %v6314 = vlaneseq
        %v6315 = vshrl.u32 %v6314, 7
        %v6316 = vsub.s32 %v6313, %v6315
        %v6317 = vrot.slane %v6309, %v6316
        %v6319 = vunpack.c.l.s4 1983009808
        %v6320 = vunpack.c.0.s8 %v6319
        %v6321 = vlaneseq
        %v6322 = vshrl.u32 %v6321, 7
        %v6323 = vsub.s32 %v6320, %v6322
        %v6324 = vrot.slane %v6310, %v6323
        %v6325 = vcombine.low %v6159, %v6245
        %v6326 = vcombine.high %v6159, %v6245
        %v6328 = vunpack.c.l.s4 1983009808
        %v6329 = vunpack.c.0.s8 %v6328
        %v6330 = vlaneseq
        %v6331 = vshrl.u32 %v6330, 7
        %v6332 = vsub.s32 %v6329, %v6331
        %v6333 = vrot.slane %v6325, %v6332
        %v6335 = vunpack.c.l.s4 1983009808
        %v6336 = vunpack.c.0.s8 %v6335
        %v6337 = vlaneseq
        %v6338 = vshrl.u32 %v6337, 7
        %v6339 = vsub.s32 %v6336, %v6338
        %v6340 = vrot.slane %v6326, %v6339
        %v6341 = vcombine.low %v6202, %v6288
        %v6342 = vcombine.high %v6202, %v6288
        %v6344 = vunpack.c.l.s4 1983009808
        %v6345 = vunpack.c.0.s8 %v6344
        %v6346 = vlaneseq
        %v6347 = vshrl.u32 %v6346, 7
        %v6348 = vsub.s32 %v6345, %v6347
        %v6349 = vrot.slane %v6341, %v6348
        %v6351 = vunpack.c.l.s4 1983009808
        %v6352 = vunpack.c.0.s8 %v6351
        %v6353 = vlaneseq
        %v6354 = vshrl.u32 %v6353, 7
        %v6355 = vsub.s32 %v6352, %v6354
        %v6356 = vrot.slane %v6342, %v6355
        %v6357 = vcombine.low %v6301, %v6317
        %v6358 = vcombine.high %v6301, %v6317
        %v6360 = vunpack.c.l.s4 1934713408
        %v6361 = vunpack.c.0.s8 %v6360
        %v6362 = vlaneseq
        %v6363 = vshrl.u32 %v6362, 7
        %v6364 = vsub.s32 %v6361, %v6363
        %v6365 = vrot.slane %v6357, %v6364
        %v6367 = vunpack.c.l.s4 1934713408
        %v6368 = vunpack.c.0.s8 %v6367
        %v6369 = vlaneseq
        %v6370 = vshrl.u32 %v6369, 7
        %v6371 = vsub.s32 %v6368, %v6370
        %v6372 = vrot.slane %v6358, %v6371
        %v6373 = vcombine.low %v6308, %v6324
        %v6374 = vcombine.high %v6308, %v6324
        %v6376 = vunpack.c.l.s4 1934713408
        %v6377 = vunpack.c.0.s8 %v6376
        %v6378 = vlaneseq
        %v6379 = vshrl.u32 %v6378, 7
        %v6380 = vsub.s32 %v6377, %v6379
        %v6381 = vrot.slane %v6373, %v6380
        %v6383 = vunpack.c.l.s4 1934713408
        %v6384 = vunpack.c.0.s8 %v6383
        %v6385 = vlaneseq
        %v6386 = vshrl.u32 %v6385, 7
        %v6387 = vsub.s32 %v6384, %v6386
        %v6388 = vrot.slane %v6374, %v6387
        %v6389 = vcombine.low %v6333, %v6349
        %v6390 = vcombine.high %v6333, %v6349
        %v6392 = vunpack.c.l.s4 1934713408
        %v6393 = vunpack.c.0.s8 %v6392
        %v6394 = vlaneseq
        %v6395 = vshrl.u32 %v6394, 7
        %v6396 = vsub.s32 %v6393, %v6395
        %v6397 = vrot.slane %v6389, %v6396
        %v6399 = vunpack.c.l.s4 1934713408
        %v6400 = vunpack.c.0.s8 %v6399
        %v6401 = vlaneseq
        %v6402 = vshrl.u32 %v6401, 7
        %v6403 = vsub.s32 %v6400, %v6402
        %v6404 = vrot.slane %v6390, %v6403
        %v6405 = vcombine.low %v6340, %v6356
        %v6406 = vcombine.high %v6340, %v6356
        %v6408 = vunpack.c.l.s4 1934713408
        %v6409 = vunpack.c.0.s8 %v6408
        %v6410 = vlaneseq
        %v6411 = vshrl.u32 %v6410, 7
        %v6412 = vsub.s32 %v6409, %v6411
        %v6413 = vrot.slane %v6405, %v6412
        %v6415 = vunpack.c.l.s4 1934713408
        %v6416 = vunpack.c.0.s8 %v6415
        %v6417 = vlaneseq
        %v6418 = vshrl.u32 %v6417, 7
        %v6419 = vsub.s32 %v6416, %v6418
        %v6420 = vrot.slane %v6406, %v6419
        %v6421 = vcombine.low %v6365, %v6397
        %v6422 = vcombine.high %v6365, %v6397
        %v6423 = vcombine.low %v6372, %v6404
        %v6424 = vcombine.high %v6372, %v6404
        %v6425 = vcombine.low %v6381, %v6413
        %v6426 = vcombine.high %v6381, %v6413
        %v6427 = vcombine.low %v6388, %v6420
        %v6428 = vcombine.high %v6388, %v6420
        %v6429 = vcombine.low %v6421, %v6423
        %v6430 = vcombine.high %v6421, %v6423
        %v6432 = vunpack.c.l.s4 1983009808
        %v6433 = vunpack.c.0.s8 %v6432
        %v6434 = vlaneseq
        %v6435 = vshrl.u32 %v6434, 7
        %v6436 = vsub.s32 %v6433, %v6435
        %v6437 = vrot.slane %v6429, %v6436
        %v6439 = vunpack.c.l.s4 1983009808
        %v6440 = vunpack.c.0.s8 %v6439
        %v6441 = vlaneseq
        %v6442 = vshrl.u32 %v6441, 7
        %v6443 = vsub.s32 %v6440, %v6442
        %v6444 = vrot.slane %v6430, %v6443
        %v6445 = vcombine.low %v6422, %v6424
        %v6446 = vcombine.high %v6422, %v6424
        %v6448 = vunpack.c.l.s4 1983009808
        %v6449 = vunpack.c.0.s8 %v6448
        %v6450 = vlaneseq
        %v6451 = vshrl.u32 %v6450, 7
        %v6452 = vsub.s32 %v6449, %v6451
        %v6453 = vrot.slane %v6445, %v6452
        %v6455 = vunpack.c.l.s4 1983009808
        %v6456 = vunpack.c.0.s8 %v6455
        %v6457 = vlaneseq
        %v6458 = vshrl.u32 %v6457, 7
        %v6459 = vsub.s32 %v6456, %v6458
        %v6460 = vrot.slane %v6446, %v6459
        %v6461 = vcombine.low %v6425, %v6427
        %v6462 = vcombine.high %v6425, %v6427
        %v6464 = vunpack.c.l.s4 1983009808
        %v6465 = vunpack.c.0.s8 %v6464
        %v6466 = vlaneseq
        %v6467 = vshrl.u32 %v6466, 7
        %v6468 = vsub.s32 %v6465, %v6467
        %v6469 = vrot.slane %v6461, %v6468
        %v6471 = vunpack.c.l.s4 1983009808
        %v6472 = vunpack.c.0.s8 %v6471
        %v6473 = vlaneseq
        %v6474 = vshrl.u32 %v6473, 7
        %v6475 = vsub.s32 %v6472, %v6474
        %v6476 = vrot.slane %v6462, %v6475
        %v6477 = vcombine.low %v6426, %v6428
        %v6478 = vcombine.high %v6426, %v6428
        %v6480 = vunpack.c.l.s4 1983009808
        %v6481 = vunpack.c.0.s8 %v6480
        %v6482 = vlaneseq
        %v6483 = vshrl.u32 %v6482, 7
        %v6484 = vsub.s32 %v6481, %v6483
        %v6485 = vrot.slane %v6477, %v6484
        %v6487 = vunpack.c.l.s4 1983009808
        %v6488 = vunpack.c.0.s8 %v6487
        %v6489 = vlaneseq
        %v6490 = vshrl.u32 %v6489, 7
        %v6491 = vsub.s32 %v6488, %v6490
        %v6492 = vrot.slane %v6478, %v6491
        %v6493 = vcombine.low %v6437, %v6453
        %v6494 = vcombine.high %v6437, %v6453
        %v6496 = vunpack.c.l.s4 1934713408
        %v6497 = vunpack.c.0.s8 %v6496
        %v6498 = vlaneseq
        %v6499 = vshrl.u32 %v6498, 7
        %v6500 = vsub.s32 %v6497, %v6499
        %v6501 = vrot.slane %v6493, %v6500
        %v6503 = vunpack.c.l.s4 1934713408
        %v6504 = vunpack.c.0.s8 %v6503
        %v6505 = vlaneseq
        %v6506 = vshrl.u32 %v6505, 7
        %v6507 = vsub.s32 %v6504, %v6506
        %v6508 = vrot.slane %v6494, %v6507
        %v6509 = vcombine.low %v6444, %v6460
        %v6510 = vcombine.high %v6444, %v6460
        %v6512 = vunpack.c.l.s4 1934713408
        %v6513 = vunpack.c.0.s8 %v6512
        %v6514 = vlaneseq
        %v6515 = vshrl.u32 %v6514, 7
        %v6516 = vsub.s32 %v6513, %v6515
        %v6517 = vrot.slane %v6509, %v6516
        %v6519 = vunpack.c.l.s4 1934713408
        %v6520 = vunpack.c.0.s8 %v6519
        %v6521 = vlaneseq
        %v6522 = vshrl.u32 %v6521, 7
        %v6523 = vsub.s32 %v6520, %v6522
        %v6524 = vrot.slane %v6510, %v6523
        %v6525 = vcombine.low %v6469, %v6485
        %v6526 = vcombine.high %v6469, %v6485
        %v6528 = vunpack.c.l.s4 1934713408
        %v6529 = vunpack.c.0.s8 %v6528
        %v6530 = vlaneseq
        %v6531 = vshrl.u32 %v6530, 7
        %v6532 = vsub.s32 %v6529, %v6531
        %v6533 = vrot.slane %v6525, %v6532
        %v6535 = vunpack.c.l.s4 1934713408
        %v6536 = vunpack.c.0.s8 %v6535
        %v6537 = vlaneseq
        %v6538 = vshrl.u32 %v6537, 7
        %v6539 = vsub.s32 %v6536, %v6538
        %v6540 = vrot.slane %v6526, %v6539
        %v6541 = vcombine.low %v6476, %v6492
        %v6542 = vcombine.high %v6476, %v6492
        %v6544 = vunpack.c.l.s4 1934713408
        %v6545 = vunpack.c.0.s8 %v6544
        %v6546 = vlaneseq
        %v6547 = vshrl.u32 %v6546, 7
        %v6548 = vsub.s32 %v6545, %v6547
        %v6549 = vrot.slane %v6541, %v6548
        %v6551 = vunpack.c.l.s4 1934713408
        %v6552 = vunpack.c.0.s8 %v6551
        %v6553 = vlaneseq
        %v6554 = vshrl.u32 %v6553, 7
        %v6555 = vsub.s32 %v6552, %v6554
        %v6556 = vrot.slane %v6542, %v6555
        %v6557 = vcombine.low %v6501, %v6533
        %v6558 = vcombine.high %v6501, %v6533
        %v6559 = vcombine.low %v6508, %v6540
        %v6560 = vcombine.high %v6508, %v6540
        %v6561 = vcombine.low %v6517, %v6549
        %v6562 = vcombine.high %v6517, %v6549
        %v6563 = vcombine.low %v6524, %v6556
        %v6564 = vcombine.high %v6524, %v6556
        %6566 = vrot.lane.b32.xlu0 %v6558, 16
        %v6567 = vpop.permute.xlu0 %6566
        %6570 = vrot.lane.b32.xlu0 %v6559, 32
        %v6571 = vpop.permute.xlu0 %6570
        %6574 = vrot.lane.b32.xlu0 %v6560, 48
        %v6575 = vpop.permute.xlu0 %6574
        %6578 = vrot.lane.b32.xlu0 %v6561, 64
        %v6579 = vpop.permute.xlu0 %6578
        %6582 = vrot.lane.b32.xlu0 %v6562, 80
        %v6583 = vpop.permute.xlu0 %6582
        %6586 = vrot.lane.b32.xlu0 %v6563, 96
        %v6587 = vpop.permute.xlu0 %6586
        %6590 = vrot.lane.b32.xlu0 %v6564, 112
        %v6591 = vpop.permute.xlu0 %6590
        %v6593 = vsel %vm2318, %v6557, %v6567
        %v6594 = vsel %vm3478, %v6593, %v6571
        %v6595 = vsel %vm3480, %v6594, %v6575
        %v6596 = vsel %vm3482, %v6595, %v6579
        %v6597 = vsel %vm3484, %v6596, %v6583
        %v6598 = vsel %vm3486, %v6597, %v6587
        %v6599 = vsel %vm3488, %v6598, %v6591
        %v6600 = vpack.c.bf16 %v6599, %v6599
        %v6601 = vld [vmem:[#allocation17] sm:$0xf]
        %v6602 = vld [vmem:[#allocation17 + $0x4] sm:$0xf]
        %v6603 = vld [vmem:[#allocation17 + $0x8] sm:$0xf]
        %v6604 = vld [vmem:[#allocation17 + $0xc] sm:$0xf]
        %v6605 = vld [vmem:[#allocation17 + $0x10] sm:$0xf]
        %v6606 = vld [vmem:[#allocation17 + $0x14] sm:$0xf]
        %v6607 = vld [vmem:[#allocation17 + $0x18] sm:$0xf]
        %v6608 = vld [vmem:[#allocation17 + $0x1c] sm:$0xf]
        %v6609 = vld [vmem:[#allocation17 + $0x20] sm:$0xf]
        %v6610 = vld [vmem:[#allocation17 + $0x24] sm:$0xf]
        %v6611 = vld [vmem:[#allocation17 + $0x28] sm:$0xf]
        %v6612 = vld [vmem:[#allocation17 + $0x2c] sm:$0xf]
        %v6613 = vld [vmem:[#allocation17 + $0x30] sm:$0xf]
        %v6614 = vld [vmem:[#allocation17 + $0x34] sm:$0xf]
        %v6615 = vld [vmem:[#allocation17 + $0x38] sm:$0xf]
        %v6616 = vld [vmem:[#allocation17 + $0x3c] sm:$0xf]
        %v6617 = vld [vmem:[%s23] sm:$0x1]
        %v6619 = vlaneseq
        %v6620 = vshrl.u32 %v6619, 7
        %v6621 = vsub.s32 0, %v6620
        %v6622 = vrot.slane %v6617, %v6621
        %v6640 = vunpack.c.l.b16 %v6601
        %v6641 = vunpack.c.l.b16 %v6602
        %v6642 = vunpack.c.l.b16 %v6603
        %v6643 = vunpack.c.l.b16 %v6604
        %v6644 = vunpack.c.l.b16 %v6605
        %v6645 = vunpack.c.l.b16 %v6606
        %v6646 = vunpack.c.l.b16 %v6607
        %v6647 = vunpack.c.l.b16 %v6608
        %v6648 = vunpack.c.l.b16 %v6609
        %v6649 = vunpack.c.l.b16 %v6610
        %v6650 = vunpack.c.l.b16 %v6611
        %v6651 = vunpack.c.l.b16 %v6612
        %v6652 = vunpack.c.l.b16 %v6613
        %v6653 = vunpack.c.l.b16 %v6614
        %v6654 = vunpack.c.l.b16 %v6615
        %v6655 = vunpack.c.l.b16 %v6616
        %v6656 = vpack.c.b16 %v6641, %v6640
        %v6657 = vpack.c.b16 %v6643, %v6642
        %v6658 = vpack.c.b16 %v6645, %v6644
        %v6659 = vpack.c.b16 %v6647, %v6646
        %v6660 = vpack.c.b16 %v6649, %v6648
        %v6661 = vpack.c.b16 %v6651, %v6650
        %v6662 = vpack.c.b16 %v6653, %v6652
        %v6663 = vpack.c.b16 %v6655, %v6654
        %6672 = vmatprep.subr.bf16.mxu0 0
        %6673 = vmatpush1.bf16.msra.mxu0 %v6663
        %6674 = vmatprep.subr.bf16.mxu0 0
        %6675 = vmatpush1.bf16.msra.mxu0 %v6662
        %6676 = vmatprep.subr.bf16.mxu0 0
        %6677 = vmatpush1.bf16.msra.mxu0 %v6661
        %6678 = vmatprep.subr.bf16.mxu0 0
        %6679 = vmatpush1.bf16.msra.mxu0 %v6660
        %6680 = vmatprep.subr.bf16.mxu0 0
        %6681 = vmatpush1.bf16.msra.mxu0 %v6659
        %6682 = vmatprep.subr.bf16.mxu0 0
        %6683 = vmatpush1.bf16.msra.mxu0 %v6658
        %6684 = vmatprep.subr.bf16.mxu0 0
        %6685 = vmatpush1.bf16.msra.mxu0 %v6657
        %6686 = vmatprep.subr.bf16.mxu0 0
        %6687 = vmatpush1.bf16.msra.mxu0 %v6656
        %6688 = vmatprep.subr.bf16.mxu0 0
        %6689 = vmatpush2.bf16.msra.mxu0 0
        %6690 = vmatprep.subr.bf16.mxu0 0
        %6691 = vmatpush2.bf16.msra.mxu0 0
        %6692 = vmatprep.subr.bf16.mxu0 0
        %6693 = vmatpush2.bf16.msra.mxu0 0
        %6694 = vmatprep.subr.bf16.mxu0 0
        %6695 = vmatpush2.bf16.msra.mxu0 0
        %6696 = vmatprep.subr.bf16.mxu0 0
        %6697 = vmatpush2.bf16.msra.mxu0 0
        %6698 = vmatprep.subr.bf16.mxu0 0
        %6699 = vmatpush2.bf16.msra.mxu0 0
        %6700 = vmatprep.subr.bf16.mxu0 0
        %6701 = vmatpush2.bf16.msra.mxu0 0
        %6702 = vmatprep.subr.bf16.mxu0 0
        %6703 = vmatpush2.bf16.msra.mxu0 0
        %6704 = vmatprep.mubr.bf16.mxu0 0
        %6705 = vmatmul.mubr.bf16.gmra.mxu0 %v6600
        %v6706 = vpop.f32.mrf.mxu0
        %v6707 = vadd.f32 %v6622, %v6706
        %v6708 = vpop.f32.mrf.mxu0
        %v6709 = vpop.f32.mrf.mxu0
        %v6710 = vpop.f32.mrf.mxu0
        %6711 = vdwg.mxu0
        %v6712 = vadd.f32 %v3602, %v6707
        %v6713 = vld [vmem:[%s6] sm:$0x1]
        %v6714 = vld [vmem:[%s7] sm:$0x1]
        %6715 = vadd.xlane.f32.xlu0 %v6712
        %v6716 = vpop.xlane.xlu0 %6715
        %v6717 = vmul.f32 %v6716, %v1054
        %v6718 = vsub.f32 %v6712, %v6717
        %v6719 = vmul.f32 %v6718, %v6718
        %6720 = vadd.xlane.f32.xlu0 %v6719
        %v6721 = vpop.xlane.xlu0 %6720
        %v6722 = vmul.f32 %v6721, %v1054
        %v6723 = vadd.f32 %v6722, 1e-05
        %v6724 = vrsqrt.pop %v6723
        %v6725 = vmul.f32 %v6718, %v6724
        %v6727 = vlaneseq
        %v6728 = vshrl.u32 %v6727, 7
        %v6729 = vsub.s32 0, %v6728
        %v6730 = vrot.slane %v6713, %v6729
        %v6732 = vmul.f32 %v6725, %v6730
        %v6734 = vlaneseq
        %v6735 = vshrl.u32 %v6734, 7
        %v6736 = vsub.s32 0, %v6735
        %v6737 = vrot.slane %v6714, %v6736
        %v6739 = vadd.f32 %v6732, %v6737
        %v6740 = vpack.c.bf16 %v6739, %v6739
        %v6741 = vld [vmem:[#allocation19] sm:$0xff]
        %v6742 = vld [vmem:[#allocation19 + $0x8] sm:$0xff]
        %v6743 = vld [vmem:[#allocation19 + $0x10] sm:$0xff]
        %v6744 = vld [vmem:[#allocation19 + $0x18] sm:$0xff]
        %v6745 = vld [vmem:[#allocation19 + $0x20] sm:$0xff]
        %v6746 = vld [vmem:[#allocation19 + $0x28] sm:$0xff]
        %v6747 = vld [vmem:[#allocation19 + $0x30] sm:$0xff]
        %v6748 = vld [vmem:[#allocation19 + $0x38] sm:$0xff]
        %v6749 = vld [vmem:[#allocation19 + $0x40] sm:$0xff]
        %v6750 = vld [vmem:[#allocation19 + $0x48] sm:$0xff]
        %v6751 = vld [vmem:[#allocation19 + $0x50] sm:$0xff]
        %v6752 = vld [vmem:[#allocation19 + $0x58] sm:$0xff]
        %v6753 = vld [vmem:[#allocation19 + $0x60] sm:$0xff]
        %v6754 = vld [vmem:[#allocation19 + $0x68] sm:$0xff]
        %v6755 = vld [vmem:[#allocation19 + $0x70] sm:$0xff]
        %v6756 = vld [vmem:[#allocation19 + $0x78] sm:$0xff]
        %v6757 = vld [vmem:[%s25] sm:$0x3]
        %v6759 = vlaneseq
        %v6760 = vshrl.u32 %v6759, 7
        %v6761 = vsub.s32 0, %v6760
        %v6762 = vrot.slane %v6757, %v6761
        %v6763 = vlaneseq
        %v6764 = vshrl.u32 %v6763, 7
        %v6765 = vsub.s32 1, %v6764
        %v6766 = vrot.slane %v6757, %v6765
        %v6785 = vunpack.c.l.b16 %v6741
        %v6786 = vunpack.c.h.b16 %v6741
        %v6787 = vunpack.c.l.b16 %v6742
        %v6788 = vunpack.c.h.b16 %v6742
        %v6789 = vunpack.c.l.b16 %v6743
        %v6790 = vunpack.c.h.b16 %v6743
        %v6791 = vunpack.c.l.b16 %v6744
        %v6792 = vunpack.c.h.b16 %v6744
        %v6793 = vunpack.c.l.b16 %v6745
        %v6794 = vunpack.c.h.b16 %v6745
        %v6795 = vunpack.c.l.b16 %v6746
        %v6796 = vunpack.c.h.b16 %v6746
        %v6797 = vunpack.c.l.b16 %v6747
        %v6798 = vunpack.c.h.b16 %v6747
        %v6799 = vunpack.c.l.b16 %v6748
        %v6800 = vunpack.c.h.b16 %v6748
        %v6801 = vunpack.c.l.b16 %v6749
        %v6802 = vunpack.c.h.b16 %v6749
        %v6803 = vunpack.c.l.b16 %v6750
        %v6804 = vunpack.c.h.b16 %v6750
        %v6805 = vunpack.c.l.b16 %v6751
        %v6806 = vunpack.c.h.b16 %v6751
        %v6807 = vunpack.c.l.b16 %v6752
        %v6808 = vunpack.c.h.b16 %v6752
        %v6809 = vunpack.c.l.b16 %v6753
        %v6810 = vunpack.c.h.b16 %v6753
        %v6811 = vunpack.c.l.b16 %v6754
        %v6812 = vunpack.c.h.b16 %v6754
        %v6813 = vunpack.c.l.b16 %v6755
        %v6814 = vunpack.c.h.b16 %v6755
        %v6815 = vunpack.c.l.b16 %v6756
        %v6816 = vunpack.c.h.b16 %v6756
        %v6817 = vpack.c.b16 %v6787, %v6785
        %v6818 = vpack.c.b16 %v6788, %v6786
        %v6819 = vpack.c.b16 %v6791, %v6789
        %v6820 = vpack.c.b16 %v6792, %v6790
        %v6821 = vpack.c.b16 %v6795, %v6793
        %v6822 = vpack.c.b16 %v6796, %v6794
        %v6823 = vpack.c.b16 %v6799, %v6797
        %v6824 = vpack.c.b16 %v6800, %v6798
        %v6825 = vpack.c.b16 %v6803, %v6801
        %v6826 = vpack.c.b16 %v6804, %v6802
        %v6827 = vpack.c.b16 %v6807, %v6805
        %v6828 = vpack.c.b16 %v6808, %v6806
        %v6829 = vpack.c.b16 %v6811, %v6809
        %v6830 = vpack.c.b16 %v6812, %v6810
        %v6831 = vpack.c.b16 %v6815, %v6813
        %v6832 = vpack.c.b16 %v6816, %v6814
        %6849 = vmatprep.subr.bf16.mxu0 %v6832
        %6850 = vmatpush1.bf16.msra.mxu0 %v6831
        %6851 = vmatprep.subr.bf16.mxu0 %v6830
        %6852 = vmatpush1.bf16.msra.mxu0 %v6829
        %6853 = vmatprep.subr.bf16.mxu0 %v6828
        %6854 = vmatpush1.bf16.msra.mxu0 %v6827
        %6855 = vmatprep.subr.bf16.mxu0 %v6826
        %6856 = vmatpush1.bf16.msra.mxu0 %v6825
        %6857 = vmatprep.subr.bf16.mxu0 %v6824
        %6858 = vmatpush1.bf16.msra.mxu0 %v6823
        %6859 = vmatprep.subr.bf16.mxu0 %v6822
        %6860 = vmatpush1.bf16.msra.mxu0 %v6821
        %6861 = vmatprep.subr.bf16.mxu0 %v6820
        %6862 = vmatpush1.bf16.msra.mxu0 %v6819
        %6863 = vmatprep.subr.bf16.mxu0 %v6818
        %6864 = vmatpush1.bf16.msra.mxu0 %v6817
        %6865 = vmatprep.subr.bf16.mxu0 0
        %6866 = vmatpush2.bf16.msra.mxu0 0
        %6867 = vmatprep.subr.bf16.mxu0 0
        %6868 = vmatpush2.bf16.msra.mxu0 0
        %6869 = vmatprep.subr.bf16.mxu0 0
        %6870 = vmatpush2.bf16.msra.mxu0 0
        %6871 = vmatprep.subr.bf16.mxu0 0
        %6872 = vmatpush2.bf16.msra.mxu0 0
        %6873 = vmatprep.subr.bf16.mxu0 0
        %6874 = vmatpush2.bf16.msra.mxu0 0
        %6875 = vmatprep.subr.bf16.mxu0 0
        %6876 = vmatpush2.bf16.msra.mxu0 0
        %6877 = vmatprep.subr.bf16.mxu0 0
        %6878 = vmatpush2.bf16.msra.mxu0 0
        %6879 = vmatprep.subr.bf16.mxu0 0
        %6880 = vmatpush2.bf16.msra.mxu0 0
        %6881 = vmatprep.mubr.bf16.mxu0 0
        %6882 = vmatmul.mubr.bf16.gmra.mxu0 %v6740
        %v6883 = vpop.f32.mrf.mxu0
        %v6884 = vadd.f32 %v6762, %v6883
        %v6885 = vpop.f32.mrf.mxu0
        %v6886 = vadd.f32 %v6766, %v6885
        %v6887 = vpop.f32.mrf.mxu0
        %v6888 = vpop.f32.mrf.mxu0
        %6889 = vdwg.mxu0
        %v6890 = vmax.f32 %v6884, 0.0
        %v6891 = vmax.f32 %v6886, 0.0
        %v6892 = vpack.c.bf16 %v6890, %v6890
        %v6893 = vpack.c.bf16 %v6891, %v6891
        %v6894 = vld [vmem:[#allocation20] sm:$0xf]
        %v6895 = vld [vmem:[#allocation20 + $0x4] sm:$0xf]
        %v6896 = vld [vmem:[#allocation20 + $0x8] sm:$0xf]
        %v6897 = vld [vmem:[#allocation20 + $0xc] sm:$0xf]
        %v6898 = vld [vmem:[#allocation20 + $0x10] sm:$0xf]
        %v6899 = vld [vmem:[#allocation20 + $0x14] sm:$0xf]
        %v6900 = vld [vmem:[#allocation20 + $0x18] sm:$0xf]
        %v6901 = vld [vmem:[#allocation20 + $0x1c] sm:$0xf]
        %v6902 = vld [vmem:[#allocation20 + $0x20] sm:$0xf]
        %v6903 = vld [vmem:[#allocation20 + $0x24] sm:$0xf]
        %v6904 = vld [vmem:[#allocation20 + $0x28] sm:$0xf]
        %v6905 = vld [vmem:[#allocation20 + $0x2c] sm:$0xf]
        %v6906 = vld [vmem:[#allocation20 + $0x30] sm:$0xf]
        %v6907 = vld [vmem:[#allocation20 + $0x34] sm:$0xf]
        %v6908 = vld [vmem:[#allocation20 + $0x38] sm:$0xf]
        %v6909 = vld [vmem:[#allocation20 + $0x3c] sm:$0xf]
        %v6910 = vld [vmem:[#allocation20 + $0x40] sm:$0xf]
        %v6911 = vld [vmem:[#allocation20 + $0x44] sm:$0xf]
        %v6912 = vld [vmem:[#allocation20 + $0x48] sm:$0xf]
        %v6913 = vld [vmem:[#allocation20 + $0x4c] sm:$0xf]
        %v6914 = vld [vmem:[#allocation20 + $0x50] sm:$0xf]
        %v6915 = vld [vmem:[#allocation20 + $0x54] sm:$0xf]
        %v6916 = vld [vmem:[#allocation20 + $0x58] sm:$0xf]
        %v6917 = vld [vmem:[#allocation20 + $0x5c] sm:$0xf]
        %v6918 = vld [vmem:[#allocation20 + $0x60] sm:$0xf]
        %v6919 = vld [vmem:[#allocation20 + $0x64] sm:$0xf]
        %v6920 = vld [vmem:[#allocation20 + $0x68] sm:$0xf]
        %v6921 = vld [vmem:[#allocation20 + $0x6c] sm:$0xf]
        %v6922 = vld [vmem:[#allocation20 + $0x70] sm:$0xf]
        %v6923 = vld [vmem:[#allocation20 + $0x74] sm:$0xf]
        %v6924 = vld [vmem:[#allocation20 + $0x78] sm:$0xf]
        %v6925 = vld [vmem:[#allocation20 + $0x7c] sm:$0xf]
        %v6958 = vunpack.c.l.b16 %v6894
        %v6959 = vunpack.c.l.b16 %v6895
        %v6960 = vunpack.c.l.b16 %v6896
        %v6961 = vunpack.c.l.b16 %v6897
        %v6962 = vunpack.c.l.b16 %v6898
        %v6963 = vunpack.c.l.b16 %v6899
        %v6964 = vunpack.c.l.b16 %v6900
        %v6965 = vunpack.c.l.b16 %v6901
        %v6966 = vunpack.c.l.b16 %v6902
        %v6967 = vunpack.c.l.b16 %v6903
        %v6968 = vunpack.c.l.b16 %v6904
        %v6969 = vunpack.c.l.b16 %v6905
        %v6970 = vunpack.c.l.b16 %v6906
        %v6971 = vunpack.c.l.b16 %v6907
        %v6972 = vunpack.c.l.b16 %v6908
        %v6973 = vunpack.c.l.b16 %v6909
        %v6974 = vunpack.c.l.b16 %v6910
        %v6975 = vunpack.c.l.b16 %v6911
        %v6976 = vunpack.c.l.b16 %v6912
        %v6977 = vunpack.c.l.b16 %v6913
        %v6978 = vunpack.c.l.b16 %v6914
        %v6979 = vunpack.c.l.b16 %v6915
        %v6980 = vunpack.c.l.b16 %v6916
        %v6981 = vunpack.c.l.b16 %v6917
        %v6982 = vunpack.c.l.b16 %v6918
        %v6983 = vunpack.c.l.b16 %v6919
        %v6984 = vunpack.c.l.b16 %v6920
        %v6985 = vunpack.c.l.b16 %v6921
        %v6986 = vunpack.c.l.b16 %v6922
        %v6987 = vunpack.c.l.b16 %v6923
        %v6988 = vunpack.c.l.b16 %v6924
        %v6989 = vunpack.c.l.b16 %v6925
        %v6990 = vpack.c.b16 %v6959, %v6958
        %v6991 = vpack.c.b16 %v6961, %v6960
        %v6992 = vpack.c.b16 %v6963, %v6962
        %v6993 = vpack.c.b16 %v6965, %v6964
        %v6994 = vpack.c.b16 %v6967, %v6966
        %v6995 = vpack.c.b16 %v6969, %v6968
        %v6996 = vpack.c.b16 %v6971, %v6970
        %v6997 = vpack.c.b16 %v6973, %v6972
        %v6998 = vpack.c.b16 %v6975, %v6974
        %v6999 = vpack.c.b16 %v6977, %v6976
        %v7000 = vpack.c.b16 %v6979, %v6978
        %v7001 = vpack.c.b16 %v6981, %v6980
        %v7002 = vpack.c.b16 %v6983, %v6982
        %v7003 = vpack.c.b16 %v6985, %v6984
        %v7004 = vpack.c.b16 %v6987, %v6986
        %v7005 = vpack.c.b16 %v6989, %v6988
        %7022 = vmatprep.subr.bf16.mxu0 0
        %7023 = vmatpush1.bf16.msra.mxu0 %v6997
        %7024 = vmatprep.subr.bf16.mxu0 0
        %7025 = vmatpush1.bf16.msra.mxu0 %v6996
        %7026 = vmatprep.subr.bf16.mxu0 0
        %7027 = vmatpush1.bf16.msra.mxu0 %v6995
        %7028 = vmatprep.subr.bf16.mxu0 0
        %7029 = vmatpush1.bf16.msra.mxu0 %v6994
        %7030 = vmatprep.subr.bf16.mxu0 0
        %7031 = vmatpush1.bf16.msra.mxu0 %v6993
        %7032 = vmatprep.subr.bf16.mxu0 0
        %7033 = vmatpush1.bf16.msra.mxu0 %v6992
        %7034 = vmatprep.subr.bf16.mxu0 0
        %7035 = vmatpush1.bf16.msra.mxu0 %v6991
        %7036 = vmatprep.subr.bf16.mxu0 0
        %7037 = vmatpush1.bf16.msra.mxu0 %v6990
        %7038 = vmatprep.subr.bf16.mxu0 0
        %7039 = vmatpush2.bf16.msra.mxu0 %v7005
        %7040 = vmatprep.subr.bf16.mxu0 0
        %7041 = vmatpush2.bf16.msra.mxu0 %v7004
        %7042 = vmatprep.subr.bf16.mxu0 0
        %7043 = vmatpush2.bf16.msra.mxu0 %v7003
        %7044 = vmatprep.subr.bf16.mxu0 0
        %7045 = vmatpush2.bf16.msra.mxu0 %v7002
        %7046 = vmatprep.subr.bf16.mxu0 0
        %7047 = vmatpush2.bf16.msra.mxu0 %v7001
        %7048 = vmatprep.subr.bf16.mxu0 0
        %7049 = vmatpush2.bf16.msra.mxu0 %v7000
        %7050 = vmatprep.subr.bf16.mxu0 0
        %7051 = vmatpush2.bf16.msra.mxu0 %v6999
        %7052 = vmatprep.subr.bf16.mxu0 0
        %7053 = vmatpush2.bf16.msra.mxu0 %v6998
        %7054 = vmatprep.mubr.bf16.mxu0 %v6893
        %7055 = vmatmul.mubr.bf16.gmra.mxu0 %v6892
        %v7056 = vpop.f32.mrf.mxu0
        %v7057 = vadd.f32 0.0, %v7056
        %v7058 = vpop.f32.mrf.mxu0
        %v7059 = vpop.f32.mrf.mxu0
        %v7060 = vpop.f32.mrf.mxu0
        %7061 = vdwg.mxu0
        %v7062 = vadd.f32 %v6712, %v7057
        %v7063 = vld [vmem:[%s27] sm:$0x1]
        %v7065 = vlaneseq
        %v7066 = vshrl.u32 %v7065, 7
        %v7067 = vsub.s32 0, %v7066
        %v7068 = vrot.slane %v7063, %v7067
        %v7070 = vadd.f32 %v7062, %v7068
        %7071 = vst [vmem:[%s1045] sm:$0xff] %v7070
        %s7072 = sand.u32 %s659, 1
        %s7073 = scalar_lea.sflag [#allocation4], %s7072
        %s7074 = sand.u32 %s659, 1
        %s7075 = smul.addr %s7074, 8
        %s7076 = scalar_lea.vmem [#allocation22], %s7075
        // Predicated region
        $region181: #{tpu_custom_call.1} parent=131 // pred_check
          %p7077 = pneg %p669
        $region182: #{tpu_custom_call.1} parent=131 // pred_check_branch
          %7079 = sbr.rel (%p7077) target = $region184
        $region183: #{tpu_custom_call.1} parent=131 // pred_region
          %s7081 = ssub.s32 128, 128
          %7082 = vsyncadd %s7073, %s7081
          %s7083 = smul.addr %s53, 128
          %s7084 = scalar_lea.hbm %s28, %s7083
          %s7086 = sshll.u32 %s7076, 4
          %s7087 = int_to_ptr.vmem [resolvable:$true] %s7086
          %7089 = dma.vmem_to_hbm [thread:$0]  %s7087, 128, %s7084, %s7073
        $region184: #{tpu_custom_call.1} parent=131 // pred_fallthru
          _
      $region132: #{tpu_custom_call.1} parent=5 // pred_fallthru
        _
      %p7090 = scmp.le.s32.totalorder 2, %s48
      // Predicated region
      $region185: #{tpu_custom_call.1} parent=5 // pred_check
        %p7091 = pneg %p7090
      $region186: #{tpu_custom_call.1} parent=5 // pred_check_branch
        %7093 = sbr.rel (%p7091) target = $region188
      $region187: #{tpu_custom_call.1} parent=5 // pred_region
        %s7094 = ssub.s32 %s48, 2
        // Predicated region
        $region189: #{tpu_custom_call.1} parent=187 // pred_check
          %p7095 = pneg %p675
        $region190: #{tpu_custom_call.1} parent=187 // pred_check_branch
          %7097 = sbr.rel (%p7095) target = $region192
        $region191: #{tpu_custom_call.1} parent=187 // pred_region
          %s7098 = sand.u32 %s660, 1
          %s7099 = scalar_lea.sflag [#allocation4], %s7098
          %s7100 = sand.u32 %s660, 1
          %s7101 = smul.addr %s7100, 8
          %s7102 = scalar_lea.vmem [#allocation22], %s7101
          %7103 = dma.done %s7099, 128
        $region192: #{tpu_custom_call.1} parent=187 // pred_fallthru
          _
      $region188: #{tpu_custom_call.1} parent=5 // pred_fallthru
        _
    $region6: #{tpu_custom_call.1} parent=1 // loop_footer
      %s52 = sadd.s32 1, %s48
    $region7: #{tpu_custom_call.1} parent=1 // loop_footer_branch
      %47 = sbr.rel target = $region3
    $region8: #{tpu_custom_call.1} parent=1 // loop_exit
      _
    %7104 = vsyncpa [#allocation3], 1
    %s7105 = scalar_lea.sflag [#allocation3], 1
    %7106 = vsyncpa %s7105, 1
    %7107 = vsyncpa [#allocation6], 1
    %s7108 = scalar_lea.sflag [#allocation6], 1
    %7109 = vsyncpa %s7108, 1
    %7110 = vsyncpa [#allocation9], 1
    %7111 = vsyncpa [#allocation12], 1
    %7112 = vsyncpa [#allocation15], 1
    %7113 = vsyncpa [#allocation18], 1
    %7114 = vsyncpa [#allocation21], 1
    %7115 = vsyncpa [#allocation4], 1
    %s7116 = scalar_lea.sflag [#allocation4], 1
    %7117 = vsyncpa %s7116, 1

</llo_original>
